<compile_context>
chip_gen: v7x
topology: tpu7x:2x2x1
jax: 0.10.0
libtpu: 0.0.40
codegen_flags: <defaults>
</compile_context>

<pallas_src>
import functools

import numpy as np
import jax
import jax.numpy as jnp
from jax.experimental import pallas as pl
from jax.experimental.pallas import tpu as pltpu


# ----------------------------- static helpers -----------------------------

def get_g_in_out_chs(nf, imsize):
    layer_num = int(np.log2(imsize)) - 1
    channel_nums = [nf * min(2 ** idx, 8) for idx in range(layer_num)]
    channel_nums = channel_nums[::-1]
    return list(zip(channel_nums[:-1], channel_nums[1:]))


def _round8(x):
    return ((x + 7) // 8) * 8


def _affine_layout(pairs):
    """Packed layout for all gamma/beta heads.

    Per block the 8 heads are, in order:
      [fuse1.affine0.gamma, fuse1.affine0.beta, fuse1.affine1.gamma, fuse1.affine1.beta,
       fuse2.affine0.gamma, fuse2.affine0.beta, fuse2.affine1.gamma, fuse2.affine1.beta]
    Returns (total_padded_rows, per_block list of 8 (offset, size)).
    """
    off = 0
    layout = []
    for in_ch, out_ch in pairs:
        heads = []
        for feat in (in_ch, in_ch, in_ch, in_ch, out_ch, out_ch, out_ch, out_ch):
            heads.append((off, feat))
            off += _round8(feat)  # keep every slot 8-sublane aligned
        layout.append(heads)
    return off, layout


def _upsample_matrix(H, W):
    """0/1 matrix U (H*W, 4*H*W) s.t. x_flat @ U == nearest-neighbor 2x upsample."""
    U = np.zeros((H * W, 4 * H * W), np.float32)
    for h in range(H):
        for w in range(W):
            p = h * W + w
            for a in range(2):
                for bb in range(2):
                    U[p, (2 * h + a) * (2 * W) + (2 * w + bb)] = 1.0
    return jnp.asarray(U)


# ----------------------------- fused Pallas kernel -----------------------------

def _netg_kernel(meta, noise_ref, c_ref, wfc_ref, fcb_ref,
                 aw1_ref, ab1_ref, aw2_ref, ab2_ref, *refs):
    blocks = meta["blocks"]
    nblk = len(blocks)
    blk_refs = [refs[7 * i: 7 * i + 7] for i in range(nblk)]
    rgbw_ref = refs[7 * nblk]
    rgbb_ref = refs[7 * nblk + 1]
    o_ref = refs[7 * nblk + 2]

    b = pl.program_id(0)

    def leaky(v):
        # LeakyReLU(0.2) as mul+max (cheaper than compare+select)
        return jnp.maximum(v, 0.2 * v)

    def conv3x3(xc, w_ref, b_ref, H, W):
        # xc: (Cin, H*W) ; w_ref: (Cout, 9*Cin) ; returns (Cout, H*W)
        # "same" conv as ONE matmul over a 9*Cin contraction; taps are built from a
        # zero-padded flat copy (handles top/bottom rows) plus left/right edge masks.
        cin = xc.shape[0]
        HW = H * W
        zpad = jnp.zeros((cin, W + 1), dtype=xc.dtype)
        xpad = jnp.concatenate([zpad, xc, zpad], axis=1)      # (Cin, HW + 2W + 2)
        ww = jax.lax.broadcasted_iota(jnp.int32, (1, HW), 1) % W
        left_ok = ww >= 1            # source column w-1 valid
        right_ok = ww <= W - 2       # source column w+1 valid
        taps = []
        for dy in (-1, 0, 1):
            for dx in (-1, 0, 1):
                start = (W + 1) + dy * W + dx
                t = xpad[:, start:start + HW]
                if dx == -1:
                    t = jnp.where(left_ok, t, 0.0)
                elif dx == 1:
                    t = jnp.where(right_ok, t, 0.0)
                taps.append(t)
        patches = jnp.concatenate(taps, axis=0)               # (9*Cin, HW)
        return (jnp.dot(w_ref[...], patches,
                        preferred_element_type=jnp.float32) + b_ref[...])

    # ---------------- fc: noise -> (8*ngf, 4*4), directly in (C, H*W) layout ----------
    x = fcb_ref[...]
    for k in range(meta["nz"]):
        x = x + noise_ref[b, k] * wfc_ref[k]

    # ---------------- all affine gamma/beta heads in one packed MLP -------------------
    # linear1 (block-stacked) as a scalar loop over cond_dim, then one block-diag matmul
    h1 = ab1_ref[...]
    for k in range(meta["cond_dim"]):
        h1 = h1 + c_ref[b, k] * aw1_ref[:, k:k + 1]
    h1 = jnp.maximum(h1, 0.0)                                  # ReLU
    aff = jnp.dot(aw2_ref[...], h1,
                  preferred_element_type=jnp.float32) + ab2_ref[...]   # (Ftot, 1)

    def head(off_size):
        off, size = off_size
        return aff[off:off + size, :]                          # (size, 1)

    # ---------------- G blocks --------------------------------------------------------
    H = 4
    for bi, bm in enumerate(blocks):
        u_ref, c1w_ref, c1b_ref, c2w_ref, c2b_ref, scw_ref, scb_ref = blk_refs[bi]
        # 2x nearest upsample via 0/1 matmul, staying in (C, H*W) layout
        x = jnp.dot(x, u_ref[...], preferred_element_type=jnp.float32)
        H *= 2
        g0, b0, g1, b1_, g2, b2_, g3, b3_ = [head(hs) for hs in bm["heads"]]
        # fuse1 (DFBLK): affine -> leaky -> affine -> leaky
        h = leaky(g0 * x + b0)
        h = leaky(g1 * h + b1_)
        h = conv3x3(h, c1w_ref, c1b_ref, H, H)
        # fuse2 (DFBLK)
        h = leaky(g2 * h + b2_)
        h = leaky(g3 * h + b3_)
        res = conv3x3(h, c2w_ref, c2b_ref, H, H)
        # learnable 1x1 shortcut fused with residual add
        x = (jnp.dot(scw_ref[...], x, preferred_element_type=jnp.float32)
             + scb_ref[...] + res)

    # ---------------- to_rgb: LeakyReLU -> Conv3x3 -> Tanh ----------------------------
    rgb = conv3x3(leaky(x), rgbw_ref, rgbb_ref, H, H)
    o_ref[...] = jnp.tanh(rgb)


# ----------------------------- forward wrapper -----------------------------

@jax.jit
def netg_forward(params, noise, c):
    B, nz = noise.shape
    cond_dim = c.shape[1]
    pairs = [(blk["sc_w"].shape[1], blk["sc_w"].shape[0]) for blk in params["blocks"]]
    _, layout = _affine_layout(pairs)
    ch_size = params["rgb_w"].shape[0]

    H = 4
    blocks_meta = []
    for (in_ch, out_ch), heads in zip(pairs, layout):
        H *= 2
        blocks_meta.append(dict(in_ch=in_ch, out_ch=out_ch, heads=heads))
    imsize = H
    hw_out = imsize * imsize
    meta = dict(nz=nz, cond_dim=cond_dim, blocks=blocks_meta)

    weights = [params["fc_w3"], params["fc_b2"],
               params["aff_w1"], params["aff_b1"], params["aff_w2"], params["aff_b2"]]
    for blk in params["blocks"]:
        weights += [blk["up"], blk["c1_w"], blk["c1_b"], blk["c2_w"], blk["c2_b"],
                    blk["sc_w"], blk["sc_b"]]
    weights += [params["rgb_w"], params["rgb_b"]]

    smem_spec = pl.BlockSpec(memory_space=pltpu.MemorySpace.SMEM)

    def full_spec(a):
        return pl.BlockSpec(a.shape, lambda b_, _n=a.ndim: (0,) * _n)

    in_specs = [smem_spec, smem_spec] + [full_spec(a) for a in weights]

    out = pl.pallas_call(
        functools.partial(_netg_kernel, meta),
        out_shape=jax.ShapeDtypeStruct((B, ch_size, hw_out), jnp.float32),
        grid=(B,),
        in_specs=in_specs,
        out_specs=pl.BlockSpec((None, ch_size, hw_out), lambda b_: (b_, 0, 0)),
        compiler_params=pltpu.CompilerParams(dimension_semantics=("parallel",)),
    )(noise, c, *weights)

    _cond = jnp.concatenate([noise, c], axis=1)  # computed but unused (matches torch forward)
    return out.reshape(B, ch_size, imsize, imsize)  # back to NCHW


# ----------------------------- parameter init -----------------------------

def init_params(key, ngf, nz, cond_dim, imsize, ch_size):
    keys = iter(jax.random.split(key, 512))

    def unif(shape, bound):
        return jax.random.uniform(next(keys), shape, jnp.float32, -bound, bound)

    pairs = get_g_in_out_chs(ngf, imsize)
    params = {}

    # fc: Linear(nz, 8*ngf*4*4) stored as (nz, 8*ngf, 16) weight planes + (8*ngf, 16) bias,
    # i.e. already in the kernel's (C, H*W) layout.
    c0 = ngf * 8
    bfc = 1.0 / np.sqrt(nz)
    params["fc_w3"] = unif((nz, c0, 16), bfc)
    params["fc_b2"] = unif((c0, 16), bfc)

    # Packed affine heads (block-diagonal linear2, stacked linear1).
    # TODO(synk): the original _Affine_ sizes linear1 as cond_dim+former_dim and chains
    # the wb/overlay between affines, but _NetG as written cannot run that path (G_Block
    # is constructed without former_dim and blocks return tuples); linear1 here consumes
    # cond_dim only, matching the previously accepted interpretation.
    ftot, layout = _affine_layout(pairs)
    aw1 = np.zeros((ftot, cond_dim), np.float32)
    ab1 = np.zeros((ftot, 1), np.float32)
    aw2 = np.zeros((ftot, ftot), np.float32)   # _Affine_._initialize(): linear2 weight = 0
    ab2 = np.zeros((ftot, 1), np.float32)
    ba = 1.0 / np.sqrt(cond_dim)
    for heads in layout:
        for hidx, (off, feat) in enumerate(heads):
            aw1[off:off + feat, :] = np.asarray(unif((feat, cond_dim), ba))
            ab1[off:off + feat, 0] = np.asarray(unif((feat,), ba))
            if hidx % 2 == 0:                  # gamma heads: linear2 bias = 1
                ab2[off:off + feat, 0] = 1.0   # beta heads stay 0
    params["aff_w1"] = jnp.asarray(aw1)
    params["aff_b1"] = jnp.asarray(ab1)
    params["aff_w2"] = jnp.asarray(aw2)
    params["aff_b2"] = jnp.asarray(ab2)

    blocks = []
    H = 4
    out_ch = None
    for in_ch, out_ch in pairs:
        blk = {}
        blk["up"] = _upsample_matrix(H, H)
        H *= 2
        b1 = 1.0 / np.sqrt(in_ch * 9)
        blk["c1_w"] = unif((out_ch, 9 * in_ch), b1)     # rows: tap-major, Cin inner
        blk["c1_b"] = unif((out_ch, 1), b1)
        b2 = 1.0 / np.sqrt(out_ch * 9)
        blk["c2_w"] = unif((out_ch, 9 * out_ch), b2)
        blk["c2_b"] = unif((out_ch, 1), b2)
        bs = 1.0 / np.sqrt(in_ch)
        blk["sc_w"] = unif((out_ch, in_ch), bs)         # 1x1 learnable shortcut
        blk["sc_b"] = unif((out_ch, 1), bs)
        blocks.append(blk)
    params["blocks"] = blocks

    br = 1.0 / np.sqrt(out_ch * 9)
    params["rgb_w"] = unif((ch_size, 9 * out_ch), br)
    params["rgb_b"] = unif((ch_size, 1), br)
    return params


# ----------------------------- main -----------------------------

if __name__ == "__main__":
    ngf, nz, cond_dim, imsize, ch_size = 4, 16, 8, 32, 3
    B = 2

    key = jax.random.PRNGKey(0)
    kp, kn, kc = jax.random.split(key, 3)
    params = init_params(kp, ngf, nz, cond_dim, imsize, ch_size)
    noise = jax.random.normal(kn, (B, nz), jnp.float32)
    c = jax.random.normal(kc, (B, cond_dim), jnp.float32)

    out = netg_forward(params, noise, c)
    out = jax.block_until_ready(out)

    assert out.shape == (B, ch_size, imsize, imsize), out.shape
    assert bool(jnp.all(jnp.isfinite(out)))
    assert bool(jnp.all(jnp.abs(out) <= 1.0 + 1e-6))  # tanh output range
    print("KERNEL_OK")
</pallas_src>

<mosaic_0001>
module attributes {stable_mosaic.version = 11 : i64} {
  func.func @_netg_kernel(%arg0: i32, %arg1: memref<2x16xf32, #tpu.memory_space<smem>>, %arg2: memref<2x8xf32, #tpu.memory_space<smem>>, %arg3: memref<16x32x16xf32, #tpu.memory_space<vmem>>, %arg4: memref<32x16xf32, #tpu.memory_space<vmem>>, %arg5: memref<352x8xf32, #tpu.memory_space<vmem>>, %arg6: memref<352x1xf32, #tpu.memory_space<vmem>>, %arg7: memref<352x352xf32, #tpu.memory_space<vmem>>, %arg8: memref<352x1xf32, #tpu.memory_space<vmem>>, %arg9: memref<16x64xf32, #tpu.memory_space<vmem>>, %arg10: memref<16x288xf32, #tpu.memory_space<vmem>>, %arg11: memref<16x1xf32, #tpu.memory_space<vmem>>, %arg12: memref<16x144xf32, #tpu.memory_space<vmem>>, %arg13: memref<16x1xf32, #tpu.memory_space<vmem>>, %arg14: memref<16x32xf32, #tpu.memory_space<vmem>>, %arg15: memref<16x1xf32, #tpu.memory_space<vmem>>, %arg16: memref<64x256xf32, #tpu.memory_space<vmem>>, %arg17: memref<8x144xf32, #tpu.memory_space<vmem>>, %arg18: memref<8x1xf32, #tpu.memory_space<vmem>>, %arg19: memref<8x72xf32, #tpu.memory_space<vmem>>, %arg20: memref<8x1xf32, #tpu.memory_space<vmem>>, %arg21: memref<8x16xf32, #tpu.memory_space<vmem>>, %arg22: memref<8x1xf32, #tpu.memory_space<vmem>>, %arg23: memref<256x1024xf32, #tpu.memory_space<vmem>>, %arg24: memref<4x72xf32, #tpu.memory_space<vmem>>, %arg25: memref<4x1xf32, #tpu.memory_space<vmem>>, %arg26: memref<4x36xf32, #tpu.memory_space<vmem>>, %arg27: memref<4x1xf32, #tpu.memory_space<vmem>>, %arg28: memref<4x8xf32, #tpu.memory_space<vmem>>, %arg29: memref<4x1xf32, #tpu.memory_space<vmem>>, %arg30: memref<3x36xf32, #tpu.memory_space<vmem>>, %arg31: memref<3x1xf32, #tpu.memory_space<vmem>>, %arg32: memref<1x3x1024xf32, #tpu.memory_space<vmem>>) attributes {dimension_semantics = [#tpu.dimension_semantics<parallel>], iteration_bounds = array<i64: 2>, scalar_prefetch = 0 : i64, scratch_operands = 0 : i64, tpu.core_type = #tpu.core_type<tc>, window_params = [{transform_indices = @transform_0, window_bounds = array<i64: 2, 16>}, {transform_indices = @transform_1, window_bounds = array<i64: 2, 8>}, {pipeline_mode = #tpu.pipeline_mode<synchronous>, transform_indices = @transform_2, window_bounds = array<i64: 16, 32, 16>}, {pipeline_mode = #tpu.pipeline_mode<synchronous>, transform_indices = @transform_3, window_bounds = array<i64: 32, 16>}, {pipeline_mode = #tpu.pipeline_mode<synchronous>, transform_indices = @transform_4, window_bounds = array<i64: 352, 8>}, {pipeline_mode = #tpu.pipeline_mode<synchronous>, transform_indices = @transform_5, window_bounds = array<i64: 352, 1>}, {pipeline_mode = #tpu.pipeline_mode<synchronous>, transform_indices = @transform_6, window_bounds = array<i64: 352, 352>}, {pipeline_mode = #tpu.pipeline_mode<synchronous>, transform_indices = @transform_7, window_bounds = array<i64: 352, 1>}, {pipeline_mode = #tpu.pipeline_mode<synchronous>, transform_indices = @transform_8, window_bounds = array<i64: 16, 64>}, {pipeline_mode = #tpu.pipeline_mode<synchronous>, transform_indices = @transform_9, window_bounds = array<i64: 16, 288>}, {pipeline_mode = #tpu.pipeline_mode<synchronous>, transform_indices = @transform_10, window_bounds = array<i64: 16, 1>}, {pipeline_mode = #tpu.pipeline_mode<synchronous>, transform_indices = @transform_11, window_bounds = array<i64: 16, 144>}, {pipeline_mode = #tpu.pipeline_mode<synchronous>, transform_indices = @transform_12, window_bounds = array<i64: 16, 1>}, {pipeline_mode = #tpu.pipeline_mode<synchronous>, transform_indices = @transform_13, window_bounds = array<i64: 16, 32>}, {pipeline_mode = #tpu.pipeline_mode<synchronous>, transform_indices = @transform_14, window_bounds = array<i64: 16, 1>}, {pipeline_mode = #tpu.pipeline_mode<synchronous>, transform_indices = @transform_15, window_bounds = array<i64: 64, 256>}, {pipeline_mode = #tpu.pipeline_mode<synchronous>, transform_indices = @transform_16, window_bounds = array<i64: 8, 144>}, {pipeline_mode = #tpu.pipeline_mode<synchronous>, transform_indices = @transform_17, window_bounds = array<i64: 8, 1>}, {pipeline_mode = #tpu.pipeline_mode<synchronous>, transform_indices = @transform_18, window_bounds = array<i64: 8, 72>}, {pipeline_mode = #tpu.pipeline_mode<synchronous>, transform_indices = @transform_19, window_bounds = array<i64: 8, 1>}, {pipeline_mode = #tpu.pipeline_mode<synchronous>, transform_indices = @transform_20, window_bounds = array<i64: 8, 16>}, {pipeline_mode = #tpu.pipeline_mode<synchronous>, transform_indices = @transform_21, window_bounds = array<i64: 8, 1>}, {pipeline_mode = #tpu.pipeline_mode<synchronous>, transform_indices = @transform_22, window_bounds = array<i64: 256, 1024>}, {pipeline_mode = #tpu.pipeline_mode<synchronous>, transform_indices = @transform_23, window_bounds = array<i64: 4, 72>}, {pipeline_mode = #tpu.pipeline_mode<synchronous>, transform_indices = @transform_24, window_bounds = array<i64: 4, 1>}, {pipeline_mode = #tpu.pipeline_mode<synchronous>, transform_indices = @transform_25, window_bounds = array<i64: 4, 36>}, {pipeline_mode = #tpu.pipeline_mode<synchronous>, transform_indices = @transform_26, window_bounds = array<i64: 4, 1>}, {pipeline_mode = #tpu.pipeline_mode<synchronous>, transform_indices = @transform_27, window_bounds = array<i64: 4, 8>}, {pipeline_mode = #tpu.pipeline_mode<synchronous>, transform_indices = @transform_28, window_bounds = array<i64: 4, 1>}, {pipeline_mode = #tpu.pipeline_mode<synchronous>, transform_indices = @transform_29, window_bounds = array<i64: 3, 36>}, {pipeline_mode = #tpu.pipeline_mode<synchronous>, transform_indices = @transform_30, window_bounds = array<i64: 3, 1>}, {transform_indices = @transform_31, window_bounds = array<i64: 1, 3, 1024>}]} {
    %c0 = arith.constant 0 : index
    %c0_0 = arith.constant 0 : index
    %0 = vector.load %arg4[%c0, %c0_0] : memref<32x16xf32, #tpu.memory_space<vmem>>, vector<32x16xf32>
    %1 = arith.index_cast %arg0 : i32 to index
    %c0_1 = arith.constant 0 : index
    %2 = memref.load %arg1[%1, %c0_1] : memref<2x16xf32, #tpu.memory_space<smem>>
    %c0_2 = arith.constant 0 : index
    %c0_3 = arith.constant 0 : index
    %c0_4 = arith.constant 0 : index
    %3 = vector.load %arg3[%c0_2, %c0_3, %c0_4] : memref<16x32x16xf32, #tpu.memory_space<vmem>>, vector<1x32x16xf32>
    %4 = vector.shape_cast %3 : vector<1x32x16xf32> to vector<32x16xf32>
    %5 = vector.broadcast %2 : f32 to vector<32x16xf32>
    %6 = arith.mulf %5, %4 : vector<32x16xf32>
    %7 = arith.addf %0, %6 : vector<32x16xf32>
    %8 = arith.index_cast %arg0 : i32 to index
    %c1 = arith.constant 1 : index
    %9 = memref.load %arg1[%8, %c1] : memref<2x16xf32, #tpu.memory_space<smem>>
    %c1_5 = arith.constant 1 : index
    %c0_6 = arith.constant 0 : index
    %c0_7 = arith.constant 0 : index
    %10 = vector.load %arg3[%c1_5, %c0_6, %c0_7] : memref<16x32x16xf32, #tpu.memory_space<vmem>>, vector<1x32x16xf32>
    %11 = vector.shape_cast %10 : vector<1x32x16xf32> to vector<32x16xf32>
    %12 = vector.broadcast %9 : f32 to vector<32x16xf32>
    %13 = arith.mulf %12, %11 : vector<32x16xf32>
    %14 = arith.addf %7, %13 : vector<32x16xf32>
    %15 = arith.index_cast %arg0 : i32 to index
    %c2 = arith.constant 2 : index
    %16 = memref.load %arg1[%15, %c2] : memref<2x16xf32, #tpu.memory_space<smem>>
    %c2_8 = arith.constant 2 : index
    %c0_9 = arith.constant 0 : index
    %c0_10 = arith.constant 0 : index
    %17 = vector.load %arg3[%c2_8, %c0_9, %c0_10] : memref<16x32x16xf32, #tpu.memory_space<vmem>>, vector<1x32x16xf32>
    %18 = vector.shape_cast %17 : vector<1x32x16xf32> to vector<32x16xf32>
    %19 = vector.broadcast %16 : f32 to vector<32x16xf32>
    %20 = arith.mulf %19, %18 : vector<32x16xf32>
    %21 = arith.addf %14, %20 : vector<32x16xf32>
    %22 = arith.index_cast %arg0 : i32 to index
    %c3 = arith.constant 3 : index
    %23 = memref.load %arg1[%22, %c3] : memref<2x16xf32, #tpu.memory_space<smem>>
    %c3_11 = arith.constant 3 : index
    %c0_12 = arith.constant 0 : index
    %c0_13 = arith.constant 0 : index
    %24 = vector.load %arg3[%c3_11, %c0_12, %c0_13] : memref<16x32x16xf32, #tpu.memory_space<vmem>>, vector<1x32x16xf32>
    %25 = vector.shape_cast %24 : vector<1x32x16xf32> to vector<32x16xf32>
    %26 = vector.broadcast %23 : f32 to vector<32x16xf32>
    %27 = arith.mulf %26, %25 : vector<32x16xf32>
    %28 = arith.addf %21, %27 : vector<32x16xf32>
    %29 = arith.index_cast %arg0 : i32 to index
    %c4 = arith.constant 4 : index
    %30 = memref.load %arg1[%29, %c4] : memref<2x16xf32, #tpu.memory_space<smem>>
    %c4_14 = arith.constant 4 : index
    %c0_15 = arith.constant 0 : index
    %c0_16 = arith.constant 0 : index
    %31 = vector.load %arg3[%c4_14, %c0_15, %c0_16] : memref<16x32x16xf32, #tpu.memory_space<vmem>>, vector<1x32x16xf32>
    %32 = vector.shape_cast %31 : vector<1x32x16xf32> to vector<32x16xf32>
    %33 = vector.broadcast %30 : f32 to vector<32x16xf32>
    %34 = arith.mulf %33, %32 : vector<32x16xf32>
    %35 = arith.addf %28, %34 : vector<32x16xf32>
    %36 = arith.index_cast %arg0 : i32 to index
    %c5 = arith.constant 5 : index
    %37 = memref.load %arg1[%36, %c5] : memref<2x16xf32, #tpu.memory_space<smem>>
    %c5_17 = arith.constant 5 : index
    %c0_18 = arith.constant 0 : index
    %c0_19 = arith.constant 0 : index
    %38 = vector.load %arg3[%c5_17, %c0_18, %c0_19] : memref<16x32x16xf32, #tpu.memory_space<vmem>>, vector<1x32x16xf32>
    %39 = vector.shape_cast %38 : vector<1x32x16xf32> to vector<32x16xf32>
    %40 = vector.broadcast %37 : f32 to vector<32x16xf32>
    %41 = arith.mulf %40, %39 : vector<32x16xf32>
    %42 = arith.addf %35, %41 : vector<32x16xf32>
    %43 = arith.index_cast %arg0 : i32 to index
    %c6 = arith.constant 6 : index
    %44 = memref.load %arg1[%43, %c6] : memref<2x16xf32, #tpu.memory_space<smem>>
    %c6_20 = arith.constant 6 : index
    %c0_21 = arith.constant 0 : index
    %c0_22 = arith.constant 0 : index
    %45 = vector.load %arg3[%c6_20, %c0_21, %c0_22] : memref<16x32x16xf32, #tpu.memory_space<vmem>>, vector<1x32x16xf32>
    %46 = vector.shape_cast %45 : vector<1x32x16xf32> to vector<32x16xf32>
    %47 = vector.broadcast %44 : f32 to vector<32x16xf32>
    %48 = arith.mulf %47, %46 : vector<32x16xf32>
    %49 = arith.addf %42, %48 : vector<32x16xf32>
    %50 = arith.index_cast %arg0 : i32 to index
    %c7 = arith.constant 7 : index
    %51 = memref.load %arg1[%50, %c7] : memref<2x16xf32, #tpu.memory_space<smem>>
    %c7_23 = arith.constant 7 : index
    %c0_24 = arith.constant 0 : index
    %c0_25 = arith.constant 0 : index
    %52 = vector.load %arg3[%c7_23, %c0_24, %c0_25] : memref<16x32x16xf32, #tpu.memory_space<vmem>>, vector<1x32x16xf32>
    %53 = vector.shape_cast %52 : vector<1x32x16xf32> to vector<32x16xf32>
    %54 = vector.broadcast %51 : f32 to vector<32x16xf32>
    %55 = arith.mulf %54, %53 : vector<32x16xf32>
    %56 = arith.addf %49, %55 : vector<32x16xf32>
    %57 = arith.index_cast %arg0 : i32 to index
    %c8 = arith.constant 8 : index
    %58 = memref.load %arg1[%57, %c8] : memref<2x16xf32, #tpu.memory_space<smem>>
    %c8_26 = arith.constant 8 : index
    %c0_27 = arith.constant 0 : index
    %c0_28 = arith.constant 0 : index
    %59 = vector.load %arg3[%c8_26, %c0_27, %c0_28] : memref<16x32x16xf32, #tpu.memory_space<vmem>>, vector<1x32x16xf32>
    %60 = vector.shape_cast %59 : vector<1x32x16xf32> to vector<32x16xf32>
    %61 = vector.broadcast %58 : f32 to vector<32x16xf32>
    %62 = arith.mulf %61, %60 : vector<32x16xf32>
    %63 = arith.addf %56, %62 : vector<32x16xf32>
    %64 = arith.index_cast %arg0 : i32 to index
    %c9 = arith.constant 9 : index
    %65 = memref.load %arg1[%64, %c9] : memref<2x16xf32, #tpu.memory_space<smem>>
    %c9_29 = arith.constant 9 : index
    %c0_30 = arith.constant 0 : index
    %c0_31 = arith.constant 0 : index
    %66 = vector.load %arg3[%c9_29, %c0_30, %c0_31] : memref<16x32x16xf32, #tpu.memory_space<vmem>>, vector<1x32x16xf32>
    %67 = vector.shape_cast %66 : vector<1x32x16xf32> to vector<32x16xf32>
    %68 = vector.broadcast %65 : f32 to vector<32x16xf32>
    %69 = arith.mulf %68, %67 : vector<32x16xf32>
    %70 = arith.addf %63, %69 : vector<32x16xf32>
    %71 = arith.index_cast %arg0 : i32 to index
    %c10 = arith.constant 10 : index
    %72 = memref.load %arg1[%71, %c10] : memref<2x16xf32, #tpu.memory_space<smem>>
    %c10_32 = arith.constant 10 : index
    %c0_33 = arith.constant 0 : index
    %c0_34 = arith.constant 0 : index
    %73 = vector.load %arg3[%c10_32, %c0_33, %c0_34] : memref<16x32x16xf32, #tpu.memory_space<vmem>>, vector<1x32x16xf32>
    %74 = vector.shape_cast %73 : vector<1x32x16xf32> to vector<32x16xf32>
    %75 = vector.broadcast %72 : f32 to vector<32x16xf32>
    %76 = arith.mulf %75, %74 : vector<32x16xf32>
    %77 = arith.addf %70, %76 : vector<32x16xf32>
    %78 = arith.index_cast %arg0 : i32 to index
    %c11 = arith.constant 11 : index
    %79 = memref.load %arg1[%78, %c11] : memref<2x16xf32, #tpu.memory_space<smem>>
    %c11_35 = arith.constant 11 : index
    %c0_36 = arith.constant 0 : index
    %c0_37 = arith.constant 0 : index
    %80 = vector.load %arg3[%c11_35, %c0_36, %c0_37] : memref<16x32x16xf32, #tpu.memory_space<vmem>>, vector<1x32x16xf32>
    %81 = vector.shape_cast %80 : vector<1x32x16xf32> to vector<32x16xf32>
    %82 = vector.broadcast %79 : f32 to vector<32x16xf32>
    %83 = arith.mulf %82, %81 : vector<32x16xf32>
    %84 = arith.addf %77, %83 : vector<32x16xf32>
    %85 = arith.index_cast %arg0 : i32 to index
    %c12 = arith.constant 12 : index
    %86 = memref.load %arg1[%85, %c12] : memref<2x16xf32, #tpu.memory_space<smem>>
    %c12_38 = arith.constant 12 : index
    %c0_39 = arith.constant 0 : index
    %c0_40 = arith.constant 0 : index
    %87 = vector.load %arg3[%c12_38, %c0_39, %c0_40] : memref<16x32x16xf32, #tpu.memory_space<vmem>>, vector<1x32x16xf32>
    %88 = vector.shape_cast %87 : vector<1x32x16xf32> to vector<32x16xf32>
    %89 = vector.broadcast %86 : f32 to vector<32x16xf32>
    %90 = arith.mulf %89, %88 : vector<32x16xf32>
    %91 = arith.addf %84, %90 : vector<32x16xf32>
    %92 = arith.index_cast %arg0 : i32 to index
    %c13 = arith.constant 13 : index
    %93 = memref.load %arg1[%92, %c13] : memref<2x16xf32, #tpu.memory_space<smem>>
    %c13_41 = arith.constant 13 : index
    %c0_42 = arith.constant 0 : index
    %c0_43 = arith.constant 0 : index
    %94 = vector.load %arg3[%c13_41, %c0_42, %c0_43] : memref<16x32x16xf32, #tpu.memory_space<vmem>>, vector<1x32x16xf32>
    %95 = vector.shape_cast %94 : vector<1x32x16xf32> to vector<32x16xf32>
    %96 = vector.broadcast %93 : f32 to vector<32x16xf32>
    %97 = arith.mulf %96, %95 : vector<32x16xf32>
    %98 = arith.addf %91, %97 : vector<32x16xf32>
    %99 = arith.index_cast %arg0 : i32 to index
    %c14 = arith.constant 14 : index
    %100 = memref.load %arg1[%99, %c14] : memref<2x16xf32, #tpu.memory_space<smem>>
    %c14_44 = arith.constant 14 : index
    %c0_45 = arith.constant 0 : index
    %c0_46 = arith.constant 0 : index
    %101 = vector.load %arg3[%c14_44, %c0_45, %c0_46] : memref<16x32x16xf32, #tpu.memory_space<vmem>>, vector<1x32x16xf32>
    %102 = vector.shape_cast %101 : vector<1x32x16xf32> to vector<32x16xf32>
    %103 = vector.broadcast %100 : f32 to vector<32x16xf32>
    %104 = arith.mulf %103, %102 : vector<32x16xf32>
    %105 = arith.addf %98, %104 : vector<32x16xf32>
    %106 = arith.index_cast %arg0 : i32 to index
    %c15 = arith.constant 15 : index
    %107 = memref.load %arg1[%106, %c15] : memref<2x16xf32, #tpu.memory_space<smem>>
    %c15_47 = arith.constant 15 : index
    %c0_48 = arith.constant 0 : index
    %c0_49 = arith.constant 0 : index
    %108 = vector.load %arg3[%c15_47, %c0_48, %c0_49] : memref<16x32x16xf32, #tpu.memory_space<vmem>>, vector<1x32x16xf32>
    %109 = vector.shape_cast %108 : vector<1x32x16xf32> to vector<32x16xf32>
    %110 = vector.broadcast %107 : f32 to vector<32x16xf32>
    %111 = arith.mulf %110, %109 : vector<32x16xf32>
    %112 = arith.addf %105, %111 : vector<32x16xf32>
    %c0_50 = arith.constant 0 : index
    %c0_51 = arith.constant 0 : index
    %113 = vector.load %arg6[%c0_50, %c0_51] : memref<352x1xf32, #tpu.memory_space<vmem>>, vector<352x1xf32>
    %114 = arith.index_cast %arg0 : i32 to index
    %c0_52 = arith.constant 0 : index
    %115 = memref.load %arg2[%114, %c0_52] : memref<2x8xf32, #tpu.memory_space<smem>>
    %c0_53 = arith.constant 0 : index
    %c0_54 = arith.constant 0 : index
    %116 = vector.load %arg5[%c0_53, %c0_54] : memref<352x8xf32, #tpu.memory_space<vmem>>, vector<352x1xf32>
    %117 = vector.broadcast %115 : f32 to vector<352x1xf32>
    %118 = arith.mulf %117, %116 : vector<352x1xf32>
    %119 = arith.addf %113, %118 : vector<352x1xf32>
    %120 = arith.index_cast %arg0 : i32 to index
    %c1_55 = arith.constant 1 : index
    %121 = memref.load %arg2[%120, %c1_55] : memref<2x8xf32, #tpu.memory_space<smem>>
    %c0_56 = arith.constant 0 : index
    %c1_57 = arith.constant 1 : index
    %122 = vector.load %arg5[%c0_56, %c1_57] : memref<352x8xf32, #tpu.memory_space<vmem>>, vector<352x1xf32>
    %123 = vector.broadcast %121 : f32 to vector<352x1xf32>
    %124 = arith.mulf %123, %122 : vector<352x1xf32>
    %125 = arith.addf %119, %124 : vector<352x1xf32>
    %126 = arith.index_cast %arg0 : i32 to index
    %c2_58 = arith.constant 2 : index
    %127 = memref.load %arg2[%126, %c2_58] : memref<2x8xf32, #tpu.memory_space<smem>>
    %c0_59 = arith.constant 0 : index
    %c2_60 = arith.constant 2 : index
    %128 = vector.load %arg5[%c0_59, %c2_60] : memref<352x8xf32, #tpu.memory_space<vmem>>, vector<352x1xf32>
    %129 = vector.broadcast %127 : f32 to vector<352x1xf32>
    %130 = arith.mulf %129, %128 : vector<352x1xf32>
    %131 = arith.addf %125, %130 : vector<352x1xf32>
    %132 = arith.index_cast %arg0 : i32 to index
    %c3_61 = arith.constant 3 : index
    %133 = memref.load %arg2[%132, %c3_61] : memref<2x8xf32, #tpu.memory_space<smem>>
    %c0_62 = arith.constant 0 : index
    %c3_63 = arith.constant 3 : index
    %134 = vector.load %arg5[%c0_62, %c3_63] : memref<352x8xf32, #tpu.memory_space<vmem>>, vector<352x1xf32>
    %135 = vector.broadcast %133 : f32 to vector<352x1xf32>
    %136 = arith.mulf %135, %134 : vector<352x1xf32>
    %137 = arith.addf %131, %136 : vector<352x1xf32>
    %138 = arith.index_cast %arg0 : i32 to index
    %c4_64 = arith.constant 4 : index
    %139 = memref.load %arg2[%138, %c4_64] : memref<2x8xf32, #tpu.memory_space<smem>>
    %c0_65 = arith.constant 0 : index
    %c4_66 = arith.constant 4 : index
    %140 = vector.load %arg5[%c0_65, %c4_66] : memref<352x8xf32, #tpu.memory_space<vmem>>, vector<352x1xf32>
    %141 = vector.broadcast %139 : f32 to vector<352x1xf32>
    %142 = arith.mulf %141, %140 : vector<352x1xf32>
    %143 = arith.addf %137, %142 : vector<352x1xf32>
    %144 = arith.index_cast %arg0 : i32 to index
    %c5_67 = arith.constant 5 : index
    %145 = memref.load %arg2[%144, %c5_67] : memref<2x8xf32, #tpu.memory_space<smem>>
    %c0_68 = arith.constant 0 : index
    %c5_69 = arith.constant 5 : index
    %146 = vector.load %arg5[%c0_68, %c5_69] : memref<352x8xf32, #tpu.memory_space<vmem>>, vector<352x1xf32>
    %147 = vector.broadcast %145 : f32 to vector<352x1xf32>
    %148 = arith.mulf %147, %146 : vector<352x1xf32>
    %149 = arith.addf %143, %148 : vector<352x1xf32>
    %150 = arith.index_cast %arg0 : i32 to index
    %c6_70 = arith.constant 6 : index
    %151 = memref.load %arg2[%150, %c6_70] : memref<2x8xf32, #tpu.memory_space<smem>>
    %c0_71 = arith.constant 0 : index
    %c6_72 = arith.constant 6 : index
    %152 = vector.load %arg5[%c0_71, %c6_72] : memref<352x8xf32, #tpu.memory_space<vmem>>, vector<352x1xf32>
    %153 = vector.broadcast %151 : f32 to vector<352x1xf32>
    %154 = arith.mulf %153, %152 : vector<352x1xf32>
    %155 = arith.addf %149, %154 : vector<352x1xf32>
    %156 = arith.index_cast %arg0 : i32 to index
    %c7_73 = arith.constant 7 : index
    %157 = memref.load %arg2[%156, %c7_73] : memref<2x8xf32, #tpu.memory_space<smem>>
    %c0_74 = arith.constant 0 : index
    %c7_75 = arith.constant 7 : index
    %158 = vector.load %arg5[%c0_74, %c7_75] : memref<352x8xf32, #tpu.memory_space<vmem>>, vector<352x1xf32>
    %159 = vector.broadcast %157 : f32 to vector<352x1xf32>
    %160 = arith.mulf %159, %158 : vector<352x1xf32>
    %161 = arith.addf %155, %160 : vector<352x1xf32>
    %cst = arith.constant 0.000000e+00 : f32
    %162 = vector.broadcast %cst : f32 to vector<352x1xf32>
    %163 = arith.maximumf %161, %162 : vector<352x1xf32>
    %c0_76 = arith.constant 0 : index
    %c0_77 = arith.constant 0 : index
    %164 = vector.load %arg7[%c0_76, %c0_77] : memref<352x352xf32, #tpu.memory_space<vmem>>, vector<352x352xf32>
    %cst_78 = arith.constant dense<0.000000e+00> : vector<352x1xf32>
    %165 = tpu.matmul %164, %163, %cst_78 {dimension_numbers = #tpu.dot_dimension_numbers<[1], [0], [0], [1], [0, 0, 1, 1], [], []>} : vector<352x352xf32>, vector<352x1xf32>, vector<352x1xf32> -> vector<352x1xf32>
    %c0_79 = arith.constant 0 : index
    %c0_80 = arith.constant 0 : index
    %166 = vector.load %arg8[%c0_79, %c0_80] : memref<352x1xf32, #tpu.memory_space<vmem>>, vector<352x1xf32>
    %167 = arith.addf %165, %166 : vector<352x1xf32>
    %c0_81 = arith.constant 0 : index
    %c0_82 = arith.constant 0 : index
    %168 = vector.load %arg9[%c0_81, %c0_82] : memref<16x64xf32, #tpu.memory_space<vmem>>, vector<16x64xf32>
    %cst_83 = arith.constant dense<0.000000e+00> : vector<32x64xf32>
    %169 = tpu.matmul %112, %168, %cst_83 {dimension_numbers = #tpu.dot_dimension_numbers<[1], [0], [0], [1], [0, 0, 1, 1], [], []>} : vector<32x16xf32>, vector<16x64xf32>, vector<32x64xf32> -> vector<32x64xf32>
    %170 = vector.extract_strided_slice %167 {offsets = [0, 0], sizes = [32, 1], strides = [1, 1]} : vector<352x1xf32> to vector<32x1xf32>
    %171 = vector.extract_strided_slice %167 {offsets = [32, 0], sizes = [32, 1], strides = [1, 1]} : vector<352x1xf32> to vector<32x1xf32>
    %172 = vector.extract_strided_slice %167 {offsets = [64, 0], sizes = [32, 1], strides = [1, 1]} : vector<352x1xf32> to vector<32x1xf32>
    %173 = vector.extract_strided_slice %167 {offsets = [96, 0], sizes = [32, 1], strides = [1, 1]} : vector<352x1xf32> to vector<32x1xf32>
    %174 = vector.extract_strided_slice %167 {offsets = [128, 0], sizes = [16, 1], strides = [1, 1]} : vector<352x1xf32> to vector<16x1xf32>
    %175 = vector.extract_strided_slice %167 {offsets = [144, 0], sizes = [16, 1], strides = [1, 1]} : vector<352x1xf32> to vector<16x1xf32>
    %176 = vector.extract_strided_slice %167 {offsets = [160, 0], sizes = [16, 1], strides = [1, 1]} : vector<352x1xf32> to vector<16x1xf32>
    %177 = vector.extract_strided_slice %167 {offsets = [176, 0], sizes = [16, 1], strides = [1, 1]} : vector<352x1xf32> to vector<16x1xf32>
    %178 = vector.broadcast %170 : vector<32x1xf32> to vector<32x64xf32>
    %179 = arith.mulf %178, %169 : vector<32x64xf32>
    %180 = vector.broadcast %171 : vector<32x1xf32> to vector<32x64xf32>
    %181 = arith.addf %179, %180 : vector<32x64xf32>
    %cst_84 = arith.constant 2.000000e-01 : f32
    %182 = vector.broadcast %cst_84 : f32 to vector<32x64xf32>
    %183 = arith.mulf %182, %181 : vector<32x64xf32>
    %184 = arith.maximumf %181, %183 : vector<32x64xf32>
    %185 = vector.broadcast %172 : vector<32x1xf32> to vector<32x64xf32>
    %186 = arith.mulf %185, %184 : vector<32x64xf32>
    %187 = vector.broadcast %173 : vector<32x1xf32> to vector<32x64xf32>
    %188 = arith.addf %186, %187 : vector<32x64xf32>
    %cst_85 = arith.constant 2.000000e-01 : f32
    %189 = vector.broadcast %cst_85 : f32 to vector<32x64xf32>
    %190 = arith.mulf %189, %188 : vector<32x64xf32>
    %191 = arith.maximumf %188, %190 : vector<32x64xf32>
    %cst_86 = arith.constant 0.000000e+00 : f32
    %192 = vector.broadcast %cst_86 : f32 to vector<32x9xf32>
    %193 = tpu.concatenate %192, %191, %192 in 1 : vector<32x9xf32>, vector<32x64xf32>, vector<32x9xf32> -> vector<32x82xf32>
    %194 = tpu.iota {dimensions = array<i32: 1>} : vector<1x64xi32>
    %c8_i32 = arith.constant 8 : i32
    %c0_i32 = arith.constant 0 : i32
    %195 = arith.cmpi eq, %c8_i32, %c0_i32 : i32
    %c1_i32 = arith.constant 1 : i32
    %196 = arith.select %195, %c1_i32, %c8_i32 : i32
    %197 = vector.broadcast %196 : i32 to vector<1x64xi32>
    %198 = arith.remsi %194, %197 : vector<1x64xi32>
    %c0_i32_87 = arith.constant 0 : i32
    %199 = vector.broadcast %c0_i32_87 : i32 to vector<1x64xi32>
    %200 = arith.cmpi ne, %198, %199 : vector<1x64xi32>
    %c0_i32_88 = arith.constant 0 : i32
    %201 = vector.broadcast %c0_i32_88 : i32 to vector<1x64xi32>
    %202 = arith.cmpi slt, %198, %201 : vector<1x64xi32>
    %c0_i32_89 = arith.constant 0 : i32
    %203 = arith.cmpi slt, %196, %c0_i32_89 : i32
    %204 = vector.broadcast %203 : i1 to vector<1x64xi1>
    %205 = vector.broadcast %204 : vector<1x64xi1> to vector<1x64xi1>
    %206 = arith.xori %202, %205 : vector<1x64xi1>
    %207 = arith.andi %206, %200 : vector<1x64xi1>
    %208 = vector.broadcast %196 : i32 to vector<1x64xi32>
    %209 = arith.addi %198, %208 : vector<1x64xi32>
    %210 = arith.select %207, %209, %198 : vector<1x64xi1>, vector<1x64xi32>
    %c1_i32_90 = arith.constant 1 : i32
    %211 = vector.broadcast %c1_i32_90 : i32 to vector<1x64xi32>
    %212 = arith.cmpi sge, %210, %211 : vector<1x64xi32>
    %c6_i32 = arith.constant 6 : i32
    %213 = vector.broadcast %c6_i32 : i32 to vector<1x64xi32>
    %214 = arith.cmpi sle, %210, %213 : vector<1x64xi32>
    %215 = vector.extract_strided_slice %193 {offsets = [0, 0], sizes = [32, 64], strides = [1, 1]} : vector<32x82xf32> to vector<32x64xf32>
    %cst_91 = arith.constant 0.000000e+00 : f32
    %216 = vector.shape_cast %212 : vector<1x64xi1> to vector<1x64xi1>
    %217 = vector.broadcast %216 : vector<1x64xi1> to vector<32x64xi1>
    %218 = vector.broadcast %cst_91 : f32 to vector<32x64xf32>
    %219 = arith.select %217, %215, %218 : vector<32x64xi1>, vector<32x64xf32>
    %220 = vector.extract_strided_slice %193 {offsets = [0, 1], sizes = [32, 64], strides = [1, 1]} : vector<32x82xf32> to vector<32x64xf32>
    %221 = vector.extract_strided_slice %193 {offsets = [0, 2], sizes = [32, 64], strides = [1, 1]} : vector<32x82xf32> to vector<32x64xf32>
    %cst_92 = arith.constant 0.000000e+00 : f32
    %222 = vector.shape_cast %214 : vector<1x64xi1> to vector<1x64xi1>
    %223 = vector.broadcast %222 : vector<1x64xi1> to vector<32x64xi1>
    %224 = vector.broadcast %cst_92 : f32 to vector<32x64xf32>
    %225 = arith.select %223, %221, %224 : vector<32x64xi1>, vector<32x64xf32>
    %226 = vector.extract_strided_slice %193 {offsets = [0, 8], sizes = [32, 64], strides = [1, 1]} : vector<32x82xf32> to vector<32x64xf32>
    %cst_93 = arith.constant 0.000000e+00 : f32
    %227 = vector.shape_cast %212 : vector<1x64xi1> to vector<1x64xi1>
    %228 = vector.broadcast %227 : vector<1x64xi1> to vector<32x64xi1>
    %229 = vector.broadcast %cst_93 : f32 to vector<32x64xf32>
    %230 = arith.select %228, %226, %229 : vector<32x64xi1>, vector<32x64xf32>
    %231 = vector.extract_strided_slice %193 {offsets = [0, 9], sizes = [32, 64], strides = [1, 1]} : vector<32x82xf32> to vector<32x64xf32>
    %232 = vector.extract_strided_slice %193 {offsets = [0, 10], sizes = [32, 64], strides = [1, 1]} : vector<32x82xf32> to vector<32x64xf32>
    %cst_94 = arith.constant 0.000000e+00 : f32
    %233 = vector.shape_cast %214 : vector<1x64xi1> to vector<1x64xi1>
    %234 = vector.broadcast %233 : vector<1x64xi1> to vector<32x64xi1>
    %235 = vector.broadcast %cst_94 : f32 to vector<32x64xf32>
    %236 = arith.select %234, %232, %235 : vector<32x64xi1>, vector<32x64xf32>
    %237 = vector.extract_strided_slice %193 {offsets = [0, 16], sizes = [32, 64], strides = [1, 1]} : vector<32x82xf32> to vector<32x64xf32>
    %cst_95 = arith.constant 0.000000e+00 : f32
    %238 = vector.shape_cast %212 : vector<1x64xi1> to vector<1x64xi1>
    %239 = vector.broadcast %238 : vector<1x64xi1> to vector<32x64xi1>
    %240 = vector.broadcast %cst_95 : f32 to vector<32x64xf32>
    %241 = arith.select %239, %237, %240 : vector<32x64xi1>, vector<32x64xf32>
    %242 = vector.extract_strided_slice %193 {offsets = [0, 17], sizes = [32, 64], strides = [1, 1]} : vector<32x82xf32> to vector<32x64xf32>
    %243 = vector.extract_strided_slice %193 {offsets = [0, 18], sizes = [32, 64], strides = [1, 1]} : vector<32x82xf32> to vector<32x64xf32>
    %cst_96 = arith.constant 0.000000e+00 : f32
    %244 = vector.shape_cast %214 : vector<1x64xi1> to vector<1x64xi1>
    %245 = vector.broadcast %244 : vector<1x64xi1> to vector<32x64xi1>
    %246 = vector.broadcast %cst_96 : f32 to vector<32x64xf32>
    %247 = arith.select %245, %243, %246 : vector<32x64xi1>, vector<32x64xf32>
    %248 = tpu.concatenate %219, %220, %225, %230, %231, %236, %241, %242, %247 in 0 : vector<32x64xf32>, vector<32x64xf32>, vector<32x64xf32>, vector<32x64xf32>, vector<32x64xf32>, vector<32x64xf32>, vector<32x64xf32>, vector<32x64xf32>, vector<32x64xf32> -> vector<288x64xf32>
    %c0_97 = arith.constant 0 : index
    %c0_98 = arith.constant 0 : index
    %249 = vector.load %arg10[%c0_97, %c0_98] : memref<16x288xf32, #tpu.memory_space<vmem>>, vector<16x288xf32>
    %cst_99 = arith.constant dense<0.000000e+00> : vector<16x64xf32>
    %250 = tpu.matmul %249, %248, %cst_99 {dimension_numbers = #tpu.dot_dimension_numbers<[1], [0], [0], [1], [0, 0, 1, 1], [], []>} : vector<16x288xf32>, vector<288x64xf32>, vector<16x64xf32> -> vector<16x64xf32>
    %c0_100 = arith.constant 0 : index
    %c0_101 = arith.constant 0 : index
    %251 = vector.load %arg11[%c0_100, %c0_101] : memref<16x1xf32, #tpu.memory_space<vmem>>, vector<16x1xf32>
    %252 = vector.broadcast %251 : vector<16x1xf32> to vector<16x64xf32>
    %253 = arith.addf %250, %252 : vector<16x64xf32>
    %254 = vector.broadcast %174 : vector<16x1xf32> to vector<16x64xf32>
    %255 = arith.mulf %254, %253 : vector<16x64xf32>
    %256 = vector.broadcast %175 : vector<16x1xf32> to vector<16x64xf32>
    %257 = arith.addf %255, %256 : vector<16x64xf32>
    %cst_102 = arith.constant 2.000000e-01 : f32
    %258 = vector.broadcast %cst_102 : f32 to vector<16x64xf32>
    %259 = arith.mulf %258, %257 : vector<16x64xf32>
    %260 = arith.maximumf %257, %259 : vector<16x64xf32>
    %261 = vector.broadcast %176 : vector<16x1xf32> to vector<16x64xf32>
    %262 = arith.mulf %261, %260 : vector<16x64xf32>
    %263 = vector.broadcast %177 : vector<16x1xf32> to vector<16x64xf32>
    %264 = arith.addf %262, %263 : vector<16x64xf32>
    %cst_103 = arith.constant 2.000000e-01 : f32
    %265 = vector.broadcast %cst_103 : f32 to vector<16x64xf32>
    %266 = arith.mulf %265, %264 : vector<16x64xf32>
    %267 = arith.maximumf %264, %266 : vector<16x64xf32>
    %cst_104 = arith.constant 0.000000e+00 : f32
    %268 = vector.broadcast %cst_104 : f32 to vector<16x9xf32>
    %269 = tpu.concatenate %268, %267, %268 in 1 : vector<16x9xf32>, vector<16x64xf32>, vector<16x9xf32> -> vector<16x82xf32>
    %270 = tpu.iota {dimensions = array<i32: 1>} : vector<1x64xi32>
    %c8_i32_105 = arith.constant 8 : i32
    %c0_i32_106 = arith.constant 0 : i32
    %271 = arith.cmpi eq, %c8_i32_105, %c0_i32_106 : i32
    %c1_i32_107 = arith.constant 1 : i32
    %272 = arith.select %271, %c1_i32_107, %c8_i32_105 : i32
    %273 = vector.broadcast %272 : i32 to vector<1x64xi32>
    %274 = arith.remsi %270, %273 : vector<1x64xi32>
    %c0_i32_108 = arith.constant 0 : i32
    %275 = vector.broadcast %c0_i32_108 : i32 to vector<1x64xi32>
    %276 = arith.cmpi ne, %274, %275 : vector<1x64xi32>
    %c0_i32_109 = arith.constant 0 : i32
    %277 = vector.broadcast %c0_i32_109 : i32 to vector<1x64xi32>
    %278 = arith.cmpi slt, %274, %277 : vector<1x64xi32>
    %c0_i32_110 = arith.constant 0 : i32
    %279 = arith.cmpi slt, %272, %c0_i32_110 : i32
    %280 = vector.broadcast %279 : i1 to vector<1x64xi1>
    %281 = vector.broadcast %280 : vector<1x64xi1> to vector<1x64xi1>
    %282 = arith.xori %278, %281 : vector<1x64xi1>
    %283 = arith.andi %282, %276 : vector<1x64xi1>
    %284 = vector.broadcast %272 : i32 to vector<1x64xi32>
    %285 = arith.addi %274, %284 : vector<1x64xi32>
    %286 = arith.select %283, %285, %274 : vector<1x64xi1>, vector<1x64xi32>
    %c1_i32_111 = arith.constant 1 : i32
    %287 = vector.broadcast %c1_i32_111 : i32 to vector<1x64xi32>
    %288 = arith.cmpi sge, %286, %287 : vector<1x64xi32>
    %c6_i32_112 = arith.constant 6 : i32
    %289 = vector.broadcast %c6_i32_112 : i32 to vector<1x64xi32>
    %290 = arith.cmpi sle, %286, %289 : vector<1x64xi32>
    %291 = vector.extract_strided_slice %269 {offsets = [0, 0], sizes = [16, 64], strides = [1, 1]} : vector<16x82xf32> to vector<16x64xf32>
    %cst_113 = arith.constant 0.000000e+00 : f32
    %292 = vector.shape_cast %288 : vector<1x64xi1> to vector<1x64xi1>
    %293 = vector.broadcast %292 : vector<1x64xi1> to vector<16x64xi1>
    %294 = vector.broadcast %cst_113 : f32 to vector<16x64xf32>
    %295 = arith.select %293, %291, %294 : vector<16x64xi1>, vector<16x64xf32>
    %296 = vector.extract_strided_slice %269 {offsets = [0, 1], sizes = [16, 64], strides = [1, 1]} : vector<16x82xf32> to vector<16x64xf32>
    %297 = vector.extract_strided_slice %269 {offsets = [0, 2], sizes = [16, 64], strides = [1, 1]} : vector<16x82xf32> to vector<16x64xf32>
    %cst_114 = arith.constant 0.000000e+00 : f32
    %298 = vector.shape_cast %290 : vector<1x64xi1> to vector<1x64xi1>
    %299 = vector.broadcast %298 : vector<1x64xi1> to vector<16x64xi1>
    %300 = vector.broadcast %cst_114 : f32 to vector<16x64xf32>
    %301 = arith.select %299, %297, %300 : vector<16x64xi1>, vector<16x64xf32>
    %302 = vector.extract_strided_slice %269 {offsets = [0, 8], sizes = [16, 64], strides = [1, 1]} : vector<16x82xf32> to vector<16x64xf32>
    %cst_115 = arith.constant 0.000000e+00 : f32
    %303 = vector.shape_cast %288 : vector<1x64xi1> to vector<1x64xi1>
    %304 = vector.broadcast %303 : vector<1x64xi1> to vector<16x64xi1>
    %305 = vector.broadcast %cst_115 : f32 to vector<16x64xf32>
    %306 = arith.select %304, %302, %305 : vector<16x64xi1>, vector<16x64xf32>
    %307 = vector.extract_strided_slice %269 {offsets = [0, 9], sizes = [16, 64], strides = [1, 1]} : vector<16x82xf32> to vector<16x64xf32>
    %308 = vector.extract_strided_slice %269 {offsets = [0, 10], sizes = [16, 64], strides = [1, 1]} : vector<16x82xf32> to vector<16x64xf32>
    %cst_116 = arith.constant 0.000000e+00 : f32
    %309 = vector.shape_cast %290 : vector<1x64xi1> to vector<1x64xi1>
    %310 = vector.broadcast %309 : vector<1x64xi1> to vector<16x64xi1>
    %311 = vector.broadcast %cst_116 : f32 to vector<16x64xf32>
    %312 = arith.select %310, %308, %311 : vector<16x64xi1>, vector<16x64xf32>
    %313 = vector.extract_strided_slice %269 {offsets = [0, 16], sizes = [16, 64], strides = [1, 1]} : vector<16x82xf32> to vector<16x64xf32>
    %cst_117 = arith.constant 0.000000e+00 : f32
    %314 = vector.shape_cast %288 : vector<1x64xi1> to vector<1x64xi1>
    %315 = vector.broadcast %314 : vector<1x64xi1> to vector<16x64xi1>
    %316 = vector.broadcast %cst_117 : f32 to vector<16x64xf32>
    %317 = arith.select %315, %313, %316 : vector<16x64xi1>, vector<16x64xf32>
    %318 = vector.extract_strided_slice %269 {offsets = [0, 17], sizes = [16, 64], strides = [1, 1]} : vector<16x82xf32> to vector<16x64xf32>
    %319 = vector.extract_strided_slice %269 {offsets = [0, 18], sizes = [16, 64], strides = [1, 1]} : vector<16x82xf32> to vector<16x64xf32>
    %cst_118 = arith.constant 0.000000e+00 : f32
    %320 = vector.shape_cast %290 : vector<1x64xi1> to vector<1x64xi1>
    %321 = vector.broadcast %320 : vector<1x64xi1> to vector<16x64xi1>
    %322 = vector.broadcast %cst_118 : f32 to vector<16x64xf32>
    %323 = arith.select %321, %319, %322 : vector<16x64xi1>, vector<16x64xf32>
    %324 = tpu.concatenate %295, %296, %301, %306, %307, %312, %317, %318, %323 in 0 : vector<16x64xf32>, vector<16x64xf32>, vector<16x64xf32>, vector<16x64xf32>, vector<16x64xf32>, vector<16x64xf32>, vector<16x64xf32>, vector<16x64xf32>, vector<16x64xf32> -> vector<144x64xf32>
    %c0_119 = arith.constant 0 : index
    %c0_120 = arith.constant 0 : index
    %325 = vector.load %arg12[%c0_119, %c0_120] : memref<16x144xf32, #tpu.memory_space<vmem>>, vector<16x144xf32>
    %cst_121 = arith.constant dense<0.000000e+00> : vector<16x64xf32>
    %326 = tpu.matmul %325, %324, %cst_121 {dimension_numbers = #tpu.dot_dimension_numbers<[1], [0], [0], [1], [0, 0, 1, 1], [], []>} : vector<16x144xf32>, vector<144x64xf32>, vector<16x64xf32> -> vector<16x64xf32>
    %c0_122 = arith.constant 0 : index
    %c0_123 = arith.constant 0 : index
    %327 = vector.load %arg13[%c0_122, %c0_123] : memref<16x1xf32, #tpu.memory_space<vmem>>, vector<16x1xf32>
    %328 = vector.broadcast %327 : vector<16x1xf32> to vector<16x64xf32>
    %329 = arith.addf %326, %328 : vector<16x64xf32>
    %c0_124 = arith.constant 0 : index
    %c0_125 = arith.constant 0 : index
    %330 = vector.load %arg14[%c0_124, %c0_125] : memref<16x32xf32, #tpu.memory_space<vmem>>, vector<16x32xf32>
    %cst_126 = arith.constant dense<0.000000e+00> : vector<16x64xf32>
    %331 = tpu.matmul %330, %169, %cst_126 {dimension_numbers = #tpu.dot_dimension_numbers<[1], [0], [0], [1], [0, 0, 1, 1], [], []>} : vector<16x32xf32>, vector<32x64xf32>, vector<16x64xf32> -> vector<16x64xf32>
    %c0_127 = arith.constant 0 : index
    %c0_128 = arith.constant 0 : index
    %332 = vector.load %arg15[%c0_127, %c0_128] : memref<16x1xf32, #tpu.memory_space<vmem>>, vector<16x1xf32>
    %333 = vector.broadcast %332 : vector<16x1xf32> to vector<16x64xf32>
    %334 = arith.addf %331, %333 : vector<16x64xf32>
    %335 = arith.addf %334, %329 : vector<16x64xf32>
    %c0_129 = arith.constant 0 : index
    %c0_130 = arith.constant 0 : index
    %336 = vector.load %arg16[%c0_129, %c0_130] : memref<64x256xf32, #tpu.memory_space<vmem>>, vector<64x256xf32>
    %cst_131 = arith.constant dense<0.000000e+00> : vector<16x256xf32>
    %337 = tpu.matmul %335, %336, %cst_131 {dimension_numbers = #tpu.dot_dimension_numbers<[1], [0], [0], [1], [0, 0, 1, 1], [], []>} : vector<16x64xf32>, vector<64x256xf32>, vector<16x256xf32> -> vector<16x256xf32>
    %338 = vector.extract_strided_slice %167 {offsets = [192, 0], sizes = [16, 1], strides = [1, 1]} : vector<352x1xf32> to vector<16x1xf32>
    %339 = vector.extract_strided_slice %167 {offsets = [208, 0], sizes = [16, 1], strides = [1, 1]} : vector<352x1xf32> to vector<16x1xf32>
    %340 = vector.extract_strided_slice %167 {offsets = [224, 0], sizes = [16, 1], strides = [1, 1]} : vector<352x1xf32> to vector<16x1xf32>
    %341 = vector.extract_strided_slice %167 {offsets = [240, 0], sizes = [16, 1], strides = [1, 1]} : vector<352x1xf32> to vector<16x1xf32>
    %342 = vector.extract_strided_slice %167 {offsets = [256, 0], sizes = [8, 1], strides = [1, 1]} : vector<352x1xf32> to vector<8x1xf32>
    %343 = vector.extract_strided_slice %167 {offsets = [264, 0], sizes = [8, 1], strides = [1, 1]} : vector<352x1xf32> to vector<8x1xf32>
    %344 = vector.extract_strided_slice %167 {offsets = [272, 0], sizes = [8, 1], strides = [1, 1]} : vector<352x1xf32> to vector<8x1xf32>
    %345 = vector.extract_strided_slice %167 {offsets = [280, 0], sizes = [8, 1], strides = [1, 1]} : vector<352x1xf32> to vector<8x1xf32>
    %346 = vector.broadcast %338 : vector<16x1xf32> to vector<16x256xf32>
    %347 = arith.mulf %346, %337 : vector<16x256xf32>
    %348 = vector.broadcast %339 : vector<16x1xf32> to vector<16x256xf32>
    %349 = arith.addf %347, %348 : vector<16x256xf32>
    %cst_132 = arith.constant 2.000000e-01 : f32
    %350 = vector.broadcast %cst_132 : f32 to vector<16x256xf32>
    %351 = arith.mulf %350, %349 : vector<16x256xf32>
    %352 = arith.maximumf %349, %351 : vector<16x256xf32>
    %353 = vector.broadcast %340 : vector<16x1xf32> to vector<16x256xf32>
    %354 = arith.mulf %353, %352 : vector<16x256xf32>
    %355 = vector.broadcast %341 : vector<16x1xf32> to vector<16x256xf32>
    %356 = arith.addf %354, %355 : vector<16x256xf32>
    %cst_133 = arith.constant 2.000000e-01 : f32
    %357 = vector.broadcast %cst_133 : f32 to vector<16x256xf32>
    %358 = arith.mulf %357, %356 : vector<16x256xf32>
    %359 = arith.maximumf %356, %358 : vector<16x256xf32>
    %cst_134 = arith.constant 0.000000e+00 : f32
    %360 = vector.broadcast %cst_134 : f32 to vector<16x17xf32>
    %361 = tpu.concatenate %360, %359, %360 in 1 : vector<16x17xf32>, vector<16x256xf32>, vector<16x17xf32> -> vector<16x290xf32>
    %362 = tpu.iota {dimensions = array<i32: 1>} : vector<1x256xi32>
    %c16_i32 = arith.constant 16 : i32
    %c0_i32_135 = arith.constant 0 : i32
    %363 = arith.cmpi eq, %c16_i32, %c0_i32_135 : i32
    %c1_i32_136 = arith.constant 1 : i32
    %364 = arith.select %363, %c1_i32_136, %c16_i32 : i32
    %365 = vector.broadcast %364 : i32 to vector<1x256xi32>
    %366 = arith.remsi %362, %365 : vector<1x256xi32>
    %c0_i32_137 = arith.constant 0 : i32
    %367 = vector.broadcast %c0_i32_137 : i32 to vector<1x256xi32>
    %368 = arith.cmpi ne, %366, %367 : vector<1x256xi32>
    %c0_i32_138 = arith.constant 0 : i32
    %369 = vector.broadcast %c0_i32_138 : i32 to vector<1x256xi32>
    %370 = arith.cmpi slt, %366, %369 : vector<1x256xi32>
    %c0_i32_139 = arith.constant 0 : i32
    %371 = arith.cmpi slt, %364, %c0_i32_139 : i32
    %372 = vector.broadcast %371 : i1 to vector<1x256xi1>
    %373 = vector.broadcast %372 : vector<1x256xi1> to vector<1x256xi1>
    %374 = arith.xori %370, %373 : vector<1x256xi1>
    %375 = arith.andi %374, %368 : vector<1x256xi1>
    %376 = vector.broadcast %364 : i32 to vector<1x256xi32>
    %377 = arith.addi %366, %376 : vector<1x256xi32>
    %378 = arith.select %375, %377, %366 : vector<1x256xi1>, vector<1x256xi32>
    %c1_i32_140 = arith.constant 1 : i32
    %379 = vector.broadcast %c1_i32_140 : i32 to vector<1x256xi32>
    %380 = arith.cmpi sge, %378, %379 : vector<1x256xi32>
    %c14_i32 = arith.constant 14 : i32
    %381 = vector.broadcast %c14_i32 : i32 to vector<1x256xi32>
    %382 = arith.cmpi sle, %378, %381 : vector<1x256xi32>
    %383 = vector.extract_strided_slice %361 {offsets = [0, 0], sizes = [16, 256], strides = [1, 1]} : vector<16x290xf32> to vector<16x256xf32>
    %cst_141 = arith.constant 0.000000e+00 : f32
    %384 = vector.shape_cast %380 : vector<1x256xi1> to vector<1x256xi1>
    %385 = vector.broadcast %384 : vector<1x256xi1> to vector<16x256xi1>
    %386 = vector.broadcast %cst_141 : f32 to vector<16x256xf32>
    %387 = arith.select %385, %383, %386 : vector<16x256xi1>, vector<16x256xf32>
    %388 = vector.extract_strided_slice %361 {offsets = [0, 1], sizes = [16, 256], strides = [1, 1]} : vector<16x290xf32> to vector<16x256xf32>
    %389 = vector.extract_strided_slice %361 {offsets = [0, 2], sizes = [16, 256], strides = [1, 1]} : vector<16x290xf32> to vector<16x256xf32>
    %cst_142 = arith.constant 0.000000e+00 : f32
    %390 = vector.shape_cast %382 : vector<1x256xi1> to vector<1x256xi1>
    %391 = vector.broadcast %390 : vector<1x256xi1> to vector<16x256xi1>
    %392 = vector.broadcast %cst_142 : f32 to vector<16x256xf32>
    %393 = arith.select %391, %389, %392 : vector<16x256xi1>, vector<16x256xf32>
    %394 = vector.extract_strided_slice %361 {offsets = [0, 16], sizes = [16, 256], strides = [1, 1]} : vector<16x290xf32> to vector<16x256xf32>
    %cst_143 = arith.constant 0.000000e+00 : f32
    %395 = vector.shape_cast %380 : vector<1x256xi1> to vector<1x256xi1>
    %396 = vector.broadcast %395 : vector<1x256xi1> to vector<16x256xi1>
    %397 = vector.broadcast %cst_143 : f32 to vector<16x256xf32>
    %398 = arith.select %396, %394, %397 : vector<16x256xi1>, vector<16x256xf32>
    %399 = vector.extract_strided_slice %361 {offsets = [0, 17], sizes = [16, 256], strides = [1, 1]} : vector<16x290xf32> to vector<16x256xf32>
    %400 = vector.extract_strided_slice %361 {offsets = [0, 18], sizes = [16, 256], strides = [1, 1]} : vector<16x290xf32> to vector<16x256xf32>
    %cst_144 = arith.constant 0.000000e+00 : f32
    %401 = vector.shape_cast %382 : vector<1x256xi1> to vector<1x256xi1>
    %402 = vector.broadcast %401 : vector<1x256xi1> to vector<16x256xi1>
    %403 = vector.broadcast %cst_144 : f32 to vector<16x256xf32>
    %404 = arith.select %402, %400, %403 : vector<16x256xi1>, vector<16x256xf32>
    %405 = vector.extract_strided_slice %361 {offsets = [0, 32], sizes = [16, 256], strides = [1, 1]} : vector<16x290xf32> to vector<16x256xf32>
    %cst_145 = arith.constant 0.000000e+00 : f32
    %406 = vector.shape_cast %380 : vector<1x256xi1> to vector<1x256xi1>
    %407 = vector.broadcast %406 : vector<1x256xi1> to vector<16x256xi1>
    %408 = vector.broadcast %cst_145 : f32 to vector<16x256xf32>
    %409 = arith.select %407, %405, %408 : vector<16x256xi1>, vector<16x256xf32>
    %410 = vector.extract_strided_slice %361 {offsets = [0, 33], sizes = [16, 256], strides = [1, 1]} : vector<16x290xf32> to vector<16x256xf32>
    %411 = vector.extract_strided_slice %361 {offsets = [0, 34], sizes = [16, 256], strides = [1, 1]} : vector<16x290xf32> to vector<16x256xf32>
    %cst_146 = arith.constant 0.000000e+00 : f32
    %412 = vector.shape_cast %382 : vector<1x256xi1> to vector<1x256xi1>
    %413 = vector.broadcast %412 : vector<1x256xi1> to vector<16x256xi1>
    %414 = vector.broadcast %cst_146 : f32 to vector<16x256xf32>
    %415 = arith.select %413, %411, %414 : vector<16x256xi1>, vector<16x256xf32>
    %416 = tpu.concatenate %387, %388, %393, %398, %399, %404, %409, %410, %415 in 0 : vector<16x256xf32>, vector<16x256xf32>, vector<16x256xf32>, vector<16x256xf32>, vector<16x256xf32>, vector<16x256xf32>, vector<16x256xf32>, vector<16x256xf32>, vector<16x256xf32> -> vector<144x256xf32>
    %c0_147 = arith.constant 0 : index
    %c0_148 = arith.constant 0 : index
    %417 = vector.load %arg17[%c0_147, %c0_148] : memref<8x144xf32, #tpu.memory_space<vmem>>, vector<8x144xf32>
    %cst_149 = arith.constant dense<0.000000e+00> : vector<8x256xf32>
    %418 = tpu.matmul %417, %416, %cst_149 {dimension_numbers = #tpu.dot_dimension_numbers<[1], [0], [0], [1], [0, 0, 1, 1], [], []>} : vector<8x144xf32>, vector<144x256xf32>, vector<8x256xf32> -> vector<8x256xf32>
    %c0_150 = arith.constant 0 : index
    %c0_151 = arith.constant 0 : index
    %419 = vector.load %arg18[%c0_150, %c0_151] : memref<8x1xf32, #tpu.memory_space<vmem>>, vector<8x1xf32>
    %420 = vector.broadcast %419 : vector<8x1xf32> to vector<8x256xf32>
    %421 = arith.addf %418, %420 : vector<8x256xf32>
    %422 = vector.broadcast %342 : vector<8x1xf32> to vector<8x256xf32>
    %423 = arith.mulf %422, %421 : vector<8x256xf32>
    %424 = vector.broadcast %343 : vector<8x1xf32> to vector<8x256xf32>
    %425 = arith.addf %423, %424 : vector<8x256xf32>
    %cst_152 = arith.constant 2.000000e-01 : f32
    %426 = vector.broadcast %cst_152 : f32 to vector<8x256xf32>
    %427 = arith.mulf %426, %425 : vector<8x256xf32>
    %428 = arith.maximumf %425, %427 : vector<8x256xf32>
    %429 = vector.broadcast %344 : vector<8x1xf32> to vector<8x256xf32>
    %430 = arith.mulf %429, %428 : vector<8x256xf32>
    %431 = vector.broadcast %345 : vector<8x1xf32> to vector<8x256xf32>
    %432 = arith.addf %430, %431 : vector<8x256xf32>
    %cst_153 = arith.constant 2.000000e-01 : f32
    %433 = vector.broadcast %cst_153 : f32 to vector<8x256xf32>
    %434 = arith.mulf %433, %432 : vector<8x256xf32>
    %435 = arith.maximumf %432, %434 : vector<8x256xf32>
    %cst_154 = arith.constant 0.000000e+00 : f32
    %436 = vector.broadcast %cst_154 : f32 to vector<8x17xf32>
    %437 = tpu.concatenate %436, %435, %436 in 1 : vector<8x17xf32>, vector<8x256xf32>, vector<8x17xf32> -> vector<8x290xf32>
    %438 = tpu.iota {dimensions = array<i32: 1>} : vector<1x256xi32>
    %c16_i32_155 = arith.constant 16 : i32
    %c0_i32_156 = arith.constant 0 : i32
    %439 = arith.cmpi eq, %c16_i32_155, %c0_i32_156 : i32
    %c1_i32_157 = arith.constant 1 : i32
    %440 = arith.select %439, %c1_i32_157, %c16_i32_155 : i32
    %441 = vector.broadcast %440 : i32 to vector<1x256xi32>
    %442 = arith.remsi %438, %441 : vector<1x256xi32>
    %c0_i32_158 = arith.constant 0 : i32
    %443 = vector.broadcast %c0_i32_158 : i32 to vector<1x256xi32>
    %444 = arith.cmpi ne, %442, %443 : vector<1x256xi32>
    %c0_i32_159 = arith.constant 0 : i32
    %445 = vector.broadcast %c0_i32_159 : i32 to vector<1x256xi32>
    %446 = arith.cmpi slt, %442, %445 : vector<1x256xi32>
    %c0_i32_160 = arith.constant 0 : i32
    %447 = arith.cmpi slt, %440, %c0_i32_160 : i32
    %448 = vector.broadcast %447 : i1 to vector<1x256xi1>
    %449 = vector.broadcast %448 : vector<1x256xi1> to vector<1x256xi1>
    %450 = arith.xori %446, %449 : vector<1x256xi1>
    %451 = arith.andi %450, %444 : vector<1x256xi1>
    %452 = vector.broadcast %440 : i32 to vector<1x256xi32>
    %453 = arith.addi %442, %452 : vector<1x256xi32>
    %454 = arith.select %451, %453, %442 : vector<1x256xi1>, vector<1x256xi32>
    %c1_i32_161 = arith.constant 1 : i32
    %455 = vector.broadcast %c1_i32_161 : i32 to vector<1x256xi32>
    %456 = arith.cmpi sge, %454, %455 : vector<1x256xi32>
    %c14_i32_162 = arith.constant 14 : i32
    %457 = vector.broadcast %c14_i32_162 : i32 to vector<1x256xi32>
    %458 = arith.cmpi sle, %454, %457 : vector<1x256xi32>
    %459 = vector.extract_strided_slice %437 {offsets = [0, 0], sizes = [8, 256], strides = [1, 1]} : vector<8x290xf32> to vector<8x256xf32>
    %cst_163 = arith.constant 0.000000e+00 : f32
    %460 = vector.shape_cast %456 : vector<1x256xi1> to vector<1x256xi1>
    %461 = vector.broadcast %460 : vector<1x256xi1> to vector<8x256xi1>
    %462 = vector.broadcast %cst_163 : f32 to vector<8x256xf32>
    %463 = arith.select %461, %459, %462 : vector<8x256xi1>, vector<8x256xf32>
    %464 = vector.extract_strided_slice %437 {offsets = [0, 1], sizes = [8, 256], strides = [1, 1]} : vector<8x290xf32> to vector<8x256xf32>
    %465 = vector.extract_strided_slice %437 {offsets = [0, 2], sizes = [8, 256], strides = [1, 1]} : vector<8x290xf32> to vector<8x256xf32>
    %cst_164 = arith.constant 0.000000e+00 : f32
    %466 = vector.shape_cast %458 : vector<1x256xi1> to vector<1x256xi1>
    %467 = vector.broadcast %466 : vector<1x256xi1> to vector<8x256xi1>
    %468 = vector.broadcast %cst_164 : f32 to vector<8x256xf32>
    %469 = arith.select %467, %465, %468 : vector<8x256xi1>, vector<8x256xf32>
    %470 = vector.extract_strided_slice %437 {offsets = [0, 16], sizes = [8, 256], strides = [1, 1]} : vector<8x290xf32> to vector<8x256xf32>
    %cst_165 = arith.constant 0.000000e+00 : f32
    %471 = vector.shape_cast %456 : vector<1x256xi1> to vector<1x256xi1>
    %472 = vector.broadcast %471 : vector<1x256xi1> to vector<8x256xi1>
    %473 = vector.broadcast %cst_165 : f32 to vector<8x256xf32>
    %474 = arith.select %472, %470, %473 : vector<8x256xi1>, vector<8x256xf32>
    %475 = vector.extract_strided_slice %437 {offsets = [0, 17], sizes = [8, 256], strides = [1, 1]} : vector<8x290xf32> to vector<8x256xf32>
    %476 = vector.extract_strided_slice %437 {offsets = [0, 18], sizes = [8, 256], strides = [1, 1]} : vector<8x290xf32> to vector<8x256xf32>
    %cst_166 = arith.constant 0.000000e+00 : f32
    %477 = vector.shape_cast %458 : vector<1x256xi1> to vector<1x256xi1>
    %478 = vector.broadcast %477 : vector<1x256xi1> to vector<8x256xi1>
    %479 = vector.broadcast %cst_166 : f32 to vector<8x256xf32>
    %480 = arith.select %478, %476, %479 : vector<8x256xi1>, vector<8x256xf32>
    %481 = vector.extract_strided_slice %437 {offsets = [0, 32], sizes = [8, 256], strides = [1, 1]} : vector<8x290xf32> to vector<8x256xf32>
    %cst_167 = arith.constant 0.000000e+00 : f32
    %482 = vector.shape_cast %456 : vector<1x256xi1> to vector<1x256xi1>
    %483 = vector.broadcast %482 : vector<1x256xi1> to vector<8x256xi1>
    %484 = vector.broadcast %cst_167 : f32 to vector<8x256xf32>
    %485 = arith.select %483, %481, %484 : vector<8x256xi1>, vector<8x256xf32>
    %486 = vector.extract_strided_slice %437 {offsets = [0, 33], sizes = [8, 256], strides = [1, 1]} : vector<8x290xf32> to vector<8x256xf32>
    %487 = vector.extract_strided_slice %437 {offsets = [0, 34], sizes = [8, 256], strides = [1, 1]} : vector<8x290xf32> to vector<8x256xf32>
    %cst_168 = arith.constant 0.000000e+00 : f32
    %488 = vector.shape_cast %458 : vector<1x256xi1> to vector<1x256xi1>
    %489 = vector.broadcast %488 : vector<1x256xi1> to vector<8x256xi1>
    %490 = vector.broadcast %cst_168 : f32 to vector<8x256xf32>
    %491 = arith.select %489, %487, %490 : vector<8x256xi1>, vector<8x256xf32>
    %492 = tpu.concatenate %463, %464, %469, %474, %475, %480, %485, %486, %491 in 0 : vector<8x256xf32>, vector<8x256xf32>, vector<8x256xf32>, vector<8x256xf32>, vector<8x256xf32>, vector<8x256xf32>, vector<8x256xf32>, vector<8x256xf32>, vector<8x256xf32> -> vector<72x256xf32>
    %c0_169 = arith.constant 0 : index
    %c0_170 = arith.constant 0 : index
    %493 = vector.load %arg19[%c0_169, %c0_170] : memref<8x72xf32, #tpu.memory_space<vmem>>, vector<8x72xf32>
    %cst_171 = arith.constant dense<0.000000e+00> : vector<8x256xf32>
    %494 = tpu.matmul %493, %492, %cst_171 {dimension_numbers = #tpu.dot_dimension_numbers<[1], [0], [0], [1], [0, 0, 1, 1], [], []>} : vector<8x72xf32>, vector<72x256xf32>, vector<8x256xf32> -> vector<8x256xf32>
    %c0_172 = arith.constant 0 : index
    %c0_173 = arith.constant 0 : index
    %495 = vector.load %arg20[%c0_172, %c0_173] : memref<8x1xf32, #tpu.memory_space<vmem>>, vector<8x1xf32>
    %496 = vector.broadcast %495 : vector<8x1xf32> to vector<8x256xf32>
    %497 = arith.addf %494, %496 : vector<8x256xf32>
    %c0_174 = arith.constant 0 : index
    %c0_175 = arith.constant 0 : index
    %498 = vector.load %arg21[%c0_174, %c0_175] : memref<8x16xf32, #tpu.memory_space<vmem>>, vector<8x16xf32>
    %cst_176 = arith.constant dense<0.000000e+00> : vector<8x256xf32>
    %499 = tpu.matmul %498, %337, %cst_176 {dimension_numbers = #tpu.dot_dimension_numbers<[1], [0], [0], [1], [0, 0, 1, 1], [], []>} : vector<8x16xf32>, vector<16x256xf32>, vector<8x256xf32> -> vector<8x256xf32>
    %c0_177 = arith.constant 0 : index
    %c0_178 = arith.constant 0 : index
    %500 = vector.load %arg22[%c0_177, %c0_178] : memref<8x1xf32, #tpu.memory_space<vmem>>, vector<8x1xf32>
    %501 = vector.broadcast %500 : vector<8x1xf32> to vector<8x256xf32>
    %502 = arith.addf %499, %501 : vector<8x256xf32>
    %503 = arith.addf %502, %497 : vector<8x256xf32>
    %c0_179 = arith.constant 0 : index
    %c0_180 = arith.constant 0 : index
    %504 = vector.load %arg23[%c0_179, %c0_180] : memref<256x1024xf32, #tpu.memory_space<vmem>>, vector<256x1024xf32>
    %cst_181 = arith.constant dense<0.000000e+00> : vector<8x1024xf32>
    %505 = tpu.matmul %503, %504, %cst_181 {dimension_numbers = #tpu.dot_dimension_numbers<[1], [0], [0], [1], [0, 0, 1, 1], [], []>} : vector<8x256xf32>, vector<256x1024xf32>, vector<8x1024xf32> -> vector<8x1024xf32>
    %506 = vector.extract_strided_slice %167 {offsets = [288, 0], sizes = [8, 1], strides = [1, 1]} : vector<352x1xf32> to vector<8x1xf32>
    %507 = vector.extract_strided_slice %167 {offsets = [296, 0], sizes = [8, 1], strides = [1, 1]} : vector<352x1xf32> to vector<8x1xf32>
    %508 = vector.extract_strided_slice %167 {offsets = [304, 0], sizes = [8, 1], strides = [1, 1]} : vector<352x1xf32> to vector<8x1xf32>
    %509 = vector.extract_strided_slice %167 {offsets = [312, 0], sizes = [8, 1], strides = [1, 1]} : vector<352x1xf32> to vector<8x1xf32>
    %510 = vector.extract_strided_slice %167 {offsets = [320, 0], sizes = [4, 1], strides = [1, 1]} : vector<352x1xf32> to vector<4x1xf32>
    %511 = vector.extract_strided_slice %167 {offsets = [328, 0], sizes = [4, 1], strides = [1, 1]} : vector<352x1xf32> to vector<4x1xf32>
    %512 = vector.extract_strided_slice %167 {offsets = [336, 0], sizes = [4, 1], strides = [1, 1]} : vector<352x1xf32> to vector<4x1xf32>
    %513 = vector.extract_strided_slice %167 {offsets = [344, 0], sizes = [4, 1], strides = [1, 1]} : vector<352x1xf32> to vector<4x1xf32>
    %514 = vector.broadcast %506 : vector<8x1xf32> to vector<8x1024xf32>
    %515 = arith.mulf %514, %505 : vector<8x1024xf32>
    %516 = vector.broadcast %507 : vector<8x1xf32> to vector<8x1024xf32>
    %517 = arith.addf %515, %516 : vector<8x1024xf32>
    %cst_182 = arith.constant 2.000000e-01 : f32
    %518 = vector.broadcast %cst_182 : f32 to vector<8x1024xf32>
    %519 = arith.mulf %518, %517 : vector<8x1024xf32>
    %520 = arith.maximumf %517, %519 : vector<8x1024xf32>
    %521 = vector.broadcast %508 : vector<8x1xf32> to vector<8x1024xf32>
    %522 = arith.mulf %521, %520 : vector<8x1024xf32>
    %523 = vector.broadcast %509 : vector<8x1xf32> to vector<8x1024xf32>
    %524 = arith.addf %522, %523 : vector<8x1024xf32>
    %cst_183 = arith.constant 2.000000e-01 : f32
    %525 = vector.broadcast %cst_183 : f32 to vector<8x1024xf32>
    %526 = arith.mulf %525, %524 : vector<8x1024xf32>
    %527 = arith.maximumf %524, %526 : vector<8x1024xf32>
    %cst_184 = arith.constant 0.000000e+00 : f32
    %528 = vector.broadcast %cst_184 : f32 to vector<8x33xf32>
    %529 = tpu.concatenate %528, %527, %528 in 1 : vector<8x33xf32>, vector<8x1024xf32>, vector<8x33xf32> -> vector<8x1090xf32>
    %530 = tpu.iota {dimensions = array<i32: 1>} : vector<1x1024xi32>
    %c32_i32 = arith.constant 32 : i32
    %c0_i32_185 = arith.constant 0 : i32
    %531 = arith.cmpi eq, %c32_i32, %c0_i32_185 : i32
    %c1_i32_186 = arith.constant 1 : i32
    %532 = arith.select %531, %c1_i32_186, %c32_i32 : i32
    %533 = vector.broadcast %532 : i32 to vector<1x1024xi32>
    %534 = arith.remsi %530, %533 : vector<1x1024xi32>
    %c0_i32_187 = arith.constant 0 : i32
    %535 = vector.broadcast %c0_i32_187 : i32 to vector<1x1024xi32>
    %536 = arith.cmpi ne, %534, %535 : vector<1x1024xi32>
    %c0_i32_188 = arith.constant 0 : i32
    %537 = vector.broadcast %c0_i32_188 : i32 to vector<1x1024xi32>
    %538 = arith.cmpi slt, %534, %537 : vector<1x1024xi32>
    %c0_i32_189 = arith.constant 0 : i32
    %539 = arith.cmpi slt, %532, %c0_i32_189 : i32
    %540 = vector.broadcast %539 : i1 to vector<1x1024xi1>
    %541 = vector.broadcast %540 : vector<1x1024xi1> to vector<1x1024xi1>
    %542 = arith.xori %538, %541 : vector<1x1024xi1>
    %543 = arith.andi %542, %536 : vector<1x1024xi1>
    %544 = vector.broadcast %532 : i32 to vector<1x1024xi32>
    %545 = arith.addi %534, %544 : vector<1x1024xi32>
    %546 = arith.select %543, %545, %534 : vector<1x1024xi1>, vector<1x1024xi32>
    %c1_i32_190 = arith.constant 1 : i32
    %547 = vector.broadcast %c1_i32_190 : i32 to vector<1x1024xi32>
    %548 = arith.cmpi sge, %546, %547 : vector<1x1024xi32>
    %c30_i32 = arith.constant 30 : i32
    %549 = vector.broadcast %c30_i32 : i32 to vector<1x1024xi32>
    %550 = arith.cmpi sle, %546, %549 : vector<1x1024xi32>
    %551 = vector.extract_strided_slice %529 {offsets = [0, 0], sizes = [8, 1024], strides = [1, 1]} : vector<8x1090xf32> to vector<8x1024xf32>
    %cst_191 = arith.constant 0.000000e+00 : f32
    %552 = vector.shape_cast %548 : vector<1x1024xi1> to vector<1x1024xi1>
    %553 = vector.broadcast %552 : vector<1x1024xi1> to vector<8x1024xi1>
    %554 = vector.broadcast %cst_191 : f32 to vector<8x1024xf32>
    %555 = arith.select %553, %551, %554 : vector<8x1024xi1>, vector<8x1024xf32>
    %556 = vector.extract_strided_slice %529 {offsets = [0, 1], sizes = [8, 1024], strides = [1, 1]} : vector<8x1090xf32> to vector<8x1024xf32>
    %557 = vector.extract_strided_slice %529 {offsets = [0, 2], sizes = [8, 1024], strides = [1, 1]} : vector<8x1090xf32> to vector<8x1024xf32>
    %cst_192 = arith.constant 0.000000e+00 : f32
    %558 = vector.shape_cast %550 : vector<1x1024xi1> to vector<1x1024xi1>
    %559 = vector.broadcast %558 : vector<1x1024xi1> to vector<8x1024xi1>
    %560 = vector.broadcast %cst_192 : f32 to vector<8x1024xf32>
    %561 = arith.select %559, %557, %560 : vector<8x1024xi1>, vector<8x1024xf32>
    %562 = vector.extract_strided_slice %529 {offsets = [0, 32], sizes = [8, 1024], strides = [1, 1]} : vector<8x1090xf32> to vector<8x1024xf32>
    %cst_193 = arith.constant 0.000000e+00 : f32
    %563 = vector.shape_cast %548 : vector<1x1024xi1> to vector<1x1024xi1>
    %564 = vector.broadcast %563 : vector<1x1024xi1> to vector<8x1024xi1>
    %565 = vector.broadcast %cst_193 : f32 to vector<8x1024xf32>
    %566 = arith.select %564, %562, %565 : vector<8x1024xi1>, vector<8x1024xf32>
    %567 = vector.extract_strided_slice %529 {offsets = [0, 33], sizes = [8, 1024], strides = [1, 1]} : vector<8x1090xf32> to vector<8x1024xf32>
    %568 = vector.extract_strided_slice %529 {offsets = [0, 34], sizes = [8, 1024], strides = [1, 1]} : vector<8x1090xf32> to vector<8x1024xf32>
    %cst_194 = arith.constant 0.000000e+00 : f32
    %569 = vector.shape_cast %550 : vector<1x1024xi1> to vector<1x1024xi1>
    %570 = vector.broadcast %569 : vector<1x1024xi1> to vector<8x1024xi1>
    %571 = vector.broadcast %cst_194 : f32 to vector<8x1024xf32>
    %572 = arith.select %570, %568, %571 : vector<8x1024xi1>, vector<8x1024xf32>
    %573 = vector.extract_strided_slice %529 {offsets = [0, 64], sizes = [8, 1024], strides = [1, 1]} : vector<8x1090xf32> to vector<8x1024xf32>
    %cst_195 = arith.constant 0.000000e+00 : f32
    %574 = vector.shape_cast %548 : vector<1x1024xi1> to vector<1x1024xi1>
    %575 = vector.broadcast %574 : vector<1x1024xi1> to vector<8x1024xi1>
    %576 = vector.broadcast %cst_195 : f32 to vector<8x1024xf32>
    %577 = arith.select %575, %573, %576 : vector<8x1024xi1>, vector<8x1024xf32>
    %578 = vector.extract_strided_slice %529 {offsets = [0, 65], sizes = [8, 1024], strides = [1, 1]} : vector<8x1090xf32> to vector<8x1024xf32>
    %579 = vector.extract_strided_slice %529 {offsets = [0, 66], sizes = [8, 1024], strides = [1, 1]} : vector<8x1090xf32> to vector<8x1024xf32>
    %cst_196 = arith.constant 0.000000e+00 : f32
    %580 = vector.shape_cast %550 : vector<1x1024xi1> to vector<1x1024xi1>
    %581 = vector.broadcast %580 : vector<1x1024xi1> to vector<8x1024xi1>
    %582 = vector.broadcast %cst_196 : f32 to vector<8x1024xf32>
    %583 = arith.select %581, %579, %582 : vector<8x1024xi1>, vector<8x1024xf32>
    %584 = tpu.concatenate %555, %556, %561, %566, %567, %572, %577, %578, %583 in 0 : vector<8x1024xf32>, vector<8x1024xf32>, vector<8x1024xf32>, vector<8x1024xf32>, vector<8x1024xf32>, vector<8x1024xf32>, vector<8x1024xf32>, vector<8x1024xf32>, vector<8x1024xf32> -> vector<72x1024xf32>
    %c0_197 = arith.constant 0 : index
    %c0_198 = arith.constant 0 : index
    %585 = vector.load %arg24[%c0_197, %c0_198] : memref<4x72xf32, #tpu.memory_space<vmem>>, vector<4x72xf32>
    %cst_199 = arith.constant dense<0.000000e+00> : vector<4x1024xf32>
    %586 = tpu.matmul %585, %584, %cst_199 {dimension_numbers = #tpu.dot_dimension_numbers<[1], [0], [0], [1], [0, 0, 1, 1], [], []>} : vector<4x72xf32>, vector<72x1024xf32>, vector<4x1024xf32> -> vector<4x1024xf32>
    %c0_200 = arith.constant 0 : index
    %c0_201 = arith.constant 0 : index
    %587 = vector.load %arg25[%c0_200, %c0_201] : memref<4x1xf32, #tpu.memory_space<vmem>>, vector<4x1xf32>
    %588 = vector.broadcast %587 : vector<4x1xf32> to vector<4x1024xf32>
    %589 = arith.addf %586, %588 : vector<4x1024xf32>
    %590 = vector.broadcast %510 : vector<4x1xf32> to vector<4x1024xf32>
    %591 = arith.mulf %590, %589 : vector<4x1024xf32>
    %592 = vector.broadcast %511 : vector<4x1xf32> to vector<4x1024xf32>
    %593 = arith.addf %591, %592 : vector<4x1024xf32>
    %cst_202 = arith.constant 2.000000e-01 : f32
    %594 = vector.broadcast %cst_202 : f32 to vector<4x1024xf32>
    %595 = arith.mulf %594, %593 : vector<4x1024xf32>
    %596 = arith.maximumf %593, %595 : vector<4x1024xf32>
    %597 = vector.broadcast %512 : vector<4x1xf32> to vector<4x1024xf32>
    %598 = arith.mulf %597, %596 : vector<4x1024xf32>
    %599 = vector.broadcast %513 : vector<4x1xf32> to vector<4x1024xf32>
    %600 = arith.addf %598, %599 : vector<4x1024xf32>
    %cst_203 = arith.constant 2.000000e-01 : f32
    %601 = vector.broadcast %cst_203 : f32 to vector<4x1024xf32>
    %602 = arith.mulf %601, %600 : vector<4x1024xf32>
    %603 = arith.maximumf %600, %602 : vector<4x1024xf32>
    %cst_204 = arith.constant 0.000000e+00 : f32
    %604 = vector.broadcast %cst_204 : f32 to vector<4x33xf32>
    %605 = tpu.concatenate %604, %603, %604 in 1 : vector<4x33xf32>, vector<4x1024xf32>, vector<4x33xf32> -> vector<4x1090xf32>
    %606 = tpu.iota {dimensions = array<i32: 1>} : vector<1x1024xi32>
    %c32_i32_205 = arith.constant 32 : i32
    %c0_i32_206 = arith.constant 0 : i32
    %607 = arith.cmpi eq, %c32_i32_205, %c0_i32_206 : i32
    %c1_i32_207 = arith.constant 1 : i32
    %608 = arith.select %607, %c1_i32_207, %c32_i32_205 : i32
    %609 = vector.broadcast %608 : i32 to vector<1x1024xi32>
    %610 = arith.remsi %606, %609 : vector<1x1024xi32>
    %c0_i32_208 = arith.constant 0 : i32
    %611 = vector.broadcast %c0_i32_208 : i32 to vector<1x1024xi32>
    %612 = arith.cmpi ne, %610, %611 : vector<1x1024xi32>
    %c0_i32_209 = arith.constant 0 : i32
    %613 = vector.broadcast %c0_i32_209 : i32 to vector<1x1024xi32>
    %614 = arith.cmpi slt, %610, %613 : vector<1x1024xi32>
    %c0_i32_210 = arith.constant 0 : i32
    %615 = arith.cmpi slt, %608, %c0_i32_210 : i32
    %616 = vector.broadcast %615 : i1 to vector<1x1024xi1>
    %617 = vector.broadcast %616 : vector<1x1024xi1> to vector<1x1024xi1>
    %618 = arith.xori %614, %617 : vector<1x1024xi1>
    %619 = arith.andi %618, %612 : vector<1x1024xi1>
    %620 = vector.broadcast %608 : i32 to vector<1x1024xi32>
    %621 = arith.addi %610, %620 : vector<1x1024xi32>
    %622 = arith.select %619, %621, %610 : vector<1x1024xi1>, vector<1x1024xi32>
    %c1_i32_211 = arith.constant 1 : i32
    %623 = vector.broadcast %c1_i32_211 : i32 to vector<1x1024xi32>
    %624 = arith.cmpi sge, %622, %623 : vector<1x1024xi32>
    %c30_i32_212 = arith.constant 30 : i32
    %625 = vector.broadcast %c30_i32_212 : i32 to vector<1x1024xi32>
    %626 = arith.cmpi sle, %622, %625 : vector<1x1024xi32>
    %627 = vector.extract_strided_slice %605 {offsets = [0, 0], sizes = [4, 1024], strides = [1, 1]} : vector<4x1090xf32> to vector<4x1024xf32>
    %cst_213 = arith.constant 0.000000e+00 : f32
    %628 = vector.shape_cast %624 : vector<1x1024xi1> to vector<1x1024xi1>
    %629 = vector.broadcast %628 : vector<1x1024xi1> to vector<4x1024xi1>
    %630 = vector.broadcast %cst_213 : f32 to vector<4x1024xf32>
    %631 = arith.select %629, %627, %630 : vector<4x1024xi1>, vector<4x1024xf32>
    %632 = vector.extract_strided_slice %605 {offsets = [0, 1], sizes = [4, 1024], strides = [1, 1]} : vector<4x1090xf32> to vector<4x1024xf32>
    %633 = vector.extract_strided_slice %605 {offsets = [0, 2], sizes = [4, 1024], strides = [1, 1]} : vector<4x1090xf32> to vector<4x1024xf32>
    %cst_214 = arith.constant 0.000000e+00 : f32
    %634 = vector.shape_cast %626 : vector<1x1024xi1> to vector<1x1024xi1>
    %635 = vector.broadcast %634 : vector<1x1024xi1> to vector<4x1024xi1>
    %636 = vector.broadcast %cst_214 : f32 to vector<4x1024xf32>
    %637 = arith.select %635, %633, %636 : vector<4x1024xi1>, vector<4x1024xf32>
    %638 = vector.extract_strided_slice %605 {offsets = [0, 32], sizes = [4, 1024], strides = [1, 1]} : vector<4x1090xf32> to vector<4x1024xf32>
    %cst_215 = arith.constant 0.000000e+00 : f32
    %639 = vector.shape_cast %624 : vector<1x1024xi1> to vector<1x1024xi1>
    %640 = vector.broadcast %639 : vector<1x1024xi1> to vector<4x1024xi1>
    %641 = vector.broadcast %cst_215 : f32 to vector<4x1024xf32>
    %642 = arith.select %640, %638, %641 : vector<4x1024xi1>, vector<4x1024xf32>
    %643 = vector.extract_strided_slice %605 {offsets = [0, 33], sizes = [4, 1024], strides = [1, 1]} : vector<4x1090xf32> to vector<4x1024xf32>
    %644 = vector.extract_strided_slice %605 {offsets = [0, 34], sizes = [4, 1024], strides = [1, 1]} : vector<4x1090xf32> to vector<4x1024xf32>
    %cst_216 = arith.constant 0.000000e+00 : f32
    %645 = vector.shape_cast %626 : vector<1x1024xi1> to vector<1x1024xi1>
    %646 = vector.broadcast %645 : vector<1x1024xi1> to vector<4x1024xi1>
    %647 = vector.broadcast %cst_216 : f32 to vector<4x1024xf32>
    %648 = arith.select %646, %644, %647 : vector<4x1024xi1>, vector<4x1024xf32>
    %649 = vector.extract_strided_slice %605 {offsets = [0, 64], sizes = [4, 1024], strides = [1, 1]} : vector<4x1090xf32> to vector<4x1024xf32>
    %cst_217 = arith.constant 0.000000e+00 : f32
    %650 = vector.shape_cast %624 : vector<1x1024xi1> to vector<1x1024xi1>
    %651 = vector.broadcast %650 : vector<1x1024xi1> to vector<4x1024xi1>
    %652 = vector.broadcast %cst_217 : f32 to vector<4x1024xf32>
    %653 = arith.select %651, %649, %652 : vector<4x1024xi1>, vector<4x1024xf32>
    %654 = vector.extract_strided_slice %605 {offsets = [0, 65], sizes = [4, 1024], strides = [1, 1]} : vector<4x1090xf32> to vector<4x1024xf32>
    %655 = vector.extract_strided_slice %605 {offsets = [0, 66], sizes = [4, 1024], strides = [1, 1]} : vector<4x1090xf32> to vector<4x1024xf32>
    %cst_218 = arith.constant 0.000000e+00 : f32
    %656 = vector.shape_cast %626 : vector<1x1024xi1> to vector<1x1024xi1>
    %657 = vector.broadcast %656 : vector<1x1024xi1> to vector<4x1024xi1>
    %658 = vector.broadcast %cst_218 : f32 to vector<4x1024xf32>
    %659 = arith.select %657, %655, %658 : vector<4x1024xi1>, vector<4x1024xf32>
    %660 = tpu.concatenate %631, %632, %637, %642, %643, %648, %653, %654, %659 in 0 : vector<4x1024xf32>, vector<4x1024xf32>, vector<4x1024xf32>, vector<4x1024xf32>, vector<4x1024xf32>, vector<4x1024xf32>, vector<4x1024xf32>, vector<4x1024xf32>, vector<4x1024xf32> -> vector<36x1024xf32>
    %c0_219 = arith.constant 0 : index
    %c0_220 = arith.constant 0 : index
    %661 = vector.load %arg26[%c0_219, %c0_220] : memref<4x36xf32, #tpu.memory_space<vmem>>, vector<4x36xf32>
    %cst_221 = arith.constant dense<0.000000e+00> : vector<4x1024xf32>
    %662 = tpu.matmul %661, %660, %cst_221 {dimension_numbers = #tpu.dot_dimension_numbers<[1], [0], [0], [1], [0, 0, 1, 1], [], []>} : vector<4x36xf32>, vector<36x1024xf32>, vector<4x1024xf32> -> vector<4x1024xf32>
    %c0_222 = arith.constant 0 : index
    %c0_223 = arith.constant 0 : index
    %663 = vector.load %arg27[%c0_222, %c0_223] : memref<4x1xf32, #tpu.memory_space<vmem>>, vector<4x1xf32>
    %664 = vector.broadcast %663 : vector<4x1xf32> to vector<4x1024xf32>
    %665 = arith.addf %662, %664 : vector<4x1024xf32>
    %c0_224 = arith.constant 0 : index
    %c0_225 = arith.constant 0 : index
    %666 = vector.load %arg28[%c0_224, %c0_225] : memref<4x8xf32, #tpu.memory_space<vmem>>, vector<4x8xf32>
    %cst_226 = arith.constant dense<0.000000e+00> : vector<4x1024xf32>
    %667 = tpu.matmul %666, %505, %cst_226 {dimension_numbers = #tpu.dot_dimension_numbers<[1], [0], [0], [1], [0, 0, 1, 1], [], []>} : vector<4x8xf32>, vector<8x1024xf32>, vector<4x1024xf32> -> vector<4x1024xf32>
    %c0_227 = arith.constant 0 : index
    %c0_228 = arith.constant 0 : index
    %668 = vector.load %arg29[%c0_227, %c0_228] : memref<4x1xf32, #tpu.memory_space<vmem>>, vector<4x1xf32>
    %669 = vector.broadcast %668 : vector<4x1xf32> to vector<4x1024xf32>
    %670 = arith.addf %667, %669 : vector<4x1024xf32>
    %671 = arith.addf %670, %665 : vector<4x1024xf32>
    %cst_229 = arith.constant 2.000000e-01 : f32
    %672 = vector.broadcast %cst_229 : f32 to vector<4x1024xf32>
    %673 = arith.mulf %672, %671 : vector<4x1024xf32>
    %674 = arith.maximumf %671, %673 : vector<4x1024xf32>
    %cst_230 = arith.constant 0.000000e+00 : f32
    %675 = vector.broadcast %cst_230 : f32 to vector<4x33xf32>
    %676 = tpu.concatenate %675, %674, %675 in 1 : vector<4x33xf32>, vector<4x1024xf32>, vector<4x33xf32> -> vector<4x1090xf32>
    %677 = tpu.iota {dimensions = array<i32: 1>} : vector<1x1024xi32>
    %c32_i32_231 = arith.constant 32 : i32
    %c0_i32_232 = arith.constant 0 : i32
    %678 = arith.cmpi eq, %c32_i32_231, %c0_i32_232 : i32
    %c1_i32_233 = arith.constant 1 : i32
    %679 = arith.select %678, %c1_i32_233, %c32_i32_231 : i32
    %680 = vector.broadcast %679 : i32 to vector<1x1024xi32>
    %681 = arith.remsi %677, %680 : vector<1x1024xi32>
    %c0_i32_234 = arith.constant 0 : i32
    %682 = vector.broadcast %c0_i32_234 : i32 to vector<1x1024xi32>
    %683 = arith.cmpi ne, %681, %682 : vector<1x1024xi32>
    %c0_i32_235 = arith.constant 0 : i32
    %684 = vector.broadcast %c0_i32_235 : i32 to vector<1x1024xi32>
    %685 = arith.cmpi slt, %681, %684 : vector<1x1024xi32>
    %c0_i32_236 = arith.constant 0 : i32
    %686 = arith.cmpi slt, %679, %c0_i32_236 : i32
    %687 = vector.broadcast %686 : i1 to vector<1x1024xi1>
    %688 = vector.broadcast %687 : vector<1x1024xi1> to vector<1x1024xi1>
    %689 = arith.xori %685, %688 : vector<1x1024xi1>
    %690 = arith.andi %689, %683 : vector<1x1024xi1>
    %691 = vector.broadcast %679 : i32 to vector<1x1024xi32>
    %692 = arith.addi %681, %691 : vector<1x1024xi32>
    %693 = arith.select %690, %692, %681 : vector<1x1024xi1>, vector<1x1024xi32>
    %c1_i32_237 = arith.constant 1 : i32
    %694 = vector.broadcast %c1_i32_237 : i32 to vector<1x1024xi32>
    %695 = arith.cmpi sge, %693, %694 : vector<1x1024xi32>
    %c30_i32_238 = arith.constant 30 : i32
    %696 = vector.broadcast %c30_i32_238 : i32 to vector<1x1024xi32>
    %697 = arith.cmpi sle, %693, %696 : vector<1x1024xi32>
    %698 = vector.extract_strided_slice %676 {offsets = [0, 0], sizes = [4, 1024], strides = [1, 1]} : vector<4x1090xf32> to vector<4x1024xf32>
    %cst_239 = arith.constant 0.000000e+00 : f32
    %699 = vector.shape_cast %695 : vector<1x1024xi1> to vector<1x1024xi1>
    %700 = vector.broadcast %699 : vector<1x1024xi1> to vector<4x1024xi1>
    %701 = vector.broadcast %cst_239 : f32 to vector<4x1024xf32>
    %702 = arith.select %700, %698, %701 : vector<4x1024xi1>, vector<4x1024xf32>
    %703 = vector.extract_strided_slice %676 {offsets = [0, 1], sizes = [4, 1024], strides = [1, 1]} : vector<4x1090xf32> to vector<4x1024xf32>
    %704 = vector.extract_strided_slice %676 {offsets = [0, 2], sizes = [4, 1024], strides = [1, 1]} : vector<4x1090xf32> to vector<4x1024xf32>
    %cst_240 = arith.constant 0.000000e+00 : f32
    %705 = vector.shape_cast %697 : vector<1x1024xi1> to vector<1x1024xi1>
    %706 = vector.broadcast %705 : vector<1x1024xi1> to vector<4x1024xi1>
    %707 = vector.broadcast %cst_240 : f32 to vector<4x1024xf32>
    %708 = arith.select %706, %704, %707 : vector<4x1024xi1>, vector<4x1024xf32>
    %709 = vector.extract_strided_slice %676 {offsets = [0, 32], sizes = [4, 1024], strides = [1, 1]} : vector<4x1090xf32> to vector<4x1024xf32>
    %cst_241 = arith.constant 0.000000e+00 : f32
    %710 = vector.shape_cast %695 : vector<1x1024xi1> to vector<1x1024xi1>
    %711 = vector.broadcast %710 : vector<1x1024xi1> to vector<4x1024xi1>
    %712 = vector.broadcast %cst_241 : f32 to vector<4x1024xf32>
    %713 = arith.select %711, %709, %712 : vector<4x1024xi1>, vector<4x1024xf32>
    %714 = vector.extract_strided_slice %676 {offsets = [0, 33], sizes = [4, 1024], strides = [1, 1]} : vector<4x1090xf32> to vector<4x1024xf32>
    %715 = vector.extract_strided_slice %676 {offsets = [0, 34], sizes = [4, 1024], strides = [1, 1]} : vector<4x1090xf32> to vector<4x1024xf32>
    %cst_242 = arith.constant 0.000000e+00 : f32
    %716 = vector.shape_cast %697 : vector<1x1024xi1> to vector<1x1024xi1>
    %717 = vector.broadcast %716 : vector<1x1024xi1> to vector<4x1024xi1>
    %718 = vector.broadcast %cst_242 : f32 to vector<4x1024xf32>
    %719 = arith.select %717, %715, %718 : vector<4x1024xi1>, vector<4x1024xf32>
    %720 = vector.extract_strided_slice %676 {offsets = [0, 64], sizes = [4, 1024], strides = [1, 1]} : vector<4x1090xf32> to vector<4x1024xf32>
    %cst_243 = arith.constant 0.000000e+00 : f32
    %721 = vector.shape_cast %695 : vector<1x1024xi1> to vector<1x1024xi1>
    %722 = vector.broadcast %721 : vector<1x1024xi1> to vector<4x1024xi1>
    %723 = vector.broadcast %cst_243 : f32 to vector<4x1024xf32>
    %724 = arith.select %722, %720, %723 : vector<4x1024xi1>, vector<4x1024xf32>
    %725 = vector.extract_strided_slice %676 {offsets = [0, 65], sizes = [4, 1024], strides = [1, 1]} : vector<4x1090xf32> to vector<4x1024xf32>
    %726 = vector.extract_strided_slice %676 {offsets = [0, 66], sizes = [4, 1024], strides = [1, 1]} : vector<4x1090xf32> to vector<4x1024xf32>
    %cst_244 = arith.constant 0.000000e+00 : f32
    %727 = vector.shape_cast %697 : vector<1x1024xi1> to vector<1x1024xi1>
    %728 = vector.broadcast %727 : vector<1x1024xi1> to vector<4x1024xi1>
    %729 = vector.broadcast %cst_244 : f32 to vector<4x1024xf32>
    %730 = arith.select %728, %726, %729 : vector<4x1024xi1>, vector<4x1024xf32>
    %731 = tpu.concatenate %702, %703, %708, %713, %714, %719, %724, %725, %730 in 0 : vector<4x1024xf32>, vector<4x1024xf32>, vector<4x1024xf32>, vector<4x1024xf32>, vector<4x1024xf32>, vector<4x1024xf32>, vector<4x1024xf32>, vector<4x1024xf32>, vector<4x1024xf32> -> vector<36x1024xf32>
    %c0_245 = arith.constant 0 : index
    %c0_246 = arith.constant 0 : index
    %732 = vector.load %arg30[%c0_245, %c0_246] : memref<3x36xf32, #tpu.memory_space<vmem>>, vector<3x36xf32>
    %cst_247 = arith.constant dense<0.000000e+00> : vector<3x1024xf32>
    %733 = tpu.matmul %732, %731, %cst_247 {dimension_numbers = #tpu.dot_dimension_numbers<[1], [0], [0], [1], [0, 0, 1, 1], [], []>} : vector<3x36xf32>, vector<36x1024xf32>, vector<3x1024xf32> -> vector<3x1024xf32>
    %c0_248 = arith.constant 0 : index
    %c0_249 = arith.constant 0 : index
    %734 = vector.load %arg31[%c0_248, %c0_249] : memref<3x1xf32, #tpu.memory_space<vmem>>, vector<3x1xf32>
    %735 = vector.broadcast %734 : vector<3x1xf32> to vector<3x1024xf32>
    %736 = arith.addf %733, %735 : vector<3x1024xf32>
    %737 = math.tanh %736 : vector<3x1024xf32>
    %c0_250 = arith.constant 0 : index
    %c0_251 = arith.constant 0 : index
    %c0_252 = arith.constant 0 : index
    %738 = vector.load %arg32[%c0_250, %c0_251, %c0_252] : memref<1x3x1024xf32, #tpu.memory_space<vmem>>, vector<1x3x1024xf32>
    %739 = vector.shape_cast %738 : vector<1x3x1024xf32> to vector<3x1024xf32>
    %740 = vector.shape_cast %737 : vector<3x1024xf32> to vector<1x3x1024xf32>
    tpu.vector_store %arg32[%c0_250, %c0_251, %c0_252], %740 {strides = array<i32>} : memref<1x3x1024xf32, #tpu.memory_space<vmem>>, vector<1x3x1024xf32>,
    return
  }
  func.func @transform_0(%arg0: i32) -> (i32, i32) {
    %c0_i32 = arith.constant 0 : i32
    %c0_i32_0 = arith.constant 0 : i32
    %c0_i32_1 = arith.constant 0 : i32
    return %c0_i32, %c0_i32_0 : i32, i32
  }
  func.func @transform_1(%arg0: i32) -> (i32, i32) {
    %c0_i32 = arith.constant 0 : i32
    %c0_i32_0 = arith.constant 0 : i32
    %c0_i32_1 = arith.constant 0 : i32
    return %c0_i32, %c0_i32_0 : i32, i32
  }
  func.func @transform_2(%arg0: i32) -> (i32, i32, i32) {
    %c0_i32 = arith.constant 0 : i32
    %c0_i32_0 = arith.constant 0 : i32
    %c0_i32_1 = arith.constant 0 : i32
    %c0_i32_2 = arith.constant 0 : i32
    return %c0_i32, %c0_i32_0, %c0_i32_1 : i32, i32, i32
  }
  func.func @transform_3(%arg0: i32) -> (i32, i32) {
    %c0_i32 = arith.constant 0 : i32
    %c0_i32_0 = arith.constant 0 : i32
    %c0_i32_1 = arith.constant 0 : i32
    return %c0_i32, %c0_i32_0 : i32, i32
  }
  func.func @transform_4(%arg0: i32) -> (i32, i32) {
    %c0_i32 = arith.constant 0 : i32
    %c0_i32_0 = arith.constant 0 : i32
    %c0_i32_1 = arith.constant 0 : i32
    return %c0_i32, %c0_i32_0 : i32, i32
  }
  func.func @transform_5(%arg0: i32) -> (i32, i32) {
    %c0_i32 = arith.constant 0 : i32
    %c0_i32_0 = arith.constant 0 : i32
    %c0_i32_1 = arith.constant 0 : i32
    return %c0_i32, %c0_i32_0 : i32, i32
  }
  func.func @transform_6(%arg0: i32) -> (i32, i32) {
    %c0_i32 = arith.constant 0 : i32
    %c0_i32_0 = arith.constant 0 : i32
    %c0_i32_1 = arith.constant 0 : i32
    return %c0_i32, %c0_i32_0 : i32, i32
  }
  func.func @transform_7(%arg0: i32) -> (i32, i32) {
    %c0_i32 = arith.constant 0 : i32
    %c0_i32_0 = arith.constant 0 : i32
    %c0_i32_1 = arith.constant 0 : i32
    return %c0_i32, %c0_i32_0 : i32, i32
  }
  func.func @transform_8(%arg0: i32) -> (i32, i32) {
    %c0_i32 = arith.constant 0 : i32
    %c0_i32_0 = arith.constant 0 : i32
    %c0_i32_1 = arith.constant 0 : i32
    return %c0_i32, %c0_i32_0 : i32, i32
  }
  func.func @transform_9(%arg0: i32) -> (i32, i32) {
    %c0_i32 = arith.constant 0 : i32
    %c0_i32_0 = arith.constant 0 : i32
    %c0_i32_1 = arith.constant 0 : i32
    return %c0_i32, %c0_i32_0 : i32, i32
  }
  func.func @transform_10(%arg0: i32) -> (i32, i32) {
    %c0_i32 = arith.constant 0 : i32
    %c0_i32_0 = arith.constant 0 : i32
    %c0_i32_1 = arith.constant 0 : i32
    return %c0_i32, %c0_i32_0 : i32, i32
  }
  func.func @transform_11(%arg0: i32) -> (i32, i32) {
    %c0_i32 = arith.constant 0 : i32
    %c0_i32_0 = arith.constant 0 : i32
    %c0_i32_1 = arith.constant 0 : i32
    return %c0_i32, %c0_i32_0 : i32, i32
  }
  func.func @transform_12(%arg0: i32) -> (i32, i32) {
    %c0_i32 = arith.constant 0 : i32
    %c0_i32_0 = arith.constant 0 : i32
    %c0_i32_1 = arith.constant 0 : i32
    return %c0_i32, %c0_i32_0 : i32, i32
  }
  func.func @transform_13(%arg0: i32) -> (i32, i32) {
    %c0_i32 = arith.constant 0 : i32
    %c0_i32_0 = arith.constant 0 : i32
    %c0_i32_1 = arith.constant 0 : i32
    return %c0_i32, %c0_i32_0 : i32, i32
  }
  func.func @transform_14(%arg0: i32) -> (i32, i32) {
    %c0_i32 = arith.constant 0 : i32
    %c0_i32_0 = arith.constant 0 : i32
    %c0_i32_1 = arith.constant 0 : i32
    return %c0_i32, %c0_i32_0 : i32, i32
  }
  func.func @transform_15(%arg0: i32) -> (i32, i32) {
    %c0_i32 = arith.constant 0 : i32
    %c0_i32_0 = arith.constant 0 : i32
    %c0_i32_1 = arith.constant 0 : i32
    return %c0_i32, %c0_i32_0 : i32, i32
  }
  func.func @transform_16(%arg0: i32) -> (i32, i32) {
    %c0_i32 = arith.constant 0 : i32
    %c0_i32_0 = arith.constant 0 : i32
    %c0_i32_1 = arith.constant 0 : i32
    return %c0_i32, %c0_i32_0 : i32, i32
  }
  func.func @transform_17(%arg0: i32) -> (i32, i32) {
    %c0_i32 = arith.constant 0 : i32
    %c0_i32_0 = arith.constant 0 : i32
    %c0_i32_1 = arith.constant 0 : i32
    return %c0_i32, %c0_i32_0 : i32, i32
  }
  func.func @transform_18(%arg0: i32) -> (i32, i32) {
    %c0_i32 = arith.constant 0 : i32
    %c0_i32_0 = arith.constant 0 : i32
    %c0_i32_1 = arith.constant 0 : i32
    return %c0_i32, %c0_i32_0 : i32, i32
  }
  func.func @transform_19(%arg0: i32) -> (i32, i32) {
    %c0_i32 = arith.constant 0 : i32
    %c0_i32_0 = arith.constant 0 : i32
    %c0_i32_1 = arith.constant 0 : i32
    return %c0_i32, %c0_i32_0 : i32, i32
  }
  func.func @transform_20(%arg0: i32) -> (i32, i32) {
    %c0_i32 = arith.constant 0 : i32
    %c0_i32_0 = arith.constant 0 : i32
    %c0_i32_1 = arith.constant 0 : i32
    return %c0_i32, %c0_i32_0 : i32, i32
  }
  func.func @transform_21(%arg0: i32) -> (i32, i32) {
    %c0_i32 = arith.constant 0 : i32
    %c0_i32_0 = arith.constant 0 : i32
    %c0_i32_1 = arith.constant 0 : i32
    return %c0_i32, %c0_i32_0 : i32, i32
  }
  func.func @transform_22(%arg0: i32) -> (i32, i32) {
    %c0_i32 = arith.constant 0 : i32
    %c0_i32_0 = arith.constant 0 : i32
    %c0_i32_1 = arith.constant 0 : i32
    return %c0_i32, %c0_i32_0 : i32, i32
  }
  func.func @transform_23(%arg0: i32) -> (i32, i32) {
    %c0_i32 = arith.constant 0 : i32
    %c0_i32_0 = arith.constant 0 : i32
    %c0_i32_1 = arith.constant 0 : i32
    return %c0_i32, %c0_i32_0 : i32, i32
  }
  func.func @transform_24(%arg0: i32) -> (i32, i32) {
    %c0_i32 = arith.constant 0 : i32
    %c0_i32_0 = arith.constant 0 : i32
    %c0_i32_1 = arith.constant 0 : i32
    return %c0_i32, %c0_i32_0 : i32, i32
  }
  func.func @transform_25(%arg0: i32) -> (i32, i32) {
    %c0_i32 = arith.constant 0 : i32
    %c0_i32_0 = arith.constant 0 : i32
    %c0_i32_1 = arith.constant 0 : i32
    return %c0_i32, %c0_i32_0 : i32, i32
  }
  func.func @transform_26(%arg0: i32) -> (i32, i32) {
    %c0_i32 = arith.constant 0 : i32
    %c0_i32_0 = arith.constant 0 : i32
    %c0_i32_1 = arith.constant 0 : i32
    return %c0_i32, %c0_i32_0 : i32, i32
  }
  func.func @transform_27(%arg0: i32) -> (i32, i32) {
    %c0_i32 = arith.constant 0 : i32
    %c0_i32_0 = arith.constant 0 : i32
    %c0_i32_1 = arith.constant 0 : i32
    return %c0_i32, %c0_i32_0 : i32, i32
  }
  func.func @transform_28(%arg0: i32) -> (i32, i32) {
    %c0_i32 = arith.constant 0 : i32
    %c0_i32_0 = arith.constant 0 : i32
    %c0_i32_1 = arith.constant 0 : i32
    return %c0_i32, %c0_i32_0 : i32, i32
  }
  func.func @transform_29(%arg0: i32) -> (i32, i32) {
    %c0_i32 = arith.constant 0 : i32
    %c0_i32_0 = arith.constant 0 : i32
    %c0_i32_1 = arith.constant 0 : i32
    return %c0_i32, %c0_i32_0 : i32, i32
  }
  func.func @transform_30(%arg0: i32) -> (i32, i32) {
    %c0_i32 = arith.constant 0 : i32
    %c0_i32_0 = arith.constant 0 : i32
    %c0_i32_1 = arith.constant 0 : i32
    return %c0_i32, %c0_i32_0 : i32, i32
  }
  func.func @transform_31(%arg0: i32) -> (i32, i32, i32) {
    %c0_i32 = arith.constant 0 : i32
    %c0_i32_0 = arith.constant 0 : i32
    %c0_i32_1 = arith.constant 0 : i32
    return %arg0, %c0_i32, %c0_i32_0 : i32, i32, i32
  }
}

</mosaic_0001>

<llo_original>
// kernel: netg_forward.1
$region0: #{netg_forward.1}
  #allocation0 [shape = 'u32[]', space=smem, size = 0x4, offset = 0x4, fixed_abs, tag = 'smem constant byte address 0x4 - core index']
  #allocation1 [shape = 'u32[144,128]{1,0:T(1,128)}', space=vmem, size = 0x12000, scoped, tag = 'internal scratch']
  %s0 = inlined_call_operand.smem [shape: u32[32], index: -1, kind: input, shape index: {}]
  %s1 = sld [smem:[%s0]]
  %s2 = scalar_lea.smem %s0, 1
  %s3 = sld [smem:[%s2]]
  %s4 = scalar_lea.smem %s0, 2
  %s5 = sld [smem:[%s4]]
  %s6 = scalar_lea.smem %s0, 3
  %s7 = sld [smem:[%s6]]
  %s8 = scalar_lea.smem %s0, 4
  %s9 = sld [smem:[%s8]]
  %s10 = scalar_lea.smem %s0, 5
  %s11 = sld [smem:[%s10]]
  %s12 = scalar_lea.smem %s0, 6
  %s13 = sld [smem:[%s12]]
  %s14 = scalar_lea.smem %s0, 7
  %s15 = sld [smem:[%s14]]
  %s16 = scalar_lea.smem %s0, 8
  %s17 = sld [smem:[%s16]]
  %s18 = scalar_lea.smem %s0, 9
  %s19 = sld [smem:[%s18]]
  %s20 = scalar_lea.smem %s0, 10
  %s21 = sld [smem:[%s20]]
  %s22 = scalar_lea.smem %s0, 11
  %s23 = sld [smem:[%s22]]
  %s24 = scalar_lea.smem %s0, 12
  %s25 = sld [smem:[%s24]]
  %s26 = scalar_lea.smem %s0, 13
  %s27 = sld [smem:[%s26]]
  %s28 = scalar_lea.smem %s0, 14
  %s29 = sld [smem:[%s28]]
  %s30 = scalar_lea.smem %s0, 15
  %s31 = sld [smem:[%s30]]
  %s32 = scalar_lea.smem %s0, 16
  %s33 = sld [smem:[%s32]]
  %s34 = scalar_lea.smem %s0, 17
  %s35 = sld [smem:[%s34]]
  %s36 = scalar_lea.smem %s0, 18
  %s37 = sld [smem:[%s36]]
  %s38 = scalar_lea.smem %s0, 19
  %s39 = sld [smem:[%s38]]
  %s40 = scalar_lea.smem %s0, 20
  %s41 = sld [smem:[%s40]]
  %s42 = scalar_lea.smem %s0, 21
  %s43 = sld [smem:[%s42]]
  %s44 = scalar_lea.smem %s0, 22
  %s45 = sld [smem:[%s44]]
  %s46 = scalar_lea.smem %s0, 23
  %s47 = sld [smem:[%s46]]
  %s48 = scalar_lea.smem %s0, 24
  %s49 = sld [smem:[%s48]]
  %s50 = scalar_lea.smem %s0, 25
  %s51 = sld [smem:[%s50]]
  %s52 = scalar_lea.smem %s0, 26
  %s53 = sld [smem:[%s52]]
  %s54 = scalar_lea.smem %s0, 27
  %s55 = sld [smem:[%s54]]
  %s56 = scalar_lea.smem %s0, 28
  %s57 = sld [smem:[%s56]]
  %s58 = scalar_lea.smem %s0, 29
  %s59 = sld [smem:[%s58]]
  %s60 = scalar_lea.smem %s0, 30
  %s61 = sld [smem:[%s60]]
  %s62 = scalar_lea.smem %s0, 31
  %s63 = sld [smem:[%s62]]
  %s64 = sld [smem:[#allocation0]]
  $region205: #{netg_forward.1} parent=0
    _
  %s66 = ssub.s32 1, %s64
  %s67 = scalar_select 0, %s66, %s64
  $region1: #{netg_forward.1} parent=0
    #allocation2 [shape = 'u8[1024]{0}', space=smem, size = 0x400, scoped, tag = 'input window, operand 0, single buffered']
    #allocation3 [shape = 's32[2]{0}', space=sflag, size = 0x8, scoped, tag = 'scoped memory for netg_forward.1']
    #allocation4 [shape = 's32[2]{0}', space=sflag, size = 0x8, scoped, tag = 'scoped memory for netg_forward.1']
    #allocation5 [shape = 'u8[1024]{0}', space=smem, size = 0x400, scoped, tag = 'input window, operand 1, single buffered']
    #allocation6 [shape = 's32[1]{0}', space=sflag, size = 0x4, scoped, tag = 'scoped memory for netg_forward.1']
    #allocation7 [shape = 'u8[540672]{0}', space=vmem, size = 0x84000, scoped, tag = 'input window, operand 6, single buffered']
    #allocation8 [shape = 'u8[8192]{0}', space=vmem, size = 0x2000, scoped, tag = 'input window, operand 8, single buffered']
    #allocation9 [shape = 's32[1]{0}', space=sflag, size = 0x4, scoped, tag = 'scoped memory for netg_forward.1']
    #allocation10 [shape = 'u8[24576]{0}', space=vmem, size = 0x6000, scoped, tag = 'input window, operand 9, single buffered']
    #allocation11 [shape = 'u8[8192]{0}', space=vmem, size = 0x2000, scoped, tag = 'input window, operand 13, single buffered']
    #allocation12 [shape = 's32[1]{0}', space=sflag, size = 0x4, scoped, tag = 'scoped memory for netg_forward.1']
    #allocation13 [shape = 'u8[65536]{0}', space=vmem, size = 0x10000, scoped, tag = 'input window, operand 15, single buffered']
    #allocation14 [shape = 'u8[8192]{0}', space=vmem, size = 0x2000, scoped, tag = 'input window, operand 16, single buffered']
    #allocation15 [shape = 's32[1]{0}', space=sflag, size = 0x4, scoped, tag = 'scoped memory for netg_forward.1']
    #allocation16 [shape = 'u8[4096]{0}', space=vmem, size = 0x1000, scoped, tag = 'input window, operand 20, single buffered']
    #allocation17 [shape = 'u8[2048]{0}', space=vmem, size = 0x800, scoped, tag = 'input window, operand 23, single buffered']
    #allocation18 [shape = 's32[1]{0}', space=sflag, size = 0x4, scoped, tag = 'scoped memory for netg_forward.1']
    #allocation19 [shape = 'u8[2048]{0}', space=vmem, size = 0x800, scoped, tag = 'input window, operand 25, single buffered']
    #allocation20 [shape = 'u8[2048]{0}', space=vmem, size = 0x800, scoped, tag = 'input window, operand 27, single buffered']
    #allocation21 [shape = 's32[1]{0}', space=sflag, size = 0x4, scoped, tag = 'scoped memory for netg_forward.1']
    %68 = vsyncpa [#allocation4], 0
    %69 = vsyncpa [#allocation6], 0
    %70 = vsyncpa [#allocation3], 0
    %71 = vsyncpa [#allocation9], 0
    %72 = vsyncpa [#allocation12], 0
    %73 = vsyncpa [#allocation15], 0
    %74 = vsyncpa [#allocation18], 0
    %75 = vsyncpa [#allocation21], 0
    loop: start=0, step=1, limit=4
    $region2: #{netg_forward.1} parent=1 // loop_pre_header
      _
    $region3: #{netg_forward.1} parent=1 // loop_header
      %s77 = sphi 0, %s81
      %p78 = scmp.ge.s32.totalorder %s77, 4
      %s85 = sphi 0, %s85
      %s87 = sphi 0, %s85
      %s88 = sphi 0, %s87
      %s102 = sphi 0, %s88
      %s106 = sphi 0, %s106
      %s108 = sphi 0, %s106
      %s109 = sphi 0, %s108
      %s123 = sphi 0, %s109
      %s127 = sphi 0, %s127
      %s129 = sphi 0, %s127
      %s130 = sphi 0, %s129
      %s144 = sphi 0, %s130
      %s148 = sphi 0, %s148
      %s150 = sphi 0, %s148
      %s151 = sphi 0, %s150
      %s165 = sphi 0, %s151
      %s169 = sphi 0, %s169
      %s171 = sphi 0, %s169
      %s172 = sphi 0, %s171
      %s186 = sphi 0, %s172
      %s190 = sphi 0, %s190
      %s192 = sphi 0, %s190
      %s193 = sphi 0, %s192
      %s207 = sphi 0, %s193
      %s211 = sphi 0, %s211
      %s213 = sphi 0, %s211
      %s214 = sphi 0, %s213
      %s228 = sphi 0, %s214
      %s232 = sphi 0, %s232
      %s234 = sphi 0, %s232
      %s235 = sphi 0, %s234
      %s249 = sphi 0, %s235
      %s253 = sphi 0, %s253
      %s255 = sphi 0, %s253
      %s256 = sphi 0, %s255
      %s270 = sphi 0, %s256
      %s274 = sphi 0, %s274
      %s276 = sphi 0, %s274
      %s277 = sphi 0, %s276
      %s291 = sphi 0, %s277
      %s295 = sphi 0, %s295
      %s297 = sphi 0, %s295
      %s298 = sphi 0, %s297
      %s312 = sphi 0, %s298
      %s316 = sphi 0, %s316
      %s318 = sphi 0, %s316
      %s319 = sphi 0, %s318
      %s333 = sphi 0, %s319
      %s337 = sphi 0, %s337
      %s339 = sphi 0, %s337
      %s340 = sphi 0, %s339
      %s354 = sphi 0, %s340
      %s358 = sphi 0, %s358
      %s360 = sphi 0, %s358
      %s361 = sphi 0, %s360
      %s375 = sphi 0, %s361
      %s379 = sphi 0, %s379
      %s381 = sphi 0, %s379
      %s382 = sphi 0, %s381
      %s396 = sphi 0, %s382
      %s400 = sphi 0, %s400
      %s402 = sphi 0, %s400
      %s403 = sphi 0, %s402
      %s417 = sphi 0, %s403
      %s421 = sphi 0, %s421
      %s423 = sphi 0, %s421
      %s424 = sphi 0, %s423
      %s438 = sphi 0, %s424
      %s442 = sphi 0, %s442
      %s444 = sphi 0, %s442
      %s445 = sphi 0, %s444
      %s459 = sphi 0, %s445
      %s463 = sphi 0, %s463
      %s465 = sphi 0, %s463
      %s466 = sphi 0, %s465
      %s480 = sphi 0, %s466
      %s484 = sphi 0, %s484
      %s486 = sphi 0, %s484
      %s487 = sphi 0, %s486
      %s501 = sphi 0, %s487
      %s505 = sphi 0, %s505
      %s507 = sphi 0, %s505
      %s508 = sphi 0, %s507
      %s522 = sphi 0, %s508
      %s526 = sphi 0, %s526
      %s528 = sphi 0, %s526
      %s529 = sphi 0, %s528
      %s543 = sphi 0, %s529
      %s547 = sphi 0, %s547
      %s549 = sphi 0, %s547
      %s550 = sphi 0, %s549
      %s564 = sphi 0, %s550
      %s568 = sphi 0, %s568
      %s570 = sphi 0, %s568
      %s571 = sphi 0, %s570
      %s585 = sphi 0, %s571
      %s589 = sphi 0, %s589
      %s591 = sphi 0, %s589
      %s592 = sphi 0, %s591
      %s606 = sphi 0, %s592
      %s610 = sphi 0, %s610
      %s612 = sphi 0, %s610
      %s613 = sphi 0, %s612
      %s627 = sphi 0, %s613
      %s631 = sphi 0, %s631
      %s633 = sphi 0, %s631
      %s634 = sphi 0, %s633
      %s648 = sphi 0, %s634
      %s652 = sphi 0, %s652
      %s654 = sphi 0, %s652
      %s655 = sphi 0, %s654
      %s669 = sphi 0, %s655
      %s673 = sphi 0, %s673
      %s675 = sphi 0, %s673
      %s676 = sphi 0, %s675
      %s690 = sphi 0, %s676
      %s694 = sphi 0, %s694
      %s696 = sphi 0, %s694
      %s697 = sphi 0, %s696
      %s711 = sphi 0, %s697
      %s715 = sphi 0, %s715
      %s717 = sphi 0, %s715
      %s718 = sphi 0, %s717
      %s732 = sphi 0, %s718
      %s738 = sphi 0, %s740
      %s741 = sphi 0, %s738
      %s742 = sphi 0, %s741
      %s758 = sphi 0, %s742
    $region4: #{netg_forward.1} parent=1 // loop_header_branch
      %80 = sbr.rel (%p78) target = $region8
    $region5: #{netg_forward.1} parent=1 // loop_body
      %s82 = ssub.s32 %s77, 1
      %s83 = ssub.s32 %s77, 2
      %s84 = sadd.s32 %s77, 1
      %s86 = sadd.s32 %s85, 1
      %p89 = scmp.eq.s32.totalorder %s77, 1
      %p90 = scmp.ne.s32.totalorder %s85, %s87
      %p91 = scmp.eq.s32.totalorder %s77, 0
      %p92 = por %p90, %p91
      %p93 = scmp.ne.s32.totalorder %s85, %s87
      %p94 = scmp.eq.s32.totalorder %s82, 1
      %p95 = por %p93, %p94
      %p96 = scmp.ne.s32.totalorder %s87, %s88
      %p97 = scmp.eq.s32.totalorder %s82, 0
      %p98 = por %p96, %p97
      %p99 = scmp.ne.s32.totalorder %s87, %s88
      %p100 = scmp.eq.s32.totalorder %s83, 1
      %p101 = por %p99, %p100
      %p103 = scmp.ne.s32.totalorder %s88, %s102
      %p104 = scmp.eq.s32.totalorder %s83, 0
      %p105 = por %p103, %p104
      %s107 = sadd.s32 %s106, 1
      %p110 = scmp.eq.s32.totalorder %s77, 1
      %p111 = scmp.ne.s32.totalorder %s106, %s108
      %p112 = scmp.eq.s32.totalorder %s77, 0
      %p113 = por %p111, %p112
      %p114 = scmp.ne.s32.totalorder %s106, %s108
      %p115 = scmp.eq.s32.totalorder %s82, 1
      %p116 = por %p114, %p115
      %p117 = scmp.ne.s32.totalorder %s108, %s109
      %p118 = scmp.eq.s32.totalorder %s82, 0
      %p119 = por %p117, %p118
      %p120 = scmp.ne.s32.totalorder %s108, %s109
      %p121 = scmp.eq.s32.totalorder %s83, 1
      %p122 = por %p120, %p121
      %p124 = scmp.ne.s32.totalorder %s109, %s123
      %p125 = scmp.eq.s32.totalorder %s83, 0
      %p126 = por %p124, %p125
      %s128 = sadd.s32 %s127, 1
      %p131 = scmp.eq.s32.totalorder %s77, 1
      %p132 = scmp.ne.s32.totalorder %s127, %s129
      %p133 = scmp.eq.s32.totalorder %s77, 0
      %p134 = por %p132, %p133
      %p135 = scmp.ne.s32.totalorder %s127, %s129
      %p136 = scmp.eq.s32.totalorder %s82, 1
      %p137 = por %p135, %p136
      %p138 = scmp.ne.s32.totalorder %s129, %s130
      %p139 = scmp.eq.s32.totalorder %s82, 0
      %p140 = por %p138, %p139
      %p141 = scmp.ne.s32.totalorder %s129, %s130
      %p142 = scmp.eq.s32.totalorder %s83, 1
      %p143 = por %p141, %p142
      %p145 = scmp.ne.s32.totalorder %s130, %s144
      %p146 = scmp.eq.s32.totalorder %s83, 0
      %p147 = por %p145, %p146
      %s149 = sadd.s32 %s148, 1
      %p152 = scmp.eq.s32.totalorder %s77, 1
      %p153 = scmp.ne.s32.totalorder %s148, %s150
      %p154 = scmp.eq.s32.totalorder %s77, 0
      %p155 = por %p153, %p154
      %p156 = scmp.ne.s32.totalorder %s148, %s150
      %p157 = scmp.eq.s32.totalorder %s82, 1
      %p158 = por %p156, %p157
      %p159 = scmp.ne.s32.totalorder %s150, %s151
      %p160 = scmp.eq.s32.totalorder %s82, 0
      %p161 = por %p159, %p160
      %p162 = scmp.ne.s32.totalorder %s150, %s151
      %p163 = scmp.eq.s32.totalorder %s83, 1
      %p164 = por %p162, %p163
      %p166 = scmp.ne.s32.totalorder %s151, %s165
      %p167 = scmp.eq.s32.totalorder %s83, 0
      %p168 = por %p166, %p167
      %s170 = sadd.s32 %s169, 1
      %p173 = scmp.eq.s32.totalorder %s77, 1
      %p174 = scmp.ne.s32.totalorder %s169, %s171
      %p175 = scmp.eq.s32.totalorder %s77, 0
      %p176 = por %p174, %p175
      %p177 = scmp.ne.s32.totalorder %s169, %s171
      %p178 = scmp.eq.s32.totalorder %s82, 1
      %p179 = por %p177, %p178
      %p180 = scmp.ne.s32.totalorder %s171, %s172
      %p181 = scmp.eq.s32.totalorder %s82, 0
      %p182 = por %p180, %p181
      %p183 = scmp.ne.s32.totalorder %s171, %s172
      %p184 = scmp.eq.s32.totalorder %s83, 1
      %p185 = por %p183, %p184
      %p187 = scmp.ne.s32.totalorder %s172, %s186
      %p188 = scmp.eq.s32.totalorder %s83, 0
      %p189 = por %p187, %p188
      %s191 = sadd.s32 %s190, 1
      %p194 = scmp.eq.s32.totalorder %s77, 1
      %p195 = scmp.ne.s32.totalorder %s190, %s192
      %p196 = scmp.eq.s32.totalorder %s77, 0
      %p197 = por %p195, %p196
      %p198 = scmp.ne.s32.totalorder %s190, %s192
      %p199 = scmp.eq.s32.totalorder %s82, 1
      %p200 = por %p198, %p199
      %p201 = scmp.ne.s32.totalorder %s192, %s193
      %p202 = scmp.eq.s32.totalorder %s82, 0
      %p203 = por %p201, %p202
      %p204 = scmp.ne.s32.totalorder %s192, %s193
      %p205 = scmp.eq.s32.totalorder %s83, 1
      %p206 = por %p204, %p205
      %p208 = scmp.ne.s32.totalorder %s193, %s207
      %p209 = scmp.eq.s32.totalorder %s83, 0
      %p210 = por %p208, %p209
      %s212 = sadd.s32 %s211, 1
      %p215 = scmp.eq.s32.totalorder %s77, 1
      %p216 = scmp.ne.s32.totalorder %s211, %s213
      %p217 = scmp.eq.s32.totalorder %s77, 0
      %p218 = por %p216, %p217
      %p219 = scmp.ne.s32.totalorder %s211, %s213
      %p220 = scmp.eq.s32.totalorder %s82, 1
      %p221 = por %p219, %p220
      %p222 = scmp.ne.s32.totalorder %s213, %s214
      %p223 = scmp.eq.s32.totalorder %s82, 0
      %p224 = por %p222, %p223
      %p225 = scmp.ne.s32.totalorder %s213, %s214
      %p226 = scmp.eq.s32.totalorder %s83, 1
      %p227 = por %p225, %p226
      %p229 = scmp.ne.s32.totalorder %s214, %s228
      %p230 = scmp.eq.s32.totalorder %s83, 0
      %p231 = por %p229, %p230
      %s233 = sadd.s32 %s232, 1
      %p236 = scmp.eq.s32.totalorder %s77, 1
      %p237 = scmp.ne.s32.totalorder %s232, %s234
      %p238 = scmp.eq.s32.totalorder %s77, 0
      %p239 = por %p237, %p238
      %p240 = scmp.ne.s32.totalorder %s232, %s234
      %p241 = scmp.eq.s32.totalorder %s82, 1
      %p242 = por %p240, %p241
      %p243 = scmp.ne.s32.totalorder %s234, %s235
      %p244 = scmp.eq.s32.totalorder %s82, 0
      %p245 = por %p243, %p244
      %p246 = scmp.ne.s32.totalorder %s234, %s235
      %p247 = scmp.eq.s32.totalorder %s83, 1
      %p248 = por %p246, %p247
      %p250 = scmp.ne.s32.totalorder %s235, %s249
      %p251 = scmp.eq.s32.totalorder %s83, 0
      %p252 = por %p250, %p251
      %s254 = sadd.s32 %s253, 1
      %p257 = scmp.eq.s32.totalorder %s77, 1
      %p258 = scmp.ne.s32.totalorder %s253, %s255
      %p259 = scmp.eq.s32.totalorder %s77, 0
      %p260 = por %p258, %p259
      %p261 = scmp.ne.s32.totalorder %s253, %s255
      %p262 = scmp.eq.s32.totalorder %s82, 1
      %p263 = por %p261, %p262
      %p264 = scmp.ne.s32.totalorder %s255, %s256
      %p265 = scmp.eq.s32.totalorder %s82, 0
      %p266 = por %p264, %p265
      %p267 = scmp.ne.s32.totalorder %s255, %s256
      %p268 = scmp.eq.s32.totalorder %s83, 1
      %p269 = por %p267, %p268
      %p271 = scmp.ne.s32.totalorder %s256, %s270
      %p272 = scmp.eq.s32.totalorder %s83, 0
      %p273 = por %p271, %p272
      %s275 = sadd.s32 %s274, 1
      %p278 = scmp.eq.s32.totalorder %s77, 1
      %p279 = scmp.ne.s32.totalorder %s274, %s276
      %p280 = scmp.eq.s32.totalorder %s77, 0
      %p281 = por %p279, %p280
      %p282 = scmp.ne.s32.totalorder %s274, %s276
      %p283 = scmp.eq.s32.totalorder %s82, 1
      %p284 = por %p282, %p283
      %p285 = scmp.ne.s32.totalorder %s276, %s277
      %p286 = scmp.eq.s32.totalorder %s82, 0
      %p287 = por %p285, %p286
      %p288 = scmp.ne.s32.totalorder %s276, %s277
      %p289 = scmp.eq.s32.totalorder %s83, 1
      %p290 = por %p288, %p289
      %p292 = scmp.ne.s32.totalorder %s277, %s291
      %p293 = scmp.eq.s32.totalorder %s83, 0
      %p294 = por %p292, %p293
      %s296 = sadd.s32 %s295, 1
      %p299 = scmp.eq.s32.totalorder %s77, 1
      %p300 = scmp.ne.s32.totalorder %s295, %s297
      %p301 = scmp.eq.s32.totalorder %s77, 0
      %p302 = por %p300, %p301
      %p303 = scmp.ne.s32.totalorder %s295, %s297
      %p304 = scmp.eq.s32.totalorder %s82, 1
      %p305 = por %p303, %p304
      %p306 = scmp.ne.s32.totalorder %s297, %s298
      %p307 = scmp.eq.s32.totalorder %s82, 0
      %p308 = por %p306, %p307
      %p309 = scmp.ne.s32.totalorder %s297, %s298
      %p310 = scmp.eq.s32.totalorder %s83, 1
      %p311 = por %p309, %p310
      %p313 = scmp.ne.s32.totalorder %s298, %s312
      %p314 = scmp.eq.s32.totalorder %s83, 0
      %p315 = por %p313, %p314
      %s317 = sadd.s32 %s316, 1
      %p320 = scmp.eq.s32.totalorder %s77, 1
      %p321 = scmp.ne.s32.totalorder %s316, %s318
      %p322 = scmp.eq.s32.totalorder %s77, 0
      %p323 = por %p321, %p322
      %p324 = scmp.ne.s32.totalorder %s316, %s318
      %p325 = scmp.eq.s32.totalorder %s82, 1
      %p326 = por %p324, %p325
      %p327 = scmp.ne.s32.totalorder %s318, %s319
      %p328 = scmp.eq.s32.totalorder %s82, 0
      %p329 = por %p327, %p328
      %p330 = scmp.ne.s32.totalorder %s318, %s319
      %p331 = scmp.eq.s32.totalorder %s83, 1
      %p332 = por %p330, %p331
      %p334 = scmp.ne.s32.totalorder %s319, %s333
      %p335 = scmp.eq.s32.totalorder %s83, 0
      %p336 = por %p334, %p335
      %s338 = sadd.s32 %s337, 1
      %p341 = scmp.eq.s32.totalorder %s77, 1
      %p342 = scmp.ne.s32.totalorder %s337, %s339
      %p343 = scmp.eq.s32.totalorder %s77, 0
      %p344 = por %p342, %p343
      %p345 = scmp.ne.s32.totalorder %s337, %s339
      %p346 = scmp.eq.s32.totalorder %s82, 1
      %p347 = por %p345, %p346
      %p348 = scmp.ne.s32.totalorder %s339, %s340
      %p349 = scmp.eq.s32.totalorder %s82, 0
      %p350 = por %p348, %p349
      %p351 = scmp.ne.s32.totalorder %s339, %s340
      %p352 = scmp.eq.s32.totalorder %s83, 1
      %p353 = por %p351, %p352
      %p355 = scmp.ne.s32.totalorder %s340, %s354
      %p356 = scmp.eq.s32.totalorder %s83, 0
      %p357 = por %p355, %p356
      %s359 = sadd.s32 %s358, 1
      %p362 = scmp.eq.s32.totalorder %s77, 1
      %p363 = scmp.ne.s32.totalorder %s358, %s360
      %p364 = scmp.eq.s32.totalorder %s77, 0
      %p365 = por %p363, %p364
      %p366 = scmp.ne.s32.totalorder %s358, %s360
      %p367 = scmp.eq.s32.totalorder %s82, 1
      %p368 = por %p366, %p367
      %p369 = scmp.ne.s32.totalorder %s360, %s361
      %p370 = scmp.eq.s32.totalorder %s82, 0
      %p371 = por %p369, %p370
      %p372 = scmp.ne.s32.totalorder %s360, %s361
      %p373 = scmp.eq.s32.totalorder %s83, 1
      %p374 = por %p372, %p373
      %p376 = scmp.ne.s32.totalorder %s361, %s375
      %p377 = scmp.eq.s32.totalorder %s83, 0
      %p378 = por %p376, %p377
      %s380 = sadd.s32 %s379, 1
      %p383 = scmp.eq.s32.totalorder %s77, 1
      %p384 = scmp.ne.s32.totalorder %s379, %s381
      %p385 = scmp.eq.s32.totalorder %s77, 0
      %p386 = por %p384, %p385
      %p387 = scmp.ne.s32.totalorder %s379, %s381
      %p388 = scmp.eq.s32.totalorder %s82, 1
      %p389 = por %p387, %p388
      %p390 = scmp.ne.s32.totalorder %s381, %s382
      %p391 = scmp.eq.s32.totalorder %s82, 0
      %p392 = por %p390, %p391
      %p393 = scmp.ne.s32.totalorder %s381, %s382
      %p394 = scmp.eq.s32.totalorder %s83, 1
      %p395 = por %p393, %p394
      %p397 = scmp.ne.s32.totalorder %s382, %s396
      %p398 = scmp.eq.s32.totalorder %s83, 0
      %p399 = por %p397, %p398
      %s401 = sadd.s32 %s400, 1
      %p404 = scmp.eq.s32.totalorder %s77, 1
      %p405 = scmp.ne.s32.totalorder %s400, %s402
      %p406 = scmp.eq.s32.totalorder %s77, 0
      %p407 = por %p405, %p406
      %p408 = scmp.ne.s32.totalorder %s400, %s402
      %p409 = scmp.eq.s32.totalorder %s82, 1
      %p410 = por %p408, %p409
      %p411 = scmp.ne.s32.totalorder %s402, %s403
      %p412 = scmp.eq.s32.totalorder %s82, 0
      %p413 = por %p411, %p412
      %p414 = scmp.ne.s32.totalorder %s402, %s403
      %p415 = scmp.eq.s32.totalorder %s83, 1
      %p416 = por %p414, %p415
      %p418 = scmp.ne.s32.totalorder %s403, %s417
      %p419 = scmp.eq.s32.totalorder %s83, 0
      %p420 = por %p418, %p419
      %s422 = sadd.s32 %s421, 1
      %p425 = scmp.eq.s32.totalorder %s77, 1
      %p426 = scmp.ne.s32.totalorder %s421, %s423
      %p427 = scmp.eq.s32.totalorder %s77, 0
      %p428 = por %p426, %p427
      %p429 = scmp.ne.s32.totalorder %s421, %s423
      %p430 = scmp.eq.s32.totalorder %s82, 1
      %p431 = por %p429, %p430
      %p432 = scmp.ne.s32.totalorder %s423, %s424
      %p433 = scmp.eq.s32.totalorder %s82, 0
      %p434 = por %p432, %p433
      %p435 = scmp.ne.s32.totalorder %s423, %s424
      %p436 = scmp.eq.s32.totalorder %s83, 1
      %p437 = por %p435, %p436
      %p439 = scmp.ne.s32.totalorder %s424, %s438
      %p440 = scmp.eq.s32.totalorder %s83, 0
      %p441 = por %p439, %p440
      %s443 = sadd.s32 %s442, 1
      %p446 = scmp.eq.s32.totalorder %s77, 1
      %p447 = scmp.ne.s32.totalorder %s442, %s444
      %p448 = scmp.eq.s32.totalorder %s77, 0
      %p449 = por %p447, %p448
      %p450 = scmp.ne.s32.totalorder %s442, %s444
      %p451 = scmp.eq.s32.totalorder %s82, 1
      %p452 = por %p450, %p451
      %p453 = scmp.ne.s32.totalorder %s444, %s445
      %p454 = scmp.eq.s32.totalorder %s82, 0
      %p455 = por %p453, %p454
      %p456 = scmp.ne.s32.totalorder %s444, %s445
      %p457 = scmp.eq.s32.totalorder %s83, 1
      %p458 = por %p456, %p457
      %p460 = scmp.ne.s32.totalorder %s445, %s459
      %p461 = scmp.eq.s32.totalorder %s83, 0
      %p462 = por %p460, %p461
      %s464 = sadd.s32 %s463, 1
      %p467 = scmp.eq.s32.totalorder %s77, 1
      %p468 = scmp.ne.s32.totalorder %s463, %s465
      %p469 = scmp.eq.s32.totalorder %s77, 0
      %p470 = por %p468, %p469
      %p471 = scmp.ne.s32.totalorder %s463, %s465
      %p472 = scmp.eq.s32.totalorder %s82, 1
      %p473 = por %p471, %p472
      %p474 = scmp.ne.s32.totalorder %s465, %s466
      %p475 = scmp.eq.s32.totalorder %s82, 0
      %p476 = por %p474, %p475
      %p477 = scmp.ne.s32.totalorder %s465, %s466
      %p478 = scmp.eq.s32.totalorder %s83, 1
      %p479 = por %p477, %p478
      %p481 = scmp.ne.s32.totalorder %s466, %s480
      %p482 = scmp.eq.s32.totalorder %s83, 0
      %p483 = por %p481, %p482
      %s485 = sadd.s32 %s484, 1
      %p488 = scmp.eq.s32.totalorder %s77, 1
      %p489 = scmp.ne.s32.totalorder %s484, %s486
      %p490 = scmp.eq.s32.totalorder %s77, 0
      %p491 = por %p489, %p490
      %p492 = scmp.ne.s32.totalorder %s484, %s486
      %p493 = scmp.eq.s32.totalorder %s82, 1
      %p494 = por %p492, %p493
      %p495 = scmp.ne.s32.totalorder %s486, %s487
      %p496 = scmp.eq.s32.totalorder %s82, 0
      %p497 = por %p495, %p496
      %p498 = scmp.ne.s32.totalorder %s486, %s487
      %p499 = scmp.eq.s32.totalorder %s83, 1
      %p500 = por %p498, %p499
      %p502 = scmp.ne.s32.totalorder %s487, %s501
      %p503 = scmp.eq.s32.totalorder %s83, 0
      %p504 = por %p502, %p503
      %s506 = sadd.s32 %s505, 1
      %p509 = scmp.eq.s32.totalorder %s77, 1
      %p510 = scmp.ne.s32.totalorder %s505, %s507
      %p511 = scmp.eq.s32.totalorder %s77, 0
      %p512 = por %p510, %p511
      %p513 = scmp.ne.s32.totalorder %s505, %s507
      %p514 = scmp.eq.s32.totalorder %s82, 1
      %p515 = por %p513, %p514
      %p516 = scmp.ne.s32.totalorder %s507, %s508
      %p517 = scmp.eq.s32.totalorder %s82, 0
      %p518 = por %p516, %p517
      %p519 = scmp.ne.s32.totalorder %s507, %s508
      %p520 = scmp.eq.s32.totalorder %s83, 1
      %p521 = por %p519, %p520
      %p523 = scmp.ne.s32.totalorder %s508, %s522
      %p524 = scmp.eq.s32.totalorder %s83, 0
      %p525 = por %p523, %p524
      %s527 = sadd.s32 %s526, 1
      %p530 = scmp.eq.s32.totalorder %s77, 1
      %p531 = scmp.ne.s32.totalorder %s526, %s528
      %p532 = scmp.eq.s32.totalorder %s77, 0
      %p533 = por %p531, %p532
      %p534 = scmp.ne.s32.totalorder %s526, %s528
      %p535 = scmp.eq.s32.totalorder %s82, 1
      %p536 = por %p534, %p535
      %p537 = scmp.ne.s32.totalorder %s528, %s529
      %p538 = scmp.eq.s32.totalorder %s82, 0
      %p539 = por %p537, %p538
      %p540 = scmp.ne.s32.totalorder %s528, %s529
      %p541 = scmp.eq.s32.totalorder %s83, 1
      %p542 = por %p540, %p541
      %p544 = scmp.ne.s32.totalorder %s529, %s543
      %p545 = scmp.eq.s32.totalorder %s83, 0
      %p546 = por %p544, %p545
      %s548 = sadd.s32 %s547, 1
      %p551 = scmp.eq.s32.totalorder %s77, 1
      %p552 = scmp.ne.s32.totalorder %s547, %s549
      %p553 = scmp.eq.s32.totalorder %s77, 0
      %p554 = por %p552, %p553
      %p555 = scmp.ne.s32.totalorder %s547, %s549
      %p556 = scmp.eq.s32.totalorder %s82, 1
      %p557 = por %p555, %p556
      %p558 = scmp.ne.s32.totalorder %s549, %s550
      %p559 = scmp.eq.s32.totalorder %s82, 0
      %p560 = por %p558, %p559
      %p561 = scmp.ne.s32.totalorder %s549, %s550
      %p562 = scmp.eq.s32.totalorder %s83, 1
      %p563 = por %p561, %p562
      %p565 = scmp.ne.s32.totalorder %s550, %s564
      %p566 = scmp.eq.s32.totalorder %s83, 0
      %p567 = por %p565, %p566
      %s569 = sadd.s32 %s568, 1
      %p572 = scmp.eq.s32.totalorder %s77, 1
      %p573 = scmp.ne.s32.totalorder %s568, %s570
      %p574 = scmp.eq.s32.totalorder %s77, 0
      %p575 = por %p573, %p574
      %p576 = scmp.ne.s32.totalorder %s568, %s570
      %p577 = scmp.eq.s32.totalorder %s82, 1
      %p578 = por %p576, %p577
      %p579 = scmp.ne.s32.totalorder %s570, %s571
      %p580 = scmp.eq.s32.totalorder %s82, 0
      %p581 = por %p579, %p580
      %p582 = scmp.ne.s32.totalorder %s570, %s571
      %p583 = scmp.eq.s32.totalorder %s83, 1
      %p584 = por %p582, %p583
      %p586 = scmp.ne.s32.totalorder %s571, %s585
      %p587 = scmp.eq.s32.totalorder %s83, 0
      %p588 = por %p586, %p587
      %s590 = sadd.s32 %s589, 1
      %p593 = scmp.eq.s32.totalorder %s77, 1
      %p594 = scmp.ne.s32.totalorder %s589, %s591
      %p595 = scmp.eq.s32.totalorder %s77, 0
      %p596 = por %p594, %p595
      %p597 = scmp.ne.s32.totalorder %s589, %s591
      %p598 = scmp.eq.s32.totalorder %s82, 1
      %p599 = por %p597, %p598
      %p600 = scmp.ne.s32.totalorder %s591, %s592
      %p601 = scmp.eq.s32.totalorder %s82, 0
      %p602 = por %p600, %p601
      %p603 = scmp.ne.s32.totalorder %s591, %s592
      %p604 = scmp.eq.s32.totalorder %s83, 1
      %p605 = por %p603, %p604
      %p607 = scmp.ne.s32.totalorder %s592, %s606
      %p608 = scmp.eq.s32.totalorder %s83, 0
      %p609 = por %p607, %p608
      %s611 = sadd.s32 %s610, 1
      %p614 = scmp.eq.s32.totalorder %s77, 1
      %p615 = scmp.ne.s32.totalorder %s610, %s612
      %p616 = scmp.eq.s32.totalorder %s77, 0
      %p617 = por %p615, %p616
      %p618 = scmp.ne.s32.totalorder %s610, %s612
      %p619 = scmp.eq.s32.totalorder %s82, 1
      %p620 = por %p618, %p619
      %p621 = scmp.ne.s32.totalorder %s612, %s613
      %p622 = scmp.eq.s32.totalorder %s82, 0
      %p623 = por %p621, %p622
      %p624 = scmp.ne.s32.totalorder %s612, %s613
      %p625 = scmp.eq.s32.totalorder %s83, 1
      %p626 = por %p624, %p625
      %p628 = scmp.ne.s32.totalorder %s613, %s627
      %p629 = scmp.eq.s32.totalorder %s83, 0
      %p630 = por %p628, %p629
      %s632 = sadd.s32 %s631, 1
      %p635 = scmp.eq.s32.totalorder %s77, 1
      %p636 = scmp.ne.s32.totalorder %s631, %s633
      %p637 = scmp.eq.s32.totalorder %s77, 0
      %p638 = por %p636, %p637
      %p639 = scmp.ne.s32.totalorder %s631, %s633
      %p640 = scmp.eq.s32.totalorder %s82, 1
      %p641 = por %p639, %p640
      %p642 = scmp.ne.s32.totalorder %s633, %s634
      %p643 = scmp.eq.s32.totalorder %s82, 0
      %p644 = por %p642, %p643
      %p645 = scmp.ne.s32.totalorder %s633, %s634
      %p646 = scmp.eq.s32.totalorder %s83, 1
      %p647 = por %p645, %p646
      %p649 = scmp.ne.s32.totalorder %s634, %s648
      %p650 = scmp.eq.s32.totalorder %s83, 0
      %p651 = por %p649, %p650
      %s653 = sadd.s32 %s652, 1
      %p656 = scmp.eq.s32.totalorder %s77, 1
      %p657 = scmp.ne.s32.totalorder %s652, %s654
      %p658 = scmp.eq.s32.totalorder %s77, 0
      %p659 = por %p657, %p658
      %p660 = scmp.ne.s32.totalorder %s652, %s654
      %p661 = scmp.eq.s32.totalorder %s82, 1
      %p662 = por %p660, %p661
      %p663 = scmp.ne.s32.totalorder %s654, %s655
      %p664 = scmp.eq.s32.totalorder %s82, 0
      %p665 = por %p663, %p664
      %p666 = scmp.ne.s32.totalorder %s654, %s655
      %p667 = scmp.eq.s32.totalorder %s83, 1
      %p668 = por %p666, %p667
      %p670 = scmp.ne.s32.totalorder %s655, %s669
      %p671 = scmp.eq.s32.totalorder %s83, 0
      %p672 = por %p670, %p671
      %s674 = sadd.s32 %s673, 1
      %p677 = scmp.eq.s32.totalorder %s77, 1
      %p678 = scmp.ne.s32.totalorder %s673, %s675
      %p679 = scmp.eq.s32.totalorder %s77, 0
      %p680 = por %p678, %p679
      %p681 = scmp.ne.s32.totalorder %s673, %s675
      %p682 = scmp.eq.s32.totalorder %s82, 1
      %p683 = por %p681, %p682
      %p684 = scmp.ne.s32.totalorder %s675, %s676
      %p685 = scmp.eq.s32.totalorder %s82, 0
      %p686 = por %p684, %p685
      %p687 = scmp.ne.s32.totalorder %s675, %s676
      %p688 = scmp.eq.s32.totalorder %s83, 1
      %p689 = por %p687, %p688
      %p691 = scmp.ne.s32.totalorder %s676, %s690
      %p692 = scmp.eq.s32.totalorder %s83, 0
      %p693 = por %p691, %p692
      %s695 = sadd.s32 %s694, 1
      %p698 = scmp.eq.s32.totalorder %s77, 1
      %p699 = scmp.ne.s32.totalorder %s694, %s696
      %p700 = scmp.eq.s32.totalorder %s77, 0
      %p701 = por %p699, %p700
      %p702 = scmp.ne.s32.totalorder %s694, %s696
      %p703 = scmp.eq.s32.totalorder %s82, 1
      %p704 = por %p702, %p703
      %p705 = scmp.ne.s32.totalorder %s696, %s697
      %p706 = scmp.eq.s32.totalorder %s82, 0
      %p707 = por %p705, %p706
      %p708 = scmp.ne.s32.totalorder %s696, %s697
      %p709 = scmp.eq.s32.totalorder %s83, 1
      %p710 = por %p708, %p709
      %p712 = scmp.ne.s32.totalorder %s697, %s711
      %p713 = scmp.eq.s32.totalorder %s83, 0
      %p714 = por %p712, %p713
      %s716 = sadd.s32 %s715, 1
      %p719 = scmp.eq.s32.totalorder %s77, 1
      %p720 = scmp.ne.s32.totalorder %s715, %s717
      %p721 = scmp.eq.s32.totalorder %s77, 0
      %p722 = por %p720, %p721
      %p723 = scmp.ne.s32.totalorder %s715, %s717
      %p724 = scmp.eq.s32.totalorder %s82, 1
      %p725 = por %p723, %p724
      %p726 = scmp.ne.s32.totalorder %s717, %s718
      %p727 = scmp.eq.s32.totalorder %s82, 0
      %p728 = por %p726, %p727
      %p729 = scmp.ne.s32.totalorder %s717, %s718
      %p730 = scmp.eq.s32.totalorder %s83, 1
      %p731 = por %p729, %p730
      %p733 = scmp.ne.s32.totalorder %s718, %s732
      %p734 = scmp.eq.s32.totalorder %s83, 0
      %p735 = por %p733, %p734
      %s736 = ssub.s32 %s77, %s84
      %p737 = scmp.eq.s32.totalorder %s736, 0
      %s739 = sadd.s32 %s738, 1
      %s740 = scalar_select %p737, %s738, %s739
      %p743 = pneg %p737
      %p744 = scmp.eq.s32.totalorder %s77, 1
      %p745 = por %p743, %p744
      %p746 = scmp.ne.s32.totalorder %s738, %s741
      %p747 = scmp.eq.s32.totalorder %s77, 0
      %p748 = por %p746, %p747
      %p749 = scmp.ne.s32.totalorder %s738, %s741
      %p750 = scmp.eq.s32.totalorder %s82, 1
      %p751 = por %p749, %p750
      %p752 = scmp.ne.s32.totalorder %s741, %s742
      %p753 = scmp.eq.s32.totalorder %s82, 0
      %p754 = por %p752, %p753
      %p755 = scmp.ne.s32.totalorder %s741, %s742
      %p756 = scmp.eq.s32.totalorder %s83, 1
      %p757 = por %p755, %p756
      %p759 = scmp.ne.s32.totalorder %s742, %s758
      %p760 = scmp.eq.s32.totalorder %s83, 0
      %p761 = por %p759, %p760
      %p762 = scmp.le.s32.totalorder 1, %s77
      %p763 = scmp.lt.s32.totalorder %s77, 3
      %p764 = pnand %p762, %p763
      %p765 = pneg %p764
      // Predicated region
      $region9: #{netg_forward.1} parent=5 // pred_check
        _
      $region10: #{netg_forward.1} parent=5 // pred_check_branch
        %767 = sbr.rel (%p764) target = $region12
      $region11: #{netg_forward.1} parent=5 // pred_region
        %s768 = ssub.s32 %s77, 1
        // Predicated region
        $region13: #{netg_forward.1} parent=11 // pred_check
          %p769 = pneg %p98
        $region14: #{netg_forward.1} parent=11 // pred_check_branch
          %771 = sbr.rel (%p769) target = $region16
        $region15: #{netg_forward.1} parent=11 // pred_region
          %s773 = ssub.s32 32, 32
          %774 = vsyncadd [#allocation4], %s773
          %s776 = sshll.u32 %s1, 4
          %s777 = int_to_ptr.vmem [resolvable:$true] %s776
          %779 = dma.vmem_to_smem %s777, 32, [#allocation2], [#allocation4]
        $region16: #{netg_forward.1} parent=11 // pred_fallthru
          _
        // Predicated region
        $region17: #{netg_forward.1} parent=11 // pred_check
          %p780 = pneg %p119
        $region18: #{netg_forward.1} parent=11 // pred_check_branch
          %782 = sbr.rel (%p780) target = $region20
        $region19: #{netg_forward.1} parent=11 // pred_region
          %s784 = ssub.s32 32, 32
          %785 = vsyncadd [#allocation6], %s784
          %s787 = sshll.u32 %s3, 4
          %s788 = int_to_ptr.vmem [resolvable:$true] %s787
          %790 = dma.vmem_to_smem %s788, 32, [#allocation5], [#allocation6]
        $region20: #{netg_forward.1} parent=11 // pred_fallthru
          _
        // Predicated region
        $region21: #{netg_forward.1} parent=11 // pred_check
          %p791 = pneg %p140
        $region22: #{netg_forward.1} parent=11 // pred_check_branch
          %793 = sbr.rel (%p791) target = $region24
        $region23: #{netg_forward.1} parent=11 // pred_region
          _
        $region24: #{netg_forward.1} parent=11 // pred_fallthru
          _
        // Predicated region
        $region25: #{netg_forward.1} parent=11 // pred_check
          %p794 = pneg %p161
        $region26: #{netg_forward.1} parent=11 // pred_check_branch
          %796 = sbr.rel (%p794) target = $region28
        $region27: #{netg_forward.1} parent=11 // pred_region
          _
        $region28: #{netg_forward.1} parent=11 // pred_fallthru
          _
        // Predicated region
        $region29: #{netg_forward.1} parent=11 // pred_check
          %p797 = pneg %p182
        $region30: #{netg_forward.1} parent=11 // pred_check_branch
          %799 = sbr.rel (%p797) target = $region32
        $region31: #{netg_forward.1} parent=11 // pred_region
          _
        $region32: #{netg_forward.1} parent=11 // pred_fallthru
          _
        // Predicated region
        $region33: #{netg_forward.1} parent=11 // pred_check
          %p800 = pneg %p203
        $region34: #{netg_forward.1} parent=11 // pred_check_branch
          %802 = sbr.rel (%p800) target = $region36
        $region35: #{netg_forward.1} parent=11 // pred_region
          _
        $region36: #{netg_forward.1} parent=11 // pred_fallthru
          _
        // Predicated region
        $region37: #{netg_forward.1} parent=11 // pred_check
          %p803 = pneg %p224
        $region38: #{netg_forward.1} parent=11 // pred_check_branch
          %805 = sbr.rel (%p803) target = $region40
        $region39: #{netg_forward.1} parent=11 // pred_region
          %s807 = ssub.s32 16896, 16896
          %808 = vsyncadd [#allocation3], %s807
          %s809 = sshll.u32 [#allocation7], 4
          %s810 = int_to_ptr.vmem [resolvable:$true] %s809
          %815 = dma.hbm_to_vmem [thread:$0]  %s13, 16896, %s810, [#allocation3], 384, 384, 24
        $region40: #{netg_forward.1} parent=11 // pred_fallthru
          _
        // Predicated region
        $region41: #{netg_forward.1} parent=11 // pred_check
          %p816 = pneg %p245
        $region42: #{netg_forward.1} parent=11 // pred_check_branch
          %818 = sbr.rel (%p816) target = $region44
        $region43: #{netg_forward.1} parent=11 // pred_region
          _
        $region44: #{netg_forward.1} parent=11 // pred_fallthru
          _
        // Predicated region
        $region45: #{netg_forward.1} parent=11 // pred_check
          %p819 = pneg %p266
        $region46: #{netg_forward.1} parent=11 // pred_check_branch
          %821 = sbr.rel (%p819) target = $region48
        $region47: #{netg_forward.1} parent=11 // pred_region
          %s823 = ssub.s32 256, 256
          %824 = vsyncadd [#allocation9], %s823
          %s825 = sshll.u32 [#allocation8], 4
          %s826 = int_to_ptr.vmem [resolvable:$true] %s825
          %831 = dma.hbm_to_vmem [thread:$0]  %s17, 256, %s826, [#allocation9], 128, 128, 8
        $region48: #{netg_forward.1} parent=11 // pred_fallthru
          _
        // Predicated region
        $region49: #{netg_forward.1} parent=11 // pred_check
          %p832 = pneg %p287
        $region50: #{netg_forward.1} parent=11 // pred_check_branch
          %834 = sbr.rel (%p832) target = $region52
        $region51: #{netg_forward.1} parent=11 // pred_region
          %s836 = ssub.s32 768, 768
          %837 = vsyncadd [#allocation9], %s836
          %s838 = sshll.u32 [#allocation10], 4
          %s839 = int_to_ptr.vmem [resolvable:$true] %s838
          %844 = dma.hbm_to_vmem [thread:$0]  %s19, 768, %s839, [#allocation9], 384, 384, 24
        $region52: #{netg_forward.1} parent=11 // pred_fallthru
          _
        // Predicated region
        $region53: #{netg_forward.1} parent=11 // pred_check
          %p845 = pneg %p308
        $region54: #{netg_forward.1} parent=11 // pred_check_branch
          %847 = sbr.rel (%p845) target = $region56
        $region55: #{netg_forward.1} parent=11 // pred_region
          _
        $region56: #{netg_forward.1} parent=11 // pred_fallthru
          _
        // Predicated region
        $region57: #{netg_forward.1} parent=11 // pred_check
          %p848 = pneg %p329
        $region58: #{netg_forward.1} parent=11 // pred_check_branch
          %850 = sbr.rel (%p848) target = $region60
        $region59: #{netg_forward.1} parent=11 // pred_region
          _
        $region60: #{netg_forward.1} parent=11 // pred_fallthru
          _
        // Predicated region
        $region61: #{netg_forward.1} parent=11 // pred_check
          %p851 = pneg %p350
        $region62: #{netg_forward.1} parent=11 // pred_check_branch
          %853 = sbr.rel (%p851) target = $region64
        $region63: #{netg_forward.1} parent=11 // pred_region
          _
        $region64: #{netg_forward.1} parent=11 // pred_fallthru
          _
        // Predicated region
        $region65: #{netg_forward.1} parent=11 // pred_check
          %p854 = pneg %p371
        $region66: #{netg_forward.1} parent=11 // pred_check_branch
          %856 = sbr.rel (%p854) target = $region68
        $region67: #{netg_forward.1} parent=11 // pred_region
          %s858 = ssub.s32 256, 256
          %859 = vsyncadd [#allocation12], %s858
          %s860 = sshll.u32 [#allocation11], 4
          %s861 = int_to_ptr.vmem [resolvable:$true] %s860
          %866 = dma.hbm_to_vmem [thread:$0]  %s27, 256, %s861, [#allocation12], 128, 128, 8
        $region68: #{netg_forward.1} parent=11 // pred_fallthru
          _
        // Predicated region
        $region69: #{netg_forward.1} parent=11 // pred_check
          %p867 = pneg %p392
        $region70: #{netg_forward.1} parent=11 // pred_check_branch
          %869 = sbr.rel (%p867) target = $region72
        $region71: #{netg_forward.1} parent=11 // pred_region
          _
        $region72: #{netg_forward.1} parent=11 // pred_fallthru
          _
        // Predicated region
        $region73: #{netg_forward.1} parent=11 // pred_check
          %p870 = pneg %p413
        $region74: #{netg_forward.1} parent=11 // pred_check_branch
          %872 = sbr.rel (%p870) target = $region76
        $region75: #{netg_forward.1} parent=11 // pred_region
          %s874 = ssub.s32 2048, 2048
          %875 = vsyncadd [#allocation12], %s874
          %s876 = sshll.u32 [#allocation13], 4
          %s877 = int_to_ptr.vmem [resolvable:$true] %s876
          %882 = dma.hbm_to_vmem [thread:$0]  %s31, 2048, %s877, [#allocation12], 256, 256, 16
        $region76: #{netg_forward.1} parent=11 // pred_fallthru
          _
        // Predicated region
        $region77: #{netg_forward.1} parent=11 // pred_check
          %p883 = pneg %p434
        $region78: #{netg_forward.1} parent=11 // pred_check_branch
          %885 = sbr.rel (%p883) target = $region80
        $region79: #{netg_forward.1} parent=11 // pred_region
          %s887 = ssub.s32 256, 256
          %888 = vsyncadd [#allocation15], %s887
          %s890 = sshll.u32 [#allocation14], 4
          %s891 = int_to_ptr.vmem [resolvable:$true] %s890
          %893 = dma.hbm_to_vmem [thread:$0]  %s33, 256, %s891, [#allocation15]
        $region80: #{netg_forward.1} parent=11 // pred_fallthru
          _
        // Predicated region
        $region81: #{netg_forward.1} parent=11 // pred_check
          %p894 = pneg %p455
        $region82: #{netg_forward.1} parent=11 // pred_check_branch
          %896 = sbr.rel (%p894) target = $region84
        $region83: #{netg_forward.1} parent=11 // pred_region
          _
        $region84: #{netg_forward.1} parent=11 // pred_fallthru
          _
        // Predicated region
        $region85: #{netg_forward.1} parent=11 // pred_check
          %p897 = pneg %p476
        $region86: #{netg_forward.1} parent=11 // pred_check_branch
          %899 = sbr.rel (%p897) target = $region88
        $region87: #{netg_forward.1} parent=11 // pred_region
          _
        $region88: #{netg_forward.1} parent=11 // pred_fallthru
          _
        // Predicated region
        $region89: #{netg_forward.1} parent=11 // pred_check
          %p900 = pneg %p497
        $region90: #{netg_forward.1} parent=11 // pred_check_branch
          %902 = sbr.rel (%p900) target = $region92
        $region91: #{netg_forward.1} parent=11 // pred_region
          _
        $region92: #{netg_forward.1} parent=11 // pred_fallthru
          _
        // Predicated region
        $region93: #{netg_forward.1} parent=11 // pred_check
          %p903 = pneg %p518
        $region94: #{netg_forward.1} parent=11 // pred_check_branch
          %905 = sbr.rel (%p903) target = $region96
        $region95: #{netg_forward.1} parent=11 // pred_region
          %s907 = ssub.s32 128, 128
          %908 = vsyncadd [#allocation15], %s907
          %s910 = sshll.u32 [#allocation16], 4
          %s911 = int_to_ptr.vmem [resolvable:$true] %s910
          %913 = dma.hbm_to_vmem [thread:$0]  %s41, 128, %s911, [#allocation15]
        $region96: #{netg_forward.1} parent=11 // pred_fallthru
          _
        // Predicated region
        $region97: #{netg_forward.1} parent=11 // pred_check
          %p914 = pneg %p539
        $region98: #{netg_forward.1} parent=11 // pred_check_branch
          %916 = sbr.rel (%p914) target = $region100
        $region99: #{netg_forward.1} parent=11 // pred_region
          _
        $region100: #{netg_forward.1} parent=11 // pred_fallthru
          _
        // Predicated region
        $region101: #{netg_forward.1} parent=11 // pred_check
          %p917 = pneg %p560
        $region102: #{netg_forward.1} parent=11 // pred_check_branch
          %919 = sbr.rel (%p917) target = $region104
        $region103: #{netg_forward.1} parent=11 // pred_region
          _
        $region104: #{netg_forward.1} parent=11 // pred_fallthru
          _
        // Predicated region
        $region105: #{netg_forward.1} parent=11 // pred_check
          %p920 = pneg %p581
        $region106: #{netg_forward.1} parent=11 // pred_check_branch
          %922 = sbr.rel (%p920) target = $region108
        $region107: #{netg_forward.1} parent=11 // pred_region
          %s924 = ssub.s32 64, 64
          %925 = vsyncadd [#allocation18], %s924
          %s927 = sshll.u32 [#allocation17], 4
          %s928 = int_to_ptr.vmem [resolvable:$true] %s927
          %930 = dma.hbm_to_vmem [thread:$0]  %s47, 64, %s928, [#allocation18]
        $region108: #{netg_forward.1} parent=11 // pred_fallthru
          _
        // Predicated region
        $region109: #{netg_forward.1} parent=11 // pred_check
          %p931 = pneg %p602
        $region110: #{netg_forward.1} parent=11 // pred_check_branch
          %933 = sbr.rel (%p931) target = $region112
        $region111: #{netg_forward.1} parent=11 // pred_region
          _
        $region112: #{netg_forward.1} parent=11 // pred_fallthru
          _
        // Predicated region
        $region113: #{netg_forward.1} parent=11 // pred_check
          %p934 = pneg %p623
        $region114: #{netg_forward.1} parent=11 // pred_check_branch
          %936 = sbr.rel (%p934) target = $region116
        $region115: #{netg_forward.1} parent=11 // pred_region
          %s938 = ssub.s32 64, 64
          %939 = vsyncadd [#allocation18], %s938
          %s941 = sshll.u32 [#allocation19], 4
          %s942 = int_to_ptr.vmem [resolvable:$true] %s941
          %944 = dma.hbm_to_vmem [thread:$0]  %s51, 64, %s942, [#allocation18]
        $region116: #{netg_forward.1} parent=11 // pred_fallthru
          _
        // Predicated region
        $region117: #{netg_forward.1} parent=11 // pred_check
          %p945 = pneg %p644
        $region118: #{netg_forward.1} parent=11 // pred_check_branch
          %947 = sbr.rel (%p945) target = $region120
        $region119: #{netg_forward.1} parent=11 // pred_region
          _
        $region120: #{netg_forward.1} parent=11 // pred_fallthru
          _
        // Predicated region
        $region121: #{netg_forward.1} parent=11 // pred_check
          %p948 = pneg %p665
        $region122: #{netg_forward.1} parent=11 // pred_check_branch
          %950 = sbr.rel (%p948) target = $region124
        $region123: #{netg_forward.1} parent=11 // pred_region
          %s952 = ssub.s32 64, 64
          %953 = vsyncadd [#allocation21], %s952
          %s955 = sshll.u32 [#allocation20], 4
          %s956 = int_to_ptr.vmem [resolvable:$true] %s955
          %958 = dma.hbm_to_vmem [thread:$0]  %s55, 64, %s956, [#allocation21]
        $region124: #{netg_forward.1} parent=11 // pred_fallthru
          _
        // Predicated region
        $region125: #{netg_forward.1} parent=11 // pred_check
          %p959 = pneg %p686
        $region126: #{netg_forward.1} parent=11 // pred_check_branch
          %961 = sbr.rel (%p959) target = $region128
        $region127: #{netg_forward.1} parent=11 // pred_region
          _
        $region128: #{netg_forward.1} parent=11 // pred_fallthru
          _
        // Predicated region
        $region129: #{netg_forward.1} parent=11 // pred_check
          %p962 = pneg %p707
        $region130: #{netg_forward.1} parent=11 // pred_check_branch
          %964 = sbr.rel (%p962) target = $region132
        $region131: #{netg_forward.1} parent=11 // pred_region
          _
        $region132: #{netg_forward.1} parent=11 // pred_fallthru
          _
        // Predicated region
        $region133: #{netg_forward.1} parent=11 // pred_check
          %p965 = pneg %p728
        $region134: #{netg_forward.1} parent=11 // pred_check_branch
          %967 = sbr.rel (%p965) target = $region136
        $region135: #{netg_forward.1} parent=11 // pred_region
          _
        $region136: #{netg_forward.1} parent=11 // pred_fallthru
          _
      $region12: #{netg_forward.1} parent=5 // pred_fallthru
        _
      %p968 = scmp.lt.s32.totalorder %s77, 2
      // Predicated region
      $region137: #{netg_forward.1} parent=5 // pred_check
        %p969 = pneg %p968
      $region138: #{netg_forward.1} parent=5 // pred_check_branch
        %971 = sbr.rel (%p969) target = $region140
      $region139: #{netg_forward.1} parent=5 // pred_region
        _
      $region140: #{netg_forward.1} parent=5 // pred_fallthru
        _
      %p972 = scmp.le.s32.totalorder 1, %s77
      %p973 = scmp.lt.s32.totalorder %s77, 3
      %p974 = pnand %p972, %p973
      %p975 = pneg %p974
      // Predicated region
      $region141: #{netg_forward.1} parent=5 // pred_check
        _
      $region142: #{netg_forward.1} parent=5 // pred_check_branch
        %977 = sbr.rel (%p974) target = $region144
      $region143: #{netg_forward.1} parent=5 // pred_region
        %s978 = ssub.s32 %s77, 1
        // Predicated region
        $region145: #{netg_forward.1} parent=143 // pred_check
          %p979 = pneg %p98
        $region146: #{netg_forward.1} parent=143 // pred_check_branch
          %981 = sbr.rel (%p979) target = $region148
        $region147: #{netg_forward.1} parent=143 // pred_region
          %982 = dma.done [#allocation4], 32
        $region148: #{netg_forward.1} parent=143 // pred_fallthru
          _
        // Predicated region
        $region149: #{netg_forward.1} parent=143 // pred_check
          %p983 = pneg %p119
        $region150: #{netg_forward.1} parent=143 // pred_check_branch
          %985 = sbr.rel (%p983) target = $region152
        $region151: #{netg_forward.1} parent=143 // pred_region
          %986 = dma.done [#allocation6], 32
        $region152: #{netg_forward.1} parent=143 // pred_fallthru
          _
        // Predicated region
        $region153: #{netg_forward.1} parent=143 // pred_check
          %p987 = pneg %p224
        $region154: #{netg_forward.1} parent=143 // pred_check_branch
          %989 = sbr.rel (%p987) target = $region156
        $region155: #{netg_forward.1} parent=143 // pred_region
          %990 = dma.done [#allocation3], 16896
        $region156: #{netg_forward.1} parent=143 // pred_fallthru
          _
        // Predicated region
        $region157: #{netg_forward.1} parent=143 // pred_check
          %p991 = pneg %p266
        $region158: #{netg_forward.1} parent=143 // pred_check_branch
          %993 = sbr.rel (%p991) target = $region160
        $region159: #{netg_forward.1} parent=143 // pred_region
          %994 = dma.done [#allocation9], 256
        $region160: #{netg_forward.1} parent=143 // pred_fallthru
          _
        // Predicated region
        $region161: #{netg_forward.1} parent=143 // pred_check
          %p995 = pneg %p287
        $region162: #{netg_forward.1} parent=143 // pred_check_branch
          %997 = sbr.rel (%p995) target = $region164
        $region163: #{netg_forward.1} parent=143 // pred_region
          %998 = dma.done [#allocation9], 768
        $region164: #{netg_forward.1} parent=143 // pred_fallthru
          _
        // Predicated region
        $region165: #{netg_forward.1} parent=143 // pred_check
          %p999 = pneg %p371
        $region166: #{netg_forward.1} parent=143 // pred_check_branch
          %1001 = sbr.rel (%p999) target = $region168
        $region167: #{netg_forward.1} parent=143 // pred_region
          %1002 = dma.done [#allocation12], 256
        $region168: #{netg_forward.1} parent=143 // pred_fallthru
          _
        // Predicated region
        $region169: #{netg_forward.1} parent=143 // pred_check
          %p1003 = pneg %p413
        $region170: #{netg_forward.1} parent=143 // pred_check_branch
          %1005 = sbr.rel (%p1003) target = $region172
        $region171: #{netg_forward.1} parent=143 // pred_region
          %1006 = dma.done [#allocation12], 2048
        $region172: #{netg_forward.1} parent=143 // pred_fallthru
          _
        // Predicated region
        $region173: #{netg_forward.1} parent=143 // pred_check
          %p1007 = pneg %p434
        $region174: #{netg_forward.1} parent=143 // pred_check_branch
          %1009 = sbr.rel (%p1007) target = $region176
        $region175: #{netg_forward.1} parent=143 // pred_region
          %1010 = dma.done [#allocation15], 256
        $region176: #{netg_forward.1} parent=143 // pred_fallthru
          _
        // Predicated region
        $region177: #{netg_forward.1} parent=143 // pred_check
          %p1011 = pneg %p518
        $region178: #{netg_forward.1} parent=143 // pred_check_branch
          %1013 = sbr.rel (%p1011) target = $region180
        $region179: #{netg_forward.1} parent=143 // pred_region
          %1014 = dma.done [#allocation15], 128
        $region180: #{netg_forward.1} parent=143 // pred_fallthru
          _
        // Predicated region
        $region181: #{netg_forward.1} parent=143 // pred_check
          %p1015 = pneg %p581
        $region182: #{netg_forward.1} parent=143 // pred_check_branch
          %1017 = sbr.rel (%p1015) target = $region184
        $region183: #{netg_forward.1} parent=143 // pred_region
          %1018 = dma.done [#allocation18], 64
        $region184: #{netg_forward.1} parent=143 // pred_fallthru
          _
        // Predicated region
        $region185: #{netg_forward.1} parent=143 // pred_check
          %p1019 = pneg %p623
        $region186: #{netg_forward.1} parent=143 // pred_check_branch
          %1021 = sbr.rel (%p1019) target = $region188
        $region187: #{netg_forward.1} parent=143 // pred_region
          %1022 = dma.done [#allocation18], 64
        $region188: #{netg_forward.1} parent=143 // pred_fallthru
          _
        // Predicated region
        $region189: #{netg_forward.1} parent=143 // pred_check
          %p1023 = pneg %p665
        $region190: #{netg_forward.1} parent=143 // pred_check_branch
          %1025 = sbr.rel (%p1023) target = $region192
        $region191: #{netg_forward.1} parent=143 // pred_region
          %1026 = dma.done [#allocation21], 64
        $region192: #{netg_forward.1} parent=143 // pred_fallthru
          _
        %1027 = sfence
        %p1028 = pneg %p98
        %p1029 = pneg %p95
        %p1030 = pneg %p119
        %p1031 = pneg %p116
        %p1032 = pneg %p140
        %p1033 = pneg %p137
        %p1034 = pneg %p161
        %p1035 = pneg %p158
        %p1036 = pneg %p182
        %p1037 = pneg %p179
        %p1038 = pneg %p203
        %p1039 = pneg %p200
        %p1040 = pneg %p224
        %p1041 = pneg %p221
        %p1042 = pneg %p245
        %p1043 = pneg %p242
        %p1044 = pneg %p266
        %p1045 = pneg %p263
        %p1046 = pneg %p287
        %p1047 = pneg %p284
        %p1048 = pneg %p308
        %p1049 = pneg %p305
        %p1050 = pneg %p329
        %p1051 = pneg %p326
        %p1052 = pneg %p350
        %p1053 = pneg %p347
        %p1054 = pneg %p371
        %p1055 = pneg %p368
        %p1056 = pneg %p392
        %p1057 = pneg %p389
        %p1058 = pneg %p413
        %p1059 = pneg %p410
        %p1060 = pneg %p434
        %p1061 = pneg %p431
        %p1062 = pneg %p455
        %p1063 = pneg %p452
        %p1064 = pneg %p476
        %p1065 = pneg %p473
        %p1066 = pneg %p497
        %p1067 = pneg %p494
        %p1068 = pneg %p518
        %p1069 = pneg %p515
        %p1070 = pneg %p539
        %p1071 = pneg %p536
        %p1072 = pneg %p560
        %p1073 = pneg %p557
        %p1074 = pneg %p581
        %p1075 = pneg %p578
        %p1076 = pneg %p602
        %p1077 = pneg %p599
        %p1078 = pneg %p623
        %p1079 = pneg %p620
        %p1080 = pneg %p644
        %p1081 = pneg %p641
        %p1082 = pneg %p665
        %p1083 = pneg %p662
        %p1084 = pneg %p686
        %p1085 = pneg %p683
        %p1086 = pneg %p707
        %p1087 = pneg %p704
        %p1088 = pneg %p728
        %p1089 = pneg %p725
        %p1090 = pneg %p754
        %p1091 = pneg %p751
        %p1092 = scmp.lt.s32.totalorder %s82, 1
        %s1093 = scalar_select %p1092, %s82, 1
        %s1094 = smul.addr %s1093, 8
        %s1095 = smul.addr %s1094, 4
        %s1096 = scalar_lea.vmem %s63, %s1095
        %p1097 = scmp.lt.s32.totalorder %s82, 1
        %s1098 = scalar_select %p1097, %s82, 1
        %s1099 = smul.addr %s1098, 8
        %s1100 = smul.addr %s1099, 4
        %s1101 = scalar_lea.vmem %s63, %s1100
        %v1102 = vld [vmem:[%s7] sm:$0xff]
        %v1103 = vld [vmem:[%s7 + $0x8] sm:$0xff]
        %v1104 = vld [vmem:[%s7 + $0x10] sm:$0xff]
        %v1105 = vld [vmem:[%s7 + $0x18] sm:$0xff]
        %s1106 = smul.u32 %s82, 128
        %s1107 = sld [smem:[#allocation2 + %s1106]]
        %v1108 = vld [vmem:[%s5] sm:$0xff]
        %v1109 = vld [vmem:[%s5 + $0x8] sm:$0xff]
        %v1110 = vld [vmem:[%s5 + $0x10] sm:$0xff]
        %v1111 = vld [vmem:[%s5 + $0x18] sm:$0xff]
        %v1112 = vstv %s1107
        %v1113 = vmul.f32 %v1112, %v1108
        %v1114 = vmul.f32 %v1112, %v1109
        %v1115 = vmul.f32 %v1112, %v1110
        %v1116 = vmul.f32 %v1112, %v1111
        %v1117 = vadd.f32 %v1102, %v1113
        %v1118 = vadd.f32 %v1103, %v1114
        %v1119 = vadd.f32 %v1104, %v1115
        %v1120 = vadd.f32 %v1105, %v1116
        %s1121 = sadd.s32 %s1106, 1
        %s1122 = sld [smem:[#allocation2 + %s1121]]
        %s1123 = scalar_lea.vmem %s5, 32
        %v1124 = vld [vmem:[%s1123] sm:$0xff]
        %v1125 = vld [vmem:[%s1123 + $0x8] sm:$0xff]
        %v1126 = vld [vmem:[%s1123 + $0x10] sm:$0xff]
        %v1127 = vld [vmem:[%s1123 + $0x18] sm:$0xff]
        %v1128 = vstv %s1122
        %v1129 = vmul.f32 %v1128, %v1124
        %v1130 = vmul.f32 %v1128, %v1125
        %v1131 = vmul.f32 %v1128, %v1126
        %v1132 = vmul.f32 %v1128, %v1127
        %v1133 = vadd.f32 %v1117, %v1129
        %v1134 = vadd.f32 %v1118, %v1130
        %v1135 = vadd.f32 %v1119, %v1131
        %v1136 = vadd.f32 %v1120, %v1132
        %s1137 = sadd.s32 %s1106, 2
        %s1138 = sld [smem:[#allocation2 + %s1137]]
        %s1139 = scalar_lea.vmem %s5, 64
        %v1140 = vld [vmem:[%s1139] sm:$0xff]
        %v1141 = vld [vmem:[%s1139 + $0x8] sm:$0xff]
        %v1142 = vld [vmem:[%s1139 + $0x10] sm:$0xff]
        %v1143 = vld [vmem:[%s1139 + $0x18] sm:$0xff]
        %v1144 = vstv %s1138
        %v1145 = vmul.f32 %v1144, %v1140
        %v1146 = vmul.f32 %v1144, %v1141
        %v1147 = vmul.f32 %v1144, %v1142
        %v1148 = vmul.f32 %v1144, %v1143
        %v1149 = vadd.f32 %v1133, %v1145
        %v1150 = vadd.f32 %v1134, %v1146
        %v1151 = vadd.f32 %v1135, %v1147
        %v1152 = vadd.f32 %v1136, %v1148
        %s1153 = sadd.s32 %s1106, 3
        %s1154 = sld [smem:[#allocation2 + %s1153]]
        %s1155 = scalar_lea.vmem %s5, 96
        %v1156 = vld [vmem:[%s1155] sm:$0xff]
        %v1157 = vld [vmem:[%s1155 + $0x8] sm:$0xff]
        %v1158 = vld [vmem:[%s1155 + $0x10] sm:$0xff]
        %v1159 = vld [vmem:[%s1155 + $0x18] sm:$0xff]
        %v1160 = vstv %s1154
        %v1161 = vmul.f32 %v1160, %v1156
        %v1162 = vmul.f32 %v1160, %v1157
        %v1163 = vmul.f32 %v1160, %v1158
        %v1164 = vmul.f32 %v1160, %v1159
        %v1165 = vadd.f32 %v1149, %v1161
        %v1166 = vadd.f32 %v1150, %v1162
        %v1167 = vadd.f32 %v1151, %v1163
        %v1168 = vadd.f32 %v1152, %v1164
        %s1169 = sadd.s32 %s1106, 4
        %s1170 = sld [smem:[#allocation2 + %s1169]]
        %s1171 = scalar_lea.vmem %s5, 128
        %v1172 = vld [vmem:[%s1171] sm:$0xff]
        %v1173 = vld [vmem:[%s1171 + $0x8] sm:$0xff]
        %v1174 = vld [vmem:[%s1171 + $0x10] sm:$0xff]
        %v1175 = vld [vmem:[%s1171 + $0x18] sm:$0xff]
        %v1176 = vstv %s1170
        %v1177 = vmul.f32 %v1176, %v1172
        %v1178 = vmul.f32 %v1176, %v1173
        %v1179 = vmul.f32 %v1176, %v1174
        %v1180 = vmul.f32 %v1176, %v1175
        %v1181 = vadd.f32 %v1165, %v1177
        %v1182 = vadd.f32 %v1166, %v1178
        %v1183 = vadd.f32 %v1167, %v1179
        %v1184 = vadd.f32 %v1168, %v1180
        %s1185 = sadd.s32 %s1106, 5
        %s1186 = sld [smem:[#allocation2 + %s1185]]
        %s1187 = scalar_lea.vmem %s5, 160
        %v1188 = vld [vmem:[%s1187] sm:$0xff]
        %v1189 = vld [vmem:[%s1187 + $0x8] sm:$0xff]
        %v1190 = vld [vmem:[%s1187 + $0x10] sm:$0xff]
        %v1191 = vld [vmem:[%s1187 + $0x18] sm:$0xff]
        %v1192 = vstv %s1186
        %v1193 = vmul.f32 %v1192, %v1188
        %v1194 = vmul.f32 %v1192, %v1189
        %v1195 = vmul.f32 %v1192, %v1190
        %v1196 = vmul.f32 %v1192, %v1191
        %v1197 = vadd.f32 %v1181, %v1193
        %v1198 = vadd.f32 %v1182, %v1194
        %v1199 = vadd.f32 %v1183, %v1195
        %v1200 = vadd.f32 %v1184, %v1196
        %s1201 = sadd.s32 %s1106, 6
        %s1202 = sld [smem:[#allocation2 + %s1201]]
        %s1203 = scalar_lea.vmem %s5, 192
        %v1204 = vld [vmem:[%s1203] sm:$0xff]
        %v1205 = vld [vmem:[%s1203 + $0x8] sm:$0xff]
        %v1206 = vld [vmem:[%s1203 + $0x10] sm:$0xff]
        %v1207 = vld [vmem:[%s1203 + $0x18] sm:$0xff]
        %v1208 = vstv %s1202
        %v1209 = vmul.f32 %v1208, %v1204
        %v1210 = vmul.f32 %v1208, %v1205
        %v1211 = vmul.f32 %v1208, %v1206
        %v1212 = vmul.f32 %v1208, %v1207
        %v1213 = vadd.f32 %v1197, %v1209
        %v1214 = vadd.f32 %v1198, %v1210
        %v1215 = vadd.f32 %v1199, %v1211
        %v1216 = vadd.f32 %v1200, %v1212
        %s1217 = sadd.s32 %s1106, 7
        %s1218 = sld [smem:[#allocation2 + %s1217]]
        %s1219 = scalar_lea.vmem %s5, 224
        %v1220 = vld [vmem:[%s1219] sm:$0xff]
        %v1221 = vld [vmem:[%s1219 + $0x8] sm:$0xff]
        %v1222 = vld [vmem:[%s1219 + $0x10] sm:$0xff]
        %v1223 = vld [vmem:[%s1219 + $0x18] sm:$0xff]
        %v1224 = vstv %s1218
        %v1225 = vmul.f32 %v1224, %v1220
        %v1226 = vmul.f32 %v1224, %v1221
        %v1227 = vmul.f32 %v1224, %v1222
        %v1228 = vmul.f32 %v1224, %v1223
        %v1229 = vadd.f32 %v1213, %v1225
        %v1230 = vadd.f32 %v1214, %v1226
        %v1231 = vadd.f32 %v1215, %v1227
        %v1232 = vadd.f32 %v1216, %v1228
        %s1233 = sadd.s32 %s1106, 8
        %s1234 = sld [smem:[#allocation2 + %s1233]]
        %s1235 = scalar_lea.vmem %s5, 256
        %v1236 = vld [vmem:[%s1235] sm:$0xff]
        %v1237 = vld [vmem:[%s1235 + $0x8] sm:$0xff]
        %v1238 = vld [vmem:[%s1235 + $0x10] sm:$0xff]
        %v1239 = vld [vmem:[%s1235 + $0x18] sm:$0xff]
        %v1240 = vstv %s1234
        %v1241 = vmul.f32 %v1240, %v1236
        %v1242 = vmul.f32 %v1240, %v1237
        %v1243 = vmul.f32 %v1240, %v1238
        %v1244 = vmul.f32 %v1240, %v1239
        %v1245 = vadd.f32 %v1229, %v1241
        %v1246 = vadd.f32 %v1230, %v1242
        %v1247 = vadd.f32 %v1231, %v1243
        %v1248 = vadd.f32 %v1232, %v1244
        %s1249 = sadd.s32 %s1106, 9
        %s1250 = sld [smem:[#allocation2 + %s1249]]
        %s1251 = scalar_lea.vmem %s5, 288
        %v1252 = vld [vmem:[%s1251] sm:$0xff]
        %v1253 = vld [vmem:[%s1251 + $0x8] sm:$0xff]
        %v1254 = vld [vmem:[%s1251 + $0x10] sm:$0xff]
        %v1255 = vld [vmem:[%s1251 + $0x18] sm:$0xff]
        %v1256 = vstv %s1250
        %v1257 = vmul.f32 %v1256, %v1252
        %v1258 = vmul.f32 %v1256, %v1253
        %v1259 = vmul.f32 %v1256, %v1254
        %v1260 = vmul.f32 %v1256, %v1255
        %v1261 = vadd.f32 %v1245, %v1257
        %v1262 = vadd.f32 %v1246, %v1258
        %v1263 = vadd.f32 %v1247, %v1259
        %v1264 = vadd.f32 %v1248, %v1260
        %s1265 = sadd.s32 %s1106, 10
        %s1266 = sld [smem:[#allocation2 + %s1265]]
        %s1267 = scalar_lea.vmem %s5, 320
        %v1268 = vld [vmem:[%s1267] sm:$0xff]
        %v1269 = vld [vmem:[%s1267 + $0x8] sm:$0xff]
        %v1270 = vld [vmem:[%s1267 + $0x10] sm:$0xff]
        %v1271 = vld [vmem:[%s1267 + $0x18] sm:$0xff]
        %v1272 = vstv %s1266
        %v1273 = vmul.f32 %v1272, %v1268
        %v1274 = vmul.f32 %v1272, %v1269
        %v1275 = vmul.f32 %v1272, %v1270
        %v1276 = vmul.f32 %v1272, %v1271
        %v1277 = vadd.f32 %v1261, %v1273
        %v1278 = vadd.f32 %v1262, %v1274
        %v1279 = vadd.f32 %v1263, %v1275
        %v1280 = vadd.f32 %v1264, %v1276
        %s1281 = sadd.s32 %s1106, 11
        %s1282 = sld [smem:[#allocation2 + %s1281]]
        %s1283 = scalar_lea.vmem %s5, 352
        %v1284 = vld [vmem:[%s1283] sm:$0xff]
        %v1285 = vld [vmem:[%s1283 + $0x8] sm:$0xff]
        %v1286 = vld [vmem:[%s1283 + $0x10] sm:$0xff]
        %v1287 = vld [vmem:[%s1283 + $0x18] sm:$0xff]
        %v1288 = vstv %s1282
        %v1289 = vmul.f32 %v1288, %v1284
        %v1290 = vmul.f32 %v1288, %v1285
        %v1291 = vmul.f32 %v1288, %v1286
        %v1292 = vmul.f32 %v1288, %v1287
        %v1293 = vadd.f32 %v1277, %v1289
        %v1294 = vadd.f32 %v1278, %v1290
        %v1295 = vadd.f32 %v1279, %v1291
        %v1296 = vadd.f32 %v1280, %v1292
        %s1297 = sadd.s32 %s1106, 12
        %s1298 = sld [smem:[#allocation2 + %s1297]]
        %s1299 = scalar_lea.vmem %s5, 384
        %v1300 = vld [vmem:[%s1299] sm:$0xff]
        %v1301 = vld [vmem:[%s1299 + $0x8] sm:$0xff]
        %v1302 = vld [vmem:[%s1299 + $0x10] sm:$0xff]
        %v1303 = vld [vmem:[%s1299 + $0x18] sm:$0xff]
        %v1304 = vstv %s1298
        %v1305 = vmul.f32 %v1304, %v1300
        %v1306 = vmul.f32 %v1304, %v1301
        %v1307 = vmul.f32 %v1304, %v1302
        %v1308 = vmul.f32 %v1304, %v1303
        %v1309 = vadd.f32 %v1293, %v1305
        %v1310 = vadd.f32 %v1294, %v1306
        %v1311 = vadd.f32 %v1295, %v1307
        %v1312 = vadd.f32 %v1296, %v1308
        %s1313 = sadd.s32 %s1106, 13
        %s1314 = sld [smem:[#allocation2 + %s1313]]
        %s1315 = scalar_lea.vmem %s5, 416
        %v1316 = vld [vmem:[%s1315] sm:$0xff]
        %v1317 = vld [vmem:[%s1315 + $0x8] sm:$0xff]
        %v1318 = vld [vmem:[%s1315 + $0x10] sm:$0xff]
        %v1319 = vld [vmem:[%s1315 + $0x18] sm:$0xff]
        %v1320 = vstv %s1314
        %v1321 = vmul.f32 %v1320, %v1316
        %v1322 = vmul.f32 %v1320, %v1317
        %v1323 = vmul.f32 %v1320, %v1318
        %v1324 = vmul.f32 %v1320, %v1319
        %v1325 = vadd.f32 %v1309, %v1321
        %v1326 = vadd.f32 %v1310, %v1322
        %v1327 = vadd.f32 %v1311, %v1323
        %v1328 = vadd.f32 %v1312, %v1324
        %s1329 = sadd.s32 %s1106, 14
        %s1330 = sld [smem:[#allocation2 + %s1329]]
        %s1331 = scalar_lea.vmem %s5, 448
        %v1332 = vld [vmem:[%s1331] sm:$0xff]
        %v1333 = vld [vmem:[%s1331 + $0x8] sm:$0xff]
        %v1334 = vld [vmem:[%s1331 + $0x10] sm:$0xff]
        %v1335 = vld [vmem:[%s1331 + $0x18] sm:$0xff]
        %v1336 = vstv %s1330
        %v1337 = vmul.f32 %v1336, %v1332
        %v1338 = vmul.f32 %v1336, %v1333
        %v1339 = vmul.f32 %v1336, %v1334
        %v1340 = vmul.f32 %v1336, %v1335
        %v1341 = vadd.f32 %v1325, %v1337
        %v1342 = vadd.f32 %v1326, %v1338
        %v1343 = vadd.f32 %v1327, %v1339
        %v1344 = vadd.f32 %v1328, %v1340
        %s1345 = sadd.s32 %s1106, 15
        %s1346 = sld [smem:[#allocation2 + %s1345]]
        %s1347 = scalar_lea.vmem %s5, 480
        %v1348 = vld [vmem:[%s1347] sm:$0xff]
        %v1349 = vld [vmem:[%s1347 + $0x8] sm:$0xff]
        %v1350 = vld [vmem:[%s1347 + $0x10] sm:$0xff]
        %v1351 = vld [vmem:[%s1347 + $0x18] sm:$0xff]
        %v1352 = vstv %s1346
        %v1353 = vmul.f32 %v1352, %v1348
        %v1354 = vmul.f32 %v1352, %v1349
        %v1355 = vmul.f32 %v1352, %v1350
        %v1356 = vmul.f32 %v1352, %v1351
        %v1357 = vadd.f32 %v1341, %v1353
        %v1358 = vadd.f32 %v1342, %v1354
        %v1359 = vadd.f32 %v1343, %v1355
        %v1360 = vadd.f32 %v1344, %v1356
        %v1361 = vld [vmem:[%s11] sm:$0xff]
        %v1362 = vld [vmem:[%s11 + $0x8] sm:$0xff]
        %v1363 = vld [vmem:[%s11 + $0x10] sm:$0xff]
        %v1364 = vld [vmem:[%s11 + $0x18] sm:$0xff]
        %v1365 = vld [vmem:[%s11 + $0x20] sm:$0xff]
        %v1366 = vld [vmem:[%s11 + $0x28] sm:$0xff]
        %v1367 = vld [vmem:[%s11 + $0x30] sm:$0xff]
        %v1368 = vld [vmem:[%s11 + $0x38] sm:$0xff]
        %v1369 = vld [vmem:[%s11 + $0x40] sm:$0xff]
        %v1370 = vld [vmem:[%s11 + $0x48] sm:$0xff]
        %v1371 = vld [vmem:[%s11 + $0x50] sm:$0xff]
        %v1372 = vld [vmem:[%s11 + $0x58] sm:$0xff]
        %v1373 = vld [vmem:[%s11 + $0x60] sm:$0xff]
        %v1374 = vld [vmem:[%s11 + $0x68] sm:$0xff]
        %v1375 = vld [vmem:[%s11 + $0x70] sm:$0xff]
        %v1376 = vld [vmem:[%s11 + $0x78] sm:$0xff]
        %v1377 = vld [vmem:[%s11 + $0x80] sm:$0xff]
        %v1378 = vld [vmem:[%s11 + $0x88] sm:$0xff]
        %v1379 = vld [vmem:[%s11 + $0x90] sm:$0xff]
        %v1380 = vld [vmem:[%s11 + $0x98] sm:$0xff]
        %v1381 = vld [vmem:[%s11 + $0xa0] sm:$0xff]
        %v1382 = vld [vmem:[%s11 + $0xa8] sm:$0xff]
        %v1383 = vld [vmem:[%s11 + $0xb0] sm:$0xff]
        %v1384 = vld [vmem:[%s11 + $0xb8] sm:$0xff]
        %v1385 = vld [vmem:[%s11 + $0xc0] sm:$0xff]
        %v1386 = vld [vmem:[%s11 + $0xc8] sm:$0xff]
        %v1387 = vld [vmem:[%s11 + $0xd0] sm:$0xff]
        %v1388 = vld [vmem:[%s11 + $0xd8] sm:$0xff]
        %v1389 = vld [vmem:[%s11 + $0xe0] sm:$0xff]
        %v1390 = vld [vmem:[%s11 + $0xe8] sm:$0xff]
        %v1391 = vld [vmem:[%s11 + $0xf0] sm:$0xff]
        %v1392 = vld [vmem:[%s11 + $0xf8] sm:$0xff]
        %v1393 = vld [vmem:[%s11 + $0x100] sm:$0xff]
        %v1394 = vld [vmem:[%s11 + $0x108] sm:$0xff]
        %v1395 = vld [vmem:[%s11 + $0x110] sm:$0xff]
        %v1396 = vld [vmem:[%s11 + $0x118] sm:$0xff]
        %v1397 = vld [vmem:[%s11 + $0x120] sm:$0xff]
        %v1398 = vld [vmem:[%s11 + $0x128] sm:$0xff]
        %v1399 = vld [vmem:[%s11 + $0x130] sm:$0xff]
        %v1400 = vld [vmem:[%s11 + $0x138] sm:$0xff]
        %v1401 = vld [vmem:[%s11 + $0x140] sm:$0xff]
        %v1402 = vld [vmem:[%s11 + $0x148] sm:$0xff]
        %v1403 = vld [vmem:[%s11 + $0x150] sm:$0xff]
        %v1404 = vld [vmem:[%s11 + $0x158] sm:$0xff]
        %s1405 = sld [smem:[#allocation5 + %s1106]]
        %v1406 = vld [vmem:[%s9] sm:$0xff]
        %v1407 = vld [vmem:[%s9 + $0x8] sm:$0xff]
        %v1408 = vld [vmem:[%s9 + $0x10] sm:$0xff]
        %v1409 = vld [vmem:[%s9 + $0x18] sm:$0xff]
        %v1410 = vld [vmem:[%s9 + $0x20] sm:$0xff]
        %v1411 = vld [vmem:[%s9 + $0x28] sm:$0xff]
        %v1412 = vld [vmem:[%s9 + $0x30] sm:$0xff]
        %v1413 = vld [vmem:[%s9 + $0x38] sm:$0xff]
        %v1414 = vld [vmem:[%s9 + $0x40] sm:$0xff]
        %v1415 = vld [vmem:[%s9 + $0x48] sm:$0xff]
        %v1416 = vld [vmem:[%s9 + $0x50] sm:$0xff]
        %v1417 = vld [vmem:[%s9 + $0x58] sm:$0xff]
        %v1418 = vld [vmem:[%s9 + $0x60] sm:$0xff]
        %v1419 = vld [vmem:[%s9 + $0x68] sm:$0xff]
        %v1420 = vld [vmem:[%s9 + $0x70] sm:$0xff]
        %v1421 = vld [vmem:[%s9 + $0x78] sm:$0xff]
        %v1422 = vld [vmem:[%s9 + $0x80] sm:$0xff]
        %v1423 = vld [vmem:[%s9 + $0x88] sm:$0xff]
        %v1424 = vld [vmem:[%s9 + $0x90] sm:$0xff]
        %v1425 = vld [vmem:[%s9 + $0x98] sm:$0xff]
        %v1426 = vld [vmem:[%s9 + $0xa0] sm:$0xff]
        %v1427 = vld [vmem:[%s9 + $0xa8] sm:$0xff]
        %v1428 = vld [vmem:[%s9 + $0xb0] sm:$0xff]
        %v1429 = vld [vmem:[%s9 + $0xb8] sm:$0xff]
        %v1430 = vld [vmem:[%s9 + $0xc0] sm:$0xff]
        %v1431 = vld [vmem:[%s9 + $0xc8] sm:$0xff]
        %v1432 = vld [vmem:[%s9 + $0xd0] sm:$0xff]
        %v1433 = vld [vmem:[%s9 + $0xd8] sm:$0xff]
        %v1434 = vld [vmem:[%s9 + $0xe0] sm:$0xff]
        %v1435 = vld [vmem:[%s9 + $0xe8] sm:$0xff]
        %v1436 = vld [vmem:[%s9 + $0xf0] sm:$0xff]
        %v1437 = vld [vmem:[%s9 + $0xf8] sm:$0xff]
        %v1438 = vld [vmem:[%s9 + $0x100] sm:$0xff]
        %v1439 = vld [vmem:[%s9 + $0x108] sm:$0xff]
        %v1440 = vld [vmem:[%s9 + $0x110] sm:$0xff]
        %v1441 = vld [vmem:[%s9 + $0x118] sm:$0xff]
        %v1442 = vld [vmem:[%s9 + $0x120] sm:$0xff]
        %v1443 = vld [vmem:[%s9 + $0x128] sm:$0xff]
        %v1444 = vld [vmem:[%s9 + $0x130] sm:$0xff]
        %v1445 = vld [vmem:[%s9 + $0x138] sm:$0xff]
        %v1446 = vld [vmem:[%s9 + $0x140] sm:$0xff]
        %v1447 = vld [vmem:[%s9 + $0x148] sm:$0xff]
        %v1448 = vld [vmem:[%s9 + $0x150] sm:$0xff]
        %v1449 = vld [vmem:[%s9 + $0x158] sm:$0xff]
        %v1450 = vstv %s1405
        %v1451 = vmul.f32 %v1450, %v1406
        %v1452 = vmul.f32 %v1450, %v1407
        %v1453 = vmul.f32 %v1450, %v1408
        %v1454 = vmul.f32 %v1450, %v1409
        %v1455 = vmul.f32 %v1450, %v1410
        %v1456 = vmul.f32 %v1450, %v1411
        %v1457 = vmul.f32 %v1450, %v1412
        %v1458 = vmul.f32 %v1450, %v1413
        %v1459 = vmul.f32 %v1450, %v1414
        %v1460 = vmul.f32 %v1450, %v1415
        %v1461 = vmul.f32 %v1450, %v1416
        %v1462 = vmul.f32 %v1450, %v1417
        %v1463 = vmul.f32 %v1450, %v1418
        %v1464 = vmul.f32 %v1450, %v1419
        %v1465 = vmul.f32 %v1450, %v1420
        %v1466 = vmul.f32 %v1450, %v1421
        %v1467 = vmul.f32 %v1450, %v1422
        %v1468 = vmul.f32 %v1450, %v1423
        %v1469 = vmul.f32 %v1450, %v1424
        %v1470 = vmul.f32 %v1450, %v1425
        %v1471 = vmul.f32 %v1450, %v1426
        %v1472 = vmul.f32 %v1450, %v1427
        %v1473 = vmul.f32 %v1450, %v1428
        %v1474 = vmul.f32 %v1450, %v1429
        %v1475 = vmul.f32 %v1450, %v1430
        %v1476 = vmul.f32 %v1450, %v1431
        %v1477 = vmul.f32 %v1450, %v1432
        %v1478 = vmul.f32 %v1450, %v1433
        %v1479 = vmul.f32 %v1450, %v1434
        %v1480 = vmul.f32 %v1450, %v1435
        %v1481 = vmul.f32 %v1450, %v1436
        %v1482 = vmul.f32 %v1450, %v1437
        %v1483 = vmul.f32 %v1450, %v1438
        %v1484 = vmul.f32 %v1450, %v1439
        %v1485 = vmul.f32 %v1450, %v1440
        %v1486 = vmul.f32 %v1450, %v1441
        %v1487 = vmul.f32 %v1450, %v1442
        %v1488 = vmul.f32 %v1450, %v1443
        %v1489 = vmul.f32 %v1450, %v1444
        %v1490 = vmul.f32 %v1450, %v1445
        %v1491 = vmul.f32 %v1450, %v1446
        %v1492 = vmul.f32 %v1450, %v1447
        %v1493 = vmul.f32 %v1450, %v1448
        %v1494 = vmul.f32 %v1450, %v1449
        %v1495 = vadd.f32 %v1361, %v1451
        %v1496 = vadd.f32 %v1362, %v1452
        %v1497 = vadd.f32 %v1363, %v1453
        %v1498 = vadd.f32 %v1364, %v1454
        %v1499 = vadd.f32 %v1365, %v1455
        %v1500 = vadd.f32 %v1366, %v1456
        %v1501 = vadd.f32 %v1367, %v1457
        %v1502 = vadd.f32 %v1368, %v1458
        %v1503 = vadd.f32 %v1369, %v1459
        %v1504 = vadd.f32 %v1370, %v1460
        %v1505 = vadd.f32 %v1371, %v1461
        %v1506 = vadd.f32 %v1372, %v1462
        %v1507 = vadd.f32 %v1373, %v1463
        %v1508 = vadd.f32 %v1374, %v1464
        %v1509 = vadd.f32 %v1375, %v1465
        %v1510 = vadd.f32 %v1376, %v1466
        %v1511 = vadd.f32 %v1377, %v1467
        %v1512 = vadd.f32 %v1378, %v1468
        %v1513 = vadd.f32 %v1379, %v1469
        %v1514 = vadd.f32 %v1380, %v1470
        %v1515 = vadd.f32 %v1381, %v1471
        %v1516 = vadd.f32 %v1382, %v1472
        %v1517 = vadd.f32 %v1383, %v1473
        %v1518 = vadd.f32 %v1384, %v1474
        %v1519 = vadd.f32 %v1385, %v1475
        %v1520 = vadd.f32 %v1386, %v1476
        %v1521 = vadd.f32 %v1387, %v1477
        %v1522 = vadd.f32 %v1388, %v1478
        %v1523 = vadd.f32 %v1389, %v1479
        %v1524 = vadd.f32 %v1390, %v1480
        %v1525 = vadd.f32 %v1391, %v1481
        %v1526 = vadd.f32 %v1392, %v1482
        %v1527 = vadd.f32 %v1393, %v1483
        %v1528 = vadd.f32 %v1394, %v1484
        %v1529 = vadd.f32 %v1395, %v1485
        %v1530 = vadd.f32 %v1396, %v1486
        %v1531 = vadd.f32 %v1397, %v1487
        %v1532 = vadd.f32 %v1398, %v1488
        %v1533 = vadd.f32 %v1399, %v1489
        %v1534 = vadd.f32 %v1400, %v1490
        %v1535 = vadd.f32 %v1401, %v1491
        %v1536 = vadd.f32 %v1402, %v1492
        %v1537 = vadd.f32 %v1403, %v1493
        %v1538 = vadd.f32 %v1404, %v1494
        %s1539 = sld [smem:[#allocation5 + %s1121]]
        %v1540 = vstv %s1539
        %v1541 = vmul.f32 %v1540, %v1406
        %v1542 = vmul.f32 %v1540, %v1407
        %v1543 = vmul.f32 %v1540, %v1408
        %v1544 = vmul.f32 %v1540, %v1409
        %v1545 = vmul.f32 %v1540, %v1410
        %v1546 = vmul.f32 %v1540, %v1411
        %v1547 = vmul.f32 %v1540, %v1412
        %v1548 = vmul.f32 %v1540, %v1413
        %v1549 = vmul.f32 %v1540, %v1414
        %v1550 = vmul.f32 %v1540, %v1415
        %v1551 = vmul.f32 %v1540, %v1416
        %v1552 = vmul.f32 %v1540, %v1417
        %v1553 = vmul.f32 %v1540, %v1418
        %v1554 = vmul.f32 %v1540, %v1419
        %v1555 = vmul.f32 %v1540, %v1420
        %v1556 = vmul.f32 %v1540, %v1421
        %v1557 = vmul.f32 %v1540, %v1422
        %v1558 = vmul.f32 %v1540, %v1423
        %v1559 = vmul.f32 %v1540, %v1424
        %v1560 = vmul.f32 %v1540, %v1425
        %v1561 = vmul.f32 %v1540, %v1426
        %v1562 = vmul.f32 %v1540, %v1427
        %v1563 = vmul.f32 %v1540, %v1428
        %v1564 = vmul.f32 %v1540, %v1429
        %v1565 = vmul.f32 %v1540, %v1430
        %v1566 = vmul.f32 %v1540, %v1431
        %v1567 = vmul.f32 %v1540, %v1432
        %v1568 = vmul.f32 %v1540, %v1433
        %v1569 = vmul.f32 %v1540, %v1434
        %v1570 = vmul.f32 %v1540, %v1435
        %v1571 = vmul.f32 %v1540, %v1436
        %v1572 = vmul.f32 %v1540, %v1437
        %v1573 = vmul.f32 %v1540, %v1438
        %v1574 = vmul.f32 %v1540, %v1439
        %v1575 = vmul.f32 %v1540, %v1440
        %v1576 = vmul.f32 %v1540, %v1441
        %v1577 = vmul.f32 %v1540, %v1442
        %v1578 = vmul.f32 %v1540, %v1443
        %v1579 = vmul.f32 %v1540, %v1444
        %v1580 = vmul.f32 %v1540, %v1445
        %v1581 = vmul.f32 %v1540, %v1446
        %v1582 = vmul.f32 %v1540, %v1447
        %v1583 = vmul.f32 %v1540, %v1448
        %v1584 = vmul.f32 %v1540, %v1449
        %1629 = vrot.lane.b32.xlu0 %v1541, 127
        %v1630 = vpop.permute.xlu0 %1629
        %1631 = vrot.lane.b32.xlu0 %v1542, 127
        %v1632 = vpop.permute.xlu0 %1631
        %1633 = vrot.lane.b32.xlu0 %v1543, 127
        %v1634 = vpop.permute.xlu0 %1633
        %1635 = vrot.lane.b32.xlu0 %v1544, 127
        %v1636 = vpop.permute.xlu0 %1635
        %1637 = vrot.lane.b32.xlu0 %v1545, 127
        %v1638 = vpop.permute.xlu0 %1637
        %1639 = vrot.lane.b32.xlu0 %v1546, 127
        %v1640 = vpop.permute.xlu0 %1639
        %1641 = vrot.lane.b32.xlu0 %v1547, 127
        %v1642 = vpop.permute.xlu0 %1641
        %1643 = vrot.lane.b32.xlu0 %v1548, 127
        %v1644 = vpop.permute.xlu0 %1643
        %1645 = vrot.lane.b32.xlu0 %v1549, 127
        %v1646 = vpop.permute.xlu0 %1645
        %1647 = vrot.lane.b32.xlu0 %v1550, 127
        %v1648 = vpop.permute.xlu0 %1647
        %1649 = vrot.lane.b32.xlu0 %v1551, 127
        %v1650 = vpop.permute.xlu0 %1649
        %1651 = vrot.lane.b32.xlu0 %v1552, 127
        %v1652 = vpop.permute.xlu0 %1651
        %1653 = vrot.lane.b32.xlu0 %v1553, 127
        %v1654 = vpop.permute.xlu0 %1653
        %1655 = vrot.lane.b32.xlu0 %v1554, 127
        %v1656 = vpop.permute.xlu0 %1655
        %1657 = vrot.lane.b32.xlu0 %v1555, 127
        %v1658 = vpop.permute.xlu0 %1657
        %1659 = vrot.lane.b32.xlu0 %v1556, 127
        %v1660 = vpop.permute.xlu0 %1659
        %1661 = vrot.lane.b32.xlu0 %v1557, 127
        %v1662 = vpop.permute.xlu0 %1661
        %1663 = vrot.lane.b32.xlu0 %v1558, 127
        %v1664 = vpop.permute.xlu0 %1663
        %1665 = vrot.lane.b32.xlu0 %v1559, 127
        %v1666 = vpop.permute.xlu0 %1665
        %1667 = vrot.lane.b32.xlu0 %v1560, 127
        %v1668 = vpop.permute.xlu0 %1667
        %1669 = vrot.lane.b32.xlu0 %v1561, 127
        %v1670 = vpop.permute.xlu0 %1669
        %1671 = vrot.lane.b32.xlu0 %v1562, 127
        %v1672 = vpop.permute.xlu0 %1671
        %1673 = vrot.lane.b32.xlu0 %v1563, 127
        %v1674 = vpop.permute.xlu0 %1673
        %1675 = vrot.lane.b32.xlu0 %v1564, 127
        %v1676 = vpop.permute.xlu0 %1675
        %1677 = vrot.lane.b32.xlu0 %v1565, 127
        %v1678 = vpop.permute.xlu0 %1677
        %1679 = vrot.lane.b32.xlu0 %v1566, 127
        %v1680 = vpop.permute.xlu0 %1679
        %1681 = vrot.lane.b32.xlu0 %v1567, 127
        %v1682 = vpop.permute.xlu0 %1681
        %1683 = vrot.lane.b32.xlu0 %v1568, 127
        %v1684 = vpop.permute.xlu0 %1683
        %1685 = vrot.lane.b32.xlu0 %v1569, 127
        %v1686 = vpop.permute.xlu0 %1685
        %1687 = vrot.lane.b32.xlu0 %v1570, 127
        %v1688 = vpop.permute.xlu0 %1687
        %1689 = vrot.lane.b32.xlu0 %v1571, 127
        %v1690 = vpop.permute.xlu0 %1689
        %1691 = vrot.lane.b32.xlu0 %v1572, 127
        %v1692 = vpop.permute.xlu0 %1691
        %1693 = vrot.lane.b32.xlu0 %v1573, 127
        %v1694 = vpop.permute.xlu0 %1693
        %1695 = vrot.lane.b32.xlu0 %v1574, 127
        %v1696 = vpop.permute.xlu0 %1695
        %1697 = vrot.lane.b32.xlu0 %v1575, 127
        %v1698 = vpop.permute.xlu0 %1697
        %1699 = vrot.lane.b32.xlu0 %v1576, 127
        %v1700 = vpop.permute.xlu0 %1699
        %1701 = vrot.lane.b32.xlu0 %v1577, 127
        %v1702 = vpop.permute.xlu0 %1701
        %1703 = vrot.lane.b32.xlu0 %v1578, 127
        %v1704 = vpop.permute.xlu0 %1703
        %1705 = vrot.lane.b32.xlu0 %v1579, 127
        %v1706 = vpop.permute.xlu0 %1705
        %1707 = vrot.lane.b32.xlu0 %v1580, 127
        %v1708 = vpop.permute.xlu0 %1707
        %1709 = vrot.lane.b32.xlu0 %v1581, 127
        %v1710 = vpop.permute.xlu0 %1709
        %1711 = vrot.lane.b32.xlu0 %v1582, 127
        %v1712 = vpop.permute.xlu0 %1711
        %1713 = vrot.lane.b32.xlu0 %v1583, 127
        %v1714 = vpop.permute.xlu0 %1713
        %1715 = vrot.lane.b32.xlu0 %v1584, 127
        %v1716 = vpop.permute.xlu0 %1715
        %v1761 = vadd.f32 %v1495, %v1630
        %v1762 = vadd.f32 %v1496, %v1632
        %v1763 = vadd.f32 %v1497, %v1634
        %v1764 = vadd.f32 %v1498, %v1636
        %v1765 = vadd.f32 %v1499, %v1638
        %v1766 = vadd.f32 %v1500, %v1640
        %v1767 = vadd.f32 %v1501, %v1642
        %v1768 = vadd.f32 %v1502, %v1644
        %v1769 = vadd.f32 %v1503, %v1646
        %v1770 = vadd.f32 %v1504, %v1648
        %v1771 = vadd.f32 %v1505, %v1650
        %v1772 = vadd.f32 %v1506, %v1652
        %v1773 = vadd.f32 %v1507, %v1654
        %v1774 = vadd.f32 %v1508, %v1656
        %v1775 = vadd.f32 %v1509, %v1658
        %v1776 = vadd.f32 %v1510, %v1660
        %v1777 = vadd.f32 %v1511, %v1662
        %v1778 = vadd.f32 %v1512, %v1664
        %v1779 = vadd.f32 %v1513, %v1666
        %v1780 = vadd.f32 %v1514, %v1668
        %v1781 = vadd.f32 %v1515, %v1670
        %v1782 = vadd.f32 %v1516, %v1672
        %v1783 = vadd.f32 %v1517, %v1674
        %v1784 = vadd.f32 %v1518, %v1676
        %v1785 = vadd.f32 %v1519, %v1678
        %v1786 = vadd.f32 %v1520, %v1680
        %v1787 = vadd.f32 %v1521, %v1682
        %v1788 = vadd.f32 %v1522, %v1684
        %v1789 = vadd.f32 %v1523, %v1686
        %v1790 = vadd.f32 %v1524, %v1688
        %v1791 = vadd.f32 %v1525, %v1690
        %v1792 = vadd.f32 %v1526, %v1692
        %v1793 = vadd.f32 %v1527, %v1694
        %v1794 = vadd.f32 %v1528, %v1696
        %v1795 = vadd.f32 %v1529, %v1698
        %v1796 = vadd.f32 %v1530, %v1700
        %v1797 = vadd.f32 %v1531, %v1702
        %v1798 = vadd.f32 %v1532, %v1704
        %v1799 = vadd.f32 %v1533, %v1706
        %v1800 = vadd.f32 %v1534, %v1708
        %v1801 = vadd.f32 %v1535, %v1710
        %v1802 = vadd.f32 %v1536, %v1712
        %v1803 = vadd.f32 %v1537, %v1714
        %v1804 = vadd.f32 %v1538, %v1716
        %s1805 = sld [smem:[#allocation5 + %s1137]]
        %v1806 = vstv %s1805
        %v1807 = vmul.f32 %v1806, %v1406
        %v1808 = vmul.f32 %v1806, %v1407
        %v1809 = vmul.f32 %v1806, %v1408
        %v1810 = vmul.f32 %v1806, %v1409
        %v1811 = vmul.f32 %v1806, %v1410
        %v1812 = vmul.f32 %v1806, %v1411
        %v1813 = vmul.f32 %v1806, %v1412
        %v1814 = vmul.f32 %v1806, %v1413
        %v1815 = vmul.f32 %v1806, %v1414
        %v1816 = vmul.f32 %v1806, %v1415
        %v1817 = vmul.f32 %v1806, %v1416
        %v1818 = vmul.f32 %v1806, %v1417
        %v1819 = vmul.f32 %v1806, %v1418
        %v1820 = vmul.f32 %v1806, %v1419
        %v1821 = vmul.f32 %v1806, %v1420
        %v1822 = vmul.f32 %v1806, %v1421
        %v1823 = vmul.f32 %v1806, %v1422
        %v1824 = vmul.f32 %v1806, %v1423
        %v1825 = vmul.f32 %v1806, %v1424
        %v1826 = vmul.f32 %v1806, %v1425
        %v1827 = vmul.f32 %v1806, %v1426
        %v1828 = vmul.f32 %v1806, %v1427
        %v1829 = vmul.f32 %v1806, %v1428
        %v1830 = vmul.f32 %v1806, %v1429
        %v1831 = vmul.f32 %v1806, %v1430
        %v1832 = vmul.f32 %v1806, %v1431
        %v1833 = vmul.f32 %v1806, %v1432
        %v1834 = vmul.f32 %v1806, %v1433
        %v1835 = vmul.f32 %v1806, %v1434
        %v1836 = vmul.f32 %v1806, %v1435
        %v1837 = vmul.f32 %v1806, %v1436
        %v1838 = vmul.f32 %v1806, %v1437
        %v1839 = vmul.f32 %v1806, %v1438
        %v1840 = vmul.f32 %v1806, %v1439
        %v1841 = vmul.f32 %v1806, %v1440
        %v1842 = vmul.f32 %v1806, %v1441
        %v1843 = vmul.f32 %v1806, %v1442
        %v1844 = vmul.f32 %v1806, %v1443
        %v1845 = vmul.f32 %v1806, %v1444
        %v1846 = vmul.f32 %v1806, %v1445
        %v1847 = vmul.f32 %v1806, %v1446
        %v1848 = vmul.f32 %v1806, %v1447
        %v1849 = vmul.f32 %v1806, %v1448
        %v1850 = vmul.f32 %v1806, %v1449
        %1895 = vrot.lane.b32.xlu0 %v1807, 126
        %v1896 = vpop.permute.xlu0 %1895
        %1897 = vrot.lane.b32.xlu0 %v1808, 126
        %v1898 = vpop.permute.xlu0 %1897
        %1899 = vrot.lane.b32.xlu0 %v1809, 126
        %v1900 = vpop.permute.xlu0 %1899
        %1901 = vrot.lane.b32.xlu0 %v1810, 126
        %v1902 = vpop.permute.xlu0 %1901
        %1903 = vrot.lane.b32.xlu0 %v1811, 126
        %v1904 = vpop.permute.xlu0 %1903
        %1905 = vrot.lane.b32.xlu0 %v1812, 126
        %v1906 = vpop.permute.xlu0 %1905
        %1907 = vrot.lane.b32.xlu0 %v1813, 126
        %v1908 = vpop.permute.xlu0 %1907
        %1909 = vrot.lane.b32.xlu0 %v1814, 126
        %v1910 = vpop.permute.xlu0 %1909
        %1911 = vrot.lane.b32.xlu0 %v1815, 126
        %v1912 = vpop.permute.xlu0 %1911
        %1913 = vrot.lane.b32.xlu0 %v1816, 126
        %v1914 = vpop.permute.xlu0 %1913
        %1915 = vrot.lane.b32.xlu0 %v1817, 126
        %v1916 = vpop.permute.xlu0 %1915
        %1917 = vrot.lane.b32.xlu0 %v1818, 126
        %v1918 = vpop.permute.xlu0 %1917
        %1919 = vrot.lane.b32.xlu0 %v1819, 126
        %v1920 = vpop.permute.xlu0 %1919
        %1921 = vrot.lane.b32.xlu0 %v1820, 126
        %v1922 = vpop.permute.xlu0 %1921
        %1923 = vrot.lane.b32.xlu0 %v1821, 126
        %v1924 = vpop.permute.xlu0 %1923
        %1925 = vrot.lane.b32.xlu0 %v1822, 126
        %v1926 = vpop.permute.xlu0 %1925
        %1927 = vrot.lane.b32.xlu0 %v1823, 126
        %v1928 = vpop.permute.xlu0 %1927
        %1929 = vrot.lane.b32.xlu0 %v1824, 126
        %v1930 = vpop.permute.xlu0 %1929
        %1931 = vrot.lane.b32.xlu0 %v1825, 126
        %v1932 = vpop.permute.xlu0 %1931
        %1933 = vrot.lane.b32.xlu0 %v1826, 126
        %v1934 = vpop.permute.xlu0 %1933
        %1935 = vrot.lane.b32.xlu0 %v1827, 126
        %v1936 = vpop.permute.xlu0 %1935
        %1937 = vrot.lane.b32.xlu0 %v1828, 126
        %v1938 = vpop.permute.xlu0 %1937
        %1939 = vrot.lane.b32.xlu0 %v1829, 126
        %v1940 = vpop.permute.xlu0 %1939
        %1941 = vrot.lane.b32.xlu0 %v1830, 126
        %v1942 = vpop.permute.xlu0 %1941
        %1943 = vrot.lane.b32.xlu0 %v1831, 126
        %v1944 = vpop.permute.xlu0 %1943
        %1945 = vrot.lane.b32.xlu0 %v1832, 126
        %v1946 = vpop.permute.xlu0 %1945
        %1947 = vrot.lane.b32.xlu0 %v1833, 126
        %v1948 = vpop.permute.xlu0 %1947
        %1949 = vrot.lane.b32.xlu0 %v1834, 126
        %v1950 = vpop.permute.xlu0 %1949
        %1951 = vrot.lane.b32.xlu0 %v1835, 126
        %v1952 = vpop.permute.xlu0 %1951
        %1953 = vrot.lane.b32.xlu0 %v1836, 126
        %v1954 = vpop.permute.xlu0 %1953
        %1955 = vrot.lane.b32.xlu0 %v1837, 126
        %v1956 = vpop.permute.xlu0 %1955
        %1957 = vrot.lane.b32.xlu0 %v1838, 126
        %v1958 = vpop.permute.xlu0 %1957
        %1959 = vrot.lane.b32.xlu0 %v1839, 126
        %v1960 = vpop.permute.xlu0 %1959
        %1961 = vrot.lane.b32.xlu0 %v1840, 126
        %v1962 = vpop.permute.xlu0 %1961
        %1963 = vrot.lane.b32.xlu0 %v1841, 126
        %v1964 = vpop.permute.xlu0 %1963
        %1965 = vrot.lane.b32.xlu0 %v1842, 126
        %v1966 = vpop.permute.xlu0 %1965
        %1967 = vrot.lane.b32.xlu0 %v1843, 126
        %v1968 = vpop.permute.xlu0 %1967
        %1969 = vrot.lane.b32.xlu0 %v1844, 126
        %v1970 = vpop.permute.xlu0 %1969
        %1971 = vrot.lane.b32.xlu0 %v1845, 126
        %v1972 = vpop.permute.xlu0 %1971
        %1973 = vrot.lane.b32.xlu0 %v1846, 126
        %v1974 = vpop.permute.xlu0 %1973
        %1975 = vrot.lane.b32.xlu0 %v1847, 126
        %v1976 = vpop.permute.xlu0 %1975
        %1977 = vrot.lane.b32.xlu0 %v1848, 126
        %v1978 = vpop.permute.xlu0 %1977
        %1979 = vrot.lane.b32.xlu0 %v1849, 126
        %v1980 = vpop.permute.xlu0 %1979
        %1981 = vrot.lane.b32.xlu0 %v1850, 126
        %v1982 = vpop.permute.xlu0 %1981
        %v2027 = vadd.f32 %v1761, %v1896
        %v2028 = vadd.f32 %v1762, %v1898
        %v2029 = vadd.f32 %v1763, %v1900
        %v2030 = vadd.f32 %v1764, %v1902
        %v2031 = vadd.f32 %v1765, %v1904
        %v2032 = vadd.f32 %v1766, %v1906
        %v2033 = vadd.f32 %v1767, %v1908
        %v2034 = vadd.f32 %v1768, %v1910
        %v2035 = vadd.f32 %v1769, %v1912
        %v2036 = vadd.f32 %v1770, %v1914
        %v2037 = vadd.f32 %v1771, %v1916
        %v2038 = vadd.f32 %v1772, %v1918
        %v2039 = vadd.f32 %v1773, %v1920
        %v2040 = vadd.f32 %v1774, %v1922
        %v2041 = vadd.f32 %v1775, %v1924
        %v2042 = vadd.f32 %v1776, %v1926
        %v2043 = vadd.f32 %v1777, %v1928
        %v2044 = vadd.f32 %v1778, %v1930
        %v2045 = vadd.f32 %v1779, %v1932
        %v2046 = vadd.f32 %v1780, %v1934
        %v2047 = vadd.f32 %v1781, %v1936
        %v2048 = vadd.f32 %v1782, %v1938
        %v2049 = vadd.f32 %v1783, %v1940
        %v2050 = vadd.f32 %v1784, %v1942
        %v2051 = vadd.f32 %v1785, %v1944
        %v2052 = vadd.f32 %v1786, %v1946
        %v2053 = vadd.f32 %v1787, %v1948
        %v2054 = vadd.f32 %v1788, %v1950
        %v2055 = vadd.f32 %v1789, %v1952
        %v2056 = vadd.f32 %v1790, %v1954
        %v2057 = vadd.f32 %v1791, %v1956
        %v2058 = vadd.f32 %v1792, %v1958
        %v2059 = vadd.f32 %v1793, %v1960
        %v2060 = vadd.f32 %v1794, %v1962
        %v2061 = vadd.f32 %v1795, %v1964
        %v2062 = vadd.f32 %v1796, %v1966
        %v2063 = vadd.f32 %v1797, %v1968
        %v2064 = vadd.f32 %v1798, %v1970
        %v2065 = vadd.f32 %v1799, %v1972
        %v2066 = vadd.f32 %v1800, %v1974
        %v2067 = vadd.f32 %v1801, %v1976
        %v2068 = vadd.f32 %v1802, %v1978
        %v2069 = vadd.f32 %v1803, %v1980
        %v2070 = vadd.f32 %v1804, %v1982
        %s2071 = sld [smem:[#allocation5 + %s1153]]
        %v2072 = vstv %s2071
        %v2073 = vmul.f32 %v2072, %v1406
        %v2074 = vmul.f32 %v2072, %v1407
        %v2075 = vmul.f32 %v2072, %v1408
        %v2076 = vmul.f32 %v2072, %v1409
        %v2077 = vmul.f32 %v2072, %v1410
        %v2078 = vmul.f32 %v2072, %v1411
        %v2079 = vmul.f32 %v2072, %v1412
        %v2080 = vmul.f32 %v2072, %v1413
        %v2081 = vmul.f32 %v2072, %v1414
        %v2082 = vmul.f32 %v2072, %v1415
        %v2083 = vmul.f32 %v2072, %v1416
        %v2084 = vmul.f32 %v2072, %v1417
        %v2085 = vmul.f32 %v2072, %v1418
        %v2086 = vmul.f32 %v2072, %v1419
        %v2087 = vmul.f32 %v2072, %v1420
        %v2088 = vmul.f32 %v2072, %v1421
        %v2089 = vmul.f32 %v2072, %v1422
        %v2090 = vmul.f32 %v2072, %v1423
        %v2091 = vmul.f32 %v2072, %v1424
        %v2092 = vmul.f32 %v2072, %v1425
        %v2093 = vmul.f32 %v2072, %v1426
        %v2094 = vmul.f32 %v2072, %v1427
        %v2095 = vmul.f32 %v2072, %v1428
        %v2096 = vmul.f32 %v2072, %v1429
        %v2097 = vmul.f32 %v2072, %v1430
        %v2098 = vmul.f32 %v2072, %v1431
        %v2099 = vmul.f32 %v2072, %v1432
        %v2100 = vmul.f32 %v2072, %v1433
        %v2101 = vmul.f32 %v2072, %v1434
        %v2102 = vmul.f32 %v2072, %v1435
        %v2103 = vmul.f32 %v2072, %v1436
        %v2104 = vmul.f32 %v2072, %v1437
        %v2105 = vmul.f32 %v2072, %v1438
        %v2106 = vmul.f32 %v2072, %v1439
        %v2107 = vmul.f32 %v2072, %v1440
        %v2108 = vmul.f32 %v2072, %v1441
        %v2109 = vmul.f32 %v2072, %v1442
        %v2110 = vmul.f32 %v2072, %v1443
        %v2111 = vmul.f32 %v2072, %v1444
        %v2112 = vmul.f32 %v2072, %v1445
        %v2113 = vmul.f32 %v2072, %v1446
        %v2114 = vmul.f32 %v2072, %v1447
        %v2115 = vmul.f32 %v2072, %v1448
        %v2116 = vmul.f32 %v2072, %v1449
        %2161 = vrot.lane.b32.xlu0 %v2073, 125
        %v2162 = vpop.permute.xlu0 %2161
        %2163 = vrot.lane.b32.xlu0 %v2074, 125
        %v2164 = vpop.permute.xlu0 %2163
        %2165 = vrot.lane.b32.xlu0 %v2075, 125
        %v2166 = vpop.permute.xlu0 %2165
        %2167 = vrot.lane.b32.xlu0 %v2076, 125
        %v2168 = vpop.permute.xlu0 %2167
        %2169 = vrot.lane.b32.xlu0 %v2077, 125
        %v2170 = vpop.permute.xlu0 %2169
        %2171 = vrot.lane.b32.xlu0 %v2078, 125
        %v2172 = vpop.permute.xlu0 %2171
        %2173 = vrot.lane.b32.xlu0 %v2079, 125
        %v2174 = vpop.permute.xlu0 %2173
        %2175 = vrot.lane.b32.xlu0 %v2080, 125
        %v2176 = vpop.permute.xlu0 %2175
        %2177 = vrot.lane.b32.xlu0 %v2081, 125
        %v2178 = vpop.permute.xlu0 %2177
        %2179 = vrot.lane.b32.xlu0 %v2082, 125
        %v2180 = vpop.permute.xlu0 %2179
        %2181 = vrot.lane.b32.xlu0 %v2083, 125
        %v2182 = vpop.permute.xlu0 %2181
        %2183 = vrot.lane.b32.xlu0 %v2084, 125
        %v2184 = vpop.permute.xlu0 %2183
        %2185 = vrot.lane.b32.xlu0 %v2085, 125
        %v2186 = vpop.permute.xlu0 %2185
        %2187 = vrot.lane.b32.xlu0 %v2086, 125
        %v2188 = vpop.permute.xlu0 %2187
        %2189 = vrot.lane.b32.xlu0 %v2087, 125
        %v2190 = vpop.permute.xlu0 %2189
        %2191 = vrot.lane.b32.xlu0 %v2088, 125
        %v2192 = vpop.permute.xlu0 %2191
        %2193 = vrot.lane.b32.xlu0 %v2089, 125
        %v2194 = vpop.permute.xlu0 %2193
        %2195 = vrot.lane.b32.xlu0 %v2090, 125
        %v2196 = vpop.permute.xlu0 %2195
        %2197 = vrot.lane.b32.xlu0 %v2091, 125
        %v2198 = vpop.permute.xlu0 %2197
        %2199 = vrot.lane.b32.xlu0 %v2092, 125
        %v2200 = vpop.permute.xlu0 %2199
        %2201 = vrot.lane.b32.xlu0 %v2093, 125
        %v2202 = vpop.permute.xlu0 %2201
        %2203 = vrot.lane.b32.xlu0 %v2094, 125
        %v2204 = vpop.permute.xlu0 %2203
        %2205 = vrot.lane.b32.xlu0 %v2095, 125
        %v2206 = vpop.permute.xlu0 %2205
        %2207 = vrot.lane.b32.xlu0 %v2096, 125
        %v2208 = vpop.permute.xlu0 %2207
        %2209 = vrot.lane.b32.xlu0 %v2097, 125
        %v2210 = vpop.permute.xlu0 %2209
        %2211 = vrot.lane.b32.xlu0 %v2098, 125
        %v2212 = vpop.permute.xlu0 %2211
        %2213 = vrot.lane.b32.xlu0 %v2099, 125
        %v2214 = vpop.permute.xlu0 %2213
        %2215 = vrot.lane.b32.xlu0 %v2100, 125
        %v2216 = vpop.permute.xlu0 %2215
        %2217 = vrot.lane.b32.xlu0 %v2101, 125
        %v2218 = vpop.permute.xlu0 %2217
        %2219 = vrot.lane.b32.xlu0 %v2102, 125
        %v2220 = vpop.permute.xlu0 %2219
        %2221 = vrot.lane.b32.xlu0 %v2103, 125
        %v2222 = vpop.permute.xlu0 %2221
        %2223 = vrot.lane.b32.xlu0 %v2104, 125
        %v2224 = vpop.permute.xlu0 %2223
        %2225 = vrot.lane.b32.xlu0 %v2105, 125
        %v2226 = vpop.permute.xlu0 %2225
        %2227 = vrot.lane.b32.xlu0 %v2106, 125
        %v2228 = vpop.permute.xlu0 %2227
        %2229 = vrot.lane.b32.xlu0 %v2107, 125
        %v2230 = vpop.permute.xlu0 %2229
        %2231 = vrot.lane.b32.xlu0 %v2108, 125
        %v2232 = vpop.permute.xlu0 %2231
        %2233 = vrot.lane.b32.xlu0 %v2109, 125
        %v2234 = vpop.permute.xlu0 %2233
        %2235 = vrot.lane.b32.xlu0 %v2110, 125
        %v2236 = vpop.permute.xlu0 %2235
        %2237 = vrot.lane.b32.xlu0 %v2111, 125
        %v2238 = vpop.permute.xlu0 %2237
        %2239 = vrot.lane.b32.xlu0 %v2112, 125
        %v2240 = vpop.permute.xlu0 %2239
        %2241 = vrot.lane.b32.xlu0 %v2113, 125
        %v2242 = vpop.permute.xlu0 %2241
        %2243 = vrot.lane.b32.xlu0 %v2114, 125
        %v2244 = vpop.permute.xlu0 %2243
        %2245 = vrot.lane.b32.xlu0 %v2115, 125
        %v2246 = vpop.permute.xlu0 %2245
        %2247 = vrot.lane.b32.xlu0 %v2116, 125
        %v2248 = vpop.permute.xlu0 %2247
        %v2293 = vadd.f32 %v2027, %v2162
        %v2294 = vadd.f32 %v2028, %v2164
        %v2295 = vadd.f32 %v2029, %v2166
        %v2296 = vadd.f32 %v2030, %v2168
        %v2297 = vadd.f32 %v2031, %v2170
        %v2298 = vadd.f32 %v2032, %v2172
        %v2299 = vadd.f32 %v2033, %v2174
        %v2300 = vadd.f32 %v2034, %v2176
        %v2301 = vadd.f32 %v2035, %v2178
        %v2302 = vadd.f32 %v2036, %v2180
        %v2303 = vadd.f32 %v2037, %v2182
        %v2304 = vadd.f32 %v2038, %v2184
        %v2305 = vadd.f32 %v2039, %v2186
        %v2306 = vadd.f32 %v2040, %v2188
        %v2307 = vadd.f32 %v2041, %v2190
        %v2308 = vadd.f32 %v2042, %v2192
        %v2309 = vadd.f32 %v2043, %v2194
        %v2310 = vadd.f32 %v2044, %v2196
        %v2311 = vadd.f32 %v2045, %v2198
        %v2312 = vadd.f32 %v2046, %v2200
        %v2313 = vadd.f32 %v2047, %v2202
        %v2314 = vadd.f32 %v2048, %v2204
        %v2315 = vadd.f32 %v2049, %v2206
        %v2316 = vadd.f32 %v2050, %v2208
        %v2317 = vadd.f32 %v2051, %v2210
        %v2318 = vadd.f32 %v2052, %v2212
        %v2319 = vadd.f32 %v2053, %v2214
        %v2320 = vadd.f32 %v2054, %v2216
        %v2321 = vadd.f32 %v2055, %v2218
        %v2322 = vadd.f32 %v2056, %v2220
        %v2323 = vadd.f32 %v2057, %v2222
        %v2324 = vadd.f32 %v2058, %v2224
        %v2325 = vadd.f32 %v2059, %v2226
        %v2326 = vadd.f32 %v2060, %v2228
        %v2327 = vadd.f32 %v2061, %v2230
        %v2328 = vadd.f32 %v2062, %v2232
        %v2329 = vadd.f32 %v2063, %v2234
        %v2330 = vadd.f32 %v2064, %v2236
        %v2331 = vadd.f32 %v2065, %v2238
        %v2332 = vadd.f32 %v2066, %v2240
        %v2333 = vadd.f32 %v2067, %v2242
        %v2334 = vadd.f32 %v2068, %v2244
        %v2335 = vadd.f32 %v2069, %v2246
        %v2336 = vadd.f32 %v2070, %v2248
        %s2337 = sld [smem:[#allocation5 + %s1169]]
        %v2338 = vstv %s2337
        %v2339 = vmul.f32 %v2338, %v1406
        %v2340 = vmul.f32 %v2338, %v1407
        %v2341 = vmul.f32 %v2338, %v1408
        %v2342 = vmul.f32 %v2338, %v1409
        %v2343 = vmul.f32 %v2338, %v1410
        %v2344 = vmul.f32 %v2338, %v1411
        %v2345 = vmul.f32 %v2338, %v1412
        %v2346 = vmul.f32 %v2338, %v1413
        %v2347 = vmul.f32 %v2338, %v1414
        %v2348 = vmul.f32 %v2338, %v1415
        %v2349 = vmul.f32 %v2338, %v1416
        %v2350 = vmul.f32 %v2338, %v1417
        %v2351 = vmul.f32 %v2338, %v1418
        %v2352 = vmul.f32 %v2338, %v1419
        %v2353 = vmul.f32 %v2338, %v1420
        %v2354 = vmul.f32 %v2338, %v1421
        %v2355 = vmul.f32 %v2338, %v1422
        %v2356 = vmul.f32 %v2338, %v1423
        %v2357 = vmul.f32 %v2338, %v1424
        %v2358 = vmul.f32 %v2338, %v1425
        %v2359 = vmul.f32 %v2338, %v1426
        %v2360 = vmul.f32 %v2338, %v1427
        %v2361 = vmul.f32 %v2338, %v1428
        %v2362 = vmul.f32 %v2338, %v1429
        %v2363 = vmul.f32 %v2338, %v1430
        %v2364 = vmul.f32 %v2338, %v1431
        %v2365 = vmul.f32 %v2338, %v1432
        %v2366 = vmul.f32 %v2338, %v1433
        %v2367 = vmul.f32 %v2338, %v1434
        %v2368 = vmul.f32 %v2338, %v1435
        %v2369 = vmul.f32 %v2338, %v1436
        %v2370 = vmul.f32 %v2338, %v1437
        %v2371 = vmul.f32 %v2338, %v1438
        %v2372 = vmul.f32 %v2338, %v1439
        %v2373 = vmul.f32 %v2338, %v1440
        %v2374 = vmul.f32 %v2338, %v1441
        %v2375 = vmul.f32 %v2338, %v1442
        %v2376 = vmul.f32 %v2338, %v1443
        %v2377 = vmul.f32 %v2338, %v1444
        %v2378 = vmul.f32 %v2338, %v1445
        %v2379 = vmul.f32 %v2338, %v1446
        %v2380 = vmul.f32 %v2338, %v1447
        %v2381 = vmul.f32 %v2338, %v1448
        %v2382 = vmul.f32 %v2338, %v1449
        %2427 = vrot.lane.b32.xlu0 %v2339, 124
        %v2428 = vpop.permute.xlu0 %2427
        %2429 = vrot.lane.b32.xlu0 %v2340, 124
        %v2430 = vpop.permute.xlu0 %2429
        %2431 = vrot.lane.b32.xlu0 %v2341, 124
        %v2432 = vpop.permute.xlu0 %2431
        %2433 = vrot.lane.b32.xlu0 %v2342, 124
        %v2434 = vpop.permute.xlu0 %2433
        %2435 = vrot.lane.b32.xlu0 %v2343, 124
        %v2436 = vpop.permute.xlu0 %2435
        %2437 = vrot.lane.b32.xlu0 %v2344, 124
        %v2438 = vpop.permute.xlu0 %2437
        %2439 = vrot.lane.b32.xlu0 %v2345, 124
        %v2440 = vpop.permute.xlu0 %2439
        %2441 = vrot.lane.b32.xlu0 %v2346, 124
        %v2442 = vpop.permute.xlu0 %2441
        %2443 = vrot.lane.b32.xlu0 %v2347, 124
        %v2444 = vpop.permute.xlu0 %2443
        %2445 = vrot.lane.b32.xlu0 %v2348, 124
        %v2446 = vpop.permute.xlu0 %2445
        %2447 = vrot.lane.b32.xlu0 %v2349, 124
        %v2448 = vpop.permute.xlu0 %2447
        %2449 = vrot.lane.b32.xlu0 %v2350, 124
        %v2450 = vpop.permute.xlu0 %2449
        %2451 = vrot.lane.b32.xlu0 %v2351, 124
        %v2452 = vpop.permute.xlu0 %2451
        %2453 = vrot.lane.b32.xlu0 %v2352, 124
        %v2454 = vpop.permute.xlu0 %2453
        %2455 = vrot.lane.b32.xlu0 %v2353, 124
        %v2456 = vpop.permute.xlu0 %2455
        %2457 = vrot.lane.b32.xlu0 %v2354, 124
        %v2458 = vpop.permute.xlu0 %2457
        %2459 = vrot.lane.b32.xlu0 %v2355, 124
        %v2460 = vpop.permute.xlu0 %2459
        %2461 = vrot.lane.b32.xlu0 %v2356, 124
        %v2462 = vpop.permute.xlu0 %2461
        %2463 = vrot.lane.b32.xlu0 %v2357, 124
        %v2464 = vpop.permute.xlu0 %2463
        %2465 = vrot.lane.b32.xlu0 %v2358, 124
        %v2466 = vpop.permute.xlu0 %2465
        %2467 = vrot.lane.b32.xlu0 %v2359, 124
        %v2468 = vpop.permute.xlu0 %2467
        %2469 = vrot.lane.b32.xlu0 %v2360, 124
        %v2470 = vpop.permute.xlu0 %2469
        %2471 = vrot.lane.b32.xlu0 %v2361, 124
        %v2472 = vpop.permute.xlu0 %2471
        %2473 = vrot.lane.b32.xlu0 %v2362, 124
        %v2474 = vpop.permute.xlu0 %2473
        %2475 = vrot.lane.b32.xlu0 %v2363, 124
        %v2476 = vpop.permute.xlu0 %2475
        %2477 = vrot.lane.b32.xlu0 %v2364, 124
        %v2478 = vpop.permute.xlu0 %2477
        %2479 = vrot.lane.b32.xlu0 %v2365, 124
        %v2480 = vpop.permute.xlu0 %2479
        %2481 = vrot.lane.b32.xlu0 %v2366, 124
        %v2482 = vpop.permute.xlu0 %2481
        %2483 = vrot.lane.b32.xlu0 %v2367, 124
        %v2484 = vpop.permute.xlu0 %2483
        %2485 = vrot.lane.b32.xlu0 %v2368, 124
        %v2486 = vpop.permute.xlu0 %2485
        %2487 = vrot.lane.b32.xlu0 %v2369, 124
        %v2488 = vpop.permute.xlu0 %2487
        %2489 = vrot.lane.b32.xlu0 %v2370, 124
        %v2490 = vpop.permute.xlu0 %2489
        %2491 = vrot.lane.b32.xlu0 %v2371, 124
        %v2492 = vpop.permute.xlu0 %2491
        %2493 = vrot.lane.b32.xlu0 %v2372, 124
        %v2494 = vpop.permute.xlu0 %2493
        %2495 = vrot.lane.b32.xlu0 %v2373, 124
        %v2496 = vpop.permute.xlu0 %2495
        %2497 = vrot.lane.b32.xlu0 %v2374, 124
        %v2498 = vpop.permute.xlu0 %2497
        %2499 = vrot.lane.b32.xlu0 %v2375, 124
        %v2500 = vpop.permute.xlu0 %2499
        %2501 = vrot.lane.b32.xlu0 %v2376, 124
        %v2502 = vpop.permute.xlu0 %2501
        %2503 = vrot.lane.b32.xlu0 %v2377, 124
        %v2504 = vpop.permute.xlu0 %2503
        %2505 = vrot.lane.b32.xlu0 %v2378, 124
        %v2506 = vpop.permute.xlu0 %2505
        %2507 = vrot.lane.b32.xlu0 %v2379, 124
        %v2508 = vpop.permute.xlu0 %2507
        %2509 = vrot.lane.b32.xlu0 %v2380, 124
        %v2510 = vpop.permute.xlu0 %2509
        %2511 = vrot.lane.b32.xlu0 %v2381, 124
        %v2512 = vpop.permute.xlu0 %2511
        %2513 = vrot.lane.b32.xlu0 %v2382, 124
        %v2514 = vpop.permute.xlu0 %2513
        %v2559 = vadd.f32 %v2293, %v2428
        %v2560 = vadd.f32 %v2294, %v2430
        %v2561 = vadd.f32 %v2295, %v2432
        %v2562 = vadd.f32 %v2296, %v2434
        %v2563 = vadd.f32 %v2297, %v2436
        %v2564 = vadd.f32 %v2298, %v2438
        %v2565 = vadd.f32 %v2299, %v2440
        %v2566 = vadd.f32 %v2300, %v2442
        %v2567 = vadd.f32 %v2301, %v2444
        %v2568 = vadd.f32 %v2302, %v2446
        %v2569 = vadd.f32 %v2303, %v2448
        %v2570 = vadd.f32 %v2304, %v2450
        %v2571 = vadd.f32 %v2305, %v2452
        %v2572 = vadd.f32 %v2306, %v2454
        %v2573 = vadd.f32 %v2307, %v2456
        %v2574 = vadd.f32 %v2308, %v2458
        %v2575 = vadd.f32 %v2309, %v2460
        %v2576 = vadd.f32 %v2310, %v2462
        %v2577 = vadd.f32 %v2311, %v2464
        %v2578 = vadd.f32 %v2312, %v2466
        %v2579 = vadd.f32 %v2313, %v2468
        %v2580 = vadd.f32 %v2314, %v2470
        %v2581 = vadd.f32 %v2315, %v2472
        %v2582 = vadd.f32 %v2316, %v2474
        %v2583 = vadd.f32 %v2317, %v2476
        %v2584 = vadd.f32 %v2318, %v2478
        %v2585 = vadd.f32 %v2319, %v2480
        %v2586 = vadd.f32 %v2320, %v2482
        %v2587 = vadd.f32 %v2321, %v2484
        %v2588 = vadd.f32 %v2322, %v2486
        %v2589 = vadd.f32 %v2323, %v2488
        %v2590 = vadd.f32 %v2324, %v2490
        %v2591 = vadd.f32 %v2325, %v2492
        %v2592 = vadd.f32 %v2326, %v2494
        %v2593 = vadd.f32 %v2327, %v2496
        %v2594 = vadd.f32 %v2328, %v2498
        %v2595 = vadd.f32 %v2329, %v2500
        %v2596 = vadd.f32 %v2330, %v2502
        %v2597 = vadd.f32 %v2331, %v2504
        %v2598 = vadd.f32 %v2332, %v2506
        %v2599 = vadd.f32 %v2333, %v2508
        %v2600 = vadd.f32 %v2334, %v2510
        %v2601 = vadd.f32 %v2335, %v2512
        %v2602 = vadd.f32 %v2336, %v2514
        %s2603 = sld [smem:[#allocation5 + %s1185]]
        %v2604 = vstv %s2603
        %v2605 = vmul.f32 %v2604, %v1406
        %v2606 = vmul.f32 %v2604, %v1407
        %v2607 = vmul.f32 %v2604, %v1408
        %v2608 = vmul.f32 %v2604, %v1409
        %v2609 = vmul.f32 %v2604, %v1410
        %v2610 = vmul.f32 %v2604, %v1411
        %v2611 = vmul.f32 %v2604, %v1412
        %v2612 = vmul.f32 %v2604, %v1413
        %v2613 = vmul.f32 %v2604, %v1414
        %v2614 = vmul.f32 %v2604, %v1415
        %v2615 = vmul.f32 %v2604, %v1416
        %v2616 = vmul.f32 %v2604, %v1417
        %v2617 = vmul.f32 %v2604, %v1418
        %v2618 = vmul.f32 %v2604, %v1419
        %v2619 = vmul.f32 %v2604, %v1420
        %v2620 = vmul.f32 %v2604, %v1421
        %v2621 = vmul.f32 %v2604, %v1422
        %v2622 = vmul.f32 %v2604, %v1423
        %v2623 = vmul.f32 %v2604, %v1424
        %v2624 = vmul.f32 %v2604, %v1425
        %v2625 = vmul.f32 %v2604, %v1426
        %v2626 = vmul.f32 %v2604, %v1427
        %v2627 = vmul.f32 %v2604, %v1428
        %v2628 = vmul.f32 %v2604, %v1429
        %v2629 = vmul.f32 %v2604, %v1430
        %v2630 = vmul.f32 %v2604, %v1431
        %v2631 = vmul.f32 %v2604, %v1432
        %v2632 = vmul.f32 %v2604, %v1433
        %v2633 = vmul.f32 %v2604, %v1434
        %v2634 = vmul.f32 %v2604, %v1435
        %v2635 = vmul.f32 %v2604, %v1436
        %v2636 = vmul.f32 %v2604, %v1437
        %v2637 = vmul.f32 %v2604, %v1438
        %v2638 = vmul.f32 %v2604, %v1439
        %v2639 = vmul.f32 %v2604, %v1440
        %v2640 = vmul.f32 %v2604, %v1441
        %v2641 = vmul.f32 %v2604, %v1442
        %v2642 = vmul.f32 %v2604, %v1443
        %v2643 = vmul.f32 %v2604, %v1444
        %v2644 = vmul.f32 %v2604, %v1445
        %v2645 = vmul.f32 %v2604, %v1446
        %v2646 = vmul.f32 %v2604, %v1447
        %v2647 = vmul.f32 %v2604, %v1448
        %v2648 = vmul.f32 %v2604, %v1449
        %2693 = vrot.lane.b32.xlu0 %v2605, 123
        %v2694 = vpop.permute.xlu0 %2693
        %2695 = vrot.lane.b32.xlu0 %v2606, 123
        %v2696 = vpop.permute.xlu0 %2695
        %2697 = vrot.lane.b32.xlu0 %v2607, 123
        %v2698 = vpop.permute.xlu0 %2697
        %2699 = vrot.lane.b32.xlu0 %v2608, 123
        %v2700 = vpop.permute.xlu0 %2699
        %2701 = vrot.lane.b32.xlu0 %v2609, 123
        %v2702 = vpop.permute.xlu0 %2701
        %2703 = vrot.lane.b32.xlu0 %v2610, 123
        %v2704 = vpop.permute.xlu0 %2703
        %2705 = vrot.lane.b32.xlu0 %v2611, 123
        %v2706 = vpop.permute.xlu0 %2705
        %2707 = vrot.lane.b32.xlu0 %v2612, 123
        %v2708 = vpop.permute.xlu0 %2707
        %2709 = vrot.lane.b32.xlu0 %v2613, 123
        %v2710 = vpop.permute.xlu0 %2709
        %2711 = vrot.lane.b32.xlu0 %v2614, 123
        %v2712 = vpop.permute.xlu0 %2711
        %2713 = vrot.lane.b32.xlu0 %v2615, 123
        %v2714 = vpop.permute.xlu0 %2713
        %2715 = vrot.lane.b32.xlu0 %v2616, 123
        %v2716 = vpop.permute.xlu0 %2715
        %2717 = vrot.lane.b32.xlu0 %v2617, 123
        %v2718 = vpop.permute.xlu0 %2717
        %2719 = vrot.lane.b32.xlu0 %v2618, 123
        %v2720 = vpop.permute.xlu0 %2719
        %2721 = vrot.lane.b32.xlu0 %v2619, 123
        %v2722 = vpop.permute.xlu0 %2721
        %2723 = vrot.lane.b32.xlu0 %v2620, 123
        %v2724 = vpop.permute.xlu0 %2723
        %2725 = vrot.lane.b32.xlu0 %v2621, 123
        %v2726 = vpop.permute.xlu0 %2725
        %2727 = vrot.lane.b32.xlu0 %v2622, 123
        %v2728 = vpop.permute.xlu0 %2727
        %2729 = vrot.lane.b32.xlu0 %v2623, 123
        %v2730 = vpop.permute.xlu0 %2729
        %2731 = vrot.lane.b32.xlu0 %v2624, 123
        %v2732 = vpop.permute.xlu0 %2731
        %2733 = vrot.lane.b32.xlu0 %v2625, 123
        %v2734 = vpop.permute.xlu0 %2733
        %2735 = vrot.lane.b32.xlu0 %v2626, 123
        %v2736 = vpop.permute.xlu0 %2735
        %2737 = vrot.lane.b32.xlu0 %v2627, 123
        %v2738 = vpop.permute.xlu0 %2737
        %2739 = vrot.lane.b32.xlu0 %v2628, 123
        %v2740 = vpop.permute.xlu0 %2739
        %2741 = vrot.lane.b32.xlu0 %v2629, 123
        %v2742 = vpop.permute.xlu0 %2741
        %2743 = vrot.lane.b32.xlu0 %v2630, 123
        %v2744 = vpop.permute.xlu0 %2743
        %2745 = vrot.lane.b32.xlu0 %v2631, 123
        %v2746 = vpop.permute.xlu0 %2745
        %2747 = vrot.lane.b32.xlu0 %v2632, 123
        %v2748 = vpop.permute.xlu0 %2747
        %2749 = vrot.lane.b32.xlu0 %v2633, 123
        %v2750 = vpop.permute.xlu0 %2749
        %2751 = vrot.lane.b32.xlu0 %v2634, 123
        %v2752 = vpop.permute.xlu0 %2751
        %2753 = vrot.lane.b32.xlu0 %v2635, 123
        %v2754 = vpop.permute.xlu0 %2753
        %2755 = vrot.lane.b32.xlu0 %v2636, 123
        %v2756 = vpop.permute.xlu0 %2755
        %2757 = vrot.lane.b32.xlu0 %v2637, 123
        %v2758 = vpop.permute.xlu0 %2757
        %2759 = vrot.lane.b32.xlu0 %v2638, 123
        %v2760 = vpop.permute.xlu0 %2759
        %2761 = vrot.lane.b32.xlu0 %v2639, 123
        %v2762 = vpop.permute.xlu0 %2761
        %2763 = vrot.lane.b32.xlu0 %v2640, 123
        %v2764 = vpop.permute.xlu0 %2763
        %2765 = vrot.lane.b32.xlu0 %v2641, 123
        %v2766 = vpop.permute.xlu0 %2765
        %2767 = vrot.lane.b32.xlu0 %v2642, 123
        %v2768 = vpop.permute.xlu0 %2767
        %2769 = vrot.lane.b32.xlu0 %v2643, 123
        %v2770 = vpop.permute.xlu0 %2769
        %2771 = vrot.lane.b32.xlu0 %v2644, 123
        %v2772 = vpop.permute.xlu0 %2771
        %2773 = vrot.lane.b32.xlu0 %v2645, 123
        %v2774 = vpop.permute.xlu0 %2773
        %2775 = vrot.lane.b32.xlu0 %v2646, 123
        %v2776 = vpop.permute.xlu0 %2775
        %2777 = vrot.lane.b32.xlu0 %v2647, 123
        %v2778 = vpop.permute.xlu0 %2777
        %2779 = vrot.lane.b32.xlu0 %v2648, 123
        %v2780 = vpop.permute.xlu0 %2779
        %v2825 = vadd.f32 %v2559, %v2694
        %v2826 = vadd.f32 %v2560, %v2696
        %v2827 = vadd.f32 %v2561, %v2698
        %v2828 = vadd.f32 %v2562, %v2700
        %v2829 = vadd.f32 %v2563, %v2702
        %v2830 = vadd.f32 %v2564, %v2704
        %v2831 = vadd.f32 %v2565, %v2706
        %v2832 = vadd.f32 %v2566, %v2708
        %v2833 = vadd.f32 %v2567, %v2710
        %v2834 = vadd.f32 %v2568, %v2712
        %v2835 = vadd.f32 %v2569, %v2714
        %v2836 = vadd.f32 %v2570, %v2716
        %v2837 = vadd.f32 %v2571, %v2718
        %v2838 = vadd.f32 %v2572, %v2720
        %v2839 = vadd.f32 %v2573, %v2722
        %v2840 = vadd.f32 %v2574, %v2724
        %v2841 = vadd.f32 %v2575, %v2726
        %v2842 = vadd.f32 %v2576, %v2728
        %v2843 = vadd.f32 %v2577, %v2730
        %v2844 = vadd.f32 %v2578, %v2732
        %v2845 = vadd.f32 %v2579, %v2734
        %v2846 = vadd.f32 %v2580, %v2736
        %v2847 = vadd.f32 %v2581, %v2738
        %v2848 = vadd.f32 %v2582, %v2740
        %v2849 = vadd.f32 %v2583, %v2742
        %v2850 = vadd.f32 %v2584, %v2744
        %v2851 = vadd.f32 %v2585, %v2746
        %v2852 = vadd.f32 %v2586, %v2748
        %v2853 = vadd.f32 %v2587, %v2750
        %v2854 = vadd.f32 %v2588, %v2752
        %v2855 = vadd.f32 %v2589, %v2754
        %v2856 = vadd.f32 %v2590, %v2756
        %v2857 = vadd.f32 %v2591, %v2758
        %v2858 = vadd.f32 %v2592, %v2760
        %v2859 = vadd.f32 %v2593, %v2762
        %v2860 = vadd.f32 %v2594, %v2764
        %v2861 = vadd.f32 %v2595, %v2766
        %v2862 = vadd.f32 %v2596, %v2768
        %v2863 = vadd.f32 %v2597, %v2770
        %v2864 = vadd.f32 %v2598, %v2772
        %v2865 = vadd.f32 %v2599, %v2774
        %v2866 = vadd.f32 %v2600, %v2776
        %v2867 = vadd.f32 %v2601, %v2778
        %v2868 = vadd.f32 %v2602, %v2780
        %s2869 = sld [smem:[#allocation5 + %s1201]]
        %v2870 = vstv %s2869
        %v2871 = vmul.f32 %v2870, %v1406
        %v2872 = vmul.f32 %v2870, %v1407
        %v2873 = vmul.f32 %v2870, %v1408
        %v2874 = vmul.f32 %v2870, %v1409
        %v2875 = vmul.f32 %v2870, %v1410
        %v2876 = vmul.f32 %v2870, %v1411
        %v2877 = vmul.f32 %v2870, %v1412
        %v2878 = vmul.f32 %v2870, %v1413
        %v2879 = vmul.f32 %v2870, %v1414
        %v2880 = vmul.f32 %v2870, %v1415
        %v2881 = vmul.f32 %v2870, %v1416
        %v2882 = vmul.f32 %v2870, %v1417
        %v2883 = vmul.f32 %v2870, %v1418
        %v2884 = vmul.f32 %v2870, %v1419
        %v2885 = vmul.f32 %v2870, %v1420
        %v2886 = vmul.f32 %v2870, %v1421
        %v2887 = vmul.f32 %v2870, %v1422
        %v2888 = vmul.f32 %v2870, %v1423
        %v2889 = vmul.f32 %v2870, %v1424
        %v2890 = vmul.f32 %v2870, %v1425
        %v2891 = vmul.f32 %v2870, %v1426
        %v2892 = vmul.f32 %v2870, %v1427
        %v2893 = vmul.f32 %v2870, %v1428
        %v2894 = vmul.f32 %v2870, %v1429
        %v2895 = vmul.f32 %v2870, %v1430
        %v2896 = vmul.f32 %v2870, %v1431
        %v2897 = vmul.f32 %v2870, %v1432
        %v2898 = vmul.f32 %v2870, %v1433
        %v2899 = vmul.f32 %v2870, %v1434
        %v2900 = vmul.f32 %v2870, %v1435
        %v2901 = vmul.f32 %v2870, %v1436
        %v2902 = vmul.f32 %v2870, %v1437
        %v2903 = vmul.f32 %v2870, %v1438
        %v2904 = vmul.f32 %v2870, %v1439
        %v2905 = vmul.f32 %v2870, %v1440
        %v2906 = vmul.f32 %v2870, %v1441
        %v2907 = vmul.f32 %v2870, %v1442
        %v2908 = vmul.f32 %v2870, %v1443
        %v2909 = vmul.f32 %v2870, %v1444
        %v2910 = vmul.f32 %v2870, %v1445
        %v2911 = vmul.f32 %v2870, %v1446
        %v2912 = vmul.f32 %v2870, %v1447
        %v2913 = vmul.f32 %v2870, %v1448
        %v2914 = vmul.f32 %v2870, %v1449
        %2959 = vrot.lane.b32.xlu0 %v2871, 122
        %v2960 = vpop.permute.xlu0 %2959
        %2961 = vrot.lane.b32.xlu0 %v2872, 122
        %v2962 = vpop.permute.xlu0 %2961
        %2963 = vrot.lane.b32.xlu0 %v2873, 122
        %v2964 = vpop.permute.xlu0 %2963
        %2965 = vrot.lane.b32.xlu0 %v2874, 122
        %v2966 = vpop.permute.xlu0 %2965
        %2967 = vrot.lane.b32.xlu0 %v2875, 122
        %v2968 = vpop.permute.xlu0 %2967
        %2969 = vrot.lane.b32.xlu0 %v2876, 122
        %v2970 = vpop.permute.xlu0 %2969
        %2971 = vrot.lane.b32.xlu0 %v2877, 122
        %v2972 = vpop.permute.xlu0 %2971
        %2973 = vrot.lane.b32.xlu0 %v2878, 122
        %v2974 = vpop.permute.xlu0 %2973
        %2975 = vrot.lane.b32.xlu0 %v2879, 122
        %v2976 = vpop.permute.xlu0 %2975
        %2977 = vrot.lane.b32.xlu0 %v2880, 122
        %v2978 = vpop.permute.xlu0 %2977
        %2979 = vrot.lane.b32.xlu0 %v2881, 122
        %v2980 = vpop.permute.xlu0 %2979
        %2981 = vrot.lane.b32.xlu0 %v2882, 122
        %v2982 = vpop.permute.xlu0 %2981
        %2983 = vrot.lane.b32.xlu0 %v2883, 122
        %v2984 = vpop.permute.xlu0 %2983
        %2985 = vrot.lane.b32.xlu0 %v2884, 122
        %v2986 = vpop.permute.xlu0 %2985
        %2987 = vrot.lane.b32.xlu0 %v2885, 122
        %v2988 = vpop.permute.xlu0 %2987
        %2989 = vrot.lane.b32.xlu0 %v2886, 122
        %v2990 = vpop.permute.xlu0 %2989
        %2991 = vrot.lane.b32.xlu0 %v2887, 122
        %v2992 = vpop.permute.xlu0 %2991
        %2993 = vrot.lane.b32.xlu0 %v2888, 122
        %v2994 = vpop.permute.xlu0 %2993
        %2995 = vrot.lane.b32.xlu0 %v2889, 122
        %v2996 = vpop.permute.xlu0 %2995
        %2997 = vrot.lane.b32.xlu0 %v2890, 122
        %v2998 = vpop.permute.xlu0 %2997
        %2999 = vrot.lane.b32.xlu0 %v2891, 122
        %v3000 = vpop.permute.xlu0 %2999
        %3001 = vrot.lane.b32.xlu0 %v2892, 122
        %v3002 = vpop.permute.xlu0 %3001
        %3003 = vrot.lane.b32.xlu0 %v2893, 122
        %v3004 = vpop.permute.xlu0 %3003
        %3005 = vrot.lane.b32.xlu0 %v2894, 122
        %v3006 = vpop.permute.xlu0 %3005
        %3007 = vrot.lane.b32.xlu0 %v2895, 122
        %v3008 = vpop.permute.xlu0 %3007
        %3009 = vrot.lane.b32.xlu0 %v2896, 122
        %v3010 = vpop.permute.xlu0 %3009
        %3011 = vrot.lane.b32.xlu0 %v2897, 122
        %v3012 = vpop.permute.xlu0 %3011
        %3013 = vrot.lane.b32.xlu0 %v2898, 122
        %v3014 = vpop.permute.xlu0 %3013
        %3015 = vrot.lane.b32.xlu0 %v2899, 122
        %v3016 = vpop.permute.xlu0 %3015
        %3017 = vrot.lane.b32.xlu0 %v2900, 122
        %v3018 = vpop.permute.xlu0 %3017
        %3019 = vrot.lane.b32.xlu0 %v2901, 122
        %v3020 = vpop.permute.xlu0 %3019
        %3021 = vrot.lane.b32.xlu0 %v2902, 122
        %v3022 = vpop.permute.xlu0 %3021
        %3023 = vrot.lane.b32.xlu0 %v2903, 122
        %v3024 = vpop.permute.xlu0 %3023
        %3025 = vrot.lane.b32.xlu0 %v2904, 122
        %v3026 = vpop.permute.xlu0 %3025
        %3027 = vrot.lane.b32.xlu0 %v2905, 122
        %v3028 = vpop.permute.xlu0 %3027
        %3029 = vrot.lane.b32.xlu0 %v2906, 122
        %v3030 = vpop.permute.xlu0 %3029
        %3031 = vrot.lane.b32.xlu0 %v2907, 122
        %v3032 = vpop.permute.xlu0 %3031
        %3033 = vrot.lane.b32.xlu0 %v2908, 122
        %v3034 = vpop.permute.xlu0 %3033
        %3035 = vrot.lane.b32.xlu0 %v2909, 122
        %v3036 = vpop.permute.xlu0 %3035
        %3037 = vrot.lane.b32.xlu0 %v2910, 122
        %v3038 = vpop.permute.xlu0 %3037
        %3039 = vrot.lane.b32.xlu0 %v2911, 122
        %v3040 = vpop.permute.xlu0 %3039
        %3041 = vrot.lane.b32.xlu0 %v2912, 122
        %v3042 = vpop.permute.xlu0 %3041
        %3043 = vrot.lane.b32.xlu0 %v2913, 122
        %v3044 = vpop.permute.xlu0 %3043
        %3045 = vrot.lane.b32.xlu0 %v2914, 122
        %v3046 = vpop.permute.xlu0 %3045
        %v3091 = vadd.f32 %v2825, %v2960
        %v3092 = vadd.f32 %v2826, %v2962
        %v3093 = vadd.f32 %v2827, %v2964
        %v3094 = vadd.f32 %v2828, %v2966
        %v3095 = vadd.f32 %v2829, %v2968
        %v3096 = vadd.f32 %v2830, %v2970
        %v3097 = vadd.f32 %v2831, %v2972
        %v3098 = vadd.f32 %v2832, %v2974
        %v3099 = vadd.f32 %v2833, %v2976
        %v3100 = vadd.f32 %v2834, %v2978
        %v3101 = vadd.f32 %v2835, %v2980
        %v3102 = vadd.f32 %v2836, %v2982
        %v3103 = vadd.f32 %v2837, %v2984
        %v3104 = vadd.f32 %v2838, %v2986
        %v3105 = vadd.f32 %v2839, %v2988
        %v3106 = vadd.f32 %v2840, %v2990
        %v3107 = vadd.f32 %v2841, %v2992
        %v3108 = vadd.f32 %v2842, %v2994
        %v3109 = vadd.f32 %v2843, %v2996
        %v3110 = vadd.f32 %v2844, %v2998
        %v3111 = vadd.f32 %v2845, %v3000
        %v3112 = vadd.f32 %v2846, %v3002
        %v3113 = vadd.f32 %v2847, %v3004
        %v3114 = vadd.f32 %v2848, %v3006
        %v3115 = vadd.f32 %v2849, %v3008
        %v3116 = vadd.f32 %v2850, %v3010
        %v3117 = vadd.f32 %v2851, %v3012
        %v3118 = vadd.f32 %v2852, %v3014
        %v3119 = vadd.f32 %v2853, %v3016
        %v3120 = vadd.f32 %v2854, %v3018
        %v3121 = vadd.f32 %v2855, %v3020
        %v3122 = vadd.f32 %v2856, %v3022
        %v3123 = vadd.f32 %v2857, %v3024
        %v3124 = vadd.f32 %v2858, %v3026
        %v3125 = vadd.f32 %v2859, %v3028
        %v3126 = vadd.f32 %v2860, %v3030
        %v3127 = vadd.f32 %v2861, %v3032
        %v3128 = vadd.f32 %v2862, %v3034
        %v3129 = vadd.f32 %v2863, %v3036
        %v3130 = vadd.f32 %v2864, %v3038
        %v3131 = vadd.f32 %v2865, %v3040
        %v3132 = vadd.f32 %v2866, %v3042
        %v3133 = vadd.f32 %v2867, %v3044
        %v3134 = vadd.f32 %v2868, %v3046
        %s3135 = sld [smem:[#allocation5 + %s1217]]
        %v3136 = vstv %s3135
        %v3137 = vmul.f32 %v3136, %v1406
        %v3138 = vmul.f32 %v3136, %v1407
        %v3139 = vmul.f32 %v3136, %v1408
        %v3140 = vmul.f32 %v3136, %v1409
        %v3141 = vmul.f32 %v3136, %v1410
        %v3142 = vmul.f32 %v3136, %v1411
        %v3143 = vmul.f32 %v3136, %v1412
        %v3144 = vmul.f32 %v3136, %v1413
        %v3145 = vmul.f32 %v3136, %v1414
        %v3146 = vmul.f32 %v3136, %v1415
        %v3147 = vmul.f32 %v3136, %v1416
        %v3148 = vmul.f32 %v3136, %v1417
        %v3149 = vmul.f32 %v3136, %v1418
        %v3150 = vmul.f32 %v3136, %v1419
        %v3151 = vmul.f32 %v3136, %v1420
        %v3152 = vmul.f32 %v3136, %v1421
        %v3153 = vmul.f32 %v3136, %v1422
        %v3154 = vmul.f32 %v3136, %v1423
        %v3155 = vmul.f32 %v3136, %v1424
        %v3156 = vmul.f32 %v3136, %v1425
        %v3157 = vmul.f32 %v3136, %v1426
        %v3158 = vmul.f32 %v3136, %v1427
        %v3159 = vmul.f32 %v3136, %v1428
        %v3160 = vmul.f32 %v3136, %v1429
        %v3161 = vmul.f32 %v3136, %v1430
        %v3162 = vmul.f32 %v3136, %v1431
        %v3163 = vmul.f32 %v3136, %v1432
        %v3164 = vmul.f32 %v3136, %v1433
        %v3165 = vmul.f32 %v3136, %v1434
        %v3166 = vmul.f32 %v3136, %v1435
        %v3167 = vmul.f32 %v3136, %v1436
        %v3168 = vmul.f32 %v3136, %v1437
        %v3169 = vmul.f32 %v3136, %v1438
        %v3170 = vmul.f32 %v3136, %v1439
        %v3171 = vmul.f32 %v3136, %v1440
        %v3172 = vmul.f32 %v3136, %v1441
        %v3173 = vmul.f32 %v3136, %v1442
        %v3174 = vmul.f32 %v3136, %v1443
        %v3175 = vmul.f32 %v3136, %v1444
        %v3176 = vmul.f32 %v3136, %v1445
        %v3177 = vmul.f32 %v3136, %v1446
        %v3178 = vmul.f32 %v3136, %v1447
        %v3179 = vmul.f32 %v3136, %v1448
        %v3180 = vmul.f32 %v3136, %v1449
        %3225 = vrot.lane.b32.xlu0 %v3137, 121
        %v3226 = vpop.permute.xlu0 %3225
        %3227 = vrot.lane.b32.xlu0 %v3138, 121
        %v3228 = vpop.permute.xlu0 %3227
        %3229 = vrot.lane.b32.xlu0 %v3139, 121
        %v3230 = vpop.permute.xlu0 %3229
        %3231 = vrot.lane.b32.xlu0 %v3140, 121
        %v3232 = vpop.permute.xlu0 %3231
        %3233 = vrot.lane.b32.xlu0 %v3141, 121
        %v3234 = vpop.permute.xlu0 %3233
        %3235 = vrot.lane.b32.xlu0 %v3142, 121
        %v3236 = vpop.permute.xlu0 %3235
        %3237 = vrot.lane.b32.xlu0 %v3143, 121
        %v3238 = vpop.permute.xlu0 %3237
        %3239 = vrot.lane.b32.xlu0 %v3144, 121
        %v3240 = vpop.permute.xlu0 %3239
        %3241 = vrot.lane.b32.xlu0 %v3145, 121
        %v3242 = vpop.permute.xlu0 %3241
        %3243 = vrot.lane.b32.xlu0 %v3146, 121
        %v3244 = vpop.permute.xlu0 %3243
        %3245 = vrot.lane.b32.xlu0 %v3147, 121
        %v3246 = vpop.permute.xlu0 %3245
        %3247 = vrot.lane.b32.xlu0 %v3148, 121
        %v3248 = vpop.permute.xlu0 %3247
        %3249 = vrot.lane.b32.xlu0 %v3149, 121
        %v3250 = vpop.permute.xlu0 %3249
        %3251 = vrot.lane.b32.xlu0 %v3150, 121
        %v3252 = vpop.permute.xlu0 %3251
        %3253 = vrot.lane.b32.xlu0 %v3151, 121
        %v3254 = vpop.permute.xlu0 %3253
        %3255 = vrot.lane.b32.xlu0 %v3152, 121
        %v3256 = vpop.permute.xlu0 %3255
        %3257 = vrot.lane.b32.xlu0 %v3153, 121
        %v3258 = vpop.permute.xlu0 %3257
        %3259 = vrot.lane.b32.xlu0 %v3154, 121
        %v3260 = vpop.permute.xlu0 %3259
        %3261 = vrot.lane.b32.xlu0 %v3155, 121
        %v3262 = vpop.permute.xlu0 %3261
        %3263 = vrot.lane.b32.xlu0 %v3156, 121
        %v3264 = vpop.permute.xlu0 %3263
        %3265 = vrot.lane.b32.xlu0 %v3157, 121
        %v3266 = vpop.permute.xlu0 %3265
        %3267 = vrot.lane.b32.xlu0 %v3158, 121
        %v3268 = vpop.permute.xlu0 %3267
        %3269 = vrot.lane.b32.xlu0 %v3159, 121
        %v3270 = vpop.permute.xlu0 %3269
        %3271 = vrot.lane.b32.xlu0 %v3160, 121
        %v3272 = vpop.permute.xlu0 %3271
        %3273 = vrot.lane.b32.xlu0 %v3161, 121
        %v3274 = vpop.permute.xlu0 %3273
        %3275 = vrot.lane.b32.xlu0 %v3162, 121
        %v3276 = vpop.permute.xlu0 %3275
        %3277 = vrot.lane.b32.xlu0 %v3163, 121
        %v3278 = vpop.permute.xlu0 %3277
        %3279 = vrot.lane.b32.xlu0 %v3164, 121
        %v3280 = vpop.permute.xlu0 %3279
        %3281 = vrot.lane.b32.xlu0 %v3165, 121
        %v3282 = vpop.permute.xlu0 %3281
        %3283 = vrot.lane.b32.xlu0 %v3166, 121
        %v3284 = vpop.permute.xlu0 %3283
        %3285 = vrot.lane.b32.xlu0 %v3167, 121
        %v3286 = vpop.permute.xlu0 %3285
        %3287 = vrot.lane.b32.xlu0 %v3168, 121
        %v3288 = vpop.permute.xlu0 %3287
        %3289 = vrot.lane.b32.xlu0 %v3169, 121
        %v3290 = vpop.permute.xlu0 %3289
        %3291 = vrot.lane.b32.xlu0 %v3170, 121
        %v3292 = vpop.permute.xlu0 %3291
        %3293 = vrot.lane.b32.xlu0 %v3171, 121
        %v3294 = vpop.permute.xlu0 %3293
        %3295 = vrot.lane.b32.xlu0 %v3172, 121
        %v3296 = vpop.permute.xlu0 %3295
        %3297 = vrot.lane.b32.xlu0 %v3173, 121
        %v3298 = vpop.permute.xlu0 %3297
        %3299 = vrot.lane.b32.xlu0 %v3174, 121
        %v3300 = vpop.permute.xlu0 %3299
        %3301 = vrot.lane.b32.xlu0 %v3175, 121
        %v3302 = vpop.permute.xlu0 %3301
        %3303 = vrot.lane.b32.xlu0 %v3176, 121
        %v3304 = vpop.permute.xlu0 %3303
        %3305 = vrot.lane.b32.xlu0 %v3177, 121
        %v3306 = vpop.permute.xlu0 %3305
        %3307 = vrot.lane.b32.xlu0 %v3178, 121
        %v3308 = vpop.permute.xlu0 %3307
        %3309 = vrot.lane.b32.xlu0 %v3179, 121
        %v3310 = vpop.permute.xlu0 %3309
        %3311 = vrot.lane.b32.xlu0 %v3180, 121
        %v3312 = vpop.permute.xlu0 %3311
        %v3357 = vadd.f32 %v3091, %v3226
        %v3358 = vadd.f32 %v3092, %v3228
        %v3359 = vadd.f32 %v3093, %v3230
        %v3360 = vadd.f32 %v3094, %v3232
        %v3361 = vadd.f32 %v3095, %v3234
        %v3362 = vadd.f32 %v3096, %v3236
        %v3363 = vadd.f32 %v3097, %v3238
        %v3364 = vadd.f32 %v3098, %v3240
        %v3365 = vadd.f32 %v3099, %v3242
        %v3366 = vadd.f32 %v3100, %v3244
        %v3367 = vadd.f32 %v3101, %v3246
        %v3368 = vadd.f32 %v3102, %v3248
        %v3369 = vadd.f32 %v3103, %v3250
        %v3370 = vadd.f32 %v3104, %v3252
        %v3371 = vadd.f32 %v3105, %v3254
        %v3372 = vadd.f32 %v3106, %v3256
        %v3373 = vadd.f32 %v3107, %v3258
        %v3374 = vadd.f32 %v3108, %v3260
        %v3375 = vadd.f32 %v3109, %v3262
        %v3376 = vadd.f32 %v3110, %v3264
        %v3377 = vadd.f32 %v3111, %v3266
        %v3378 = vadd.f32 %v3112, %v3268
        %v3379 = vadd.f32 %v3113, %v3270
        %v3380 = vadd.f32 %v3114, %v3272
        %v3381 = vadd.f32 %v3115, %v3274
        %v3382 = vadd.f32 %v3116, %v3276
        %v3383 = vadd.f32 %v3117, %v3278
        %v3384 = vadd.f32 %v3118, %v3280
        %v3385 = vadd.f32 %v3119, %v3282
        %v3386 = vadd.f32 %v3120, %v3284
        %v3387 = vadd.f32 %v3121, %v3286
        %v3388 = vadd.f32 %v3122, %v3288
        %v3389 = vadd.f32 %v3123, %v3290
        %v3390 = vadd.f32 %v3124, %v3292
        %v3391 = vadd.f32 %v3125, %v3294
        %v3392 = vadd.f32 %v3126, %v3296
        %v3393 = vadd.f32 %v3127, %v3298
        %v3394 = vadd.f32 %v3128, %v3300
        %v3395 = vadd.f32 %v3129, %v3302
        %v3396 = vadd.f32 %v3130, %v3304
        %v3397 = vadd.f32 %v3131, %v3306
        %v3398 = vadd.f32 %v3132, %v3308
        %v3399 = vadd.f32 %v3133, %v3310
        %v3400 = vadd.f32 %v3134, %v3312
        %v3401 = vmax.f32 %v3357, 0.0
        %v3402 = vmax.f32 %v3358, 0.0
        %v3403 = vmax.f32 %v3359, 0.0
        %v3404 = vmax.f32 %v3360, 0.0
        %v3405 = vmax.f32 %v3361, 0.0
        %v3406 = vmax.f32 %v3362, 0.0
        %v3407 = vmax.f32 %v3363, 0.0
        %v3408 = vmax.f32 %v3364, 0.0
        %v3409 = vmax.f32 %v3365, 0.0
        %v3410 = vmax.f32 %v3366, 0.0
        %v3411 = vmax.f32 %v3367, 0.0
        %v3412 = vmax.f32 %v3368, 0.0
        %v3413 = vmax.f32 %v3369, 0.0
        %v3414 = vmax.f32 %v3370, 0.0
        %v3415 = vmax.f32 %v3371, 0.0
        %v3416 = vmax.f32 %v3372, 0.0
        %v3417 = vmax.f32 %v3373, 0.0
        %v3418 = vmax.f32 %v3374, 0.0
        %v3419 = vmax.f32 %v3375, 0.0
        %v3420 = vmax.f32 %v3376, 0.0
        %v3421 = vmax.f32 %v3377, 0.0
        %v3422 = vmax.f32 %v3378, 0.0
        %v3423 = vmax.f32 %v3379, 0.0
        %v3424 = vmax.f32 %v3380, 0.0
        %v3425 = vmax.f32 %v3381, 0.0
        %v3426 = vmax.f32 %v3382, 0.0
        %v3427 = vmax.f32 %v3383, 0.0
        %v3428 = vmax.f32 %v3384, 0.0
        %v3429 = vmax.f32 %v3385, 0.0
        %v3430 = vmax.f32 %v3386, 0.0
        %v3431 = vmax.f32 %v3387, 0.0
        %v3432 = vmax.f32 %v3388, 0.0
        %v3433 = vmax.f32 %v3389, 0.0
        %v3434 = vmax.f32 %v3390, 0.0
        %v3435 = vmax.f32 %v3391, 0.0
        %v3436 = vmax.f32 %v3392, 0.0
        %v3437 = vmax.f32 %v3393, 0.0
        %v3438 = vmax.f32 %v3394, 0.0
        %v3439 = vmax.f32 %v3395, 0.0
        %v3440 = vmax.f32 %v3396, 0.0
        %v3441 = vmax.f32 %v3397, 0.0
        %v3442 = vmax.f32 %v3398, 0.0
        %v3443 = vmax.f32 %v3399, 0.0
        %v3444 = vmax.f32 %v3400, 0.0
        %v3445 = vld [vmem:[#allocation7] sm:$0xff]
        %v3446 = vld [vmem:[#allocation7 + $0x8] sm:$0xff]
        %v3447 = vld [vmem:[#allocation7 + $0x10] sm:$0xff]
        %v3448 = vld [vmem:[#allocation7 + $0x18] sm:$0xff]
        %v3449 = vld [vmem:[#allocation7 + $0x20] sm:$0xff]
        %v3450 = vld [vmem:[#allocation7 + $0x28] sm:$0xff]
        %v3451 = vld [vmem:[#allocation7 + $0x30] sm:$0xff]
        %v3452 = vld [vmem:[#allocation7 + $0x38] sm:$0xff]
        %v3453 = vld [vmem:[#allocation7 + $0x40] sm:$0xff]
        %v3454 = vld [vmem:[#allocation7 + $0x48] sm:$0xff]
        %v3455 = vld [vmem:[#allocation7 + $0x50] sm:$0xff]
        %v3456 = vld [vmem:[#allocation7 + $0x58] sm:$0xff]
        %v3457 = vld [vmem:[#allocation7 + $0x60] sm:$0xff]
        %v3458 = vld [vmem:[#allocation7 + $0x68] sm:$0xff]
        %v3459 = vld [vmem:[#allocation7 + $0x70] sm:$0xff]
        %v3460 = vld [vmem:[#allocation7 + $0x78] sm:$0xff]
        %v3461 = vld [vmem:[#allocation7 + $0x80] sm:$0xff]
        %v3462 = vld [vmem:[#allocation7 + $0x88] sm:$0xff]
        %v3463 = vld [vmem:[#allocation7 + $0x90] sm:$0xff]
        %v3464 = vld [vmem:[#allocation7 + $0x98] sm:$0xff]
        %v3465 = vld [vmem:[#allocation7 + $0xa0] sm:$0xff]
        %v3466 = vld [vmem:[#allocation7 + $0xa8] sm:$0xff]
        %v3467 = vld [vmem:[#allocation7 + $0xb0] sm:$0xff]
        %v3468 = vld [vmem:[#allocation7 + $0xb8] sm:$0xff]
        %v3469 = vld [vmem:[#allocation7 + $0xc0] sm:$0xff]
        %v3470 = vld [vmem:[#allocation7 + $0xc8] sm:$0xff]
        %v3471 = vld [vmem:[#allocation7 + $0xd0] sm:$0xff]
        %v3472 = vld [vmem:[#allocation7 + $0xd8] sm:$0xff]
        %v3473 = vld [vmem:[#allocation7 + $0xe0] sm:$0xff]
        %v3474 = vld [vmem:[#allocation7 + $0xe8] sm:$0xff]
        %v3475 = vld [vmem:[#allocation7 + $0xf0] sm:$0xff]
        %v3476 = vld [vmem:[#allocation7 + $0xf8] sm:$0xff]
        %v3477 = vld [vmem:[#allocation7 + $0x100] sm:$0xff]
        %v3478 = vld [vmem:[#allocation7 + $0x108] sm:$0xff]
        %v3479 = vld [vmem:[#allocation7 + $0x110] sm:$0xff]
        %v3480 = vld [vmem:[#allocation7 + $0x118] sm:$0xff]
        %v3481 = vld [vmem:[#allocation7 + $0x120] sm:$0xff]
        %v3482 = vld [vmem:[#allocation7 + $0x128] sm:$0xff]
        %v3483 = vld [vmem:[#allocation7 + $0x130] sm:$0xff]
        %v3484 = vld [vmem:[#allocation7 + $0x138] sm:$0xff]
        %v3485 = vld [vmem:[#allocation7 + $0x140] sm:$0xff]
        %v3486 = vld [vmem:[#allocation7 + $0x148] sm:$0xff]
        %v3487 = vld [vmem:[#allocation7 + $0x150] sm:$0xff]
        %v3488 = vld [vmem:[#allocation7 + $0x158] sm:$0xff]
        %v3489 = vld [vmem:[#allocation7 + $0x160] sm:$0xff]
        %v3490 = vld [vmem:[#allocation7 + $0x168] sm:$0xff]
        %v3491 = vld [vmem:[#allocation7 + $0x170] sm:$0xff]
        %v3492 = vld [vmem:[#allocation7 + $0x178] sm:$0xff]
        %v3493 = vld [vmem:[#allocation7 + $0x180] sm:$0xff]
        %v3494 = vld [vmem:[#allocation7 + $0x188] sm:$0xff]
        %v3495 = vld [vmem:[#allocation7 + $0x190] sm:$0xff]
        %v3496 = vld [vmem:[#allocation7 + $0x198] sm:$0xff]
        %v3497 = vld [vmem:[#allocation7 + $0x1a0] sm:$0xff]
        %v3498 = vld [vmem:[#allocation7 + $0x1a8] sm:$0xff]
        %v3499 = vld [vmem:[#allocation7 + $0x1b0] sm:$0xff]
        %v3500 = vld [vmem:[#allocation7 + $0x1b8] sm:$0xff]
        %v3501 = vld [vmem:[#allocation7 + $0x1c0] sm:$0xff]
        %v3502 = vld [vmem:[#allocation7 + $0x1c8] sm:$0xff]
        %v3503 = vld [vmem:[#allocation7 + $0x1d0] sm:$0xff]
        %v3504 = vld [vmem:[#allocation7 + $0x1d8] sm:$0xff]
        %v3505 = vld [vmem:[#allocation7 + $0x1e0] sm:$0xff]
        %v3506 = vld [vmem:[#allocation7 + $0x1e8] sm:$0xff]
        %v3507 = vld [vmem:[#allocation7 + $0x1f0] sm:$0xff]
        %v3508 = vld [vmem:[#allocation7 + $0x1f8] sm:$0xff]
        %v3509 = vld [vmem:[#allocation7 + $0x200] sm:$0xff]
        %v3510 = vld [vmem:[#allocation7 + $0x208] sm:$0xff]
        %v3511 = vld [vmem:[#allocation7 + $0x210] sm:$0xff]
        %v3512 = vld [vmem:[#allocation7 + $0x218] sm:$0xff]
        %v3513 = vld [vmem:[#allocation7 + $0x220] sm:$0xff]
        %v3514 = vld [vmem:[#allocation7 + $0x228] sm:$0xff]
        %v3515 = vld [vmem:[#allocation7 + $0x230] sm:$0xff]
        %v3516 = vld [vmem:[#allocation7 + $0x238] sm:$0xff]
        %v3517 = vld [vmem:[#allocation7 + $0x240] sm:$0xff]
        %v3518 = vld [vmem:[#allocation7 + $0x248] sm:$0xff]
        %v3519 = vld [vmem:[#allocation7 + $0x250] sm:$0xff]
        %v3520 = vld [vmem:[#allocation7 + $0x258] sm:$0xff]
        %v3521 = vld [vmem:[#allocation7 + $0x260] sm:$0xff]
        %v3522 = vld [vmem:[#allocation7 + $0x268] sm:$0xff]
        %v3523 = vld [vmem:[#allocation7 + $0x270] sm:$0xff]
        %v3524 = vld [vmem:[#allocation7 + $0x278] sm:$0xff]
        %v3525 = vld [vmem:[#allocation7 + $0x280] sm:$0xff]
        %v3526 = vld [vmem:[#allocation7 + $0x288] sm:$0xff]
        %v3527 = vld [vmem:[#allocation7 + $0x290] sm:$0xff]
        %v3528 = vld [vmem:[#allocation7 + $0x298] sm:$0xff]
        %v3529 = vld [vmem:[#allocation7 + $0x2a0] sm:$0xff]
        %v3530 = vld [vmem:[#allocation7 + $0x2a8] sm:$0xff]
        %v3531 = vld [vmem:[#allocation7 + $0x2b0] sm:$0xff]
        %v3532 = vld [vmem:[#allocation7 + $0x2b8] sm:$0xff]
        %v3533 = vld [vmem:[#allocation7 + $0x2c0] sm:$0xff]
        %v3534 = vld [vmem:[#allocation7 + $0x2c8] sm:$0xff]
        %v3535 = vld [vmem:[#allocation7 + $0x2d0] sm:$0xff]
        %v3536 = vld [vmem:[#allocation7 + $0x2d8] sm:$0xff]
        %v3537 = vld [vmem:[#allocation7 + $0x2e0] sm:$0xff]
        %v3538 = vld [vmem:[#allocation7 + $0x2e8] sm:$0xff]
        %v3539 = vld [vmem:[#allocation7 + $0x2f0] sm:$0xff]
        %v3540 = vld [vmem:[#allocation7 + $0x2f8] sm:$0xff]
        %v3541 = vld [vmem:[#allocation7 + $0x300] sm:$0xff]
        %v3542 = vld [vmem:[#allocation7 + $0x308] sm:$0xff]
        %v3543 = vld [vmem:[#allocation7 + $0x310] sm:$0xff]
        %v3544 = vld [vmem:[#allocation7 + $0x318] sm:$0xff]
        %v3545 = vld [vmem:[#allocation7 + $0x320] sm:$0xff]
        %v3546 = vld [vmem:[#allocation7 + $0x328] sm:$0xff]
        %v3547 = vld [vmem:[#allocation7 + $0x330] sm:$0xff]
        %v3548 = vld [vmem:[#allocation7 + $0x338] sm:$0xff]
        %v3549 = vld [vmem:[#allocation7 + $0x340] sm:$0xff]
        %v3550 = vld [vmem:[#allocation7 + $0x348] sm:$0xff]
        %v3551 = vld [vmem:[#allocation7 + $0x350] sm:$0xff]
        %v3552 = vld [vmem:[#allocation7 + $0x358] sm:$0xff]
        %v3553 = vld [vmem:[#allocation7 + $0x360] sm:$0xff]
        %v3554 = vld [vmem:[#allocation7 + $0x368] sm:$0xff]
        %v3555 = vld [vmem:[#allocation7 + $0x370] sm:$0xff]
        %v3556 = vld [vmem:[#allocation7 + $0x378] sm:$0xff]
        %v3557 = vld [vmem:[#allocation7 + $0x380] sm:$0xff]
        %v3558 = vld [vmem:[#allocation7 + $0x388] sm:$0xff]
        %v3559 = vld [vmem:[#allocation7 + $0x390] sm:$0xff]
        %v3560 = vld [vmem:[#allocation7 + $0x398] sm:$0xff]
        %v3561 = vld [vmem:[#allocation7 + $0x3a0] sm:$0xff]
        %v3562 = vld [vmem:[#allocation7 + $0x3a8] sm:$0xff]
        %v3563 = vld [vmem:[#allocation7 + $0x3b0] sm:$0xff]
        %v3564 = vld [vmem:[#allocation7 + $0x3b8] sm:$0xff]
        %v3565 = vld [vmem:[#allocation7 + $0x3c0] sm:$0xff]
        %v3566 = vld [vmem:[#allocation7 + $0x3c8] sm:$0xff]
        %v3567 = vld [vmem:[#allocation7 + $0x3d0] sm:$0xff]
        %v3568 = vld [vmem:[#allocation7 + $0x3d8] sm:$0xff]
        %v3569 = vld [vmem:[#allocation7 + $0x3e0] sm:$0xff]
        %v3570 = vld [vmem:[#allocation7 + $0x3e8] sm:$0xff]
        %v3571 = vld [vmem:[#allocation7 + $0x3f0] sm:$0xff]
        %v3572 = vld [vmem:[#allocation7 + $0x3f8] sm:$0xff]
        %v3573 = vld [vmem:[#allocation7 + $0x400] sm:$0xff]
        %v3574 = vld [vmem:[#allocation7 + $0x408] sm:$0xff]
        %v3575 = vld [vmem:[#allocation7 + $0x410] sm:$0xff]
        %v3576 = vld [vmem:[#allocation7 + $0x418] sm:$0xff]
        %v3577 = vld [vmem:[%s15] sm:$0xff]
        %v3578 = vld [vmem:[%s15 + $0x8] sm:$0xff]
        %v3579 = vld [vmem:[%s15 + $0x10] sm:$0xff]
        %v3580 = vld [vmem:[%s15 + $0x18] sm:$0xff]
        %v3581 = vld [vmem:[%s15 + $0x20] sm:$0xff]
        %v3582 = vld [vmem:[%s15 + $0x28] sm:$0xff]
        %v3583 = vld [vmem:[%s15 + $0x30] sm:$0xff]
        %v3584 = vld [vmem:[%s15 + $0x38] sm:$0xff]
        %v3585 = vld [vmem:[%s15 + $0x40] sm:$0xff]
        %v3586 = vld [vmem:[%s15 + $0x48] sm:$0xff]
        %v3587 = vld [vmem:[%s15 + $0x50] sm:$0xff]
        %v3588 = vld [vmem:[%s15 + $0x58] sm:$0xff]
        %v3589 = vld [vmem:[%s15 + $0x60] sm:$0xff]
        %v3590 = vld [vmem:[%s15 + $0x68] sm:$0xff]
        %v3591 = vld [vmem:[%s15 + $0x70] sm:$0xff]
        %v3592 = vld [vmem:[%s15 + $0x78] sm:$0xff]
        %v3593 = vld [vmem:[%s15 + $0x80] sm:$0xff]
        %v3594 = vld [vmem:[%s15 + $0x88] sm:$0xff]
        %v3595 = vld [vmem:[%s15 + $0x90] sm:$0xff]
        %v3596 = vld [vmem:[%s15 + $0x98] sm:$0xff]
        %v3597 = vld [vmem:[%s15 + $0xa0] sm:$0xff]
        %v3598 = vld [vmem:[%s15 + $0xa8] sm:$0xff]
        %v3599 = vld [vmem:[%s15 + $0xb0] sm:$0xff]
        %v3600 = vld [vmem:[%s15 + $0xb8] sm:$0xff]
        %v3601 = vld [vmem:[%s15 + $0xc0] sm:$0xff]
        %v3602 = vld [vmem:[%s15 + $0xc8] sm:$0xff]
        %v3603 = vld [vmem:[%s15 + $0xd0] sm:$0xff]
        %v3604 = vld [vmem:[%s15 + $0xd8] sm:$0xff]
        %v3605 = vld [vmem:[%s15 + $0xe0] sm:$0xff]
        %v3606 = vld [vmem:[%s15 + $0xe8] sm:$0xff]
        %v3607 = vld [vmem:[%s15 + $0xf0] sm:$0xff]
        %v3608 = vld [vmem:[%s15 + $0xf8] sm:$0xff]
        %v3609 = vld [vmem:[%s15 + $0x100] sm:$0xff]
        %v3610 = vld [vmem:[%s15 + $0x108] sm:$0xff]
        %v3611 = vld [vmem:[%s15 + $0x110] sm:$0xff]
        %v3612 = vld [vmem:[%s15 + $0x118] sm:$0xff]
        %v3613 = vld [vmem:[%s15 + $0x120] sm:$0xff]
        %v3614 = vld [vmem:[%s15 + $0x128] sm:$0xff]
        %v3615 = vld [vmem:[%s15 + $0x130] sm:$0xff]
        %v3616 = vld [vmem:[%s15 + $0x138] sm:$0xff]
        %v3617 = vld [vmem:[%s15 + $0x140] sm:$0xff]
        %v3618 = vld [vmem:[%s15 + $0x148] sm:$0xff]
        %v3619 = vld [vmem:[%s15 + $0x150] sm:$0xff]
        %v3620 = vld [vmem:[%s15 + $0x158] sm:$0xff]
        %vm3621 = vcmask 785408
        %v3623 = vsel %vm3621, %v3447, 0
        %v3626 = vsel %vm3621, %v3450, 0
        %v3629 = vsel %vm3621, %v3453, 0
        %v3632 = vsel %vm3621, %v3456, 0
        %v3635 = vsel %vm3621, %v3459, 0
        %v3638 = vsel %vm3621, %v3462, 0
        %v3641 = vsel %vm3621, %v3465, 0
        %v3644 = vsel %vm3621, %v3468, 0
        %v3647 = vsel %vm3621, %v3471, 0
        %v3650 = vsel %vm3621, %v3474, 0
        %v3653 = vsel %vm3621, %v3477, 0
        %v3656 = vsel %vm3621, %v3480, 0
        %v3659 = vsel %vm3621, %v3483, 0
        %v3662 = vsel %vm3621, %v3486, 0
        %v3665 = vsel %vm3621, %v3489, 0
        %v3668 = vsel %vm3621, %v3492, 0
        %v3671 = vsel %vm3621, %v3495, 0
        %v3674 = vsel %vm3621, %v3498, 0
        %v3677 = vsel %vm3621, %v3501, 0
        %v3680 = vsel %vm3621, %v3504, 0
        %v3683 = vsel %vm3621, %v3507, 0
        %v3686 = vsel %vm3621, %v3510, 0
        %v3689 = vsel %vm3621, %v3513, 0
        %v3692 = vsel %vm3621, %v3516, 0
        %v3695 = vsel %vm3621, %v3519, 0
        %v3698 = vsel %vm3621, %v3522, 0
        %v3701 = vsel %vm3621, %v3525, 0
        %v3704 = vsel %vm3621, %v3528, 0
        %v3707 = vsel %vm3621, %v3531, 0
        %v3710 = vsel %vm3621, %v3534, 0
        %v3713 = vsel %vm3621, %v3537, 0
        %v3716 = vsel %vm3621, %v3540, 0
        %v3719 = vsel %vm3621, %v3543, 0
        %v3722 = vsel %vm3621, %v3546, 0
        %v3725 = vsel %vm3621, %v3549, 0
        %v3728 = vsel %vm3621, %v3552, 0
        %v3731 = vsel %vm3621, %v3555, 0
        %v3734 = vsel %vm3621, %v3558, 0
        %v3737 = vsel %vm3621, %v3561, 0
        %v3740 = vsel %vm3621, %v3564, 0
        %v3743 = vsel %vm3621, %v3567, 0
        %v3746 = vsel %vm3621, %v3570, 0
        %v3749 = vsel %vm3621, %v3573, 0
        %v3752 = vsel %vm3621, %v3576, 0
        %3754 = vmatprep.subr.mxu0 0.0
        %3755 = vmatpush1.msra.mxu0 %v3401
        %3756 = vmatprep.subr.mxu0 0.0
        %3757 = vmatpush1.msra.mxu0 %v3402
        %3758 = vmatprep.subr.mxu0 0.0
        %3759 = vmatpush1.msra.mxu0 %v3403
        %3760 = vmatprep.subr.mxu0 0.0
        %3761 = vmatpush1.msra.mxu0 %v3404
        %3762 = vmatprep.subr.mxu0 0.0
        %3763 = vmatpush1.msra.mxu0 %v3405
        %3764 = vmatprep.subr.mxu0 0.0
        %3765 = vmatpush1.msra.mxu0 %v3406
        %3766 = vmatprep.subr.mxu0 0.0
        %3767 = vmatpush1.msra.mxu0 %v3407
        %3768 = vmatprep.subr.mxu0 0.0
        %3769 = vmatpush1.msra.mxu0 %v3408
        %3770 = vmatprep.subr.mxu0 0.0
        %3771 = vmatpush1.msra.mxu0 %v3409
        %3772 = vmatprep.subr.mxu0 0.0
        %3773 = vmatpush1.msra.mxu0 %v3410
        %3774 = vmatprep.subr.mxu0 0.0
        %3775 = vmatpush1.msra.mxu0 %v3411
        %3776 = vmatprep.subr.mxu0 0.0
        %3777 = vmatpush1.msra.mxu0 %v3412
        %3778 = vmatprep.subr.mxu0 0.0
        %3779 = vmatpush1.msra.mxu0 %v3413
        %3780 = vmatprep.subr.mxu0 0.0
        %3781 = vmatpush1.msra.mxu0 %v3414
        %3782 = vmatprep.subr.mxu0 0.0
        %3783 = vmatpush1.msra.mxu0 %v3415
        %3784 = vmatprep.subr.mxu0 0.0
        %3785 = vmatpush1.msra.mxu0 %v3416
        %3786 = vmatprep.subr.mxu0 0.0
        %3787 = vmatpush1.msra.mxu0 %v3417
        %3788 = vmatprep.subr.mxu0 0.0
        %3789 = vmatpush1.msra.mxu0 %v3418
        %3790 = vmatprep.subr.mxu0 0.0
        %3791 = vmatpush1.msra.mxu0 %v3419
        %3792 = vmatprep.subr.mxu0 0.0
        %3793 = vmatpush1.msra.mxu0 %v3420
        %3794 = vmatprep.subr.mxu0 0.0
        %3795 = vmatpush1.msra.mxu0 %v3421
        %3796 = vmatprep.subr.mxu0 0.0
        %3797 = vmatpush1.msra.mxu0 %v3422
        %3798 = vmatprep.subr.mxu0 0.0
        %3799 = vmatpush1.msra.mxu0 %v3423
        %3800 = vmatprep.subr.mxu0 0.0
        %3801 = vmatpush1.msra.mxu0 %v3424
        %3802 = vmatprep.subr.mxu0 0.0
        %3803 = vmatpush1.msra.mxu0 %v3425
        %3804 = vmatprep.subr.mxu0 0.0
        %3805 = vmatpush1.msra.mxu0 %v3426
        %3806 = vmatprep.subr.mxu0 0.0
        %3807 = vmatpush1.msra.mxu0 %v3427
        %3808 = vmatprep.subr.mxu0 0.0
        %3809 = vmatpush1.msra.mxu0 %v3428
        %3810 = vmatprep.subr.mxu0 0.0
        %3811 = vmatpush1.msra.mxu0 %v3429
        %3812 = vmatprep.subr.mxu0 0.0
        %3813 = vmatpush1.msra.mxu0 %v3430
        %3814 = vmatprep.subr.mxu0 0.0
        %3815 = vmatpush1.msra.mxu0 %v3431
        %3816 = vmatprep.subr.mxu0 0.0
        %3817 = vmatpush1.msra.mxu0 %v3432
        %3818 = vmatprep.mubr.f32.mxu0 %v3446
        %3819 = vmatmul.mubr.f32.gmra.mrb[0].mxu0 %v3445
        %v3820 = vpop.f32.mrb[0].mxu0
        %v3821 = vadd.f32 %v3577, %v3820
        %v3822 = vpop.f32.mrb[0].mxu0
        %3823 = vmatprep.mubr.f32.mxu0 %v3449
        %3824 = vmatmul.mubr.f32.gmra.mrb[0].mxu0 %v3448
        %v3825 = vpop.f32.mrb[0].mxu0
        %v3826 = vadd.f32 %v3578, %v3825
        %v3827 = vpop.f32.mrb[0].mxu0
        %3828 = vmatprep.mubr.f32.mxu0 %v3452
        %3829 = vmatmul.mubr.f32.gmra.mrb[0].mxu0 %v3451
        %v3830 = vpop.f32.mrb[0].mxu0
        %v3831 = vadd.f32 %v3579, %v3830
        %v3832 = vpop.f32.mrb[0].mxu0
        %3833 = vmatprep.mubr.f32.mxu0 %v3455
        %3834 = vmatmul.mubr.f32.gmra.mrb[0].mxu0 %v3454
        %v3835 = vpop.f32.mrb[0].mxu0
        %v3836 = vadd.f32 %v3580, %v3835
        %v3837 = vpop.f32.mrb[0].mxu0
        %3838 = vmatprep.mubr.f32.mxu0 %v3458
        %3839 = vmatmul.mubr.f32.gmra.mrb[0].mxu0 %v3457
        %v3840 = vpop.f32.mrb[0].mxu0
        %v3841 = vadd.f32 %v3581, %v3840
        %v3842 = vpop.f32.mrb[0].mxu0
        %3843 = vmatprep.mubr.f32.mxu0 %v3461
        %3844 = vmatmul.mubr.f32.gmra.mrb[0].mxu0 %v3460
        %v3845 = vpop.f32.mrb[0].mxu0
        %v3846 = vadd.f32 %v3582, %v3845
        %v3847 = vpop.f32.mrb[0].mxu0
        %3848 = vmatprep.mubr.f32.mxu0 %v3464
        %3849 = vmatmul.mubr.f32.gmra.mrb[0].mxu0 %v3463
        %v3850 = vpop.f32.mrb[0].mxu0
        %v3851 = vadd.f32 %v3583, %v3850
        %v3852 = vpop.f32.mrb[0].mxu0
        %3853 = vmatprep.mubr.f32.mxu0 %v3467
        %3854 = vmatmul.mubr.f32.gmra.mrb[0].mxu0 %v3466
        %v3855 = vpop.f32.mrb[0].mxu0
        %v3856 = vadd.f32 %v3584, %v3855
        %v3857 = vpop.f32.mrb[0].mxu0
        %3858 = vmatprep.mubr.f32.mxu0 %v3470
        %3859 = vmatmul.mubr.f32.gmra.mrb[0].mxu0 %v3469
        %v3860 = vpop.f32.mrb[0].mxu0
        %v3861 = vadd.f32 %v3585, %v3860
        %v3862 = vpop.f32.mrb[0].mxu0
        %3863 = vmatprep.mubr.f32.mxu0 %v3473
        %3864 = vmatmul.mubr.f32.gmra.mrb[0].mxu0 %v3472
        %v3865 = vpop.f32.mrb[0].mxu0
        %v3866 = vadd.f32 %v3586, %v3865
        %v3867 = vpop.f32.mrb[0].mxu0
        %3868 = vmatprep.mubr.f32.mxu0 %v3476
        %3869 = vmatmul.mubr.f32.gmra.mrb[0].mxu0 %v3475
        %v3870 = vpop.f32.mrb[0].mxu0
        %v3871 = vadd.f32 %v3587, %v3870
        %v3872 = vpop.f32.mrb[0].mxu0
        %3873 = vmatprep.mubr.f32.mxu0 %v3479
        %3874 = vmatmul.mubr.f32.gmra.mrb[0].mxu0 %v3478
        %v3875 = vpop.f32.mrb[0].mxu0
        %v3876 = vadd.f32 %v3588, %v3875
        %v3877 = vpop.f32.mrb[0].mxu0
        %3878 = vmatprep.mubr.f32.mxu0 %v3482
        %3879 = vmatmul.mubr.f32.gmra.mrb[0].mxu0 %v3481
        %v3880 = vpop.f32.mrb[0].mxu0
        %v3881 = vadd.f32 %v3589, %v3880
        %v3882 = vpop.f32.mrb[0].mxu0
        %3883 = vmatprep.mubr.f32.mxu0 %v3485
        %3884 = vmatmul.mubr.f32.gmra.mrb[0].mxu0 %v3484
        %v3885 = vpop.f32.mrb[0].mxu0
        %v3886 = vadd.f32 %v3590, %v3885
        %v3887 = vpop.f32.mrb[0].mxu0
        %3888 = vmatprep.mubr.f32.mxu0 %v3488
        %3889 = vmatmul.mubr.f32.gmra.mrb[0].mxu0 %v3487
        %v3890 = vpop.f32.mrb[0].mxu0
        %v3891 = vadd.f32 %v3591, %v3890
        %v3892 = vpop.f32.mrb[0].mxu0
        %3893 = vmatprep.mubr.f32.mxu0 %v3491
        %3894 = vmatmul.mubr.f32.gmra.mrb[0].mxu0 %v3490
        %v3895 = vpop.f32.mrb[0].mxu0
        %v3896 = vadd.f32 %v3592, %v3895
        %v3897 = vpop.f32.mrb[0].mxu0
        %3898 = vmatprep.mubr.f32.mxu0 %v3494
        %3899 = vmatmul.mubr.f32.gmra.mrb[0].mxu0 %v3493
        %v3900 = vpop.f32.mrb[0].mxu0
        %v3901 = vadd.f32 %v3593, %v3900
        %v3902 = vpop.f32.mrb[0].mxu0
        %3903 = vmatprep.mubr.f32.mxu0 %v3497
        %3904 = vmatmul.mubr.f32.gmra.mrb[0].mxu0 %v3496
        %v3905 = vpop.f32.mrb[0].mxu0
        %v3906 = vadd.f32 %v3594, %v3905
        %v3907 = vpop.f32.mrb[0].mxu0
        %3908 = vmatprep.mubr.f32.mxu0 %v3500
        %3909 = vmatmul.mubr.f32.gmra.mrb[0].mxu0 %v3499
        %v3910 = vpop.f32.mrb[0].mxu0
        %v3911 = vadd.f32 %v3595, %v3910
        %v3912 = vpop.f32.mrb[0].mxu0
        %3913 = vmatprep.mubr.f32.mxu0 %v3503
        %3914 = vmatmul.mubr.f32.gmra.mrb[0].mxu0 %v3502
        %v3915 = vpop.f32.mrb[0].mxu0
        %v3916 = vadd.f32 %v3596, %v3915
        %v3917 = vpop.f32.mrb[0].mxu0
        %3918 = vmatprep.mubr.f32.mxu0 %v3506
        %3919 = vmatmul.mubr.f32.gmra.mrb[0].mxu0 %v3505
        %v3920 = vpop.f32.mrb[0].mxu0
        %v3921 = vadd.f32 %v3597, %v3920
        %v3922 = vpop.f32.mrb[0].mxu0
        %3923 = vmatprep.mubr.f32.mxu0 %v3509
        %3924 = vmatmul.mubr.f32.gmra.mrb[0].mxu0 %v3508
        %v3925 = vpop.f32.mrb[0].mxu0
        %v3926 = vadd.f32 %v3598, %v3925
        %v3927 = vpop.f32.mrb[0].mxu0
        %3928 = vmatprep.mubr.f32.mxu0 %v3512
        %3929 = vmatmul.mubr.f32.gmra.mrb[0].mxu0 %v3511
        %v3930 = vpop.f32.mrb[0].mxu0
        %v3931 = vadd.f32 %v3599, %v3930
        %v3932 = vpop.f32.mrb[0].mxu0
        %3933 = vmatprep.mubr.f32.mxu0 %v3515
        %3934 = vmatmul.mubr.f32.gmra.mrb[0].mxu0 %v3514
        %v3935 = vpop.f32.mrb[0].mxu0
        %v3936 = vadd.f32 %v3600, %v3935
        %v3937 = vpop.f32.mrb[0].mxu0
        %3938 = vmatprep.mubr.f32.mxu0 %v3518
        %3939 = vmatmul.mubr.f32.gmra.mrb[0].mxu0 %v3517
        %v3940 = vpop.f32.mrb[0].mxu0
        %v3941 = vadd.f32 %v3601, %v3940
        %v3942 = vpop.f32.mrb[0].mxu0
        %3943 = vmatprep.mubr.f32.mxu0 %v3521
        %3944 = vmatmul.mubr.f32.gmra.mrb[0].mxu0 %v3520
        %v3945 = vpop.f32.mrb[0].mxu0
        %v3946 = vadd.f32 %v3602, %v3945
        %v3947 = vpop.f32.mrb[0].mxu0
        %3948 = vmatprep.mubr.f32.mxu0 %v3524
        %3949 = vmatmul.mubr.f32.gmra.mrb[0].mxu0 %v3523
        %v3950 = vpop.f32.mrb[0].mxu0
        %v3951 = vadd.f32 %v3603, %v3950
        %v3952 = vpop.f32.mrb[0].mxu0
        %3953 = vmatprep.mubr.f32.mxu0 %v3527
        %3954 = vmatmul.mubr.f32.gmra.mrb[0].mxu0 %v3526
        %v3955 = vpop.f32.mrb[0].mxu0
        %v3956 = vadd.f32 %v3604, %v3955
        %v3957 = vpop.f32.mrb[0].mxu0
        %3958 = vmatprep.mubr.f32.mxu0 %v3530
        %3959 = vmatmul.mubr.f32.gmra.mrb[0].mxu0 %v3529
        %v3960 = vpop.f32.mrb[0].mxu0
        %v3961 = vadd.f32 %v3605, %v3960
        %v3962 = vpop.f32.mrb[0].mxu0
        %3963 = vmatprep.mubr.f32.mxu0 %v3533
        %3964 = vmatmul.mubr.f32.gmra.mrb[0].mxu0 %v3532
        %v3965 = vpop.f32.mrb[0].mxu0
        %v3966 = vadd.f32 %v3606, %v3965
        %v3967 = vpop.f32.mrb[0].mxu0
        %3968 = vmatprep.mubr.f32.mxu0 %v3536
        %3969 = vmatmul.mubr.f32.gmra.mrb[0].mxu0 %v3535
        %v3970 = vpop.f32.mrb[0].mxu0
        %v3971 = vadd.f32 %v3607, %v3970
        %v3972 = vpop.f32.mrb[0].mxu0
        %3973 = vmatprep.mubr.f32.mxu0 %v3539
        %3974 = vmatmul.mubr.f32.gmra.mrb[0].mxu0 %v3538
        %v3975 = vpop.f32.mrb[0].mxu0
        %v3976 = vadd.f32 %v3608, %v3975
        %v3977 = vpop.f32.mrb[0].mxu0
        %3978 = vmatprep.mubr.f32.mxu0 %v3542
        %3979 = vmatmul.mubr.f32.gmra.mrb[0].mxu0 %v3541
        %v3980 = vpop.f32.mrb[0].mxu0
        %v3981 = vadd.f32 %v3609, %v3980
        %v3982 = vpop.f32.mrb[0].mxu0
        %3983 = vmatprep.mubr.f32.mxu0 %v3545
        %3984 = vmatmul.mubr.f32.gmra.mrb[0].mxu0 %v3544
        %v3985 = vpop.f32.mrb[0].mxu0
        %v3986 = vadd.f32 %v3610, %v3985
        %v3987 = vpop.f32.mrb[0].mxu0
        %3988 = vmatprep.mubr.f32.mxu0 %v3548
        %3989 = vmatmul.mubr.f32.gmra.mrb[0].mxu0 %v3547
        %v3990 = vpop.f32.mrb[0].mxu0
        %v3991 = vadd.f32 %v3611, %v3990
        %v3992 = vpop.f32.mrb[0].mxu0
        %3993 = vmatprep.mubr.f32.mxu0 %v3551
        %3994 = vmatmul.mubr.f32.gmra.mrb[0].mxu0 %v3550
        %v3995 = vpop.f32.mrb[0].mxu0
        %v3996 = vadd.f32 %v3612, %v3995
        %v3997 = vpop.f32.mrb[0].mxu0
        %3998 = vmatprep.mubr.f32.mxu0 %v3554
        %3999 = vmatmul.mubr.f32.gmra.mrb[0].mxu0 %v3553
        %v4000 = vpop.f32.mrb[0].mxu0
        %v4001 = vadd.f32 %v3613, %v4000
        %v4002 = vpop.f32.mrb[0].mxu0
        %4003 = vmatprep.mubr.f32.mxu0 %v3557
        %4004 = vmatmul.mubr.f32.gmra.mrb[0].mxu0 %v3556
        %v4005 = vpop.f32.mrb[0].mxu0
        %v4006 = vadd.f32 %v3614, %v4005
        %v4007 = vpop.f32.mrb[0].mxu0
        %4008 = vmatprep.mubr.f32.mxu0 %v3560
        %4009 = vmatmul.mubr.f32.gmra.mrb[0].mxu0 %v3559
        %v4010 = vpop.f32.mrb[0].mxu0
        %v4011 = vadd.f32 %v3615, %v4010
        %v4012 = vpop.f32.mrb[0].mxu0
        %4013 = vmatprep.mubr.f32.mxu0 %v3563
        %4014 = vmatmul.mubr.f32.gmra.mrb[0].mxu0 %v3562
        %v4015 = vpop.f32.mrb[0].mxu0
        %v4016 = vadd.f32 %v3616, %v4015
        %v4017 = vpop.f32.mrb[0].mxu0
        %4018 = vmatprep.mubr.f32.mxu0 %v3566
        %4019 = vmatmul.mubr.f32.gmra.mrb[0].mxu0 %v3565
        %v4020 = vpop.f32.mrb[0].mxu0
        %v4021 = vadd.f32 %v3617, %v4020
        %v4022 = vpop.f32.mrb[0].mxu0
        %4023 = vmatprep.mubr.f32.mxu0 %v3569
        %4024 = vmatmul.mubr.f32.gmra.mrb[0].mxu0 %v3568
        %v4025 = vpop.f32.mrb[0].mxu0
        %v4026 = vadd.f32 %v3618, %v4025
        %v4027 = vpop.f32.mrb[0].mxu0
        %4028 = vmatprep.mubr.f32.mxu0 %v3572
        %4029 = vmatmul.mubr.f32.gmra.mrb[0].mxu0 %v3571
        %v4030 = vpop.f32.mrb[0].mxu0
        %v4031 = vadd.f32 %v3619, %v4030
        %v4032 = vpop.f32.mrb[0].mxu0
        %4033 = vmatprep.mubr.f32.mxu0 %v3575
        %4034 = vmatmul.mubr.f32.gmra.mrb[0].mxu0 %v3574
        %v4035 = vpop.f32.mrb[0].mxu0
        %v4036 = vadd.f32 %v3620, %v4035
        %v4037 = vpop.f32.mrb[0].mxu0
        %4038 = vdwg.mxu0
        %4039 = vmatprep.subr.mxu0 0.0
        %4040 = vmatpush1.msra.mxu0 %v3433
        %4041 = vmatprep.subr.mxu0 0.0
        %4042 = vmatpush1.msra.mxu0 %v3434
        %4043 = vmatprep.subr.mxu0 0.0
        %4044 = vmatpush1.msra.mxu0 %v3435
        %4045 = vmatprep.subr.mxu0 0.0
        %4046 = vmatpush1.msra.mxu0 %v3436
        %4047 = vmatprep.subr.mxu0 0.0
        %4048 = vmatpush1.msra.mxu0 %v3437
        %4049 = vmatprep.subr.mxu0 0.0
        %4050 = vmatpush1.msra.mxu0 %v3438
        %4051 = vmatprep.subr.mxu0 0.0
        %4052 = vmatpush1.msra.mxu0 %v3439
        %4053 = vmatprep.subr.mxu0 0.0
        %4054 = vmatpush1.msra.mxu0 %v3440
        %4055 = vmatprep.subr.mxu0 0.0
        %4056 = vmatpush1.msra.mxu0 %v3441
        %4057 = vmatprep.subr.mxu0 0.0
        %4058 = vmatpush1.msra.mxu0 %v3442
        %4059 = vmatprep.subr.mxu0 0.0
        %4060 = vmatpush1.msra.mxu0 %v3443
        %4061 = vmatprep.subr.mxu0 0.0
        %4062 = vmatpush1.msra.mxu0 %v3444
        %4063 = vmatprep.subr.mxu0 0.0
        %4064 = vmatpush1.msra.mxu0 0.0
        %4065 = vmatprep.subr.mxu0 0.0
        %4066 = vmatpush1.msra.mxu0 0.0
        %4067 = vmatprep.subr.mxu0 0.0
        %4068 = vmatpush1.msra.mxu0 0.0
        %4069 = vmatprep.subr.mxu0 0.0
        %4070 = vmatpush1.msra.mxu0 0.0
        %4071 = vmatprep.subr.mxu0 0.0
        %4072 = vmatpush1.msra.mxu0 0.0
        %4073 = vmatprep.subr.mxu0 0.0
        %4074 = vmatpush1.msra.mxu0 0.0
        %4075 = vmatprep.subr.mxu0 0.0
        %4076 = vmatpush1.msra.mxu0 0.0
        %4077 = vmatprep.subr.mxu0 0.0
        %4078 = vmatpush1.msra.mxu0 0.0
        %4079 = vmatprep.subr.mxu0 0.0
        %4080 = vmatpush1.msra.mxu0 0.0
        %4081 = vmatprep.subr.mxu0 0.0
        %4082 = vmatpush1.msra.mxu0 0.0
        %4083 = vmatprep.subr.mxu0 0.0
        %4084 = vmatpush1.msra.mxu0 0.0
        %4085 = vmatprep.subr.mxu0 0.0
        %4086 = vmatpush1.msra.mxu0 0.0
        %4087 = vmatprep.subr.mxu0 0.0
        %4088 = vmatpush1.msra.mxu0 0.0
        %4089 = vmatprep.subr.mxu0 0.0
        %4090 = vmatpush1.msra.mxu0 0.0
        %4091 = vmatprep.subr.mxu0 0.0
        %4092 = vmatpush1.msra.mxu0 0.0
        %4093 = vmatprep.subr.mxu0 0.0
        %4094 = vmatpush1.msra.mxu0 0.0
        %4095 = vmatprep.subr.mxu0 0.0
        %4096 = vmatpush1.msra.mxu0 0.0
        %4097 = vmatprep.subr.mxu0 0.0
        %4098 = vmatpush1.msra.mxu0 0.0
        %4099 = vmatprep.subr.mxu0 0.0
        %4100 = vmatpush1.msra.mxu0 0.0
        %4101 = vmatprep.subr.mxu0 0.0
        %4102 = vmatpush1.msra.mxu0 0.0
        %4103 = vmatprep.mubr.f32.mxu0 0.0
        %4104 = vmatmul.mubr.f32.gmra.mrb[0].mxu0 %v3623
        %v4105 = vpop.f32.mrb[0].mxu0
        %v4106 = vadd.f32 %v3821, %v4105
        %v4107 = vpop.f32.mrb[0].mxu0
        %4108 = vmatprep.mubr.f32.mxu0 0.0
        %4109 = vmatmul.mubr.f32.gmra.mrb[0].mxu0 %v3626
        %v4110 = vpop.f32.mrb[0].mxu0
        %v4111 = vadd.f32 %v3826, %v4110
        %v4112 = vpop.f32.mrb[0].mxu0
        %4113 = vmatprep.mubr.f32.mxu0 0.0
        %4114 = vmatmul.mubr.f32.gmra.mrb[0].mxu0 %v3629
        %v4115 = vpop.f32.mrb[0].mxu0
        %v4116 = vadd.f32 %v3831, %v4115
        %v4117 = vpop.f32.mrb[0].mxu0
        %4118 = vmatprep.mubr.f32.mxu0 0.0
        %4119 = vmatmul.mubr.f32.gmra.mrb[0].mxu0 %v3632
        %v4120 = vpop.f32.mrb[0].mxu0
        %v4121 = vadd.f32 %v3836, %v4120
        %v4122 = vpop.f32.mrb[0].mxu0
        %4123 = vmatprep.mubr.f32.mxu0 0.0
        %4124 = vmatmul.mubr.f32.gmra.mrb[0].mxu0 %v3635
        %v4125 = vpop.f32.mrb[0].mxu0
        %v4126 = vadd.f32 %v3841, %v4125
        %v4127 = vpop.f32.mrb[0].mxu0
        %4128 = vmatprep.mubr.f32.mxu0 0.0
        %4129 = vmatmul.mubr.f32.gmra.mrb[0].mxu0 %v3638
        %v4130 = vpop.f32.mrb[0].mxu0
        %v4131 = vadd.f32 %v3846, %v4130
        %v4132 = vpop.f32.mrb[0].mxu0
        %4133 = vmatprep.mubr.f32.mxu0 0.0
        %4134 = vmatmul.mubr.f32.gmra.mrb[0].mxu0 %v3641
        %v4135 = vpop.f32.mrb[0].mxu0
        %v4136 = vadd.f32 %v3851, %v4135
        %v4137 = vpop.f32.mrb[0].mxu0
        %4138 = vmatprep.mubr.f32.mxu0 0.0
        %4139 = vmatmul.mubr.f32.gmra.mrb[0].mxu0 %v3644
        %v4140 = vpop.f32.mrb[0].mxu0
        %v4141 = vadd.f32 %v3856, %v4140
        %v4142 = vpop.f32.mrb[0].mxu0
        %4143 = vmatprep.mubr.f32.mxu0 0.0
        %4144 = vmatmul.mubr.f32.gmra.mrb[0].mxu0 %v3647
        %v4145 = vpop.f32.mrb[0].mxu0
        %v4146 = vadd.f32 %v3861, %v4145
        %v4147 = vpop.f32.mrb[0].mxu0
        %4148 = vmatprep.mubr.f32.mxu0 0.0
        %4149 = vmatmul.mubr.f32.gmra.mrb[0].mxu0 %v3650
        %v4150 = vpop.f32.mrb[0].mxu0
        %v4151 = vadd.f32 %v3866, %v4150
        %v4152 = vpop.f32.mrb[0].mxu0
        %4153 = vmatprep.mubr.f32.mxu0 0.0
        %4154 = vmatmul.mubr.f32.gmra.mrb[0].mxu0 %v3653
        %v4155 = vpop.f32.mrb[0].mxu0
        %v4156 = vadd.f32 %v3871, %v4155
        %v4157 = vpop.f32.mrb[0].mxu0
        %4158 = vmatprep.mubr.f32.mxu0 0.0
        %4159 = vmatmul.mubr.f32.gmra.mrb[0].mxu0 %v3656
        %v4160 = vpop.f32.mrb[0].mxu0
        %v4161 = vadd.f32 %v3876, %v4160
        %v4162 = vpop.f32.mrb[0].mxu0
        %4163 = vmatprep.mubr.f32.mxu0 0.0
        %4164 = vmatmul.mubr.f32.gmra.mrb[0].mxu0 %v3659
        %v4165 = vpop.f32.mrb[0].mxu0
        %v4166 = vadd.f32 %v3881, %v4165
        %v4167 = vpop.f32.mrb[0].mxu0
        %4168 = vmatprep.mubr.f32.mxu0 0.0
        %4169 = vmatmul.mubr.f32.gmra.mrb[0].mxu0 %v3662
        %v4170 = vpop.f32.mrb[0].mxu0
        %v4171 = vadd.f32 %v3886, %v4170
        %v4172 = vpop.f32.mrb[0].mxu0
        %4173 = vmatprep.mubr.f32.mxu0 0.0
        %4174 = vmatmul.mubr.f32.gmra.mrb[0].mxu0 %v3665
        %v4175 = vpop.f32.mrb[0].mxu0
        %v4176 = vadd.f32 %v3891, %v4175
        %v4177 = vpop.f32.mrb[0].mxu0
        %4178 = vmatprep.mubr.f32.mxu0 0.0
        %4179 = vmatmul.mubr.f32.gmra.mrb[0].mxu0 %v3668
        %v4180 = vpop.f32.mrb[0].mxu0
        %v4181 = vadd.f32 %v3896, %v4180
        %v4182 = vpop.f32.mrb[0].mxu0
        %4183 = vmatprep.mubr.f32.mxu0 0.0
        %4184 = vmatmul.mubr.f32.gmra.mrb[0].mxu0 %v3671
        %v4185 = vpop.f32.mrb[0].mxu0
        %v4186 = vadd.f32 %v3901, %v4185
        %v4187 = vpop.f32.mrb[0].mxu0
        %4188 = vmatprep.mubr.f32.mxu0 0.0
        %4189 = vmatmul.mubr.f32.gmra.mrb[0].mxu0 %v3674
        %v4190 = vpop.f32.mrb[0].mxu0
        %v4191 = vadd.f32 %v3906, %v4190
        %v4192 = vpop.f32.mrb[0].mxu0
        %4193 = vmatprep.mubr.f32.mxu0 0.0
        %4194 = vmatmul.mubr.f32.gmra.mrb[0].mxu0 %v3677
        %v4195 = vpop.f32.mrb[0].mxu0
        %v4196 = vadd.f32 %v3911, %v4195
        %v4197 = vpop.f32.mrb[0].mxu0
        %4198 = vmatprep.mubr.f32.mxu0 0.0
        %4199 = vmatmul.mubr.f32.gmra.mrb[0].mxu0 %v3680
        %v4200 = vpop.f32.mrb[0].mxu0
        %v4201 = vadd.f32 %v3916, %v4200
        %v4202 = vpop.f32.mrb[0].mxu0
        %4203 = vmatprep.mubr.f32.mxu0 0.0
        %4204 = vmatmul.mubr.f32.gmra.mrb[0].mxu0 %v3683
        %v4205 = vpop.f32.mrb[0].mxu0
        %v4206 = vadd.f32 %v3921, %v4205
        %v4207 = vpop.f32.mrb[0].mxu0
        %4208 = vmatprep.mubr.f32.mxu0 0.0
        %4209 = vmatmul.mubr.f32.gmra.mrb[0].mxu0 %v3686
        %v4210 = vpop.f32.mrb[0].mxu0
        %v4211 = vadd.f32 %v3926, %v4210
        %v4212 = vpop.f32.mrb[0].mxu0
        %4213 = vmatprep.mubr.f32.mxu0 0.0
        %4214 = vmatmul.mubr.f32.gmra.mrb[0].mxu0 %v3689
        %v4215 = vpop.f32.mrb[0].mxu0
        %v4216 = vadd.f32 %v3931, %v4215
        %v4217 = vpop.f32.mrb[0].mxu0
        %4218 = vmatprep.mubr.f32.mxu0 0.0
        %4219 = vmatmul.mubr.f32.gmra.mrb[0].mxu0 %v3692
        %v4220 = vpop.f32.mrb[0].mxu0
        %v4221 = vadd.f32 %v3936, %v4220
        %v4222 = vpop.f32.mrb[0].mxu0
        %4223 = vmatprep.mubr.f32.mxu0 0.0
        %4224 = vmatmul.mubr.f32.gmra.mrb[0].mxu0 %v3695
        %v4225 = vpop.f32.mrb[0].mxu0
        %v4226 = vadd.f32 %v3941, %v4225
        %v4227 = vpop.f32.mrb[0].mxu0
        %4228 = vmatprep.mubr.f32.mxu0 0.0
        %4229 = vmatmul.mubr.f32.gmra.mrb[0].mxu0 %v3698
        %v4230 = vpop.f32.mrb[0].mxu0
        %v4231 = vadd.f32 %v3946, %v4230
        %v4232 = vpop.f32.mrb[0].mxu0
        %4233 = vmatprep.mubr.f32.mxu0 0.0
        %4234 = vmatmul.mubr.f32.gmra.mrb[0].mxu0 %v3701
        %v4235 = vpop.f32.mrb[0].mxu0
        %v4236 = vadd.f32 %v3951, %v4235
        %v4237 = vpop.f32.mrb[0].mxu0
        %4238 = vmatprep.mubr.f32.mxu0 0.0
        %4239 = vmatmul.mubr.f32.gmra.mrb[0].mxu0 %v3704
        %v4240 = vpop.f32.mrb[0].mxu0
        %v4241 = vadd.f32 %v3956, %v4240
        %v4242 = vpop.f32.mrb[0].mxu0
        %4243 = vmatprep.mubr.f32.mxu0 0.0
        %4244 = vmatmul.mubr.f32.gmra.mrb[0].mxu0 %v3707
        %v4245 = vpop.f32.mrb[0].mxu0
        %v4246 = vadd.f32 %v3961, %v4245
        %v4247 = vpop.f32.mrb[0].mxu0
        %4248 = vmatprep.mubr.f32.mxu0 0.0
        %4249 = vmatmul.mubr.f32.gmra.mrb[0].mxu0 %v3710
        %v4250 = vpop.f32.mrb[0].mxu0
        %v4251 = vadd.f32 %v3966, %v4250
        %v4252 = vpop.f32.mrb[0].mxu0
        %4253 = vmatprep.mubr.f32.mxu0 0.0
        %4254 = vmatmul.mubr.f32.gmra.mrb[0].mxu0 %v3713
        %v4255 = vpop.f32.mrb[0].mxu0
        %v4256 = vadd.f32 %v3971, %v4255
        %v4257 = vpop.f32.mrb[0].mxu0
        %4258 = vmatprep.mubr.f32.mxu0 0.0
        %4259 = vmatmul.mubr.f32.gmra.mrb[0].mxu0 %v3716
        %v4260 = vpop.f32.mrb[0].mxu0
        %v4261 = vadd.f32 %v3976, %v4260
        %v4262 = vpop.f32.mrb[0].mxu0
        %4263 = vmatprep.mubr.f32.mxu0 0.0
        %4264 = vmatmul.mubr.f32.gmra.mrb[0].mxu0 %v3719
        %v4265 = vpop.f32.mrb[0].mxu0
        %v4266 = vadd.f32 %v3981, %v4265
        %v4267 = vpop.f32.mrb[0].mxu0
        %4268 = vmatprep.mubr.f32.mxu0 0.0
        %4269 = vmatmul.mubr.f32.gmra.mrb[0].mxu0 %v3722
        %v4270 = vpop.f32.mrb[0].mxu0
        %v4271 = vadd.f32 %v3986, %v4270
        %v4272 = vpop.f32.mrb[0].mxu0
        %4273 = vmatprep.mubr.f32.mxu0 0.0
        %4274 = vmatmul.mubr.f32.gmra.mrb[0].mxu0 %v3725
        %v4275 = vpop.f32.mrb[0].mxu0
        %v4276 = vadd.f32 %v3991, %v4275
        %v4277 = vpop.f32.mrb[0].mxu0
        %4278 = vmatprep.mubr.f32.mxu0 0.0
        %4279 = vmatmul.mubr.f32.gmra.mrb[0].mxu0 %v3728
        %v4280 = vpop.f32.mrb[0].mxu0
        %v4281 = vadd.f32 %v3996, %v4280
        %v4282 = vpop.f32.mrb[0].mxu0
        %4283 = vmatprep.mubr.f32.mxu0 0.0
        %4284 = vmatmul.mubr.f32.gmra.mrb[0].mxu0 %v3731
        %v4285 = vpop.f32.mrb[0].mxu0
        %v4286 = vadd.f32 %v4001, %v4285
        %v4287 = vpop.f32.mrb[0].mxu0
        %4288 = vmatprep.mubr.f32.mxu0 0.0
        %4289 = vmatmul.mubr.f32.gmra.mrb[0].mxu0 %v3734
        %v4290 = vpop.f32.mrb[0].mxu0
        %v4291 = vadd.f32 %v4006, %v4290
        %v4292 = vpop.f32.mrb[0].mxu0
        %4293 = vmatprep.mubr.f32.mxu0 0.0
        %4294 = vmatmul.mubr.f32.gmra.mrb[0].mxu0 %v3737
        %v4295 = vpop.f32.mrb[0].mxu0
        %v4296 = vadd.f32 %v4011, %v4295
        %v4297 = vpop.f32.mrb[0].mxu0
        %4298 = vmatprep.mubr.f32.mxu0 0.0
        %4299 = vmatmul.mubr.f32.gmra.mrb[0].mxu0 %v3740
        %v4300 = vpop.f32.mrb[0].mxu0
        %v4301 = vadd.f32 %v4016, %v4300
        %v4302 = vpop.f32.mrb[0].mxu0
        %4303 = vmatprep.mubr.f32.mxu0 0.0
        %4304 = vmatmul.mubr.f32.gmra.mrb[0].mxu0 %v3743
        %v4305 = vpop.f32.mrb[0].mxu0
        %v4306 = vadd.f32 %v4021, %v4305
        %v4307 = vpop.f32.mrb[0].mxu0
        %4308 = vmatprep.mubr.f32.mxu0 0.0
        %4309 = vmatmul.mubr.f32.gmra.mrb[0].mxu0 %v3746
        %v4310 = vpop.f32.mrb[0].mxu0
        %v4311 = vadd.f32 %v4026, %v4310
        %v4312 = vpop.f32.mrb[0].mxu0
        %4313 = vmatprep.mubr.f32.mxu0 0.0
        %4314 = vmatmul.mubr.f32.gmra.mrb[0].mxu0 %v3749
        %v4315 = vpop.f32.mrb[0].mxu0
        %v4316 = vadd.f32 %v4031, %v4315
        %v4317 = vpop.f32.mrb[0].mxu0
        %4318 = vmatprep.mubr.f32.mxu0 0.0
        %4319 = vmatmul.mubr.f32.gmra.mrb[0].mxu0 %v3752
        %v4320 = vpop.f32.mrb[0].mxu0
        %v4321 = vadd.f32 %v4036, %v4320
        %v4322 = vpop.f32.mrb[0].mxu0
        %4323 = vdwg.mxu0
        %v4324 = vld [vmem:[#allocation8] sm:$0xff]
        %v4325 = vld [vmem:[#allocation8 + $0x8] sm:$0xff]
        %vm4326 = vcmask 130048
        %v4328 = vsel %vm4326, %v1357, 0
        %v4331 = vsel %vm4326, %v1358, 0
        %v4334 = vsel %vm4326, %v1359, 0
        %v4337 = vsel %vm4326, %v1360, 0
        %4339 = vmatprep.subr.mxu0 0.0
        %4340 = vmatpush1.msra.mxu0 %v4324
        %4341 = vmatprep.subr.mxu0 0.0
        %4342 = vmatpush1.msra.mxu0 %v4325
        %4343 = vmatprep.subr.mxu0 0.0
        %4344 = vmatpush1.msra.mxu0 0.0
        %4345 = vmatprep.subr.mxu0 0.0
        %4346 = vmatpush1.msra.mxu0 0.0
        %4347 = vmatprep.subr.mxu0 0.0
        %4348 = vmatpush1.msra.mxu0 0.0
        %4349 = vmatprep.subr.mxu0 0.0
        %4350 = vmatpush1.msra.mxu0 0.0
        %4351 = vmatprep.subr.mxu0 0.0
        %4352 = vmatpush1.msra.mxu0 0.0
        %4353 = vmatprep.subr.mxu0 0.0
        %4354 = vmatpush1.msra.mxu0 0.0
        %4355 = vmatprep.subr.mxu0 0.0
        %4356 = vmatpush1.msra.mxu0 0.0
        %4357 = vmatprep.subr.mxu0 0.0
        %4358 = vmatpush1.msra.mxu0 0.0
        %4359 = vmatprep.subr.mxu0 0.0
        %4360 = vmatpush1.msra.mxu0 0.0
        %4361 = vmatprep.subr.mxu0 0.0
        %4362 = vmatpush1.msra.mxu0 0.0
        %4363 = vmatprep.subr.mxu0 0.0
        %4364 = vmatpush1.msra.mxu0 0.0
        %4365 = vmatprep.subr.mxu0 0.0
        %4366 = vmatpush1.msra.mxu0 0.0
        %4367 = vmatprep.subr.mxu0 0.0
        %4368 = vmatpush1.msra.mxu0 0.0
        %4369 = vmatprep.subr.mxu0 0.0
        %4370 = vmatpush1.msra.mxu0 0.0
        %4371 = vmatprep.subr.mxu0 0.0
        %4372 = vmatpush1.msra.mxu0 0.0
        %4373 = vmatprep.subr.mxu0 0.0
        %4374 = vmatpush1.msra.mxu0 0.0
        %4375 = vmatprep.subr.mxu0 0.0
        %4376 = vmatpush1.msra.mxu0 0.0
        %4377 = vmatprep.subr.mxu0 0.0
        %4378 = vmatpush1.msra.mxu0 0.0
        %4379 = vmatprep.subr.mxu0 0.0
        %4380 = vmatpush1.msra.mxu0 0.0
        %4381 = vmatprep.subr.mxu0 0.0
        %4382 = vmatpush1.msra.mxu0 0.0
        %4383 = vmatprep.subr.mxu0 0.0
        %4384 = vmatpush1.msra.mxu0 0.0
        %4385 = vmatprep.subr.mxu0 0.0
        %4386 = vmatpush1.msra.mxu0 0.0
        %4387 = vmatprep.subr.mxu0 0.0
        %4388 = vmatpush1.msra.mxu0 0.0
        %4389 = vmatprep.subr.mxu0 0.0
        %4390 = vmatpush1.msra.mxu0 0.0
        %4391 = vmatprep.subr.mxu0 0.0
        %4392 = vmatpush1.msra.mxu0 0.0
        %4393 = vmatprep.subr.mxu0 0.0
        %4394 = vmatpush1.msra.mxu0 0.0
        %4395 = vmatprep.subr.mxu0 0.0
        %4396 = vmatpush1.msra.mxu0 0.0
        %4397 = vmatprep.subr.mxu0 0.0
        %4398 = vmatpush1.msra.mxu0 0.0
        %4399 = vmatprep.subr.mxu0 0.0
        %4400 = vmatpush1.msra.mxu0 0.0
        %4401 = vmatprep.subr.mxu0 0.0
        %4402 = vmatpush1.msra.mxu0 0.0
        %4403 = vmatprep.mubr.f32.mxu0 0.0
        %4404 = vmatmul.mubr.f32.gmra.mrb[0].mxu0 %v4328
        %v4405 = vpop.f32.mrb[0].mxu0
        %v4406 = vadd.f32 0.0, %v4405
        %v4407 = vpop.f32.mrb[0].mxu0
        %4408 = vmatprep.mubr.f32.mxu0 0.0
        %4409 = vmatmul.mubr.f32.gmra.mrb[0].mxu0 %v4331
        %v4410 = vpop.f32.mrb[0].mxu0
        %v4411 = vadd.f32 0.0, %v4410
        %v4412 = vpop.f32.mrb[0].mxu0
        %4413 = vmatprep.mubr.f32.mxu0 0.0
        %4414 = vmatmul.mubr.f32.gmra.mrb[0].mxu0 %v4334
        %v4415 = vpop.f32.mrb[0].mxu0
        %v4416 = vadd.f32 0.0, %v4415
        %v4417 = vpop.f32.mrb[0].mxu0
        %4418 = vmatprep.mubr.f32.mxu0 0.0
        %4419 = vmatmul.mubr.f32.gmra.mrb[0].mxu0 %v4337
        %v4420 = vpop.f32.mrb[0].mxu0
        %v4421 = vadd.f32 0.0, %v4420
        %v4422 = vpop.f32.mrb[0].mxu0
        %4423 = vdwg.mxu0
        %4425 = vset.pattern.permute.xlu0 0
        %4426 = vperm.xlu0 %4425, %v4106
        %v4427 = vpop.permute.xlu0 %4426
        %4430 = vset.pattern.permute.xlu0 0
        %4431 = vperm.xlu0 %4430, %v4111
        %v4432 = vpop.permute.xlu0 %4431
        %4435 = vset.pattern.permute.xlu0 0
        %4436 = vperm.xlu0 %4435, %v4116
        %v4437 = vpop.permute.xlu0 %4436
        %4440 = vset.pattern.permute.xlu0 0
        %4441 = vperm.xlu0 %4440, %v4121
        %v4442 = vpop.permute.xlu0 %4441
        %v4444 = vmul.f32 %v4427, %v4406
        %v4445 = vmul.f32 %v4432, %v4411
        %v4446 = vmul.f32 %v4437, %v4416
        %v4447 = vmul.f32 %v4442, %v4421
        %4449 = vset.pattern.permute.xlu0 0
        %4450 = vperm.xlu0 %4449, %v4126
        %v4451 = vpop.permute.xlu0 %4450
        %4454 = vset.pattern.permute.xlu0 0
        %4455 = vperm.xlu0 %4454, %v4131
        %v4456 = vpop.permute.xlu0 %4455
        %4459 = vset.pattern.permute.xlu0 0
        %4460 = vperm.xlu0 %4459, %v4136
        %v4461 = vpop.permute.xlu0 %4460
        %4464 = vset.pattern.permute.xlu0 0
        %4465 = vperm.xlu0 %4464, %v4141
        %v4466 = vpop.permute.xlu0 %4465
        %v4468 = vadd.f32 %v4444, %v4451
        %v4469 = vadd.f32 %v4445, %v4456
        %v4470 = vadd.f32 %v4446, %v4461
        %v4471 = vadd.f32 %v4447, %v4466
        %v4472 = vmul.f32 %v4468, 0.2
        %v4473 = vmul.f32 %v4469, 0.2
        %v4474 = vmul.f32 %v4470, 0.2
        %v4475 = vmul.f32 %v4471, 0.2
        %v4476 = vmax.f32 %v4468, %v4472
        %v4477 = vmax.f32 %v4469, %v4473
        %v4478 = vmax.f32 %v4470, %v4474
        %v4479 = vmax.f32 %v4471, %v4475
        %4481 = vset.pattern.permute.xlu0 0
        %4482 = vperm.xlu0 %4481, %v4146
        %v4483 = vpop.permute.xlu0 %4482
        %4486 = vset.pattern.permute.xlu0 0
        %4487 = vperm.xlu0 %4486, %v4151
        %v4488 = vpop.permute.xlu0 %4487
        %4491 = vset.pattern.permute.xlu0 0
        %4492 = vperm.xlu0 %4491, %v4156
        %v4493 = vpop.permute.xlu0 %4492
        %4496 = vset.pattern.permute.xlu0 0
        %4497 = vperm.xlu0 %4496, %v4161
        %v4498 = vpop.permute.xlu0 %4497
        %v4500 = vmul.f32 %v4483, %v4476
        %v4501 = vmul.f32 %v4488, %v4477
        %v4502 = vmul.f32 %v4493, %v4478
        %v4503 = vmul.f32 %v4498, %v4479
        %4505 = vset.pattern.permute.xlu0 0
        %4506 = vperm.xlu0 %4505, %v4166
        %v4507 = vpop.permute.xlu0 %4506
        %4510 = vset.pattern.permute.xlu0 0
        %4511 = vperm.xlu0 %4510, %v4171
        %v4512 = vpop.permute.xlu0 %4511
        %4515 = vset.pattern.permute.xlu0 0
        %4516 = vperm.xlu0 %4515, %v4176
        %v4517 = vpop.permute.xlu0 %4516
        %4520 = vset.pattern.permute.xlu0 0
        %4521 = vperm.xlu0 %4520, %v4181
        %v4522 = vpop.permute.xlu0 %4521
        %v4524 = vadd.f32 %v4500, %v4507
        %v4525 = vadd.f32 %v4501, %v4512
        %v4526 = vadd.f32 %v4502, %v4517
        %v4527 = vadd.f32 %v4503, %v4522
        %v4528 = vmul.f32 %v4524, 0.2
        %v4529 = vmul.f32 %v4525, 0.2
        %v4530 = vmul.f32 %v4526, 0.2
        %v4531 = vmul.f32 %v4527, 0.2
        %v4532 = vmax.f32 %v4524, %v4528
        %v4533 = vmax.f32 %v4525, %v4529
        %v4534 = vmax.f32 %v4526, %v4530
        %v4535 = vmax.f32 %v4527, %v4531
        %4540 = vrot.lane.b32.xlu0 %v4532, 9
        %v4541 = vpop.permute.xlu0 %4540
        %4542 = vrot.lane.b32.xlu0 %v4533, 9
        %v4543 = vpop.permute.xlu0 %4542
        %4544 = vrot.lane.b32.xlu0 %v4534, 9
        %v4545 = vpop.permute.xlu0 %4544
        %4546 = vrot.lane.b32.xlu0 %v4535, 9
        %v4547 = vpop.permute.xlu0 %4546
        %vm4552 = vcmask 72704
        %v4553 = vsel %vm4552, 0.0, %v4541
        %v4554 = vsel %vm4552, 0.0, %v4543
        %v4555 = vsel %vm4552, 0.0, %v4545
        %v4556 = vsel %vm4552, 0.0, %v4547
        %vm4557 = vcmask 596992
        %v4558 = vsel %vm4557, %v4553, 0.0
        %v4559 = vsel %vm4557, %v4554, 0.0
        %v4560 = vsel %vm4557, %v4555, 0.0
        %v4561 = vsel %vm4557, %v4556, 0.0
        %v4562 = vlaneseq
        %v4563 = vand.u32 %v4562, 127
        %vm4564 = vcmp.lt.s32.totalorder %v4563, 0
        %v4565 = vsub.s32 0, %v4563
        %v4566 = vsel %vm4564, %v4565, %v4563
        %v4567 = vshrl.u32 %v4566, 3
        %v4568 = vand.u32 %v4566, 7
        %v4569 = vsub.s32 0, %v4568
        %v4570 = vsel %vm4564, %v4569, %v4568
        %vm4571 = vcmp.ne.s32.totalorder %v4570, 0
        %vm4572 = vcmp.lt.s32.totalorder %v4570, 0
        %vm4573 = vmand %vm4572, %vm4571
        %v4574 = vadd.s32 %v4570, 8
        %v4575 = vsel %vm4573, %v4574, %v4570
        %vm4576 = vcmp.ge.s32.totalorder %v4575, 1
        %vm4577 = vcmp.le.s32.totalorder %v4575, 6
        %v4578 = vsel %vm4576, 1, 0
        %vm4579 = vcmp.eq.s32.totalorder %v4578, 1
        %v4580 = vsel %vm4579, %v4558, 0.0
        %v4581 = vsel %vm4579, %v4559, 0.0
        %v4582 = vsel %vm4579, %v4560, 0.0
        %v4583 = vsel %vm4579, %v4561, 0.0
        %v4584 = vsel %vm4577, 1, 0
        %vm4585 = vcmp.eq.s32.totalorder %v4584, 1
        %4590 = vrot.lane.b32.xlu0 %v4558, 126
        %v4591 = vpop.permute.xlu0 %4590
        %4592 = vrot.lane.b32.xlu0 %v4559, 126
        %v4593 = vpop.permute.xlu0 %4592
        %4594 = vrot.lane.b32.xlu0 %v4560, 126
        %v4595 = vpop.permute.xlu0 %4594
        %4596 = vrot.lane.b32.xlu0 %v4561, 126
        %v4597 = vpop.permute.xlu0 %4596
        %v4602 = vsel %vm4585, %v4591, 0.0
        %v4603 = vsel %vm4585, %v4593, 0.0
        %v4604 = vsel %vm4585, %v4595, 0.0
        %v4605 = vsel %vm4585, %v4597, 0.0
        %4606 = vrot.lane.b32.xlu0 %v4558, 120
        %v4607 = vpop.permute.xlu0 %4606
        %4608 = vrot.lane.b32.xlu0 %v4559, 120
        %v4609 = vpop.permute.xlu0 %4608
        %4610 = vrot.lane.b32.xlu0 %v4560, 120
        %v4611 = vpop.permute.xlu0 %4610
        %4612 = vrot.lane.b32.xlu0 %v4561, 120
        %v4613 = vpop.permute.xlu0 %4612
        %v4618 = vsel %vm4579, %v4607, 0.0
        %v4619 = vsel %vm4579, %v4609, 0.0
        %v4620 = vsel %vm4579, %v4611, 0.0
        %v4621 = vsel %vm4579, %v4613, 0.0
        %4622 = vrot.lane.b32.xlu0 %v4558, 118
        %v4623 = vpop.permute.xlu0 %4622
        %4624 = vrot.lane.b32.xlu0 %v4559, 118
        %v4625 = vpop.permute.xlu0 %4624
        %4626 = vrot.lane.b32.xlu0 %v4560, 118
        %v4627 = vpop.permute.xlu0 %4626
        %4628 = vrot.lane.b32.xlu0 %v4561, 118
        %v4629 = vpop.permute.xlu0 %4628
        %v4634 = vsel %vm4585, %v4623, 0.0
        %v4635 = vsel %vm4585, %v4625, 0.0
        %v4636 = vsel %vm4585, %v4627, 0.0
        %v4637 = vsel %vm4585, %v4629, 0.0
        %4638 = vrot.lane.b32.xlu0 %v4558, 112
        %v4639 = vpop.permute.xlu0 %4638
        %4640 = vrot.lane.b32.xlu0 %v4559, 112
        %v4641 = vpop.permute.xlu0 %4640
        %4642 = vrot.lane.b32.xlu0 %v4560, 112
        %v4643 = vpop.permute.xlu0 %4642
        %4644 = vrot.lane.b32.xlu0 %v4561, 112
        %v4645 = vpop.permute.xlu0 %4644
        %v4650 = vsel %vm4579, %v4639, 0.0
        %v4651 = vsel %vm4579, %v4641, 0.0
        %v4652 = vsel %vm4579, %v4643, 0.0
        %v4653 = vsel %vm4579, %v4645, 0.0
        %4654 = vrot.lane.b32.xlu0 %v4558, 110
        %v4655 = vpop.permute.xlu0 %4654
        %4656 = vrot.lane.b32.xlu0 %v4559, 110
        %v4657 = vpop.permute.xlu0 %4656
        %4658 = vrot.lane.b32.xlu0 %v4560, 110
        %v4659 = vpop.permute.xlu0 %4658
        %4660 = vrot.lane.b32.xlu0 %v4561, 110
        %v4661 = vpop.permute.xlu0 %4660
        %v4666 = vsel %vm4585, %v4655, 0.0
        %v4667 = vsel %vm4585, %v4657, 0.0
        %v4668 = vsel %vm4585, %v4659, 0.0
        %v4669 = vsel %vm4585, %v4661, 0.0
        %4670 = vrot.lane.b32.xlu0 %v4558, 127
        %v4671 = vpop.permute.xlu0 %4670
        %4672 = vrot.lane.b32.xlu0 %v4559, 127
        %v4673 = vpop.permute.xlu0 %4672
        %4674 = vrot.lane.b32.xlu0 %v4560, 127
        %v4675 = vpop.permute.xlu0 %4674
        %4676 = vrot.lane.b32.xlu0 %v4561, 127
        %v4677 = vpop.permute.xlu0 %4676
        %4682 = vrot.lane.b32.xlu0 %v4558, 119
        %v4683 = vpop.permute.xlu0 %4682
        %4684 = vrot.lane.b32.xlu0 %v4559, 119
        %v4685 = vpop.permute.xlu0 %4684
        %4686 = vrot.lane.b32.xlu0 %v4560, 119
        %v4687 = vpop.permute.xlu0 %4686
        %4688 = vrot.lane.b32.xlu0 %v4561, 119
        %v4689 = vpop.permute.xlu0 %4688
        %4694 = vrot.lane.b32.xlu0 %v4558, 111
        %v4695 = vpop.permute.xlu0 %4694
        %4696 = vrot.lane.b32.xlu0 %v4559, 111
        %v4697 = vpop.permute.xlu0 %4696
        %4698 = vrot.lane.b32.xlu0 %v4560, 111
        %v4699 = vpop.permute.xlu0 %4698
        %4700 = vrot.lane.b32.xlu0 %v4561, 111
        %v4701 = vpop.permute.xlu0 %4700
        %v4706 = vld [vmem:[#allocation10] sm:$0xff]
        %v4707 = vld [vmem:[#allocation10 + $0x8] sm:$0xff]
        %v4708 = vld [vmem:[#allocation10 + $0x10] sm:$0xff]
        %v4709 = vld [vmem:[#allocation10 + $0x18] sm:$0xff]
        %v4710 = vld [vmem:[#allocation10 + $0x20] sm:$0xff]
        %v4711 = vld [vmem:[#allocation10 + $0x28] sm:$0xff]
        %v4712 = vld [vmem:[%s21] sm:$0xff]
        %v4713 = vld [vmem:[%s21 + $0x8] sm:$0xff]
        %4715 = vset.pattern.permute.xlu0 0
        %4716 = vperm.xlu0 %4715, %v4712
        %v4717 = vpop.permute.xlu0 %4716
        %4720 = vset.pattern.permute.xlu0 0
        %4721 = vperm.xlu0 %4720, %v4713
        %v4722 = vpop.permute.xlu0 %4721
        %vm4724 = vcmask 261120
        %v4726 = vsel %vm4724, %v4708, 0
        %v4729 = vsel %vm4724, %v4711, 0
        %4731 = vmatprep.subr.mxu0 0.0
        %4732 = vmatpush1.msra.mxu0 %v4580
        %4733 = vmatprep.subr.mxu0 0.0
        %4734 = vmatpush1.msra.mxu0 %v4581
        %4735 = vmatprep.subr.mxu0 0.0
        %4736 = vmatpush1.msra.mxu0 %v4582
        %4737 = vmatprep.subr.mxu0 0.0
        %4738 = vmatpush1.msra.mxu0 %v4583
        %4739 = vmatprep.subr.mxu0 0.0
        %4740 = vmatpush1.msra.mxu0 %v4671
        %4741 = vmatprep.subr.mxu0 0.0
        %4742 = vmatpush1.msra.mxu0 %v4673
        %4743 = vmatprep.subr.mxu0 0.0
        %4744 = vmatpush1.msra.mxu0 %v4675
        %4745 = vmatprep.subr.mxu0 0.0
        %4746 = vmatpush1.msra.mxu0 %v4677
        %4747 = vmatprep.subr.mxu0 0.0
        %4748 = vmatpush1.msra.mxu0 %v4602
        %4749 = vmatprep.subr.mxu0 0.0
        %4750 = vmatpush1.msra.mxu0 %v4603
        %4751 = vmatprep.subr.mxu0 0.0
        %4752 = vmatpush1.msra.mxu0 %v4604
        %4753 = vmatprep.subr.mxu0 0.0
        %4754 = vmatpush1.msra.mxu0 %v4605
        %4755 = vmatprep.subr.mxu0 0.0
        %4756 = vmatpush1.msra.mxu0 %v4618
        %4757 = vmatprep.subr.mxu0 0.0
        %4758 = vmatpush1.msra.mxu0 %v4619
        %4759 = vmatprep.subr.mxu0 0.0
        %4760 = vmatpush1.msra.mxu0 %v4620
        %4761 = vmatprep.subr.mxu0 0.0
        %4762 = vmatpush1.msra.mxu0 %v4621
        %4763 = vmatprep.subr.mxu0 0.0
        %4764 = vmatpush1.msra.mxu0 %v4683
        %4765 = vmatprep.subr.mxu0 0.0
        %4766 = vmatpush1.msra.mxu0 %v4685
        %4767 = vmatprep.subr.mxu0 0.0
        %4768 = vmatpush1.msra.mxu0 %v4687
        %4769 = vmatprep.subr.mxu0 0.0
        %4770 = vmatpush1.msra.mxu0 %v4689
        %4771 = vmatprep.subr.mxu0 0.0
        %4772 = vmatpush1.msra.mxu0 %v4634
        %4773 = vmatprep.subr.mxu0 0.0
        %4774 = vmatpush1.msra.mxu0 %v4635
        %4775 = vmatprep.subr.mxu0 0.0
        %4776 = vmatpush1.msra.mxu0 %v4636
        %4777 = vmatprep.subr.mxu0 0.0
        %4778 = vmatpush1.msra.mxu0 %v4637
        %4779 = vmatprep.subr.mxu0 0.0
        %4780 = vmatpush1.msra.mxu0 %v4650
        %4781 = vmatprep.subr.mxu0 0.0
        %4782 = vmatpush1.msra.mxu0 %v4651
        %4783 = vmatprep.subr.mxu0 0.0
        %4784 = vmatpush1.msra.mxu0 %v4652
        %4785 = vmatprep.subr.mxu0 0.0
        %4786 = vmatpush1.msra.mxu0 %v4653
        %4787 = vmatprep.subr.mxu0 0.0
        %4788 = vmatpush1.msra.mxu0 %v4695
        %4789 = vmatprep.subr.mxu0 0.0
        %4790 = vmatpush1.msra.mxu0 %v4697
        %4791 = vmatprep.subr.mxu0 0.0
        %4792 = vmatpush1.msra.mxu0 %v4699
        %4793 = vmatprep.subr.mxu0 0.0
        %4794 = vmatpush1.msra.mxu0 %v4701
        %4795 = vmatprep.mubr.f32.mxu0 %v4707
        %4796 = vmatmul.mubr.f32.gmra.mrb[0].mxu0 %v4706
        %v4797 = vpop.f32.mrb[0].mxu0
        %v4798 = vadd.f32 %v4717, %v4797
        %v4799 = vpop.f32.mrb[0].mxu0
        %4800 = vmatprep.mubr.f32.mxu0 %v4710
        %4801 = vmatmul.mubr.f32.gmra.mrb[0].mxu0 %v4709
        %v4802 = vpop.f32.mrb[0].mxu0
        %v4803 = vadd.f32 %v4722, %v4802
        %v4804 = vpop.f32.mrb[0].mxu0
        %4805 = vdwg.mxu0
        %4806 = vmatprep.subr.mxu0 0.0
        %4807 = vmatpush1.msra.mxu0 %v4666
        %4808 = vmatprep.subr.mxu0 0.0
        %4809 = vmatpush1.msra.mxu0 %v4667
        %4810 = vmatprep.subr.mxu0 0.0
        %4811 = vmatpush1.msra.mxu0 %v4668
        %4812 = vmatprep.subr.mxu0 0.0
        %4813 = vmatpush1.msra.mxu0 %v4669
        %4814 = vmatprep.subr.mxu0 0.0
        %4815 = vmatpush1.msra.mxu0 0.0
        %4816 = vmatprep.subr.mxu0 0.0
        %4817 = vmatpush1.msra.mxu0 0.0
        %4818 = vmatprep.subr.mxu0 0.0
        %4819 = vmatpush1.msra.mxu0 0.0
        %4820 = vmatprep.subr.mxu0 0.0
        %4821 = vmatpush1.msra.mxu0 0.0
        %4822 = vmatprep.subr.mxu0 0.0
        %4823 = vmatpush1.msra.mxu0 0.0
        %4824 = vmatprep.subr.mxu0 0.0
        %4825 = vmatpush1.msra.mxu0 0.0
        %4826 = vmatprep.subr.mxu0 0.0
        %4827 = vmatpush1.msra.mxu0 0.0
        %4828 = vmatprep.subr.mxu0 0.0
        %4829 = vmatpush1.msra.mxu0 0.0
        %4830 = vmatprep.subr.mxu0 0.0
        %4831 = vmatpush1.msra.mxu0 0.0
        %4832 = vmatprep.subr.mxu0 0.0
        %4833 = vmatpush1.msra.mxu0 0.0
        %4834 = vmatprep.subr.mxu0 0.0
        %4835 = vmatpush1.msra.mxu0 0.0
        %4836 = vmatprep.subr.mxu0 0.0
        %4837 = vmatpush1.msra.mxu0 0.0
        %4838 = vmatprep.subr.mxu0 0.0
        %4839 = vmatpush1.msra.mxu0 0.0
        %4840 = vmatprep.subr.mxu0 0.0
        %4841 = vmatpush1.msra.mxu0 0.0
        %4842 = vmatprep.subr.mxu0 0.0
        %4843 = vmatpush1.msra.mxu0 0.0
        %4844 = vmatprep.subr.mxu0 0.0
        %4845 = vmatpush1.msra.mxu0 0.0
        %4846 = vmatprep.subr.mxu0 0.0
        %4847 = vmatpush1.msra.mxu0 0.0
        %4848 = vmatprep.subr.mxu0 0.0
        %4849 = vmatpush1.msra.mxu0 0.0
        %4850 = vmatprep.subr.mxu0 0.0
        %4851 = vmatpush1.msra.mxu0 0.0
        %4852 = vmatprep.subr.mxu0 0.0
        %4853 = vmatpush1.msra.mxu0 0.0
        %4854 = vmatprep.subr.mxu0 0.0
        %4855 = vmatpush1.msra.mxu0 0.0
        %4856 = vmatprep.subr.mxu0 0.0
        %4857 = vmatpush1.msra.mxu0 0.0
        %4858 = vmatprep.subr.mxu0 0.0
        %4859 = vmatpush1.msra.mxu0 0.0
        %4860 = vmatprep.subr.mxu0 0.0
        %4861 = vmatpush1.msra.mxu0 0.0
        %4862 = vmatprep.subr.mxu0 0.0
        %4863 = vmatpush1.msra.mxu0 0.0
        %4864 = vmatprep.subr.mxu0 0.0
        %4865 = vmatpush1.msra.mxu0 0.0
        %4866 = vmatprep.subr.mxu0 0.0
        %4867 = vmatpush1.msra.mxu0 0.0
        %4868 = vmatprep.subr.mxu0 0.0
        %4869 = vmatpush1.msra.mxu0 0.0
        %4870 = vmatprep.mubr.f32.mxu0 0.0
        %4871 = vmatmul.mubr.f32.gmra.mrb[0].mxu0 %v4726
        %v4872 = vpop.f32.mrb[0].mxu0
        %v4873 = vadd.f32 %v4798, %v4872
        %v4874 = vpop.f32.mrb[0].mxu0
        %4875 = vmatprep.mubr.f32.mxu0 0.0
        %4876 = vmatmul.mubr.f32.gmra.mrb[0].mxu0 %v4729
        %v4877 = vpop.f32.mrb[0].mxu0
        %v4878 = vadd.f32 %v4803, %v4877
        %v4879 = vpop.f32.mrb[0].mxu0
        %4880 = vdwg.mxu0
        %4882 = vset.pattern.permute.xlu0 0
        %4883 = vperm.xlu0 %4882, %v4186
        %v4884 = vpop.permute.xlu0 %4883
        %4887 = vset.pattern.permute.xlu0 0
        %4888 = vperm.xlu0 %4887, %v4191
        %v4889 = vpop.permute.xlu0 %4888
        %v4891 = vmul.f32 %v4884, %v4873
        %v4892 = vmul.f32 %v4889, %v4878
        %4894 = vset.pattern.permute.xlu0 0
        %4895 = vperm.xlu0 %4894, %v4196
        %v4896 = vpop.permute.xlu0 %4895
        %4899 = vset.pattern.permute.xlu0 0
        %4900 = vperm.xlu0 %4899, %v4201
        %v4901 = vpop.permute.xlu0 %4900
        %v4903 = vadd.f32 %v4891, %v4896
        %v4904 = vadd.f32 %v4892, %v4901
        %v4905 = vmul.f32 %v4903, 0.2
        %v4906 = vmul.f32 %v4904, 0.2
        %v4907 = vmax.f32 %v4903, %v4905
        %v4908 = vmax.f32 %v4904, %v4906
        %4910 = vset.pattern.permute.xlu0 0
        %4911 = vperm.xlu0 %4910, %v4206
        %v4912 = vpop.permute.xlu0 %4911
        %4915 = vset.pattern.permute.xlu0 0
        %4916 = vperm.xlu0 %4915, %v4211
        %v4917 = vpop.permute.xlu0 %4916
        %v4919 = vmul.f32 %v4912, %v4907
        %v4920 = vmul.f32 %v4917, %v4908
        %4922 = vset.pattern.permute.xlu0 0
        %4923 = vperm.xlu0 %4922, %v4216
        %v4924 = vpop.permute.xlu0 %4923
        %4927 = vset.pattern.permute.xlu0 0
        %4928 = vperm.xlu0 %4927, %v4221
        %v4929 = vpop.permute.xlu0 %4928
        %v4931 = vadd.f32 %v4919, %v4924
        %v4932 = vadd.f32 %v4920, %v4929
        %v4933 = vmul.f32 %v4931, 0.2
        %v4934 = vmul.f32 %v4932, 0.2
        %v4935 = vmax.f32 %v4931, %v4933
        %v4936 = vmax.f32 %v4932, %v4934
        %4939 = vrot.lane.b32.xlu0 %v4935, 9
        %v4940 = vpop.permute.xlu0 %4939
        %4941 = vrot.lane.b32.xlu0 %v4936, 9
        %v4942 = vpop.permute.xlu0 %4941
        %v4945 = vsel %vm4552, 0.0, %v4940
        %v4946 = vsel %vm4552, 0.0, %v4942
        %v4947 = vsel %vm4557, %v4945, 0.0
        %v4948 = vsel %vm4557, %v4946, 0.0
        %v4949 = vsel %vm4579, %v4947, 0.0
        %v4950 = vsel %vm4579, %v4948, 0.0
        %4953 = vrot.lane.b32.xlu0 %v4947, 126
        %v4954 = vpop.permute.xlu0 %4953
        %4955 = vrot.lane.b32.xlu0 %v4948, 126
        %v4956 = vpop.permute.xlu0 %4955
        %v4959 = vsel %vm4585, %v4954, 0.0
        %v4960 = vsel %vm4585, %v4956, 0.0
        %4961 = vrot.lane.b32.xlu0 %v4947, 120
        %v4962 = vpop.permute.xlu0 %4961
        %4963 = vrot.lane.b32.xlu0 %v4948, 120
        %v4964 = vpop.permute.xlu0 %4963
        %v4967 = vsel %vm4579, %v4962, 0.0
        %v4968 = vsel %vm4579, %v4964, 0.0
        %4969 = vrot.lane.b32.xlu0 %v4947, 118
        %v4970 = vpop.permute.xlu0 %4969
        %4971 = vrot.lane.b32.xlu0 %v4948, 118
        %v4972 = vpop.permute.xlu0 %4971
        %v4975 = vsel %vm4585, %v4970, 0.0
        %v4976 = vsel %vm4585, %v4972, 0.0
        %4977 = vrot.lane.b32.xlu0 %v4947, 112
        %v4978 = vpop.permute.xlu0 %4977
        %4979 = vrot.lane.b32.xlu0 %v4948, 112
        %v4980 = vpop.permute.xlu0 %4979
        %v4983 = vsel %vm4579, %v4978, 0.0
        %v4984 = vsel %vm4579, %v4980, 0.0
        %4985 = vrot.lane.b32.xlu0 %v4947, 110
        %v4986 = vpop.permute.xlu0 %4985
        %4987 = vrot.lane.b32.xlu0 %v4948, 110
        %v4988 = vpop.permute.xlu0 %4987
        %v4991 = vsel %vm4585, %v4986, 0.0
        %v4992 = vsel %vm4585, %v4988, 0.0
        %4993 = vrot.lane.b32.xlu0 %v4947, 127
        %v4994 = vpop.permute.xlu0 %4993
        %4995 = vrot.lane.b32.xlu0 %v4948, 127
        %v4996 = vpop.permute.xlu0 %4995
        %4999 = vrot.lane.b32.xlu0 %v4947, 119
        %v5000 = vpop.permute.xlu0 %4999
        %5001 = vrot.lane.b32.xlu0 %v4948, 119
        %v5002 = vpop.permute.xlu0 %5001
        %5005 = vrot.lane.b32.xlu0 %v4947, 111
        %v5006 = vpop.permute.xlu0 %5005
        %5007 = vrot.lane.b32.xlu0 %v4948, 111
        %v5008 = vpop.permute.xlu0 %5007
        %v5011 = vld [vmem:[%s23] sm:$0xff]
        %v5012 = vld [vmem:[%s23 + $0x8] sm:$0xff]
        %v5013 = vld [vmem:[%s23 + $0x10] sm:$0xff]
        %v5014 = vld [vmem:[%s23 + $0x18] sm:$0xff]
        %v5015 = vld [vmem:[%s25] sm:$0xff]
        %v5016 = vld [vmem:[%s25 + $0x8] sm:$0xff]
        %5018 = vset.pattern.permute.xlu0 0
        %5019 = vperm.xlu0 %5018, %v5015
        %v5020 = vpop.permute.xlu0 %5019
        %5023 = vset.pattern.permute.xlu0 0
        %5024 = vperm.xlu0 %5023, %v5016
        %v5025 = vpop.permute.xlu0 %5024
        %v5028 = vsel %vm4326, %v5012, 0
        %v5031 = vsel %vm4326, %v5014, 0
        %5033 = vmatprep.subr.mxu0 0.0
        %5034 = vmatpush1.msra.mxu0 %v4949
        %5035 = vmatprep.subr.mxu0 0.0
        %5036 = vmatpush1.msra.mxu0 %v4950
        %5037 = vmatprep.subr.mxu0 0.0
        %5038 = vmatpush1.msra.mxu0 %v4994
        %5039 = vmatprep.subr.mxu0 0.0
        %5040 = vmatpush1.msra.mxu0 %v4996
        %5041 = vmatprep.subr.mxu0 0.0
        %5042 = vmatpush1.msra.mxu0 %v4959
        %5043 = vmatprep.subr.mxu0 0.0
        %5044 = vmatpush1.msra.mxu0 %v4960
        %5045 = vmatprep.subr.mxu0 0.0
        %5046 = vmatpush1.msra.mxu0 %v4967
        %5047 = vmatprep.subr.mxu0 0.0
        %5048 = vmatpush1.msra.mxu0 %v4968
        %5049 = vmatprep.subr.mxu0 0.0
        %5050 = vmatpush1.msra.mxu0 %v5000
        %5051 = vmatprep.subr.mxu0 0.0
        %5052 = vmatpush1.msra.mxu0 %v5002
        %5053 = vmatprep.subr.mxu0 0.0
        %5054 = vmatpush1.msra.mxu0 %v4975
        %5055 = vmatprep.subr.mxu0 0.0
        %5056 = vmatpush1.msra.mxu0 %v4976
        %5057 = vmatprep.subr.mxu0 0.0
        %5058 = vmatpush1.msra.mxu0 %v4983
        %5059 = vmatprep.subr.mxu0 0.0
        %5060 = vmatpush1.msra.mxu0 %v4984
        %5061 = vmatprep.subr.mxu0 0.0
        %5062 = vmatpush1.msra.mxu0 %v5006
        %5063 = vmatprep.subr.mxu0 0.0
        %5064 = vmatpush1.msra.mxu0 %v5008
        %5065 = vmatprep.subr.mxu0 0.0
        %5066 = vmatpush1.msra.mxu0 %v4991
        %5067 = vmatprep.subr.mxu0 0.0
        %5068 = vmatpush1.msra.mxu0 %v4992
        %5069 = vmatprep.subr.mxu0 0.0
        %5070 = vmatpush1.msra.mxu0 0.0
        %5071 = vmatprep.subr.mxu0 0.0
        %5072 = vmatpush1.msra.mxu0 0.0
        %5073 = vmatprep.subr.mxu0 0.0
        %5074 = vmatpush1.msra.mxu0 0.0
        %5075 = vmatprep.subr.mxu0 0.0
        %5076 = vmatpush1.msra.mxu0 0.0
        %5077 = vmatprep.subr.mxu0 0.0
        %5078 = vmatpush1.msra.mxu0 0.0
        %5079 = vmatprep.subr.mxu0 0.0
        %5080 = vmatpush1.msra.mxu0 0.0
        %5081 = vmatprep.subr.mxu0 0.0
        %5082 = vmatpush1.msra.mxu0 0.0
        %5083 = vmatprep.subr.mxu0 0.0
        %5084 = vmatpush1.msra.mxu0 0.0
        %5085 = vmatprep.subr.mxu0 0.0
        %5086 = vmatpush1.msra.mxu0 0.0
        %5087 = vmatprep.subr.mxu0 0.0
        %5088 = vmatpush1.msra.mxu0 0.0
        %5089 = vmatprep.subr.mxu0 0.0
        %5090 = vmatpush1.msra.mxu0 0.0
        %5091 = vmatprep.subr.mxu0 0.0
        %5092 = vmatpush1.msra.mxu0 0.0
        %5093 = vmatprep.subr.mxu0 0.0
        %5094 = vmatpush1.msra.mxu0 0.0
        %5095 = vmatprep.subr.mxu0 0.0
        %5096 = vmatpush1.msra.mxu0 0.0
        %5097 = vmatprep.mubr.f32.mxu0 %v5028
        %5098 = vmatmul.mubr.f32.gmra.mrb[0].mxu0 %v5011
        %v5099 = vpop.f32.mrb[0].mxu0
        %v5100 = vadd.f32 %v5020, %v5099
        %v5101 = vpop.f32.mrb[0].mxu0
        %5102 = vmatprep.mubr.f32.mxu0 %v5031
        %5103 = vmatmul.mubr.f32.gmra.mrb[0].mxu0 %v5013
        %v5104 = vpop.f32.mrb[0].mxu0
        %v5105 = vadd.f32 %v5025, %v5104
        %v5106 = vpop.f32.mrb[0].mxu0
        %5107 = vdwg.mxu0
        %v5108 = vld [vmem:[#allocation11] sm:$0xff]
        %v5109 = vld [vmem:[#allocation11 + $0x8] sm:$0xff]
        %v5110 = vld [vmem:[%s29] sm:$0xff]
        %v5111 = vld [vmem:[%s29 + $0x8] sm:$0xff]
        %5113 = vset.pattern.permute.xlu0 0
        %5114 = vperm.xlu0 %5113, %v5110
        %v5115 = vpop.permute.xlu0 %5114
        %5118 = vset.pattern.permute.xlu0 0
        %5119 = vperm.xlu0 %5118, %v5111
        %v5120 = vpop.permute.xlu0 %5119
        %v5123 = vsel %vm4724, %v5108, 0
        %v5126 = vsel %vm4724, %v5109, 0
        %5128 = vmatprep.subr.mxu0 0.0
        %5129 = vmatpush1.msra.mxu0 %v4406
        %5130 = vmatprep.subr.mxu0 0.0
        %5131 = vmatpush1.msra.mxu0 %v4411
        %5132 = vmatprep.subr.mxu0 0.0
        %5133 = vmatpush1.msra.mxu0 %v4416
        %5134 = vmatprep.subr.mxu0 0.0
        %5135 = vmatpush1.msra.mxu0 %v4421
        %5136 = vmatprep.subr.mxu0 0.0
        %5137 = vmatpush1.msra.mxu0 0.0
        %5138 = vmatprep.subr.mxu0 0.0
        %5139 = vmatpush1.msra.mxu0 0.0
        %5140 = vmatprep.subr.mxu0 0.0
        %5141 = vmatpush1.msra.mxu0 0.0
        %5142 = vmatprep.subr.mxu0 0.0
        %5143 = vmatpush1.msra.mxu0 0.0
        %5144 = vmatprep.subr.mxu0 0.0
        %5145 = vmatpush1.msra.mxu0 0.0
        %5146 = vmatprep.subr.mxu0 0.0
        %5147 = vmatpush1.msra.mxu0 0.0
        %5148 = vmatprep.subr.mxu0 0.0
        %5149 = vmatpush1.msra.mxu0 0.0
        %5150 = vmatprep.subr.mxu0 0.0
        %5151 = vmatpush1.msra.mxu0 0.0
        %5152 = vmatprep.subr.mxu0 0.0
        %5153 = vmatpush1.msra.mxu0 0.0
        %5154 = vmatprep.subr.mxu0 0.0
        %5155 = vmatpush1.msra.mxu0 0.0
        %5156 = vmatprep.subr.mxu0 0.0
        %5157 = vmatpush1.msra.mxu0 0.0
        %5158 = vmatprep.subr.mxu0 0.0
        %5159 = vmatpush1.msra.mxu0 0.0
        %5160 = vmatprep.subr.mxu0 0.0
        %5161 = vmatpush1.msra.mxu0 0.0
        %5162 = vmatprep.subr.mxu0 0.0
        %5163 = vmatpush1.msra.mxu0 0.0
        %5164 = vmatprep.subr.mxu0 0.0
        %5165 = vmatpush1.msra.mxu0 0.0
        %5166 = vmatprep.subr.mxu0 0.0
        %5167 = vmatpush1.msra.mxu0 0.0
        %5168 = vmatprep.subr.mxu0 0.0
        %5169 = vmatpush1.msra.mxu0 0.0
        %5170 = vmatprep.subr.mxu0 0.0
        %5171 = vmatpush1.msra.mxu0 0.0
        %5172 = vmatprep.subr.mxu0 0.0
        %5173 = vmatpush1.msra.mxu0 0.0
        %5174 = vmatprep.subr.mxu0 0.0
        %5175 = vmatpush1.msra.mxu0 0.0
        %5176 = vmatprep.subr.mxu0 0.0
        %5177 = vmatpush1.msra.mxu0 0.0
        %5178 = vmatprep.subr.mxu0 0.0
        %5179 = vmatpush1.msra.mxu0 0.0
        %5180 = vmatprep.subr.mxu0 0.0
        %5181 = vmatpush1.msra.mxu0 0.0
        %5182 = vmatprep.subr.mxu0 0.0
        %5183 = vmatpush1.msra.mxu0 0.0
        %5184 = vmatprep.subr.mxu0 0.0
        %5185 = vmatpush1.msra.mxu0 0.0
        %5186 = vmatprep.subr.mxu0 0.0
        %5187 = vmatpush1.msra.mxu0 0.0
        %5188 = vmatprep.subr.mxu0 0.0
        %5189 = vmatpush1.msra.mxu0 0.0
        %5190 = vmatprep.subr.mxu0 0.0
        %5191 = vmatpush1.msra.mxu0 0.0
        %5192 = vmatprep.mubr.f32.mxu0 0.0
        %5193 = vmatmul.mubr.f32.gmra.mrb[0].mxu0 %v5123
        %v5194 = vpop.f32.mrb[0].mxu0
        %v5195 = vadd.f32 %v5115, %v5194
        %v5196 = vpop.f32.mrb[0].mxu0
        %5197 = vmatprep.mubr.f32.mxu0 0.0
        %5198 = vmatmul.mubr.f32.gmra.mrb[0].mxu0 %v5126
        %v5199 = vpop.f32.mrb[0].mxu0
        %v5200 = vadd.f32 %v5120, %v5199
        %v5201 = vpop.f32.mrb[0].mxu0
        %5202 = vdwg.mxu0
        %v5203 = vadd.f32 %v5195, %v5100
        %v5204 = vadd.f32 %v5200, %v5105
        %v5205 = vld [vmem:[#allocation13] sm:$0xff]
        %v5206 = vld [vmem:[#allocation13 + $0x8] sm:$0xff]
        %v5207 = vld [vmem:[#allocation13 + $0x10] sm:$0xff]
        %v5208 = vld [vmem:[#allocation13 + $0x18] sm:$0xff]
        %v5209 = vld [vmem:[#allocation13 + $0x20] sm:$0xff]
        %v5210 = vld [vmem:[#allocation13 + $0x28] sm:$0xff]
        %v5211 = vld [vmem:[#allocation13 + $0x30] sm:$0xff]
        %v5212 = vld [vmem:[#allocation13 + $0x38] sm:$0xff]
        %v5213 = vld [vmem:[#allocation13 + $0x40] sm:$0xff]
        %v5214 = vld [vmem:[#allocation13 + $0x48] sm:$0xff]
        %v5215 = vld [vmem:[#allocation13 + $0x50] sm:$0xff]
        %v5216 = vld [vmem:[#allocation13 + $0x58] sm:$0xff]
        %v5217 = vld [vmem:[#allocation13 + $0x60] sm:$0xff]
        %v5218 = vld [vmem:[#allocation13 + $0x68] sm:$0xff]
        %v5219 = vld [vmem:[#allocation13 + $0x70] sm:$0xff]
        %v5220 = vld [vmem:[#allocation13 + $0x78] sm:$0xff]
        %vm5221 = vcmask 523264
        %v5223 = vsel %vm5221, %v5203, 0
        %v5226 = vsel %vm5221, %v5204, 0
        %5228 = vmatprep.subr.mxu0 %v5206
        %5229 = vmatpush1.msra.mxu0 %v5205
        %5230 = vmatprep.subr.mxu0 %v5208
        %5231 = vmatpush1.msra.mxu0 %v5207
        %5232 = vmatprep.subr.mxu0 %v5210
        %5233 = vmatpush1.msra.mxu0 %v5209
        %5234 = vmatprep.subr.mxu0 %v5212
        %5235 = vmatpush1.msra.mxu0 %v5211
        %5236 = vmatprep.subr.mxu0 %v5214
        %5237 = vmatpush1.msra.mxu0 %v5213
        %5238 = vmatprep.subr.mxu0 %v5216
        %5239 = vmatpush1.msra.mxu0 %v5215
        %5240 = vmatprep.subr.mxu0 %v5218
        %5241 = vmatpush1.msra.mxu0 %v5217
        %5242 = vmatprep.subr.mxu0 %v5220
        %5243 = vmatpush1.msra.mxu0 %v5219
        %5244 = vmatprep.subr.mxu0 0.0
        %5245 = vmatpush1.msra.mxu0 0.0
        %5246 = vmatprep.subr.mxu0 0.0
        %5247 = vmatpush1.msra.mxu0 0.0
        %5248 = vmatprep.subr.mxu0 0.0
        %5249 = vmatpush1.msra.mxu0 0.0
        %5250 = vmatprep.subr.mxu0 0.0
        %5251 = vmatpush1.msra.mxu0 0.0
        %5252 = vmatprep.subr.mxu0 0.0
        %5253 = vmatpush1.msra.mxu0 0.0
        %5254 = vmatprep.subr.mxu0 0.0
        %5255 = vmatpush1.msra.mxu0 0.0
        %5256 = vmatprep.subr.mxu0 0.0
        %5257 = vmatpush1.msra.mxu0 0.0
        %5258 = vmatprep.subr.mxu0 0.0
        %5259 = vmatpush1.msra.mxu0 0.0
        %5260 = vmatprep.subr.mxu0 0.0
        %5261 = vmatpush1.msra.mxu0 0.0
        %5262 = vmatprep.subr.mxu0 0.0
        %5263 = vmatpush1.msra.mxu0 0.0
        %5264 = vmatprep.subr.mxu0 0.0
        %5265 = vmatpush1.msra.mxu0 0.0
        %5266 = vmatprep.subr.mxu0 0.0
        %5267 = vmatpush1.msra.mxu0 0.0
        %5268 = vmatprep.subr.mxu0 0.0
        %5269 = vmatpush1.msra.mxu0 0.0
        %5270 = vmatprep.subr.mxu0 0.0
        %5271 = vmatpush1.msra.mxu0 0.0
        %5272 = vmatprep.subr.mxu0 0.0
        %5273 = vmatpush1.msra.mxu0 0.0
        %5274 = vmatprep.subr.mxu0 0.0
        %5275 = vmatpush1.msra.mxu0 0.0
        %5276 = vmatprep.subr.mxu0 0.0
        %5277 = vmatpush1.msra.mxu0 0.0
        %5278 = vmatprep.subr.mxu0 0.0
        %5279 = vmatpush1.msra.mxu0 0.0
        %5280 = vmatprep.subr.mxu0 0.0
        %5281 = vmatpush1.msra.mxu0 0.0
        %5282 = vmatprep.subr.mxu0 0.0
        %5283 = vmatpush1.msra.mxu0 0.0
        %5284 = vmatprep.subr.mxu0 0.0
        %5285 = vmatpush1.msra.mxu0 0.0
        %5286 = vmatprep.subr.mxu0 0.0
        %5287 = vmatpush1.msra.mxu0 0.0
        %5288 = vmatprep.subr.mxu0 0.0
        %5289 = vmatpush1.msra.mxu0 0.0
        %5290 = vmatprep.subr.mxu0 0.0
        %5291 = vmatpush1.msra.mxu0 0.0
        %5292 = vmatprep.mubr.f32.mxu0 0.0
        %5293 = vmatmul.mubr.f32.gmra.mrb[0].mxu0 %v5223
        %v5294 = vpop.f32.mrb[0].mxu0
        %v5295 = vadd.f32 0.0, %v5294
        %v5296 = vpop.f32.mrb[0].mxu0
        %v5297 = vadd.f32 0.0, %v5296
        %5298 = vmatprep.mubr.f32.mxu0 0.0
        %5299 = vmatmul.mubr.f32.gmra.mrb[0].mxu0 %v5226
        %v5300 = vpop.f32.mrb[0].mxu0
        %v5301 = vadd.f32 0.0, %v5300
        %v5302 = vpop.f32.mrb[0].mxu0
        %v5303 = vadd.f32 0.0, %v5302
        %5304 = vdwg.mxu0
        %5306 = vset.pattern.permute.xlu0 0
        %5307 = vperm.xlu0 %5306, %v4226
        %v5308 = vpop.permute.xlu0 %5307
        %5311 = vset.pattern.permute.xlu0 0
        %5312 = vperm.xlu0 %5311, %v4231
        %v5313 = vpop.permute.xlu0 %5312
        %v5315 = vmul.f32 %v5308, %v5295
        %v5316 = vmul.f32 %v5308, %v5297
        %v5317 = vmul.f32 %v5313, %v5301
        %v5318 = vmul.f32 %v5313, %v5303
        %5320 = vset.pattern.permute.xlu0 0
        %5321 = vperm.xlu0 %5320, %v4236
        %v5322 = vpop.permute.xlu0 %5321
        %5325 = vset.pattern.permute.xlu0 0
        %5326 = vperm.xlu0 %5325, %v4241
        %v5327 = vpop.permute.xlu0 %5326
        %v5329 = vadd.f32 %v5315, %v5322
        %v5330 = vadd.f32 %v5316, %v5322
        %v5331 = vadd.f32 %v5317, %v5327
        %v5332 = vadd.f32 %v5318, %v5327
        %v5333 = vmul.f32 %v5329, 0.2
        %v5334 = vmul.f32 %v5330, 0.2
        %v5335 = vmul.f32 %v5331, 0.2
        %v5336 = vmul.f32 %v5332, 0.2
        %v5337 = vmax.f32 %v5329, %v5333
        %v5338 = vmax.f32 %v5330, %v5334
        %v5339 = vmax.f32 %v5331, %v5335
        %v5340 = vmax.f32 %v5332, %v5336
        %5342 = vset.pattern.permute.xlu0 0
        %5343 = vperm.xlu0 %5342, %v4246
        %v5344 = vpop.permute.xlu0 %5343
        %5347 = vset.pattern.permute.xlu0 0
        %5348 = vperm.xlu0 %5347, %v4251
        %v5349 = vpop.permute.xlu0 %5348
        %v5351 = vmul.f32 %v5344, %v5337
        %v5352 = vmul.f32 %v5344, %v5338
        %v5353 = vmul.f32 %v5349, %v5339
        %v5354 = vmul.f32 %v5349, %v5340
        %5356 = vset.pattern.permute.xlu0 0
        %5357 = vperm.xlu0 %5356, %v4256
        %v5358 = vpop.permute.xlu0 %5357
        %5361 = vset.pattern.permute.xlu0 0
        %5362 = vperm.xlu0 %5361, %v4261
        %v5363 = vpop.permute.xlu0 %5362
        %v5365 = vadd.f32 %v5351, %v5358
        %v5366 = vadd.f32 %v5352, %v5358
        %v5367 = vadd.f32 %v5353, %v5363
        %v5368 = vadd.f32 %v5354, %v5363
        %v5369 = vmul.f32 %v5365, 0.2
        %v5370 = vmul.f32 %v5366, 0.2
        %v5371 = vmul.f32 %v5367, 0.2
        %v5372 = vmul.f32 %v5368, 0.2
        %v5373 = vmax.f32 %v5365, %v5369
        %v5374 = vmax.f32 %v5366, %v5370
        %v5375 = vmax.f32 %v5367, %v5371
        %v5376 = vmax.f32 %v5368, %v5372
        %5381 = vrot.lane.b32.xlu0 %v5373, 17
        %v5382 = vpop.permute.xlu0 %5381
        %5383 = vrot.lane.b32.xlu0 %v5374, 17
        %v5384 = vpop.permute.xlu0 %5383
        %5385 = vrot.lane.b32.xlu0 %v5375, 17
        %v5386 = vpop.permute.xlu0 %5385
        %5387 = vrot.lane.b32.xlu0 %v5376, 17
        %v5388 = vpop.permute.xlu0 %5387
        %vm5389 = vcmask 138240
        %v5390 = vsel %vm5389, %v5382, %v5384
        %v5391 = vsel %vm5389, %v5386, %v5388
        %v5398 = vsel %vm5389, 0.0, %v5382
        %v5399 = vsel %vm5389, 0.0, %v5386
        %v5400 = vsel %vm5389, %v5384, 0.0
        %v5401 = vsel %vm5389, %v5388, 0.0
        %v5402 = vadd.s32 %v4563, 128
        %vm5403 = vcmp.lt.s32.totalorder %v4563, 0
        %v5404 = vsub.s32 0, %v4563
        %v5405 = vsel %vm5403, %v5404, %v4563
        %v5406 = vshrl.u32 %v5405, 4
        %v5407 = vand.u32 %v5405, 15
        %v5408 = vsub.s32 0, %v5407
        %v5409 = vsel %vm5403, %v5408, %v5407
        %vm5410 = vcmp.lt.s32.totalorder %v5402, 0
        %v5411 = vsub.s32 0, %v5402
        %v5412 = vsel %vm5410, %v5411, %v5402
        %v5413 = vshrl.u32 %v5412, 4
        %v5414 = vand.u32 %v5412, 15
        %v5415 = vsub.s32 0, %v5414
        %v5416 = vsel %vm5410, %v5415, %v5414
        %vm5417 = vcmp.ne.s32.totalorder %v5409, 0
        %vm5418 = vcmp.ne.s32.totalorder %v5416, 0
        %vm5419 = vcmp.lt.s32.totalorder %v5409, 0
        %vm5420 = vcmp.lt.s32.totalorder %v5416, 0
        %vm5421 = vmand %vm5419, %vm5417
        %vm5422 = vmand %vm5420, %vm5418
        %v5423 = vadd.s32 %v5409, 16
        %v5424 = vadd.s32 %v5416, 16
        %v5425 = vsel %vm5421, %v5423, %v5409
        %v5426 = vsel %vm5422, %v5424, %v5416
        %vm5427 = vcmp.ge.s32.totalorder %v5425, 1
        %vm5428 = vcmp.ge.s32.totalorder %v5426, 1
        %vm5429 = vcmp.le.s32.totalorder %v5425, 14
        %vm5430 = vcmp.le.s32.totalorder %v5426, 14
        %v5431 = vsel %vm5427, 1, 0
        %v5432 = vsel %vm5428, 1, 0
        %vm5433 = vcmp.eq.s32.totalorder %v5431, 1
        %vm5434 = vcmp.eq.s32.totalorder %v5432, 1
        %v5435 = vsel %vm5433, %v5398, 0.0
        %v5436 = vsel %vm5434, %v5390, 0.0
        %v5437 = vsel %vm5433, %v5399, 0.0
        %v5438 = vsel %vm5434, %v5391, 0.0
        %v5439 = vsel %vm5429, 1, 0
        %v5440 = vsel %vm5430, 1, 0
        %vm5441 = vcmp.eq.s32.totalorder %v5439, 1
        %vm5442 = vcmp.eq.s32.totalorder %v5440, 1
        %5447 = vrot.lane.b32.xlu0 %v5398, 126
        %v5448 = vpop.permute.xlu0 %5447
        %5449 = vrot.lane.b32.xlu0 %v5390, 126
        %v5450 = vpop.permute.xlu0 %5449
        %5451 = vrot.lane.b32.xlu0 %v5400, 126
        %v5452 = vpop.permute.xlu0 %5451
        %5453 = vrot.lane.b32.xlu0 %v5399, 126
        %v5454 = vpop.permute.xlu0 %5453
        %5455 = vrot.lane.b32.xlu0 %v5391, 126
        %v5456 = vpop.permute.xlu0 %5455
        %5457 = vrot.lane.b32.xlu0 %v5401, 126
        %v5458 = vpop.permute.xlu0 %5457
        %vm5459 = vcmask 1031168
        %v5460 = vsel %vm5459, %v5448, %v5450
        %v5461 = vsel %vm5459, %v5450, %v5452
        %v5462 = vsel %vm5459, %v5454, %v5456
        %v5463 = vsel %vm5459, %v5456, %v5458
        %v5468 = vsel %vm5441, %v5460, 0.0
        %v5469 = vsel %vm5442, %v5461, 0.0
        %v5470 = vsel %vm5441, %v5462, 0.0
        %v5471 = vsel %vm5442, %v5463, 0.0
        %5472 = vrot.lane.b32.xlu0 %v5398, 112
        %v5473 = vpop.permute.xlu0 %5472
        %5474 = vrot.lane.b32.xlu0 %v5390, 112
        %v5475 = vpop.permute.xlu0 %5474
        %5476 = vrot.lane.b32.xlu0 %v5400, 112
        %v5477 = vpop.permute.xlu0 %5476
        %5478 = vrot.lane.b32.xlu0 %v5399, 112
        %v5479 = vpop.permute.xlu0 %5478
        %5480 = vrot.lane.b32.xlu0 %v5391, 112
        %v5481 = vpop.permute.xlu0 %5480
        %5482 = vrot.lane.b32.xlu0 %v5401, 112
        %v5483 = vpop.permute.xlu0 %5482
        %vm5484 = vcmask 916480
        %v5485 = vsel %vm5484, %v5473, %v5475
        %v5486 = vsel %vm5484, %v5475, %v5477
        %v5487 = vsel %vm5484, %v5479, %v5481
        %v5488 = vsel %vm5484, %v5481, %v5483
        %v5493 = vsel %vm5433, %v5485, 0.0
        %v5494 = vsel %vm5434, %v5486, 0.0
        %v5495 = vsel %vm5433, %v5487, 0.0
        %v5496 = vsel %vm5434, %v5488, 0.0
        %5497 = vrot.lane.b32.xlu0 %v5398, 110
        %v5498 = vpop.permute.xlu0 %5497
        %5499 = vrot.lane.b32.xlu0 %v5390, 110
        %v5500 = vpop.permute.xlu0 %5499
        %5501 = vrot.lane.b32.xlu0 %v5400, 110
        %v5502 = vpop.permute.xlu0 %5501
        %5503 = vrot.lane.b32.xlu0 %v5399, 110
        %v5504 = vpop.permute.xlu0 %5503
        %5505 = vrot.lane.b32.xlu0 %v5391, 110
        %v5506 = vpop.permute.xlu0 %5505
        %5507 = vrot.lane.b32.xlu0 %v5401, 110
        %v5508 = vpop.permute.xlu0 %5507
        %vm5509 = vcmask 900096
        %v5510 = vsel %vm5509, %v5498, %v5500
        %v5511 = vsel %vm5509, %v5500, %v5502
        %v5512 = vsel %vm5509, %v5504, %v5506
        %v5513 = vsel %vm5509, %v5506, %v5508
        %v5518 = vsel %vm5441, %v5510, 0.0
        %v5519 = vsel %vm5442, %v5511, 0.0
        %v5520 = vsel %vm5441, %v5512, 0.0
        %v5521 = vsel %vm5442, %v5513, 0.0
        %5522 = vrot.lane.b32.xlu0 %v5398, 96
        %v5523 = vpop.permute.xlu0 %5522
        %5524 = vrot.lane.b32.xlu0 %v5390, 96
        %v5525 = vpop.permute.xlu0 %5524
        %5526 = vrot.lane.b32.xlu0 %v5400, 96
        %v5527 = vpop.permute.xlu0 %5526
        %5528 = vrot.lane.b32.xlu0 %v5399, 96
        %v5529 = vpop.permute.xlu0 %5528
        %5530 = vrot.lane.b32.xlu0 %v5391, 96
        %v5531 = vpop.permute.xlu0 %5530
        %5532 = vrot.lane.b32.xlu0 %v5401, 96
        %v5533 = vpop.permute.xlu0 %5532
        %v5534 = vsel %vm3621, %v5523, %v5525
        %v5535 = vsel %vm3621, %v5525, %v5527
        %v5536 = vsel %vm3621, %v5529, %v5531
        %v5537 = vsel %vm3621, %v5531, %v5533
        %v5542 = vsel %vm5433, %v5534, 0.0
        %v5543 = vsel %vm5434, %v5535, 0.0
        %v5544 = vsel %vm5433, %v5536, 0.0
        %v5545 = vsel %vm5434, %v5537, 0.0
        %5546 = vrot.lane.b32.xlu0 %v5398, 94
        %v5547 = vpop.permute.xlu0 %5546
        %5548 = vrot.lane.b32.xlu0 %v5390, 94
        %v5549 = vpop.permute.xlu0 %5548
        %5550 = vrot.lane.b32.xlu0 %v5400, 94
        %v5551 = vpop.permute.xlu0 %5550
        %5552 = vrot.lane.b32.xlu0 %v5399, 94
        %v5553 = vpop.permute.xlu0 %5552
        %5554 = vrot.lane.b32.xlu0 %v5391, 94
        %v5555 = vpop.permute.xlu0 %5554
        %5556 = vrot.lane.b32.xlu0 %v5401, 94
        %v5557 = vpop.permute.xlu0 %5556
        %vm5558 = vcmask 769024
        %v5559 = vsel %vm5558, %v5547, %v5549
        %v5560 = vsel %vm5558, %v5549, %v5551
        %v5561 = vsel %vm5558, %v5553, %v5555
        %v5562 = vsel %vm5558, %v5555, %v5557
        %v5567 = vsel %vm5441, %v5559, 0.0
        %v5568 = vsel %vm5442, %v5560, 0.0
        %v5569 = vsel %vm5441, %v5561, 0.0
        %v5570 = vsel %vm5442, %v5562, 0.0
        %5571 = vrot.lane.b32.xlu0 %v5398, 127
        %v5572 = vpop.permute.xlu0 %5571
        %5573 = vrot.lane.b32.xlu0 %v5390, 127
        %v5574 = vpop.permute.xlu0 %5573
        %5575 = vrot.lane.b32.xlu0 %v5400, 127
        %v5576 = vpop.permute.xlu0 %5575
        %5577 = vrot.lane.b32.xlu0 %v5399, 127
        %v5578 = vpop.permute.xlu0 %5577
        %5579 = vrot.lane.b32.xlu0 %v5391, 127
        %v5580 = vpop.permute.xlu0 %5579
        %5581 = vrot.lane.b32.xlu0 %v5401, 127
        %v5582 = vpop.permute.xlu0 %5581
        %vm5583 = vcmask 1039360
        %v5584 = vsel %vm5583, %v5572, %v5574
        %v5585 = vsel %vm5583, %v5574, %v5576
        %v5586 = vsel %vm5583, %v5578, %v5580
        %v5587 = vsel %vm5583, %v5580, %v5582
        %5592 = vrot.lane.b32.xlu0 %v5398, 111
        %v5593 = vpop.permute.xlu0 %5592
        %5594 = vrot.lane.b32.xlu0 %v5390, 111
        %v5595 = vpop.permute.xlu0 %5594
        %5596 = vrot.lane.b32.xlu0 %v5400, 111
        %v5597 = vpop.permute.xlu0 %5596
        %5598 = vrot.lane.b32.xlu0 %v5399, 111
        %v5599 = vpop.permute.xlu0 %5598
        %5600 = vrot.lane.b32.xlu0 %v5391, 111
        %v5601 = vpop.permute.xlu0 %5600
        %5602 = vrot.lane.b32.xlu0 %v5401, 111
        %v5603 = vpop.permute.xlu0 %5602
        %vm5604 = vcmask 908288
        %v5605 = vsel %vm5604, %v5593, %v5595
        %v5606 = vsel %vm5604, %v5595, %v5597
        %v5607 = vsel %vm5604, %v5599, %v5601
        %v5608 = vsel %vm5604, %v5601, %v5603
        %5613 = vrot.lane.b32.xlu0 %v5398, 95
        %v5614 = vpop.permute.xlu0 %5613
        %5615 = vrot.lane.b32.xlu0 %v5390, 95
        %v5616 = vpop.permute.xlu0 %5615
        %5617 = vrot.lane.b32.xlu0 %v5400, 95
        %v5618 = vpop.permute.xlu0 %5617
        %5619 = vrot.lane.b32.xlu0 %v5399, 95
        %v5620 = vpop.permute.xlu0 %5619
        %5621 = vrot.lane.b32.xlu0 %v5391, 95
        %v5622 = vpop.permute.xlu0 %5621
        %5623 = vrot.lane.b32.xlu0 %v5401, 95
        %v5624 = vpop.permute.xlu0 %5623
        %vm5625 = vcmask 777216
        %v5626 = vsel %vm5625, %v5614, %v5616
        %v5627 = vsel %vm5625, %v5616, %v5618
        %v5628 = vsel %vm5625, %v5620, %v5622
        %v5629 = vsel %vm5625, %v5622, %v5624
        %v5634 = vld [vmem:[#allocation14] sm:$0xff]
        %v5635 = vld [vmem:[#allocation14 + $0x8] sm:$0xff]
        %v5636 = vld [vmem:[%s35] sm:$0xff]
        %5638 = vset.pattern.permute.xlu0 0
        %5639 = vperm.xlu0 %5638, %v5636
        %v5640 = vpop.permute.xlu0 %5639
        %v5643 = vsel %vm4326, %v5635, 0
        %5645 = vmatprep.subr.mxu0 %v5436
        %5646 = vmatpush1.msra.mxu0 %v5435
        %5647 = vmatprep.subr.mxu0 %v5438
        %5648 = vmatpush1.msra.mxu0 %v5437
        %5649 = vmatprep.subr.mxu0 %v5585
        %5650 = vmatpush1.msra.mxu0 %v5584
        %5651 = vmatprep.subr.mxu0 %v5587
        %5652 = vmatpush1.msra.mxu0 %v5586
        %5653 = vmatprep.subr.mxu0 %v5469
        %5654 = vmatpush1.msra.mxu0 %v5468
        %5655 = vmatprep.subr.mxu0 %v5471
        %5656 = vmatpush1.msra.mxu0 %v5470
        %5657 = vmatprep.subr.mxu0 %v5494
        %5658 = vmatpush1.msra.mxu0 %v5493
        %5659 = vmatprep.subr.mxu0 %v5496
        %5660 = vmatpush1.msra.mxu0 %v5495
        %5661 = vmatprep.subr.mxu0 %v5606
        %5662 = vmatpush1.msra.mxu0 %v5605
        %5663 = vmatprep.subr.mxu0 %v5608
        %5664 = vmatpush1.msra.mxu0 %v5607
        %5665 = vmatprep.subr.mxu0 %v5519
        %5666 = vmatpush1.msra.mxu0 %v5518
        %5667 = vmatprep.subr.mxu0 %v5521
        %5668 = vmatpush1.msra.mxu0 %v5520
        %5669 = vmatprep.subr.mxu0 %v5543
        %5670 = vmatpush1.msra.mxu0 %v5542
        %5671 = vmatprep.subr.mxu0 %v5545
        %5672 = vmatpush1.msra.mxu0 %v5544
        %5673 = vmatprep.subr.mxu0 %v5627
        %5674 = vmatpush1.msra.mxu0 %v5626
        %5675 = vmatprep.subr.mxu0 %v5629
        %5676 = vmatpush1.msra.mxu0 %v5628
        %5677 = vmatprep.subr.mxu0 %v5568
        %5678 = vmatpush1.msra.mxu0 %v5567
        %5679 = vmatprep.subr.mxu0 %v5570
        %5680 = vmatpush1.msra.mxu0 %v5569
        %5681 = vmatprep.subr.mxu0 0.0
        %5682 = vmatpush1.msra.mxu0 0.0
        %5683 = vmatprep.subr.mxu0 0.0
        %5684 = vmatpush1.msra.mxu0 0.0
        %5685 = vmatprep.subr.mxu0 0.0
        %5686 = vmatpush1.msra.mxu0 0.0
        %5687 = vmatprep.subr.mxu0 0.0
        %5688 = vmatpush1.msra.mxu0 0.0
        %5689 = vmatprep.subr.mxu0 0.0
        %5690 = vmatpush1.msra.mxu0 0.0
        %5691 = vmatprep.subr.mxu0 0.0
        %5692 = vmatpush1.msra.mxu0 0.0
        %5693 = vmatprep.subr.mxu0 0.0
        %5694 = vmatpush1.msra.mxu0 0.0
        %5695 = vmatprep.subr.mxu0 0.0
        %5696 = vmatpush1.msra.mxu0 0.0
        %5697 = vmatprep.subr.mxu0 0.0
        %5698 = vmatpush1.msra.mxu0 0.0
        %5699 = vmatprep.subr.mxu0 0.0
        %5700 = vmatpush1.msra.mxu0 0.0
        %5701 = vmatprep.subr.mxu0 0.0
        %5702 = vmatpush1.msra.mxu0 0.0
        %5703 = vmatprep.subr.mxu0 0.0
        %5704 = vmatpush1.msra.mxu0 0.0
        %5705 = vmatprep.subr.mxu0 0.0
        %5706 = vmatpush1.msra.mxu0 0.0
        %5707 = vmatprep.subr.mxu0 0.0
        %5708 = vmatpush1.msra.mxu0 0.0
        %5709 = vmatprep.mubr.f32.mxu0 %v5643
        %5710 = vmatmul.mubr.f32.gmra.mrb[0].mxu0 %v5634
        %v5711 = vpop.f32.mrb[0].mxu0
        %v5712 = vadd.f32 %v5640, %v5711
        %v5713 = vpop.f32.mrb[0].mxu0
        %v5714 = vadd.f32 %v5640, %v5713
        %5715 = vdwg.mxu0
        %5717 = vset.pattern.permute.xlu0 0
        %5718 = vperm.xlu0 %5717, %v4266
        %v5719 = vpop.permute.xlu0 %5718
        %v5721 = vmul.f32 %v5719, %v5712
        %v5722 = vmul.f32 %v5719, %v5714
        %5724 = vset.pattern.permute.xlu0 0
        %5725 = vperm.xlu0 %5724, %v4271
        %v5726 = vpop.permute.xlu0 %5725
        %v5728 = vadd.f32 %v5721, %v5726
        %v5729 = vadd.f32 %v5722, %v5726
        %v5730 = vmul.f32 %v5728, 0.2
        %v5731 = vmul.f32 %v5729, 0.2
        %v5732 = vmax.f32 %v5728, %v5730
        %v5733 = vmax.f32 %v5729, %v5731
        %5735 = vset.pattern.permute.xlu0 0
        %5736 = vperm.xlu0 %5735, %v4276
        %v5737 = vpop.permute.xlu0 %5736
        %v5739 = vmul.f32 %v5737, %v5732
        %v5740 = vmul.f32 %v5737, %v5733
        %5742 = vset.pattern.permute.xlu0 0
        %5743 = vperm.xlu0 %5742, %v4281
        %v5744 = vpop.permute.xlu0 %5743
        %v5746 = vadd.f32 %v5739, %v5744
        %v5747 = vadd.f32 %v5740, %v5744
        %v5748 = vmul.f32 %v5746, 0.2
        %v5749 = vmul.f32 %v5747, 0.2
        %v5750 = vmax.f32 %v5746, %v5748
        %v5751 = vmax.f32 %v5747, %v5749
        %5754 = vrot.lane.b32.xlu0 %v5750, 17
        %v5755 = vpop.permute.xlu0 %5754
        %5756 = vrot.lane.b32.xlu0 %v5751, 17
        %v5757 = vpop.permute.xlu0 %5756
        %v5758 = vsel %vm5389, %v5755, %v5757
        %v5762 = vsel %vm5389, 0.0, %v5755
        %v5763 = vsel %vm5389, %v5757, 0.0
        %v5764 = vsel %vm5433, %v5762, 0.0
        %v5765 = vsel %vm5434, %v5758, 0.0
        %5768 = vrot.lane.b32.xlu0 %v5762, 126
        %v5769 = vpop.permute.xlu0 %5768
        %5770 = vrot.lane.b32.xlu0 %v5758, 126
        %v5771 = vpop.permute.xlu0 %5770
        %5772 = vrot.lane.b32.xlu0 %v5763, 126
        %v5773 = vpop.permute.xlu0 %5772
        %v5774 = vsel %vm5459, %v5769, %v5771
        %v5775 = vsel %vm5459, %v5771, %v5773
        %v5778 = vsel %vm5441, %v5774, 0.0
        %v5779 = vsel %vm5442, %v5775, 0.0
        %5780 = vrot.lane.b32.xlu0 %v5762, 112
        %v5781 = vpop.permute.xlu0 %5780
        %5782 = vrot.lane.b32.xlu0 %v5758, 112
        %v5783 = vpop.permute.xlu0 %5782
        %5784 = vrot.lane.b32.xlu0 %v5763, 112
        %v5785 = vpop.permute.xlu0 %5784
        %v5786 = vsel %vm5484, %v5781, %v5783
        %v5787 = vsel %vm5484, %v5783, %v5785
        %v5790 = vsel %vm5433, %v5786, 0.0
        %v5791 = vsel %vm5434, %v5787, 0.0
        %5792 = vrot.lane.b32.xlu0 %v5762, 110
        %v5793 = vpop.permute.xlu0 %5792
        %5794 = vrot.lane.b32.xlu0 %v5758, 110
        %v5795 = vpop.permute.xlu0 %5794
        %5796 = vrot.lane.b32.xlu0 %v5763, 110
        %v5797 = vpop.permute.xlu0 %5796
        %v5798 = vsel %vm5509, %v5793, %v5795
        %v5799 = vsel %vm5509, %v5795, %v5797
        %v5802 = vsel %vm5441, %v5798, 0.0
        %v5803 = vsel %vm5442, %v5799, 0.0
        %5804 = vrot.lane.b32.xlu0 %v5762, 96
        %v5805 = vpop.permute.xlu0 %5804
        %5806 = vrot.lane.b32.xlu0 %v5758, 96
        %v5807 = vpop.permute.xlu0 %5806
        %5808 = vrot.lane.b32.xlu0 %v5763, 96
        %v5809 = vpop.permute.xlu0 %5808
        %v5810 = vsel %vm3621, %v5805, %v5807
        %v5811 = vsel %vm3621, %v5807, %v5809
        %v5814 = vsel %vm5433, %v5810, 0.0
        %v5815 = vsel %vm5434, %v5811, 0.0
        %5816 = vrot.lane.b32.xlu0 %v5762, 94
        %v5817 = vpop.permute.xlu0 %5816
        %5818 = vrot.lane.b32.xlu0 %v5758, 94
        %v5819 = vpop.permute.xlu0 %5818
        %5820 = vrot.lane.b32.xlu0 %v5763, 94
        %v5821 = vpop.permute.xlu0 %5820
        %v5822 = vsel %vm5558, %v5817, %v5819
        %v5823 = vsel %vm5558, %v5819, %v5821
        %v5826 = vsel %vm5441, %v5822, 0.0
        %v5827 = vsel %vm5442, %v5823, 0.0
        %5828 = vrot.lane.b32.xlu0 %v5762, 127
        %v5829 = vpop.permute.xlu0 %5828
        %5830 = vrot.lane.b32.xlu0 %v5758, 127
        %v5831 = vpop.permute.xlu0 %5830
        %5832 = vrot.lane.b32.xlu0 %v5763, 127
        %v5833 = vpop.permute.xlu0 %5832
        %v5834 = vsel %vm5583, %v5829, %v5831
        %v5835 = vsel %vm5583, %v5831, %v5833
        %5838 = vrot.lane.b32.xlu0 %v5762, 111
        %v5839 = vpop.permute.xlu0 %5838
        %5840 = vrot.lane.b32.xlu0 %v5758, 111
        %v5841 = vpop.permute.xlu0 %5840
        %5842 = vrot.lane.b32.xlu0 %v5763, 111
        %v5843 = vpop.permute.xlu0 %5842
        %v5844 = vsel %vm5604, %v5839, %v5841
        %v5845 = vsel %vm5604, %v5841, %v5843
        %5848 = vrot.lane.b32.xlu0 %v5762, 95
        %v5849 = vpop.permute.xlu0 %5848
        %5850 = vrot.lane.b32.xlu0 %v5758, 95
        %v5851 = vpop.permute.xlu0 %5850
        %5852 = vrot.lane.b32.xlu0 %v5763, 95
        %v5853 = vpop.permute.xlu0 %5852
        %v5854 = vsel %vm5625, %v5849, %v5851
        %v5855 = vsel %vm5625, %v5851, %v5853
        %v5858 = vld [vmem:[%s37] sm:$0xff]
        %v5859 = vld [vmem:[%s39] sm:$0xff]
        %5861 = vset.pattern.permute.xlu0 0
        %5862 = vperm.xlu0 %5861, %v5859
        %v5863 = vpop.permute.xlu0 %5862
        %vm5865 = vcmask 588800
        %v5867 = vsel %vm5865, %v5858, 0
        %5869 = vmatprep.subr.mxu0 %v5765
        %5870 = vmatpush1.msra.mxu0 %v5764
        %5871 = vmatprep.subr.mxu0 %v5835
        %5872 = vmatpush1.msra.mxu0 %v5834
        %5873 = vmatprep.subr.mxu0 %v5779
        %5874 = vmatpush1.msra.mxu0 %v5778
        %5875 = vmatprep.subr.mxu0 %v5791
        %5876 = vmatpush1.msra.mxu0 %v5790
        %5877 = vmatprep.subr.mxu0 %v5845
        %5878 = vmatpush1.msra.mxu0 %v5844
        %5879 = vmatprep.subr.mxu0 %v5803
        %5880 = vmatpush1.msra.mxu0 %v5802
        %5881 = vmatprep.subr.mxu0 %v5815
        %5882 = vmatpush1.msra.mxu0 %v5814
        %5883 = vmatprep.subr.mxu0 %v5855
        %5884 = vmatpush1.msra.mxu0 %v5854
        %5885 = vmatprep.subr.mxu0 %v5827
        %5886 = vmatpush1.msra.mxu0 %v5826
        %5887 = vmatprep.subr.mxu0 0.0
        %5888 = vmatpush1.msra.mxu0 0.0
        %5889 = vmatprep.subr.mxu0 0.0
        %5890 = vmatpush1.msra.mxu0 0.0
        %5891 = vmatprep.subr.mxu0 0.0
        %5892 = vmatpush1.msra.mxu0 0.0
        %5893 = vmatprep.subr.mxu0 0.0
        %5894 = vmatpush1.msra.mxu0 0.0
        %5895 = vmatprep.subr.mxu0 0.0
        %5896 = vmatpush1.msra.mxu0 0.0
        %5897 = vmatprep.subr.mxu0 0.0
        %5898 = vmatpush1.msra.mxu0 0.0
        %5899 = vmatprep.subr.mxu0 0.0
        %5900 = vmatpush1.msra.mxu0 0.0
        %5901 = vmatprep.subr.mxu0 0.0
        %5902 = vmatpush1.msra.mxu0 0.0
        %5903 = vmatprep.subr.mxu0 0.0
        %5904 = vmatpush1.msra.mxu0 0.0
        %5905 = vmatprep.subr.mxu0 0.0
        %5906 = vmatpush1.msra.mxu0 0.0
        %5907 = vmatprep.subr.mxu0 0.0
        %5908 = vmatpush1.msra.mxu0 0.0
        %5909 = vmatprep.subr.mxu0 0.0
        %5910 = vmatpush1.msra.mxu0 0.0
        %5911 = vmatprep.subr.mxu0 0.0
        %5912 = vmatpush1.msra.mxu0 0.0
        %5913 = vmatprep.subr.mxu0 0.0
        %5914 = vmatpush1.msra.mxu0 0.0
        %5915 = vmatprep.subr.mxu0 0.0
        %5916 = vmatpush1.msra.mxu0 0.0
        %5917 = vmatprep.subr.mxu0 0.0
        %5918 = vmatpush1.msra.mxu0 0.0
        %5919 = vmatprep.subr.mxu0 0.0
        %5920 = vmatpush1.msra.mxu0 0.0
        %5921 = vmatprep.subr.mxu0 0.0
        %5922 = vmatpush1.msra.mxu0 0.0
        %5923 = vmatprep.subr.mxu0 0.0
        %5924 = vmatpush1.msra.mxu0 0.0
        %5925 = vmatprep.subr.mxu0 0.0
        %5926 = vmatpush1.msra.mxu0 0.0
        %5927 = vmatprep.subr.mxu0 0.0
        %5928 = vmatpush1.msra.mxu0 0.0
        %5929 = vmatprep.subr.mxu0 0.0
        %5930 = vmatpush1.msra.mxu0 0.0
        %5931 = vmatprep.subr.mxu0 0.0
        %5932 = vmatpush1.msra.mxu0 0.0
        %5933 = vmatprep.mubr.f32.mxu0 0.0
        %5934 = vmatmul.mubr.f32.gmra.mrb[0].mxu0 %v5867
        %v5935 = vpop.f32.mrb[0].mxu0
        %v5936 = vadd.f32 %v5863, %v5935
        %v5937 = vpop.f32.mrb[0].mxu0
        %v5938 = vadd.f32 %v5863, %v5937
        %5939 = vdwg.mxu0
        %v5940 = vld [vmem:[#allocation16] sm:$0xff]
        %v5941 = vld [vmem:[%s43] sm:$0xff]
        %5943 = vset.pattern.permute.xlu0 0
        %5944 = vperm.xlu0 %5943, %v5941
        %v5945 = vpop.permute.xlu0 %5944
        %v5948 = vsel %vm4326, %v5940, 0
        %5950 = vmatprep.subr.mxu0 %v5297
        %5951 = vmatpush1.msra.mxu0 %v5295
        %5952 = vmatprep.subr.mxu0 %v5303
        %5953 = vmatpush1.msra.mxu0 %v5301
        %5954 = vmatprep.subr.mxu0 0.0
        %5955 = vmatpush1.msra.mxu0 0.0
        %5956 = vmatprep.subr.mxu0 0.0
        %5957 = vmatpush1.msra.mxu0 0.0
        %5958 = vmatprep.subr.mxu0 0.0
        %5959 = vmatpush1.msra.mxu0 0.0
        %5960 = vmatprep.subr.mxu0 0.0
        %5961 = vmatpush1.msra.mxu0 0.0
        %5962 = vmatprep.subr.mxu0 0.0
        %5963 = vmatpush1.msra.mxu0 0.0
        %5964 = vmatprep.subr.mxu0 0.0
        %5965 = vmatpush1.msra.mxu0 0.0
        %5966 = vmatprep.subr.mxu0 0.0
        %5967 = vmatpush1.msra.mxu0 0.0
        %5968 = vmatprep.subr.mxu0 0.0
        %5969 = vmatpush1.msra.mxu0 0.0
        %5970 = vmatprep.subr.mxu0 0.0
        %5971 = vmatpush1.msra.mxu0 0.0
        %5972 = vmatprep.subr.mxu0 0.0
        %5973 = vmatpush1.msra.mxu0 0.0
        %5974 = vmatprep.subr.mxu0 0.0
        %5975 = vmatpush1.msra.mxu0 0.0
        %5976 = vmatprep.subr.mxu0 0.0
        %5977 = vmatpush1.msra.mxu0 0.0
        %5978 = vmatprep.subr.mxu0 0.0
        %5979 = vmatpush1.msra.mxu0 0.0
        %5980 = vmatprep.subr.mxu0 0.0
        %5981 = vmatpush1.msra.mxu0 0.0
        %5982 = vmatprep.subr.mxu0 0.0
        %5983 = vmatpush1.msra.mxu0 0.0
        %5984 = vmatprep.subr.mxu0 0.0
        %5985 = vmatpush1.msra.mxu0 0.0
        %5986 = vmatprep.subr.mxu0 0.0
        %5987 = vmatpush1.msra.mxu0 0.0
        %5988 = vmatprep.subr.mxu0 0.0
        %5989 = vmatpush1.msra.mxu0 0.0
        %5990 = vmatprep.subr.mxu0 0.0
        %5991 = vmatpush1.msra.mxu0 0.0
        %5992 = vmatprep.subr.mxu0 0.0
        %5993 = vmatpush1.msra.mxu0 0.0
        %5994 = vmatprep.subr.mxu0 0.0
        %5995 = vmatpush1.msra.mxu0 0.0
        %5996 = vmatprep.subr.mxu0 0.0
        %5997 = vmatpush1.msra.mxu0 0.0
        %5998 = vmatprep.subr.mxu0 0.0
        %5999 = vmatpush1.msra.mxu0 0.0
        %6000 = vmatprep.subr.mxu0 0.0
        %6001 = vmatpush1.msra.mxu0 0.0
        %6002 = vmatprep.subr.mxu0 0.0
        %6003 = vmatpush1.msra.mxu0 0.0
        %6004 = vmatprep.subr.mxu0 0.0
        %6005 = vmatpush1.msra.mxu0 0.0
        %6006 = vmatprep.subr.mxu0 0.0
        %6007 = vmatpush1.msra.mxu0 0.0
        %6008 = vmatprep.subr.mxu0 0.0
        %6009 = vmatpush1.msra.mxu0 0.0
        %6010 = vmatprep.subr.mxu0 0.0
        %6011 = vmatpush1.msra.mxu0 0.0
        %6012 = vmatprep.subr.mxu0 0.0
        %6013 = vmatpush1.msra.mxu0 0.0
        %6014 = vmatprep.mubr.f32.mxu0 0.0
        %6015 = vmatmul.mubr.f32.gmra.mrb[0].mxu0 %v5948
        %v6016 = vpop.f32.mrb[0].mxu0
        %v6017 = vadd.f32 %v5945, %v6016
        %v6018 = vpop.f32.mrb[0].mxu0
        %v6019 = vadd.f32 %v5945, %v6018
        %6020 = vdwg.mxu0
        %v6021 = vadd.f32 %v6017, %v5936
        %v6022 = vadd.f32 %v6019, %v5938
        %v6023 = vld [vmem:[%s45] sm:$0xff]
        %v6024 = vld [vmem:[%s45 + $0x8] sm:$0xff]
        %v6025 = vld [vmem:[%s45 + $0x10] sm:$0xff]
        %v6026 = vld [vmem:[%s45 + $0x18] sm:$0xff]
        %v6027 = vld [vmem:[%s45 + $0x20] sm:$0xff]
        %v6028 = vld [vmem:[%s45 + $0x28] sm:$0xff]
        %v6029 = vld [vmem:[%s45 + $0x30] sm:$0xff]
        %v6030 = vld [vmem:[%s45 + $0x38] sm:$0xff]
        %v6031 = vld [vmem:[%s45 + $0x40] sm:$0xff]
        %v6032 = vld [vmem:[%s45 + $0x48] sm:$0xff]
        %v6033 = vld [vmem:[%s45 + $0x50] sm:$0xff]
        %v6034 = vld [vmem:[%s45 + $0x58] sm:$0xff]
        %v6035 = vld [vmem:[%s45 + $0x60] sm:$0xff]
        %v6036 = vld [vmem:[%s45 + $0x68] sm:$0xff]
        %v6037 = vld [vmem:[%s45 + $0x70] sm:$0xff]
        %v6038 = vld [vmem:[%s45 + $0x78] sm:$0xff]
        %v6039 = vld [vmem:[%s45 + $0x80] sm:$0xff]
        %v6040 = vld [vmem:[%s45 + $0x88] sm:$0xff]
        %v6041 = vld [vmem:[%s45 + $0x90] sm:$0xff]
        %v6042 = vld [vmem:[%s45 + $0x98] sm:$0xff]
        %v6043 = vld [vmem:[%s45 + $0xa0] sm:$0xff]
        %v6044 = vld [vmem:[%s45 + $0xa8] sm:$0xff]
        %v6045 = vld [vmem:[%s45 + $0xb0] sm:$0xff]
        %v6046 = vld [vmem:[%s45 + $0xb8] sm:$0xff]
        %v6047 = vld [vmem:[%s45 + $0xc0] sm:$0xff]
        %v6048 = vld [vmem:[%s45 + $0xc8] sm:$0xff]
        %v6049 = vld [vmem:[%s45 + $0xd0] sm:$0xff]
        %v6050 = vld [vmem:[%s45 + $0xd8] sm:$0xff]
        %v6051 = vld [vmem:[%s45 + $0xe0] sm:$0xff]
        %v6052 = vld [vmem:[%s45 + $0xe8] sm:$0xff]
        %v6053 = vld [vmem:[%s45 + $0xf0] sm:$0xff]
        %v6054 = vld [vmem:[%s45 + $0xf8] sm:$0xff]
        %v6055 = vld [vmem:[%s45 + $0x100] sm:$0xff]
        %v6056 = vld [vmem:[%s45 + $0x108] sm:$0xff]
        %v6057 = vld [vmem:[%s45 + $0x110] sm:$0xff]
        %v6058 = vld [vmem:[%s45 + $0x118] sm:$0xff]
        %v6059 = vld [vmem:[%s45 + $0x120] sm:$0xff]
        %v6060 = vld [vmem:[%s45 + $0x128] sm:$0xff]
        %v6061 = vld [vmem:[%s45 + $0x130] sm:$0xff]
        %v6062 = vld [vmem:[%s45 + $0x138] sm:$0xff]
        %v6063 = vld [vmem:[%s45 + $0x140] sm:$0xff]
        %v6064 = vld [vmem:[%s45 + $0x148] sm:$0xff]
        %v6065 = vld [vmem:[%s45 + $0x150] sm:$0xff]
        %v6066 = vld [vmem:[%s45 + $0x158] sm:$0xff]
        %v6067 = vld [vmem:[%s45 + $0x160] sm:$0xff]
        %v6068 = vld [vmem:[%s45 + $0x168] sm:$0xff]
        %v6069 = vld [vmem:[%s45 + $0x170] sm:$0xff]
        %v6070 = vld [vmem:[%s45 + $0x178] sm:$0xff]
        %v6071 = vld [vmem:[%s45 + $0x180] sm:$0xff]
        %v6072 = vld [vmem:[%s45 + $0x188] sm:$0xff]
        %v6073 = vld [vmem:[%s45 + $0x190] sm:$0xff]
        %v6074 = vld [vmem:[%s45 + $0x198] sm:$0xff]
        %v6075 = vld [vmem:[%s45 + $0x1a0] sm:$0xff]
        %v6076 = vld [vmem:[%s45 + $0x1a8] sm:$0xff]
        %v6077 = vld [vmem:[%s45 + $0x1b0] sm:$0xff]
        %v6078 = vld [vmem:[%s45 + $0x1b8] sm:$0xff]
        %v6079 = vld [vmem:[%s45 + $0x1c0] sm:$0xff]
        %v6080 = vld [vmem:[%s45 + $0x1c8] sm:$0xff]
        %v6081 = vld [vmem:[%s45 + $0x1d0] sm:$0xff]
        %v6082 = vld [vmem:[%s45 + $0x1d8] sm:$0xff]
        %v6083 = vld [vmem:[%s45 + $0x1e0] sm:$0xff]
        %v6084 = vld [vmem:[%s45 + $0x1e8] sm:$0xff]
        %v6085 = vld [vmem:[%s45 + $0x1f0] sm:$0xff]
        %v6086 = vld [vmem:[%s45 + $0x1f8] sm:$0xff]
        %v6087 = vld [vmem:[%s45 + $0x200] sm:$0xff]
        %v6088 = vld [vmem:[%s45 + $0x208] sm:$0xff]
        %v6089 = vld [vmem:[%s45 + $0x210] sm:$0xff]
        %v6090 = vld [vmem:[%s45 + $0x218] sm:$0xff]
        %v6091 = vld [vmem:[%s45 + $0x220] sm:$0xff]
        %v6092 = vld [vmem:[%s45 + $0x228] sm:$0xff]
        %v6093 = vld [vmem:[%s45 + $0x230] sm:$0xff]
        %v6094 = vld [vmem:[%s45 + $0x238] sm:$0xff]
        %v6095 = vld [vmem:[%s45 + $0x240] sm:$0xff]
        %v6096 = vld [vmem:[%s45 + $0x248] sm:$0xff]
        %v6097 = vld [vmem:[%s45 + $0x250] sm:$0xff]
        %v6098 = vld [vmem:[%s45 + $0x258] sm:$0xff]
        %v6099 = vld [vmem:[%s45 + $0x260] sm:$0xff]
        %v6100 = vld [vmem:[%s45 + $0x268] sm:$0xff]
        %v6101 = vld [vmem:[%s45 + $0x270] sm:$0xff]
        %v6102 = vld [vmem:[%s45 + $0x278] sm:$0xff]
        %v6103 = vld [vmem:[%s45 + $0x280] sm:$0xff]
        %v6104 = vld [vmem:[%s45 + $0x288] sm:$0xff]
        %v6105 = vld [vmem:[%s45 + $0x290] sm:$0xff]
        %v6106 = vld [vmem:[%s45 + $0x298] sm:$0xff]
        %v6107 = vld [vmem:[%s45 + $0x2a0] sm:$0xff]
        %v6108 = vld [vmem:[%s45 + $0x2a8] sm:$0xff]
        %v6109 = vld [vmem:[%s45 + $0x2b0] sm:$0xff]
        %v6110 = vld [vmem:[%s45 + $0x2b8] sm:$0xff]
        %v6111 = vld [vmem:[%s45 + $0x2c0] sm:$0xff]
        %v6112 = vld [vmem:[%s45 + $0x2c8] sm:$0xff]
        %v6113 = vld [vmem:[%s45 + $0x2d0] sm:$0xff]
        %v6114 = vld [vmem:[%s45 + $0x2d8] sm:$0xff]
        %v6115 = vld [vmem:[%s45 + $0x2e0] sm:$0xff]
        %v6116 = vld [vmem:[%s45 + $0x2e8] sm:$0xff]
        %v6117 = vld [vmem:[%s45 + $0x2f0] sm:$0xff]
        %v6118 = vld [vmem:[%s45 + $0x2f8] sm:$0xff]
        %v6119 = vld [vmem:[%s45 + $0x300] sm:$0xff]
        %v6120 = vld [vmem:[%s45 + $0x308] sm:$0xff]
        %v6121 = vld [vmem:[%s45 + $0x310] sm:$0xff]
        %v6122 = vld [vmem:[%s45 + $0x318] sm:$0xff]
        %v6123 = vld [vmem:[%s45 + $0x320] sm:$0xff]
        %v6124 = vld [vmem:[%s45 + $0x328] sm:$0xff]
        %v6125 = vld [vmem:[%s45 + $0x330] sm:$0xff]
        %v6126 = vld [vmem:[%s45 + $0x338] sm:$0xff]
        %v6127 = vld [vmem:[%s45 + $0x340] sm:$0xff]
        %v6128 = vld [vmem:[%s45 + $0x348] sm:$0xff]
        %v6129 = vld [vmem:[%s45 + $0x350] sm:$0xff]
        %v6130 = vld [vmem:[%s45 + $0x358] sm:$0xff]
        %v6131 = vld [vmem:[%s45 + $0x360] sm:$0xff]
        %v6132 = vld [vmem:[%s45 + $0x368] sm:$0xff]
        %v6133 = vld [vmem:[%s45 + $0x370] sm:$0xff]
        %v6134 = vld [vmem:[%s45 + $0x378] sm:$0xff]
        %v6135 = vld [vmem:[%s45 + $0x380] sm:$0xff]
        %v6136 = vld [vmem:[%s45 + $0x388] sm:$0xff]
        %v6137 = vld [vmem:[%s45 + $0x390] sm:$0xff]
        %v6138 = vld [vmem:[%s45 + $0x398] sm:$0xff]
        %v6139 = vld [vmem:[%s45 + $0x3a0] sm:$0xff]
        %v6140 = vld [vmem:[%s45 + $0x3a8] sm:$0xff]
        %v6141 = vld [vmem:[%s45 + $0x3b0] sm:$0xff]
        %v6142 = vld [vmem:[%s45 + $0x3b8] sm:$0xff]
        %v6143 = vld [vmem:[%s45 + $0x3c0] sm:$0xff]
        %v6144 = vld [vmem:[%s45 + $0x3c8] sm:$0xff]
        %v6145 = vld [vmem:[%s45 + $0x3d0] sm:$0xff]
        %v6146 = vld [vmem:[%s45 + $0x3d8] sm:$0xff]
        %v6147 = vld [vmem:[%s45 + $0x3e0] sm:$0xff]
        %v6148 = vld [vmem:[%s45 + $0x3e8] sm:$0xff]
        %v6149 = vld [vmem:[%s45 + $0x3f0] sm:$0xff]
        %v6150 = vld [vmem:[%s45 + $0x3f8] sm:$0xff]
        %v6151 = vld [vmem:[%s45 + $0x400] sm:$0xff]
        %v6152 = vld [vmem:[%s45 + $0x408] sm:$0xff]
        %v6153 = vld [vmem:[%s45 + $0x410] sm:$0xff]
        %v6154 = vld [vmem:[%s45 + $0x418] sm:$0xff]
        %v6155 = vld [vmem:[%s45 + $0x420] sm:$0xff]
        %v6156 = vld [vmem:[%s45 + $0x428] sm:$0xff]
        %v6157 = vld [vmem:[%s45 + $0x430] sm:$0xff]
        %v6158 = vld [vmem:[%s45 + $0x438] sm:$0xff]
        %v6159 = vld [vmem:[%s45 + $0x440] sm:$0xff]
        %v6160 = vld [vmem:[%s45 + $0x448] sm:$0xff]
        %v6161 = vld [vmem:[%s45 + $0x450] sm:$0xff]
        %v6162 = vld [vmem:[%s45 + $0x458] sm:$0xff]
        %v6163 = vld [vmem:[%s45 + $0x460] sm:$0xff]
        %v6164 = vld [vmem:[%s45 + $0x468] sm:$0xff]
        %v6165 = vld [vmem:[%s45 + $0x470] sm:$0xff]
        %v6166 = vld [vmem:[%s45 + $0x478] sm:$0xff]
        %v6167 = vld [vmem:[%s45 + $0x480] sm:$0xff]
        %v6168 = vld [vmem:[%s45 + $0x488] sm:$0xff]
        %v6169 = vld [vmem:[%s45 + $0x490] sm:$0xff]
        %v6170 = vld [vmem:[%s45 + $0x498] sm:$0xff]
        %v6171 = vld [vmem:[%s45 + $0x4a0] sm:$0xff]
        %v6172 = vld [vmem:[%s45 + $0x4a8] sm:$0xff]
        %v6173 = vld [vmem:[%s45 + $0x4b0] sm:$0xff]
        %v6174 = vld [vmem:[%s45 + $0x4b8] sm:$0xff]
        %v6175 = vld [vmem:[%s45 + $0x4c0] sm:$0xff]
        %v6176 = vld [vmem:[%s45 + $0x4c8] sm:$0xff]
        %v6177 = vld [vmem:[%s45 + $0x4d0] sm:$0xff]
        %v6178 = vld [vmem:[%s45 + $0x4d8] sm:$0xff]
        %v6179 = vld [vmem:[%s45 + $0x4e0] sm:$0xff]
        %v6180 = vld [vmem:[%s45 + $0x4e8] sm:$0xff]
        %v6181 = vld [vmem:[%s45 + $0x4f0] sm:$0xff]
        %v6182 = vld [vmem:[%s45 + $0x4f8] sm:$0xff]
        %v6183 = vld [vmem:[%s45 + $0x500] sm:$0xff]
        %v6184 = vld [vmem:[%s45 + $0x508] sm:$0xff]
        %v6185 = vld [vmem:[%s45 + $0x510] sm:$0xff]
        %v6186 = vld [vmem:[%s45 + $0x518] sm:$0xff]
        %v6187 = vld [vmem:[%s45 + $0x520] sm:$0xff]
        %v6188 = vld [vmem:[%s45 + $0x528] sm:$0xff]
        %v6189 = vld [vmem:[%s45 + $0x530] sm:$0xff]
        %v6190 = vld [vmem:[%s45 + $0x538] sm:$0xff]
        %v6191 = vld [vmem:[%s45 + $0x540] sm:$0xff]
        %v6192 = vld [vmem:[%s45 + $0x548] sm:$0xff]
        %v6193 = vld [vmem:[%s45 + $0x550] sm:$0xff]
        %v6194 = vld [vmem:[%s45 + $0x558] sm:$0xff]
        %v6195 = vld [vmem:[%s45 + $0x560] sm:$0xff]
        %v6196 = vld [vmem:[%s45 + $0x568] sm:$0xff]
        %v6197 = vld [vmem:[%s45 + $0x570] sm:$0xff]
        %v6198 = vld [vmem:[%s45 + $0x578] sm:$0xff]
        %v6199 = vld [vmem:[%s45 + $0x580] sm:$0xff]
        %v6200 = vld [vmem:[%s45 + $0x588] sm:$0xff]
        %v6201 = vld [vmem:[%s45 + $0x590] sm:$0xff]
        %v6202 = vld [vmem:[%s45 + $0x598] sm:$0xff]
        %v6203 = vld [vmem:[%s45 + $0x5a0] sm:$0xff]
        %v6204 = vld [vmem:[%s45 + $0x5a8] sm:$0xff]
        %v6205 = vld [vmem:[%s45 + $0x5b0] sm:$0xff]
        %v6206 = vld [vmem:[%s45 + $0x5b8] sm:$0xff]
        %v6207 = vld [vmem:[%s45 + $0x5c0] sm:$0xff]
        %v6208 = vld [vmem:[%s45 + $0x5c8] sm:$0xff]
        %v6209 = vld [vmem:[%s45 + $0x5d0] sm:$0xff]
        %v6210 = vld [vmem:[%s45 + $0x5d8] sm:$0xff]
        %v6211 = vld [vmem:[%s45 + $0x5e0] sm:$0xff]
        %v6212 = vld [vmem:[%s45 + $0x5e8] sm:$0xff]
        %v6213 = vld [vmem:[%s45 + $0x5f0] sm:$0xff]
        %v6214 = vld [vmem:[%s45 + $0x5f8] sm:$0xff]
        %v6215 = vld [vmem:[%s45 + $0x600] sm:$0xff]
        %v6216 = vld [vmem:[%s45 + $0x608] sm:$0xff]
        %v6217 = vld [vmem:[%s45 + $0x610] sm:$0xff]
        %v6218 = vld [vmem:[%s45 + $0x618] sm:$0xff]
        %v6219 = vld [vmem:[%s45 + $0x620] sm:$0xff]
        %v6220 = vld [vmem:[%s45 + $0x628] sm:$0xff]
        %v6221 = vld [vmem:[%s45 + $0x630] sm:$0xff]
        %v6222 = vld [vmem:[%s45 + $0x638] sm:$0xff]
        %v6223 = vld [vmem:[%s45 + $0x640] sm:$0xff]
        %v6224 = vld [vmem:[%s45 + $0x648] sm:$0xff]
        %v6225 = vld [vmem:[%s45 + $0x650] sm:$0xff]
        %v6226 = vld [vmem:[%s45 + $0x658] sm:$0xff]
        %v6227 = vld [vmem:[%s45 + $0x660] sm:$0xff]
        %v6228 = vld [vmem:[%s45 + $0x668] sm:$0xff]
        %v6229 = vld [vmem:[%s45 + $0x670] sm:$0xff]
        %v6230 = vld [vmem:[%s45 + $0x678] sm:$0xff]
        %v6231 = vld [vmem:[%s45 + $0x680] sm:$0xff]
        %v6232 = vld [vmem:[%s45 + $0x688] sm:$0xff]
        %v6233 = vld [vmem:[%s45 + $0x690] sm:$0xff]
        %v6234 = vld [vmem:[%s45 + $0x698] sm:$0xff]
        %v6235 = vld [vmem:[%s45 + $0x6a0] sm:$0xff]
        %v6236 = vld [vmem:[%s45 + $0x6a8] sm:$0xff]
        %v6237 = vld [vmem:[%s45 + $0x6b0] sm:$0xff]
        %v6238 = vld [vmem:[%s45 + $0x6b8] sm:$0xff]
        %v6239 = vld [vmem:[%s45 + $0x6c0] sm:$0xff]
        %v6240 = vld [vmem:[%s45 + $0x6c8] sm:$0xff]
        %v6241 = vld [vmem:[%s45 + $0x6d0] sm:$0xff]
        %v6242 = vld [vmem:[%s45 + $0x6d8] sm:$0xff]
        %v6243 = vld [vmem:[%s45 + $0x6e0] sm:$0xff]
        %v6244 = vld [vmem:[%s45 + $0x6e8] sm:$0xff]
        %v6245 = vld [vmem:[%s45 + $0x6f0] sm:$0xff]
        %v6246 = vld [vmem:[%s45 + $0x6f8] sm:$0xff]
        %v6247 = vld [vmem:[%s45 + $0x700] sm:$0xff]
        %v6248 = vld [vmem:[%s45 + $0x708] sm:$0xff]
        %v6249 = vld [vmem:[%s45 + $0x710] sm:$0xff]
        %v6250 = vld [vmem:[%s45 + $0x718] sm:$0xff]
        %v6251 = vld [vmem:[%s45 + $0x720] sm:$0xff]
        %v6252 = vld [vmem:[%s45 + $0x728] sm:$0xff]
        %v6253 = vld [vmem:[%s45 + $0x730] sm:$0xff]
        %v6254 = vld [vmem:[%s45 + $0x738] sm:$0xff]
        %v6255 = vld [vmem:[%s45 + $0x740] sm:$0xff]
        %v6256 = vld [vmem:[%s45 + $0x748] sm:$0xff]
        %v6257 = vld [vmem:[%s45 + $0x750] sm:$0xff]
        %v6258 = vld [vmem:[%s45 + $0x758] sm:$0xff]
        %v6259 = vld [vmem:[%s45 + $0x760] sm:$0xff]
        %v6260 = vld [vmem:[%s45 + $0x768] sm:$0xff]
        %v6261 = vld [vmem:[%s45 + $0x770] sm:$0xff]
        %v6262 = vld [vmem:[%s45 + $0x778] sm:$0xff]
        %v6263 = vld [vmem:[%s45 + $0x780] sm:$0xff]
        %v6264 = vld [vmem:[%s45 + $0x788] sm:$0xff]
        %v6265 = vld [vmem:[%s45 + $0x790] sm:$0xff]
        %v6266 = vld [vmem:[%s45 + $0x798] sm:$0xff]
        %v6267 = vld [vmem:[%s45 + $0x7a0] sm:$0xff]
        %v6268 = vld [vmem:[%s45 + $0x7a8] sm:$0xff]
        %v6269 = vld [vmem:[%s45 + $0x7b0] sm:$0xff]
        %v6270 = vld [vmem:[%s45 + $0x7b8] sm:$0xff]
        %v6271 = vld [vmem:[%s45 + $0x7c0] sm:$0xff]
        %v6272 = vld [vmem:[%s45 + $0x7c8] sm:$0xff]
        %v6273 = vld [vmem:[%s45 + $0x7d0] sm:$0xff]
        %v6274 = vld [vmem:[%s45 + $0x7d8] sm:$0xff]
        %v6275 = vld [vmem:[%s45 + $0x7e0] sm:$0xff]
        %v6276 = vld [vmem:[%s45 + $0x7e8] sm:$0xff]
        %v6277 = vld [vmem:[%s45 + $0x7f0] sm:$0xff]
        %v6278 = vld [vmem:[%s45 + $0x7f8] sm:$0xff]
        %6279 = vmatprep.subr.mxu0 %v6024
        %6280 = vmatpush1.msra.mxu0 %v6023
        %6281 = vmatprep.subr.mxu0 %v6032
        %6282 = vmatpush1.msra.mxu0 %v6031
        %6283 = vmatprep.subr.mxu0 %v6040
        %6284 = vmatpush1.msra.mxu0 %v6039
        %6285 = vmatprep.subr.mxu0 %v6048
        %6286 = vmatpush1.msra.mxu0 %v6047
        %6287 = vmatprep.subr.mxu0 %v6056
        %6288 = vmatpush1.msra.mxu0 %v6055
        %6289 = vmatprep.subr.mxu0 %v6064
        %6290 = vmatpush1.msra.mxu0 %v6063
        %6291 = vmatprep.subr.mxu0 %v6072
        %6292 = vmatpush1.msra.mxu0 %v6071
        %6293 = vmatprep.subr.mxu0 %v6080
        %6294 = vmatpush1.msra.mxu0 %v6079
        %6295 = vmatprep.subr.mxu0 %v6088
        %6296 = vmatpush1.msra.mxu0 %v6087
        %6297 = vmatprep.subr.mxu0 %v6096
        %6298 = vmatpush1.msra.mxu0 %v6095
        %6299 = vmatprep.subr.mxu0 %v6104
        %6300 = vmatpush1.msra.mxu0 %v6103
        %6301 = vmatprep.subr.mxu0 %v6112
        %6302 = vmatpush1.msra.mxu0 %v6111
        %6303 = vmatprep.subr.mxu0 %v6120
        %6304 = vmatpush1.msra.mxu0 %v6119
        %6305 = vmatprep.subr.mxu0 %v6128
        %6306 = vmatpush1.msra.mxu0 %v6127
        %6307 = vmatprep.subr.mxu0 %v6136
        %6308 = vmatpush1.msra.mxu0 %v6135
        %6309 = vmatprep.subr.mxu0 %v6144
        %6310 = vmatpush1.msra.mxu0 %v6143
        %6311 = vmatprep.subr.mxu0 %v6152
        %6312 = vmatpush1.msra.mxu0 %v6151
        %6313 = vmatprep.subr.mxu0 %v6160
        %6314 = vmatpush1.msra.mxu0 %v6159
        %6315 = vmatprep.subr.mxu0 %v6168
        %6316 = vmatpush1.msra.mxu0 %v6167
        %6317 = vmatprep.subr.mxu0 %v6176
        %6318 = vmatpush1.msra.mxu0 %v6175
        %6319 = vmatprep.subr.mxu0 %v6184
        %6320 = vmatpush1.msra.mxu0 %v6183
        %6321 = vmatprep.subr.mxu0 %v6192
        %6322 = vmatpush1.msra.mxu0 %v6191
        %6323 = vmatprep.subr.mxu0 %v6200
        %6324 = vmatpush1.msra.mxu0 %v6199
        %6325 = vmatprep.subr.mxu0 %v6208
        %6326 = vmatpush1.msra.mxu0 %v6207
        %6327 = vmatprep.subr.mxu0 %v6216
        %6328 = vmatpush1.msra.mxu0 %v6215
        %6329 = vmatprep.subr.mxu0 %v6224
        %6330 = vmatpush1.msra.mxu0 %v6223
        %6331 = vmatprep.subr.mxu0 %v6232
        %6332 = vmatpush1.msra.mxu0 %v6231
        %6333 = vmatprep.subr.mxu0 %v6240
        %6334 = vmatpush1.msra.mxu0 %v6239
        %6335 = vmatprep.subr.mxu0 %v6248
        %6336 = vmatpush1.msra.mxu0 %v6247
        %6337 = vmatprep.subr.mxu0 %v6256
        %6338 = vmatpush1.msra.mxu0 %v6255
        %6339 = vmatprep.subr.mxu0 %v6264
        %6340 = vmatpush1.msra.mxu0 %v6263
        %6341 = vmatprep.subr.mxu0 %v6272
        %6342 = vmatpush1.msra.mxu0 %v6271
        %6343 = vmatprep.mubr.f32.mxu0 %v6022
        %6344 = vmatmul.mubr.f32.gmra.mrb[0].mxu0 %v6021
        %v6345 = vpop.f32.mrb[0].mxu0
        %v6346 = vadd.f32 0.0, %v6345
        %v6347 = vpop.f32.mrb[0].mxu0
        %v6348 = vadd.f32 0.0, %v6347
        %6349 = vdwg.mxu0
        %6350 = vmatprep.subr.mxu0 %v6026
        %6351 = vmatpush1.msra.mxu0 %v6025
        %6352 = vmatprep.subr.mxu0 %v6034
        %6353 = vmatpush1.msra.mxu0 %v6033
        %6354 = vmatprep.subr.mxu0 %v6042
        %6355 = vmatpush1.msra.mxu0 %v6041
        %6356 = vmatprep.subr.mxu0 %v6050
        %6357 = vmatpush1.msra.mxu0 %v6049
        %6358 = vmatprep.subr.mxu0 %v6058
        %6359 = vmatpush1.msra.mxu0 %v6057
        %6360 = vmatprep.subr.mxu0 %v6066
        %6361 = vmatpush1.msra.mxu0 %v6065
        %6362 = vmatprep.subr.mxu0 %v6074
        %6363 = vmatpush1.msra.mxu0 %v6073
        %6364 = vmatprep.subr.mxu0 %v6082
        %6365 = vmatpush1.msra.mxu0 %v6081
        %6366 = vmatprep.subr.mxu0 %v6090
        %6367 = vmatpush1.msra.mxu0 %v6089
        %6368 = vmatprep.subr.mxu0 %v6098
        %6369 = vmatpush1.msra.mxu0 %v6097
        %6370 = vmatprep.subr.mxu0 %v6106
        %6371 = vmatpush1.msra.mxu0 %v6105
        %6372 = vmatprep.subr.mxu0 %v6114
        %6373 = vmatpush1.msra.mxu0 %v6113
        %6374 = vmatprep.subr.mxu0 %v6122
        %6375 = vmatpush1.msra.mxu0 %v6121
        %6376 = vmatprep.subr.mxu0 %v6130
        %6377 = vmatpush1.msra.mxu0 %v6129
        %6378 = vmatprep.subr.mxu0 %v6138
        %6379 = vmatpush1.msra.mxu0 %v6137
        %6380 = vmatprep.subr.mxu0 %v6146
        %6381 = vmatpush1.msra.mxu0 %v6145
        %6382 = vmatprep.subr.mxu0 %v6154
        %6383 = vmatpush1.msra.mxu0 %v6153
        %6384 = vmatprep.subr.mxu0 %v6162
        %6385 = vmatpush1.msra.mxu0 %v6161
        %6386 = vmatprep.subr.mxu0 %v6170
        %6387 = vmatpush1.msra.mxu0 %v6169
        %6388 = vmatprep.subr.mxu0 %v6178
        %6389 = vmatpush1.msra.mxu0 %v6177
        %6390 = vmatprep.subr.mxu0 %v6186
        %6391 = vmatpush1.msra.mxu0 %v6185
        %6392 = vmatprep.subr.mxu0 %v6194
        %6393 = vmatpush1.msra.mxu0 %v6193
        %6394 = vmatprep.subr.mxu0 %v6202
        %6395 = vmatpush1.msra.mxu0 %v6201
        %6396 = vmatprep.subr.mxu0 %v6210
        %6397 = vmatpush1.msra.mxu0 %v6209
        %6398 = vmatprep.subr.mxu0 %v6218
        %6399 = vmatpush1.msra.mxu0 %v6217
        %6400 = vmatprep.subr.mxu0 %v6226
        %6401 = vmatpush1.msra.mxu0 %v6225
        %6402 = vmatprep.subr.mxu0 %v6234
        %6403 = vmatpush1.msra.mxu0 %v6233
        %6404 = vmatprep.subr.mxu0 %v6242
        %6405 = vmatpush1.msra.mxu0 %v6241
        %6406 = vmatprep.subr.mxu0 %v6250
        %6407 = vmatpush1.msra.mxu0 %v6249
        %6408 = vmatprep.subr.mxu0 %v6258
        %6409 = vmatpush1.msra.mxu0 %v6257
        %6410 = vmatprep.subr.mxu0 %v6266
        %6411 = vmatpush1.msra.mxu0 %v6265
        %6412 = vmatprep.subr.mxu0 %v6274
        %6413 = vmatpush1.msra.mxu0 %v6273
        %6414 = vmatprep.mubr.f32.mxu0 %v6022
        %6415 = vmatmul.mubr.f32.gmra.mrb[0].mxu0 %v6021
        %v6416 = vpop.f32.mrb[0].mxu0
        %v6417 = vadd.f32 0.0, %v6416
        %v6418 = vpop.f32.mrb[0].mxu0
        %v6419 = vadd.f32 0.0, %v6418
        %6420 = vdwg.mxu0
        %6421 = vmatprep.subr.mxu0 %v6028
        %6422 = vmatpush1.msra.mxu0 %v6027
        %6423 = vmatprep.subr.mxu0 %v6036
        %6424 = vmatpush1.msra.mxu0 %v6035
        %6425 = vmatprep.subr.mxu0 %v6044
        %6426 = vmatpush1.msra.mxu0 %v6043
        %6427 = vmatprep.subr.mxu0 %v6052
        %6428 = vmatpush1.msra.mxu0 %v6051
        %6429 = vmatprep.subr.mxu0 %v6060
        %6430 = vmatpush1.msra.mxu0 %v6059
        %6431 = vmatprep.subr.mxu0 %v6068
        %6432 = vmatpush1.msra.mxu0 %v6067
        %6433 = vmatprep.subr.mxu0 %v6076
        %6434 = vmatpush1.msra.mxu0 %v6075
        %6435 = vmatprep.subr.mxu0 %v6084
        %6436 = vmatpush1.msra.mxu0 %v6083
        %6437 = vmatprep.subr.mxu0 %v6092
        %6438 = vmatpush1.msra.mxu0 %v6091
        %6439 = vmatprep.subr.mxu0 %v6100
        %6440 = vmatpush1.msra.mxu0 %v6099
        %6441 = vmatprep.subr.mxu0 %v6108
        %6442 = vmatpush1.msra.mxu0 %v6107
        %6443 = vmatprep.subr.mxu0 %v6116
        %6444 = vmatpush1.msra.mxu0 %v6115
        %6445 = vmatprep.subr.mxu0 %v6124
        %6446 = vmatpush1.msra.mxu0 %v6123
        %6447 = vmatprep.subr.mxu0 %v6132
        %6448 = vmatpush1.msra.mxu0 %v6131
        %6449 = vmatprep.subr.mxu0 %v6140
        %6450 = vmatpush1.msra.mxu0 %v6139
        %6451 = vmatprep.subr.mxu0 %v6148
        %6452 = vmatpush1.msra.mxu0 %v6147
        %6453 = vmatprep.subr.mxu0 %v6156
        %6454 = vmatpush1.msra.mxu0 %v6155
        %6455 = vmatprep.subr.mxu0 %v6164
        %6456 = vmatpush1.msra.mxu0 %v6163
        %6457 = vmatprep.subr.mxu0 %v6172
        %6458 = vmatpush1.msra.mxu0 %v6171
        %6459 = vmatprep.subr.mxu0 %v6180
        %6460 = vmatpush1.msra.mxu0 %v6179
        %6461 = vmatprep.subr.mxu0 %v6188
        %6462 = vmatpush1.msra.mxu0 %v6187
        %6463 = vmatprep.subr.mxu0 %v6196
        %6464 = vmatpush1.msra.mxu0 %v6195
        %6465 = vmatprep.subr.mxu0 %v6204
        %6466 = vmatpush1.msra.mxu0 %v6203
        %6467 = vmatprep.subr.mxu0 %v6212
        %6468 = vmatpush1.msra.mxu0 %v6211
        %6469 = vmatprep.subr.mxu0 %v6220
        %6470 = vmatpush1.msra.mxu0 %v6219
        %6471 = vmatprep.subr.mxu0 %v6228
        %6472 = vmatpush1.msra.mxu0 %v6227
        %6473 = vmatprep.subr.mxu0 %v6236
        %6474 = vmatpush1.msra.mxu0 %v6235
        %6475 = vmatprep.subr.mxu0 %v6244
        %6476 = vmatpush1.msra.mxu0 %v6243
        %6477 = vmatprep.subr.mxu0 %v6252
        %6478 = vmatpush1.msra.mxu0 %v6251
        %6479 = vmatprep.subr.mxu0 %v6260
        %6480 = vmatpush1.msra.mxu0 %v6259
        %6481 = vmatprep.subr.mxu0 %v6268
        %6482 = vmatpush1.msra.mxu0 %v6267
        %6483 = vmatprep.subr.mxu0 %v6276
        %6484 = vmatpush1.msra.mxu0 %v6275
        %6485 = vmatprep.mubr.f32.mxu0 %v6022
        %6486 = vmatmul.mubr.f32.gmra.mrb[0].mxu0 %v6021
        %v6487 = vpop.f32.mrb[0].mxu0
        %v6488 = vadd.f32 0.0, %v6487
        %v6489 = vpop.f32.mrb[0].mxu0
        %v6490 = vadd.f32 0.0, %v6489
        %6491 = vdwg.mxu0
        %6492 = vmatprep.subr.mxu0 %v6030
        %6493 = vmatpush1.msra.mxu0 %v6029
        %6494 = vmatprep.subr.mxu0 %v6038
        %6495 = vmatpush1.msra.mxu0 %v6037
        %6496 = vmatprep.subr.mxu0 %v6046
        %6497 = vmatpush1.msra.mxu0 %v6045
        %6498 = vmatprep.subr.mxu0 %v6054
        %6499 = vmatpush1.msra.mxu0 %v6053
        %6500 = vmatprep.subr.mxu0 %v6062
        %6501 = vmatpush1.msra.mxu0 %v6061
        %6502 = vmatprep.subr.mxu0 %v6070
        %6503 = vmatpush1.msra.mxu0 %v6069
        %6504 = vmatprep.subr.mxu0 %v6078
        %6505 = vmatpush1.msra.mxu0 %v6077
        %6506 = vmatprep.subr.mxu0 %v6086
        %6507 = vmatpush1.msra.mxu0 %v6085
        %6508 = vmatprep.subr.mxu0 %v6094
        %6509 = vmatpush1.msra.mxu0 %v6093
        %6510 = vmatprep.subr.mxu0 %v6102
        %6511 = vmatpush1.msra.mxu0 %v6101
        %6512 = vmatprep.subr.mxu0 %v6110
        %6513 = vmatpush1.msra.mxu0 %v6109
        %6514 = vmatprep.subr.mxu0 %v6118
        %6515 = vmatpush1.msra.mxu0 %v6117
        %6516 = vmatprep.subr.mxu0 %v6126
        %6517 = vmatpush1.msra.mxu0 %v6125
        %6518 = vmatprep.subr.mxu0 %v6134
        %6519 = vmatpush1.msra.mxu0 %v6133
        %6520 = vmatprep.subr.mxu0 %v6142
        %6521 = vmatpush1.msra.mxu0 %v6141
        %6522 = vmatprep.subr.mxu0 %v6150
        %6523 = vmatpush1.msra.mxu0 %v6149
        %6524 = vmatprep.subr.mxu0 %v6158
        %6525 = vmatpush1.msra.mxu0 %v6157
        %6526 = vmatprep.subr.mxu0 %v6166
        %6527 = vmatpush1.msra.mxu0 %v6165
        %6528 = vmatprep.subr.mxu0 %v6174
        %6529 = vmatpush1.msra.mxu0 %v6173
        %6530 = vmatprep.subr.mxu0 %v6182
        %6531 = vmatpush1.msra.mxu0 %v6181
        %6532 = vmatprep.subr.mxu0 %v6190
        %6533 = vmatpush1.msra.mxu0 %v6189
        %6534 = vmatprep.subr.mxu0 %v6198
        %6535 = vmatpush1.msra.mxu0 %v6197
        %6536 = vmatprep.subr.mxu0 %v6206
        %6537 = vmatpush1.msra.mxu0 %v6205
        %6538 = vmatprep.subr.mxu0 %v6214
        %6539 = vmatpush1.msra.mxu0 %v6213
        %6540 = vmatprep.subr.mxu0 %v6222
        %6541 = vmatpush1.msra.mxu0 %v6221
        %6542 = vmatprep.subr.mxu0 %v6230
        %6543 = vmatpush1.msra.mxu0 %v6229
        %6544 = vmatprep.subr.mxu0 %v6238
        %6545 = vmatpush1.msra.mxu0 %v6237
        %6546 = vmatprep.subr.mxu0 %v6246
        %6547 = vmatpush1.msra.mxu0 %v6245
        %6548 = vmatprep.subr.mxu0 %v6254
        %6549 = vmatpush1.msra.mxu0 %v6253
        %6550 = vmatprep.subr.mxu0 %v6262
        %6551 = vmatpush1.msra.mxu0 %v6261
        %6552 = vmatprep.subr.mxu0 %v6270
        %6553 = vmatpush1.msra.mxu0 %v6269
        %6554 = vmatprep.subr.mxu0 %v6278
        %6555 = vmatpush1.msra.mxu0 %v6277
        %6556 = vmatprep.mubr.f32.mxu0 %v6022
        %6557 = vmatmul.mubr.f32.gmra.mrb[0].mxu0 %v6021
        %v6558 = vpop.f32.mrb[0].mxu0
        %v6559 = vadd.f32 0.0, %v6558
        %v6560 = vpop.f32.mrb[0].mxu0
        %v6561 = vadd.f32 0.0, %v6560
        %6562 = vdwg.mxu0
        %6564 = vset.pattern.permute.xlu0 0
        %6565 = vperm.xlu0 %6564, %v4286
        %v6566 = vpop.permute.xlu0 %6565
        %v6568 = vmul.f32 %v6566, %v6346
        %v6569 = vmul.f32 %v6566, %v6348
        %v6570 = vmul.f32 %v6566, %v6417
        %v6571 = vmul.f32 %v6566, %v6419
        %v6572 = vmul.f32 %v6566, %v6488
        %v6573 = vmul.f32 %v6566, %v6490
        %v6574 = vmul.f32 %v6566, %v6559
        %v6575 = vmul.f32 %v6566, %v6561
        %6577 = vset.pattern.permute.xlu0 0
        %6578 = vperm.xlu0 %6577, %v4291
        %v6579 = vpop.permute.xlu0 %6578
        %v6581 = vadd.f32 %v6568, %v6579
        %v6582 = vadd.f32 %v6569, %v6579
        %v6583 = vadd.f32 %v6570, %v6579
        %v6584 = vadd.f32 %v6571, %v6579
        %v6585 = vadd.f32 %v6572, %v6579
        %v6586 = vadd.f32 %v6573, %v6579
        %v6587 = vadd.f32 %v6574, %v6579
        %v6588 = vadd.f32 %v6575, %v6579
        %v6589 = vmul.f32 %v6581, 0.2
        %v6590 = vmul.f32 %v6582, 0.2
        %v6591 = vmul.f32 %v6583, 0.2
        %v6592 = vmul.f32 %v6584, 0.2
        %v6593 = vmul.f32 %v6585, 0.2
        %v6594 = vmul.f32 %v6586, 0.2
        %v6595 = vmul.f32 %v6587, 0.2
        %v6596 = vmul.f32 %v6588, 0.2
        %v6597 = vmax.f32 %v6581, %v6589
        %v6598 = vmax.f32 %v6582, %v6590
        %v6599 = vmax.f32 %v6583, %v6591
        %v6600 = vmax.f32 %v6584, %v6592
        %v6601 = vmax.f32 %v6585, %v6593
        %v6602 = vmax.f32 %v6586, %v6594
        %v6603 = vmax.f32 %v6587, %v6595
        %v6604 = vmax.f32 %v6588, %v6596
        %6606 = vset.pattern.permute.xlu0 0
        %6607 = vperm.xlu0 %6606, %v4296
        %v6608 = vpop.permute.xlu0 %6607
        %v6610 = vmul.f32 %v6608, %v6597
        %v6611 = vmul.f32 %v6608, %v6598
        %v6612 = vmul.f32 %v6608, %v6599
        %v6613 = vmul.f32 %v6608, %v6600
        %v6614 = vmul.f32 %v6608, %v6601
        %v6615 = vmul.f32 %v6608, %v6602
        %v6616 = vmul.f32 %v6608, %v6603
        %v6617 = vmul.f32 %v6608, %v6604
        %6619 = vset.pattern.permute.xlu0 0
        %6620 = vperm.xlu0 %6619, %v4301
        %v6621 = vpop.permute.xlu0 %6620
        %v6623 = vadd.f32 %v6610, %v6621
        %v6624 = vadd.f32 %v6611, %v6621
        %v6625 = vadd.f32 %v6612, %v6621
        %v6626 = vadd.f32 %v6613, %v6621
        %v6627 = vadd.f32 %v6614, %v6621
        %v6628 = vadd.f32 %v6615, %v6621
        %v6629 = vadd.f32 %v6616, %v6621
        %v6630 = vadd.f32 %v6617, %v6621
        %v6631 = vmul.f32 %v6623, 0.2
        %v6632 = vmul.f32 %v6624, 0.2
        %v6633 = vmul.f32 %v6625, 0.2
        %v6634 = vmul.f32 %v6626, 0.2
        %v6635 = vmul.f32 %v6627, 0.2
        %v6636 = vmul.f32 %v6628, 0.2
        %v6637 = vmul.f32 %v6629, 0.2
        %v6638 = vmul.f32 %v6630, 0.2
        %v6639 = vmax.f32 %v6623, %v6631
        %v6640 = vmax.f32 %v6624, %v6632
        %v6641 = vmax.f32 %v6625, %v6633
        %v6642 = vmax.f32 %v6626, %v6634
        %v6643 = vmax.f32 %v6627, %v6635
        %v6644 = vmax.f32 %v6628, %v6636
        %v6645 = vmax.f32 %v6629, %v6637
        %v6646 = vmax.f32 %v6630, %v6638
        %6655 = vrot.lane.b32.xlu0 %v6639, 33
        %v6656 = vpop.permute.xlu0 %6655
        %6657 = vrot.lane.b32.xlu0 %v6640, 33
        %v6658 = vpop.permute.xlu0 %6657
        %6659 = vrot.lane.b32.xlu0 %v6641, 33
        %v6660 = vpop.permute.xlu0 %6659
        %6661 = vrot.lane.b32.xlu0 %v6642, 33
        %v6662 = vpop.permute.xlu0 %6661
        %6663 = vrot.lane.b32.xlu0 %v6643, 33
        %v6664 = vpop.permute.xlu0 %6663
        %6665 = vrot.lane.b32.xlu0 %v6644, 33
        %v6666 = vpop.permute.xlu0 %6665
        %6667 = vrot.lane.b32.xlu0 %v6645, 33
        %v6668 = vpop.permute.xlu0 %6667
        %6669 = vrot.lane.b32.xlu0 %v6646, 33
        %v6670 = vpop.permute.xlu0 %6669
        %vm6671 = vcmask 269312
        %v6672 = vsel %vm6671, %v6656, %v6658
        %v6673 = vsel %vm6671, %v6658, %v6660
        %v6674 = vsel %vm6671, %v6660, %v6662
        %v6675 = vsel %vm6671, %v6662, %v6664
        %v6676 = vsel %vm6671, %v6664, %v6666
        %v6677 = vsel %vm6671, %v6666, %v6668
        %v6678 = vsel %vm6671, %v6668, %v6670
        %v6688 = vsel %vm6671, 0.0, %v6656
        %v6689 = vsel %vm6671, %v6670, 0.0
        %v6690 = vadd.s32 %v4563, 256
        %v6691 = vadd.s32 %v4563, 384
        %v6692 = vadd.s32 %v4563, 512
        %v6693 = vadd.s32 %v4563, 640
        %v6694 = vadd.s32 %v4563, 768
        %v6695 = vadd.s32 %v4563, 896
        %vm6696 = vcmp.lt.s32.totalorder %v4563, 0
        %v6697 = vsub.s32 0, %v4563
        %v6698 = vsel %vm6696, %v6697, %v4563
        %v6699 = vshrl.u32 %v6698, 5
        %v6700 = vand.u32 %v6698, 31
        %v6701 = vsub.s32 0, %v6700
        %v6702 = vsel %vm6696, %v6701, %v6700
        %vm6703 = vcmp.lt.s32.totalorder %v5402, 0
        %v6704 = vsub.s32 0, %v5402
        %v6705 = vsel %vm6703, %v6704, %v5402
        %v6706 = vshrl.u32 %v6705, 5
        %v6707 = vand.u32 %v6705, 31
        %v6708 = vsub.s32 0, %v6707
        %v6709 = vsel %vm6703, %v6708, %v6707
        %vm6710 = vcmp.lt.s32.totalorder %v6690, 0
        %v6711 = vsub.s32 0, %v6690
        %v6712 = vsel %vm6710, %v6711, %v6690
        %v6713 = vshrl.u32 %v6712, 5
        %v6714 = vand.u32 %v6712, 31
        %v6715 = vsub.s32 0, %v6714
        %v6716 = vsel %vm6710, %v6715, %v6714
        %vm6717 = vcmp.lt.s32.totalorder %v6691, 0
        %v6718 = vsub.s32 0, %v6691
        %v6719 = vsel %vm6717, %v6718, %v6691
        %v6720 = vshrl.u32 %v6719, 5
        %v6721 = vand.u32 %v6719, 31
        %v6722 = vsub.s32 0, %v6721
        %v6723 = vsel %vm6717, %v6722, %v6721
        %vm6724 = vcmp.lt.s32.totalorder %v6692, 0
        %v6725 = vsub.s32 0, %v6692
        %v6726 = vsel %vm6724, %v6725, %v6692
        %v6727 = vshrl.u32 %v6726, 5
        %v6728 = vand.u32 %v6726, 31
        %v6729 = vsub.s32 0, %v6728
        %v6730 = vsel %vm6724, %v6729, %v6728
        %vm6731 = vcmp.lt.s32.totalorder %v6693, 0
        %v6732 = vsub.s32 0, %v6693
        %v6733 = vsel %vm6731, %v6732, %v6693
        %v6734 = vshrl.u32 %v6733, 5
        %v6735 = vand.u32 %v6733, 31
        %v6736 = vsub.s32 0, %v6735
        %v6737 = vsel %vm6731, %v6736, %v6735
        %vm6738 = vcmp.lt.s32.totalorder %v6694, 0
        %v6739 = vsub.s32 0, %v6694
        %v6740 = vsel %vm6738, %v6739, %v6694
        %v6741 = vshrl.u32 %v6740, 5
        %v6742 = vand.u32 %v6740, 31
        %v6743 = vsub.s32 0, %v6742
        %v6744 = vsel %vm6738, %v6743, %v6742
        %vm6745 = vcmp.lt.s32.totalorder %v6695, 0
        %v6746 = vsub.s32 0, %v6695
        %v6747 = vsel %vm6745, %v6746, %v6695
        %v6748 = vshrl.u32 %v6747, 5
        %v6749 = vand.u32 %v6747, 31
        %v6750 = vsub.s32 0, %v6749
        %v6751 = vsel %vm6745, %v6750, %v6749
        %vm6752 = vcmp.ne.s32.totalorder %v6702, 0
        %vm6753 = vcmp.ne.s32.totalorder %v6709, 0
        %vm6754 = vcmp.ne.s32.totalorder %v6716, 0
        %vm6755 = vcmp.ne.s32.totalorder %v6723, 0
        %vm6756 = vcmp.ne.s32.totalorder %v6730, 0
        %vm6757 = vcmp.ne.s32.totalorder %v6737, 0
        %vm6758 = vcmp.ne.s32.totalorder %v6744, 0
        %vm6759 = vcmp.ne.s32.totalorder %v6751, 0
        %vm6760 = vcmp.lt.s32.totalorder %v6702, 0
        %vm6761 = vcmp.lt.s32.totalorder %v6709, 0
        %vm6762 = vcmp.lt.s32.totalorder %v6716, 0
        %vm6763 = vcmp.lt.s32.totalorder %v6723, 0
        %vm6764 = vcmp.lt.s32.totalorder %v6730, 0
        %vm6765 = vcmp.lt.s32.totalorder %v6737, 0
        %vm6766 = vcmp.lt.s32.totalorder %v6744, 0
        %vm6767 = vcmp.lt.s32.totalorder %v6751, 0
        %vm6768 = vmand %vm6760, %vm6752
        %vm6769 = vmand %vm6761, %vm6753
        %vm6770 = vmand %vm6762, %vm6754
        %vm6771 = vmand %vm6763, %vm6755
        %vm6772 = vmand %vm6764, %vm6756
        %vm6773 = vmand %vm6765, %vm6757
        %vm6774 = vmand %vm6766, %vm6758
        %vm6775 = vmand %vm6767, %vm6759
        %v6776 = vadd.s32 %v6702, 32
        %v6777 = vadd.s32 %v6709, 32
        %v6778 = vadd.s32 %v6716, 32
        %v6779 = vadd.s32 %v6723, 32
        %v6780 = vadd.s32 %v6730, 32
        %v6781 = vadd.s32 %v6737, 32
        %v6782 = vadd.s32 %v6744, 32
        %v6783 = vadd.s32 %v6751, 32
        %v6784 = vsel %vm6768, %v6776, %v6702
        %v6785 = vsel %vm6769, %v6777, %v6709
        %v6786 = vsel %vm6770, %v6778, %v6716
        %v6787 = vsel %vm6771, %v6779, %v6723
        %v6788 = vsel %vm6772, %v6780, %v6730
        %v6789 = vsel %vm6773, %v6781, %v6737
        %v6790 = vsel %vm6774, %v6782, %v6744
        %v6791 = vsel %vm6775, %v6783, %v6751
        %vm6792 = vcmp.ge.s32.totalorder %v6784, 1
        %vm6793 = vcmp.ge.s32.totalorder %v6785, 1
        %vm6794 = vcmp.ge.s32.totalorder %v6786, 1
        %vm6795 = vcmp.ge.s32.totalorder %v6787, 1
        %vm6796 = vcmp.ge.s32.totalorder %v6788, 1
        %vm6797 = vcmp.ge.s32.totalorder %v6789, 1
        %vm6798 = vcmp.ge.s32.totalorder %v6790, 1
        %vm6799 = vcmp.ge.s32.totalorder %v6791, 1
        %vm6800 = vcmp.le.s32.totalorder %v6784, 30
        %vm6801 = vcmp.le.s32.totalorder %v6785, 30
        %vm6802 = vcmp.le.s32.totalorder %v6786, 30
        %vm6803 = vcmp.le.s32.totalorder %v6787, 30
        %vm6804 = vcmp.le.s32.totalorder %v6788, 30
        %vm6805 = vcmp.le.s32.totalorder %v6789, 30
        %vm6806 = vcmp.le.s32.totalorder %v6790, 30
        %vm6807 = vcmp.le.s32.totalorder %v6791, 30
        %v6808 = vsel %vm6792, 1, 0
        %v6809 = vsel %vm6793, 1, 0
        %v6810 = vsel %vm6794, 1, 0
        %v6811 = vsel %vm6795, 1, 0
        %v6812 = vsel %vm6796, 1, 0
        %v6813 = vsel %vm6797, 1, 0
        %v6814 = vsel %vm6798, 1, 0
        %v6815 = vsel %vm6799, 1, 0
        %vm6816 = vcmp.eq.s32.totalorder %v6808, 1
        %vm6817 = vcmp.eq.s32.totalorder %v6809, 1
        %vm6818 = vcmp.eq.s32.totalorder %v6810, 1
        %vm6819 = vcmp.eq.s32.totalorder %v6811, 1
        %vm6820 = vcmp.eq.s32.totalorder %v6812, 1
        %vm6821 = vcmp.eq.s32.totalorder %v6813, 1
        %vm6822 = vcmp.eq.s32.totalorder %v6814, 1
        %vm6823 = vcmp.eq.s32.totalorder %v6815, 1
        %v6824 = vsel %vm6816, %v6688, 0.0
        %v6825 = vsel %vm6817, %v6672, 0.0
        %v6826 = vsel %vm6818, %v6673, 0.0
        %v6827 = vsel %vm6819, %v6674, 0.0
        %v6828 = vsel %vm6820, %v6675, 0.0
        %v6829 = vsel %vm6821, %v6676, 0.0
        %v6830 = vsel %vm6822, %v6677, 0.0
        %v6831 = vsel %vm6823, %v6678, 0.0
        %v6832 = vsel %vm6800, 1, 0
        %v6833 = vsel %vm6801, 1, 0
        %v6834 = vsel %vm6802, 1, 0
        %v6835 = vsel %vm6803, 1, 0
        %v6836 = vsel %vm6804, 1, 0
        %v6837 = vsel %vm6805, 1, 0
        %v6838 = vsel %vm6806, 1, 0
        %v6839 = vsel %vm6807, 1, 0
        %vm6840 = vcmp.eq.s32.totalorder %v6832, 1
        %vm6841 = vcmp.eq.s32.totalorder %v6833, 1
        %vm6842 = vcmp.eq.s32.totalorder %v6834, 1
        %vm6843 = vcmp.eq.s32.totalorder %v6835, 1
        %vm6844 = vcmp.eq.s32.totalorder %v6836, 1
        %vm6845 = vcmp.eq.s32.totalorder %v6837, 1
        %vm6846 = vcmp.eq.s32.totalorder %v6838, 1
        %vm6847 = vcmp.eq.s32.totalorder %v6839, 1
        %6850 = vrot.lane.b32.xlu0 %v6688, 126
        %v6851 = vpop.permute.xlu0 %6850
        %6852 = vrot.lane.b32.xlu0 %v6672, 126
        %v6853 = vpop.permute.xlu0 %6852
        %6854 = vrot.lane.b32.xlu0 %v6673, 126
        %v6855 = vpop.permute.xlu0 %6854
        %6856 = vrot.lane.b32.xlu0 %v6674, 126
        %v6857 = vpop.permute.xlu0 %6856
        %6858 = vrot.lane.b32.xlu0 %v6675, 126
        %v6859 = vpop.permute.xlu0 %6858
        %6860 = vrot.lane.b32.xlu0 %v6676, 126
        %v6861 = vpop.permute.xlu0 %6860
        %6862 = vrot.lane.b32.xlu0 %v6677, 126
        %v6863 = vpop.permute.xlu0 %6862
        %6864 = vrot.lane.b32.xlu0 %v6678, 126
        %v6865 = vpop.permute.xlu0 %6864
        %6866 = vrot.lane.b32.xlu0 %v6689, 126
        %v6867 = vpop.permute.xlu0 %6866
        %v6868 = vsel %vm5459, %v6851, %v6853
        %v6869 = vsel %vm5459, %v6853, %v6855
        %v6870 = vsel %vm5459, %v6855, %v6857
        %v6871 = vsel %vm5459, %v6857, %v6859
        %v6872 = vsel %vm5459, %v6859, %v6861
        %v6873 = vsel %vm5459, %v6861, %v6863
        %v6874 = vsel %vm5459, %v6863, %v6865
        %v6875 = vsel %vm5459, %v6865, %v6867
        %v6884 = vsel %vm6840, %v6868, 0.0
        %v6885 = vsel %vm6841, %v6869, 0.0
        %v6886 = vsel %vm6842, %v6870, 0.0
        %v6887 = vsel %vm6843, %v6871, 0.0
        %v6888 = vsel %vm6844, %v6872, 0.0
        %v6889 = vsel %vm6845, %v6873, 0.0
        %v6890 = vsel %vm6846, %v6874, 0.0
        %v6891 = vsel %vm6847, %v6875, 0.0
        %6892 = vrot.lane.b32.xlu0 %v6688, 96
        %v6893 = vpop.permute.xlu0 %6892
        %6894 = vrot.lane.b32.xlu0 %v6672, 96
        %v6895 = vpop.permute.xlu0 %6894
        %6896 = vrot.lane.b32.xlu0 %v6673, 96
        %v6897 = vpop.permute.xlu0 %6896
        %6898 = vrot.lane.b32.xlu0 %v6674, 96
        %v6899 = vpop.permute.xlu0 %6898
        %6900 = vrot.lane.b32.xlu0 %v6675, 96
        %v6901 = vpop.permute.xlu0 %6900
        %6902 = vrot.lane.b32.xlu0 %v6676, 96
        %v6903 = vpop.permute.xlu0 %6902
        %6904 = vrot.lane.b32.xlu0 %v6677, 96
        %v6905 = vpop.permute.xlu0 %6904
        %6906 = vrot.lane.b32.xlu0 %v6678, 96
        %v6907 = vpop.permute.xlu0 %6906
        %6908 = vrot.lane.b32.xlu0 %v6689, 96
        %v6909 = vpop.permute.xlu0 %6908
        %v6910 = vsel %vm3621, %v6893, %v6895
        %v6911 = vsel %vm3621, %v6895, %v6897
        %v6912 = vsel %vm3621, %v6897, %v6899
        %v6913 = vsel %vm3621, %v6899, %v6901
        %v6914 = vsel %vm3621, %v6901, %v6903
        %v6915 = vsel %vm3621, %v6903, %v6905
        %v6916 = vsel %vm3621, %v6905, %v6907
        %v6917 = vsel %vm3621, %v6907, %v6909
        %v6926 = vsel %vm6816, %v6910, 0.0
        %v6927 = vsel %vm6817, %v6911, 0.0
        %v6928 = vsel %vm6818, %v6912, 0.0
        %v6929 = vsel %vm6819, %v6913, 0.0
        %v6930 = vsel %vm6820, %v6914, 0.0
        %v6931 = vsel %vm6821, %v6915, 0.0
        %v6932 = vsel %vm6822, %v6916, 0.0
        %v6933 = vsel %vm6823, %v6917, 0.0
        %6934 = vrot.lane.b32.xlu0 %v6688, 94
        %v6935 = vpop.permute.xlu0 %6934
        %6936 = vrot.lane.b32.xlu0 %v6672, 94
        %v6937 = vpop.permute.xlu0 %6936
        %6938 = vrot.lane.b32.xlu0 %v6673, 94
        %v6939 = vpop.permute.xlu0 %6938
        %6940 = vrot.lane.b32.xlu0 %v6674, 94
        %v6941 = vpop.permute.xlu0 %6940
        %6942 = vrot.lane.b32.xlu0 %v6675, 94
        %v6943 = vpop.permute.xlu0 %6942
        %6944 = vrot.lane.b32.xlu0 %v6676, 94
        %v6945 = vpop.permute.xlu0 %6944
        %6946 = vrot.lane.b32.xlu0 %v6677, 94
        %v6947 = vpop.permute.xlu0 %6946
        %6948 = vrot.lane.b32.xlu0 %v6678, 94
        %v6949 = vpop.permute.xlu0 %6948
        %6950 = vrot.lane.b32.xlu0 %v6689, 94
        %v6951 = vpop.permute.xlu0 %6950
        %v6952 = vsel %vm5558, %v6935, %v6937
        %v6953 = vsel %vm5558, %v6937, %v6939
        %v6954 = vsel %vm5558, %v6939, %v6941
        %v6955 = vsel %vm5558, %v6941, %v6943
        %v6956 = vsel %vm5558, %v6943, %v6945
        %v6957 = vsel %vm5558, %v6945, %v6947
        %v6958 = vsel %vm5558, %v6947, %v6949
        %v6959 = vsel %vm5558, %v6949, %v6951
        %v6968 = vsel %vm6840, %v6952, 0.0
        %v6969 = vsel %vm6841, %v6953, 0.0
        %v6970 = vsel %vm6842, %v6954, 0.0
        %v6971 = vsel %vm6843, %v6955, 0.0
        %v6972 = vsel %vm6844, %v6956, 0.0
        %v6973 = vsel %vm6845, %v6957, 0.0
        %v6974 = vsel %vm6846, %v6958, 0.0
        %v6975 = vsel %vm6847, %v6959, 0.0
        %6976 = vrot.lane.b32.xlu0 %v6688, 64
        %v6977 = vpop.permute.xlu0 %6976
        %6978 = vrot.lane.b32.xlu0 %v6672, 64
        %v6979 = vpop.permute.xlu0 %6978
        %6980 = vrot.lane.b32.xlu0 %v6673, 64
        %v6981 = vpop.permute.xlu0 %6980
        %6982 = vrot.lane.b32.xlu0 %v6674, 64
        %v6983 = vpop.permute.xlu0 %6982
        %6984 = vrot.lane.b32.xlu0 %v6675, 64
        %v6985 = vpop.permute.xlu0 %6984
        %6986 = vrot.lane.b32.xlu0 %v6676, 64
        %v6987 = vpop.permute.xlu0 %6986
        %6988 = vrot.lane.b32.xlu0 %v6677, 64
        %v6989 = vpop.permute.xlu0 %6988
        %6990 = vrot.lane.b32.xlu0 %v6678, 64
        %v6991 = vpop.permute.xlu0 %6990
        %6992 = vrot.lane.b32.xlu0 %v6689, 64
        %v6993 = vpop.permute.xlu0 %6992
        %v6994 = vsel %vm5221, %v6977, %v6979
        %v6995 = vsel %vm5221, %v6979, %v6981
        %v6996 = vsel %vm5221, %v6981, %v6983
        %v6997 = vsel %vm5221, %v6983, %v6985
        %v6998 = vsel %vm5221, %v6985, %v6987
        %v6999 = vsel %vm5221, %v6987, %v6989
        %v7000 = vsel %vm5221, %v6989, %v6991
        %v7001 = vsel %vm5221, %v6991, %v6993
        %v7010 = vsel %vm6816, %v6994, 0.0
        %v7011 = vsel %vm6817, %v6995, 0.0
        %v7012 = vsel %vm6818, %v6996, 0.0
        %v7013 = vsel %vm6819, %v6997, 0.0
        %v7014 = vsel %vm6820, %v6998, 0.0
        %v7015 = vsel %vm6821, %v6999, 0.0
        %v7016 = vsel %vm6822, %v7000, 0.0
        %v7017 = vsel %vm6823, %v7001, 0.0
        %7018 = vrot.lane.b32.xlu0 %v6688, 62
        %v7019 = vpop.permute.xlu0 %7018
        %7020 = vrot.lane.b32.xlu0 %v6672, 62
        %v7021 = vpop.permute.xlu0 %7020
        %7022 = vrot.lane.b32.xlu0 %v6673, 62
        %v7023 = vpop.permute.xlu0 %7022
        %7024 = vrot.lane.b32.xlu0 %v6674, 62
        %v7025 = vpop.permute.xlu0 %7024
        %7026 = vrot.lane.b32.xlu0 %v6675, 62
        %v7027 = vpop.permute.xlu0 %7026
        %7028 = vrot.lane.b32.xlu0 %v6676, 62
        %v7029 = vpop.permute.xlu0 %7028
        %7030 = vrot.lane.b32.xlu0 %v6677, 62
        %v7031 = vpop.permute.xlu0 %7030
        %7032 = vrot.lane.b32.xlu0 %v6678, 62
        %v7033 = vpop.permute.xlu0 %7032
        %7034 = vrot.lane.b32.xlu0 %v6689, 62
        %v7035 = vpop.permute.xlu0 %7034
        %vm7036 = vcmask 506880
        %v7037 = vsel %vm7036, %v7019, %v7021
        %v7038 = vsel %vm7036, %v7021, %v7023
        %v7039 = vsel %vm7036, %v7023, %v7025
        %v7040 = vsel %vm7036, %v7025, %v7027
        %v7041 = vsel %vm7036, %v7027, %v7029
        %v7042 = vsel %vm7036, %v7029, %v7031
        %v7043 = vsel %vm7036, %v7031, %v7033
        %v7044 = vsel %vm7036, %v7033, %v7035
        %v7053 = vsel %vm6840, %v7037, 0.0
        %v7054 = vsel %vm6841, %v7038, 0.0
        %v7055 = vsel %vm6842, %v7039, 0.0
        %v7056 = vsel %vm6843, %v7040, 0.0
        %v7057 = vsel %vm6844, %v7041, 0.0
        %v7058 = vsel %vm6845, %v7042, 0.0
        %v7059 = vsel %vm6846, %v7043, 0.0
        %v7060 = vsel %vm6847, %v7044, 0.0
        %7061 = vrot.lane.b32.xlu0 %v6688, 127
        %v7062 = vpop.permute.xlu0 %7061
        %7063 = vrot.lane.b32.xlu0 %v6672, 127
        %v7064 = vpop.permute.xlu0 %7063
        %7065 = vrot.lane.b32.xlu0 %v6673, 127
        %v7066 = vpop.permute.xlu0 %7065
        %7067 = vrot.lane.b32.xlu0 %v6674, 127
        %v7068 = vpop.permute.xlu0 %7067
        %7069 = vrot.lane.b32.xlu0 %v6675, 127
        %v7070 = vpop.permute.xlu0 %7069
        %7071 = vrot.lane.b32.xlu0 %v6676, 127
        %v7072 = vpop.permute.xlu0 %7071
        %7073 = vrot.lane.b32.xlu0 %v6677, 127
        %v7074 = vpop.permute.xlu0 %7073
        %7075 = vrot.lane.b32.xlu0 %v6678, 127
        %v7076 = vpop.permute.xlu0 %7075
        %7077 = vrot.lane.b32.xlu0 %v6689, 127
        %v7078 = vpop.permute.xlu0 %7077
        %v7079 = vsel %vm5583, %v7062, %v7064
        %v7080 = vsel %vm5583, %v7064, %v7066
        %v7081 = vsel %vm5583, %v7066, %v7068
        %v7082 = vsel %vm5583, %v7068, %v7070
        %v7083 = vsel %vm5583, %v7070, %v7072
        %v7084 = vsel %vm5583, %v7072, %v7074
        %v7085 = vsel %vm5583, %v7074, %v7076
        %v7086 = vsel %vm5583, %v7076, %v7078
        %7095 = vrot.lane.b32.xlu0 %v6688, 95
        %v7096 = vpop.permute.xlu0 %7095
        %7097 = vrot.lane.b32.xlu0 %v6672, 95
        %v7098 = vpop.permute.xlu0 %7097
        %7099 = vrot.lane.b32.xlu0 %v6673, 95
        %v7100 = vpop.permute.xlu0 %7099
        %7101 = vrot.lane.b32.xlu0 %v6674, 95
        %v7102 = vpop.permute.xlu0 %7101
        %7103 = vrot.lane.b32.xlu0 %v6675, 95
        %v7104 = vpop.permute.xlu0 %7103
        %7105 = vrot.lane.b32.xlu0 %v6676, 95
        %v7106 = vpop.permute.xlu0 %7105
        %7107 = vrot.lane.b32.xlu0 %v6677, 95
        %v7108 = vpop.permute.xlu0 %7107
        %7109 = vrot.lane.b32.xlu0 %v6678, 95
        %v7110 = vpop.permute.xlu0 %7109
        %7111 = vrot.lane.b32.xlu0 %v6689, 95
        %v7112 = vpop.permute.xlu0 %7111
        %v7113 = vsel %vm5625, %v7096, %v7098
        %v7114 = vsel %vm5625, %v7098, %v7100
        %v7115 = vsel %vm5625, %v7100, %v7102
        %v7116 = vsel %vm5625, %v7102, %v7104
        %v7117 = vsel %vm5625, %v7104, %v7106
        %v7118 = vsel %vm5625, %v7106, %v7108
        %v7119 = vsel %vm5625, %v7108, %v7110
        %v7120 = vsel %vm5625, %v7110, %v7112
        %7129 = vrot.lane.b32.xlu0 %v6688, 63
        %v7130 = vpop.permute.xlu0 %7129
        %7131 = vrot.lane.b32.xlu0 %v6672, 63
        %v7132 = vpop.permute.xlu0 %7131
        %7133 = vrot.lane.b32.xlu0 %v6673, 63
        %v7134 = vpop.permute.xlu0 %7133
        %7135 = vrot.lane.b32.xlu0 %v6674, 63
        %v7136 = vpop.permute.xlu0 %7135
        %7137 = vrot.lane.b32.xlu0 %v6675, 63
        %v7138 = vpop.permute.xlu0 %7137
        %7139 = vrot.lane.b32.xlu0 %v6676, 63
        %v7140 = vpop.permute.xlu0 %7139
        %7141 = vrot.lane.b32.xlu0 %v6677, 63
        %v7142 = vpop.permute.xlu0 %7141
        %7143 = vrot.lane.b32.xlu0 %v6678, 63
        %v7144 = vpop.permute.xlu0 %7143
        %7145 = vrot.lane.b32.xlu0 %v6689, 63
        %v7146 = vpop.permute.xlu0 %7145
        %vm7147 = vcmask 515072
        %v7148 = vsel %vm7147, %v7130, %v7132
        %v7149 = vsel %vm7147, %v7132, %v7134
        %v7150 = vsel %vm7147, %v7134, %v7136
        %v7151 = vsel %vm7147, %v7136, %v7138
        %v7152 = vsel %vm7147, %v7138, %v7140
        %v7153 = vsel %vm7147, %v7140, %v7142
        %v7154 = vsel %vm7147, %v7142, %v7144
        %v7155 = vsel %vm7147, %v7144, %v7146
        %v7164 = vld [vmem:[#allocation17] sm:$0xf]
        %v7165 = vld [vmem:[%s49] sm:$0xf]
        %7167 = vset.pattern.permute.xlu0 0
        %7168 = vperm.xlu0 %7167, %v7165
        %v7169 = vpop.permute.xlu0 %7168
        %v7172 = vsel %vm5865, %v7164, 0
        %7174 = vmatprep.subr.mxu0 %v6825
        %7175 = vmatpush1.msra.mxu0 %v6824
        %7176 = vmatprep.subr.mxu0 %v7080
        %7177 = vmatpush1.msra.mxu0 %v7079
        %7178 = vmatprep.subr.mxu0 %v6885
        %7179 = vmatpush1.msra.mxu0 %v6884
        %7180 = vmatprep.subr.mxu0 %v6927
        %7181 = vmatpush1.msra.mxu0 %v6926
        %7182 = vmatprep.subr.mxu0 %v7114
        %7183 = vmatpush1.msra.mxu0 %v7113
        %7184 = vmatprep.subr.mxu0 %v6969
        %7185 = vmatpush1.msra.mxu0 %v6968
        %7186 = vmatprep.subr.mxu0 %v7011
        %7187 = vmatpush1.msra.mxu0 %v7010
        %7188 = vmatprep.subr.mxu0 %v7149
        %7189 = vmatpush1.msra.mxu0 %v7148
        %7190 = vmatprep.subr.mxu0 %v7054
        %7191 = vmatpush1.msra.mxu0 %v7053
        %7192 = vmatprep.subr.mxu0 0.0
        %7193 = vmatpush1.msra.mxu0 0.0
        %7194 = vmatprep.subr.mxu0 0.0
        %7195 = vmatpush1.msra.mxu0 0.0
        %7196 = vmatprep.subr.mxu0 0.0
        %7197 = vmatpush1.msra.mxu0 0.0
        %7198 = vmatprep.subr.mxu0 0.0
        %7199 = vmatpush1.msra.mxu0 0.0
        %7200 = vmatprep.subr.mxu0 0.0
        %7201 = vmatpush1.msra.mxu0 0.0
        %7202 = vmatprep.subr.mxu0 0.0
        %7203 = vmatpush1.msra.mxu0 0.0
        %7204 = vmatprep.subr.mxu0 0.0
        %7205 = vmatpush1.msra.mxu0 0.0
        %7206 = vmatprep.subr.mxu0 0.0
        %7207 = vmatpush1.msra.mxu0 0.0
        %7208 = vmatprep.subr.mxu0 0.0
        %7209 = vmatpush1.msra.mxu0 0.0
        %7210 = vmatprep.subr.mxu0 0.0
        %7211 = vmatpush1.msra.mxu0 0.0
        %7212 = vmatprep.subr.mxu0 0.0
        %7213 = vmatpush1.msra.mxu0 0.0
        %7214 = vmatprep.subr.mxu0 0.0
        %7215 = vmatpush1.msra.mxu0 0.0
        %7216 = vmatprep.subr.mxu0 0.0
        %7217 = vmatpush1.msra.mxu0 0.0
        %7218 = vmatprep.subr.mxu0 0.0
        %7219 = vmatpush1.msra.mxu0 0.0
        %7220 = vmatprep.subr.mxu0 0.0
        %7221 = vmatpush1.msra.mxu0 0.0
        %7222 = vmatprep.subr.mxu0 0.0
        %7223 = vmatpush1.msra.mxu0 0.0
        %7224 = vmatprep.subr.mxu0 0.0
        %7225 = vmatpush1.msra.mxu0 0.0
        %7226 = vmatprep.subr.mxu0 0.0
        %7227 = vmatpush1.msra.mxu0 0.0
        %7228 = vmatprep.subr.mxu0 0.0
        %7229 = vmatpush1.msra.mxu0 0.0
        %7230 = vmatprep.subr.mxu0 0.0
        %7231 = vmatpush1.msra.mxu0 0.0
        %7232 = vmatprep.subr.mxu0 0.0
        %7233 = vmatpush1.msra.mxu0 0.0
        %7234 = vmatprep.subr.mxu0 0.0
        %7235 = vmatpush1.msra.mxu0 0.0
        %7236 = vmatprep.subr.mxu0 0.0
        %7237 = vmatpush1.msra.mxu0 0.0
        %7238 = vmatprep.mubr.f32.mxu0 0.0
        %7239 = vmatmul.mubr.f32.gmra.mrb[0].mxu0 %v7172
        %v7240 = vpop.f32.mrb[0].mxu0
        %v7241 = vadd.f32 %v7169, %v7240
        %v7242 = vpop.f32.mrb[0].mxu0
        %v7243 = vadd.f32 %v7169, %v7242
        %7244 = vdwg.mxu0
        %7245 = vmatprep.subr.mxu0 %v6827
        %7246 = vmatpush1.msra.mxu0 %v6826
        %7247 = vmatprep.subr.mxu0 %v7082
        %7248 = vmatpush1.msra.mxu0 %v7081
        %7249 = vmatprep.subr.mxu0 %v6887
        %7250 = vmatpush1.msra.mxu0 %v6886
        %7251 = vmatprep.subr.mxu0 %v6929
        %7252 = vmatpush1.msra.mxu0 %v6928
        %7253 = vmatprep.subr.mxu0 %v7116
        %7254 = vmatpush1.msra.mxu0 %v7115
        %7255 = vmatprep.subr.mxu0 %v6971
        %7256 = vmatpush1.msra.mxu0 %v6970
        %7257 = vmatprep.subr.mxu0 %v7013
        %7258 = vmatpush1.msra.mxu0 %v7012
        %7259 = vmatprep.subr.mxu0 %v7151
        %7260 = vmatpush1.msra.mxu0 %v7150
        %7261 = vmatprep.subr.mxu0 %v7056
        %7262 = vmatpush1.msra.mxu0 %v7055
        %7263 = vmatprep.subr.mxu0 0.0
        %7264 = vmatpush1.msra.mxu0 0.0
        %7265 = vmatprep.subr.mxu0 0.0
        %7266 = vmatpush1.msra.mxu0 0.0
        %7267 = vmatprep.subr.mxu0 0.0
        %7268 = vmatpush1.msra.mxu0 0.0
        %7269 = vmatprep.subr.mxu0 0.0
        %7270 = vmatpush1.msra.mxu0 0.0
        %7271 = vmatprep.subr.mxu0 0.0
        %7272 = vmatpush1.msra.mxu0 0.0
        %7273 = vmatprep.subr.mxu0 0.0
        %7274 = vmatpush1.msra.mxu0 0.0
        %7275 = vmatprep.subr.mxu0 0.0
        %7276 = vmatpush1.msra.mxu0 0.0
        %7277 = vmatprep.subr.mxu0 0.0
        %7278 = vmatpush1.msra.mxu0 0.0
        %7279 = vmatprep.subr.mxu0 0.0
        %7280 = vmatpush1.msra.mxu0 0.0
        %7281 = vmatprep.subr.mxu0 0.0
        %7282 = vmatpush1.msra.mxu0 0.0
        %7283 = vmatprep.subr.mxu0 0.0
        %7284 = vmatpush1.msra.mxu0 0.0
        %7285 = vmatprep.subr.mxu0 0.0
        %7286 = vmatpush1.msra.mxu0 0.0
        %7287 = vmatprep.subr.mxu0 0.0
        %7288 = vmatpush1.msra.mxu0 0.0
        %7289 = vmatprep.subr.mxu0 0.0
        %7290 = vmatpush1.msra.mxu0 0.0
        %7291 = vmatprep.subr.mxu0 0.0
        %7292 = vmatpush1.msra.mxu0 0.0
        %7293 = vmatprep.subr.mxu0 0.0
        %7294 = vmatpush1.msra.mxu0 0.0
        %7295 = vmatprep.subr.mxu0 0.0
        %7296 = vmatpush1.msra.mxu0 0.0
        %7297 = vmatprep.subr.mxu0 0.0
        %7298 = vmatpush1.msra.mxu0 0.0
        %7299 = vmatprep.subr.mxu0 0.0
        %7300 = vmatpush1.msra.mxu0 0.0
        %7301 = vmatprep.subr.mxu0 0.0
        %7302 = vmatpush1.msra.mxu0 0.0
        %7303 = vmatprep.subr.mxu0 0.0
        %7304 = vmatpush1.msra.mxu0 0.0
        %7305 = vmatprep.subr.mxu0 0.0
        %7306 = vmatpush1.msra.mxu0 0.0
        %7307 = vmatprep.subr.mxu0 0.0
        %7308 = vmatpush1.msra.mxu0 0.0
        %7309 = vmatprep.mubr.f32.mxu0 0.0
        %7310 = vmatmul.mubr.f32.gmra.mrb[0].mxu0 %v7172
        %v7311 = vpop.f32.mrb[0].mxu0
        %v7312 = vadd.f32 %v7169, %v7311
        %v7313 = vpop.f32.mrb[0].mxu0
        %v7314 = vadd.f32 %v7169, %v7313
        %7315 = vdwg.mxu0
        %7316 = vmatprep.subr.mxu0 %v6829
        %7317 = vmatpush1.msra.mxu0 %v6828
        %7318 = vmatprep.subr.mxu0 %v7084
        %7319 = vmatpush1.msra.mxu0 %v7083
        %7320 = vmatprep.subr.mxu0 %v6889
        %7321 = vmatpush1.msra.mxu0 %v6888
        %7322 = vmatprep.subr.mxu0 %v6931
        %7323 = vmatpush1.msra.mxu0 %v6930
        %7324 = vmatprep.subr.mxu0 %v7118
        %7325 = vmatpush1.msra.mxu0 %v7117
        %7326 = vmatprep.subr.mxu0 %v6973
        %7327 = vmatpush1.msra.mxu0 %v6972
        %7328 = vmatprep.subr.mxu0 %v7015
        %7329 = vmatpush1.msra.mxu0 %v7014
        %7330 = vmatprep.subr.mxu0 %v7153
        %7331 = vmatpush1.msra.mxu0 %v7152
        %7332 = vmatprep.subr.mxu0 %v7058
        %7333 = vmatpush1.msra.mxu0 %v7057
        %7334 = vmatprep.subr.mxu0 0.0
        %7335 = vmatpush1.msra.mxu0 0.0
        %7336 = vmatprep.subr.mxu0 0.0
        %7337 = vmatpush1.msra.mxu0 0.0
        %7338 = vmatprep.subr.mxu0 0.0
        %7339 = vmatpush1.msra.mxu0 0.0
        %7340 = vmatprep.subr.mxu0 0.0
        %7341 = vmatpush1.msra.mxu0 0.0
        %7342 = vmatprep.subr.mxu0 0.0
        %7343 = vmatpush1.msra.mxu0 0.0
        %7344 = vmatprep.subr.mxu0 0.0
        %7345 = vmatpush1.msra.mxu0 0.0
        %7346 = vmatprep.subr.mxu0 0.0
        %7347 = vmatpush1.msra.mxu0 0.0
        %7348 = vmatprep.subr.mxu0 0.0
        %7349 = vmatpush1.msra.mxu0 0.0
        %7350 = vmatprep.subr.mxu0 0.0
        %7351 = vmatpush1.msra.mxu0 0.0
        %7352 = vmatprep.subr.mxu0 0.0
        %7353 = vmatpush1.msra.mxu0 0.0
        %7354 = vmatprep.subr.mxu0 0.0
        %7355 = vmatpush1.msra.mxu0 0.0
        %7356 = vmatprep.subr.mxu0 0.0
        %7357 = vmatpush1.msra.mxu0 0.0
        %7358 = vmatprep.subr.mxu0 0.0
        %7359 = vmatpush1.msra.mxu0 0.0
        %7360 = vmatprep.subr.mxu0 0.0
        %7361 = vmatpush1.msra.mxu0 0.0
        %7362 = vmatprep.subr.mxu0 0.0
        %7363 = vmatpush1.msra.mxu0 0.0
        %7364 = vmatprep.subr.mxu0 0.0
        %7365 = vmatpush1.msra.mxu0 0.0
        %7366 = vmatprep.subr.mxu0 0.0
        %7367 = vmatpush1.msra.mxu0 0.0
        %7368 = vmatprep.subr.mxu0 0.0
        %7369 = vmatpush1.msra.mxu0 0.0
        %7370 = vmatprep.subr.mxu0 0.0
        %7371 = vmatpush1.msra.mxu0 0.0
        %7372 = vmatprep.subr.mxu0 0.0
        %7373 = vmatpush1.msra.mxu0 0.0
        %7374 = vmatprep.subr.mxu0 0.0
        %7375 = vmatpush1.msra.mxu0 0.0
        %7376 = vmatprep.subr.mxu0 0.0
        %7377 = vmatpush1.msra.mxu0 0.0
        %7378 = vmatprep.subr.mxu0 0.0
        %7379 = vmatpush1.msra.mxu0 0.0
        %7380 = vmatprep.mubr.f32.mxu0 0.0
        %7381 = vmatmul.mubr.f32.gmra.mrb[0].mxu0 %v7172
        %v7382 = vpop.f32.mrb[0].mxu0
        %v7383 = vadd.f32 %v7169, %v7382
        %v7384 = vpop.f32.mrb[0].mxu0
        %v7385 = vadd.f32 %v7169, %v7384
        %7386 = vdwg.mxu0
        %7387 = vmatprep.subr.mxu0 %v6831
        %7388 = vmatpush1.msra.mxu0 %v6830
        %7389 = vmatprep.subr.mxu0 %v7086
        %7390 = vmatpush1.msra.mxu0 %v7085
        %7391 = vmatprep.subr.mxu0 %v6891
        %7392 = vmatpush1.msra.mxu0 %v6890
        %7393 = vmatprep.subr.mxu0 %v6933
        %7394 = vmatpush1.msra.mxu0 %v6932
        %7395 = vmatprep.subr.mxu0 %v7120
        %7396 = vmatpush1.msra.mxu0 %v7119
        %7397 = vmatprep.subr.mxu0 %v6975
        %7398 = vmatpush1.msra.mxu0 %v6974
        %7399 = vmatprep.subr.mxu0 %v7017
        %7400 = vmatpush1.msra.mxu0 %v7016
        %7401 = vmatprep.subr.mxu0 %v7155
        %7402 = vmatpush1.msra.mxu0 %v7154
        %7403 = vmatprep.subr.mxu0 %v7060
        %7404 = vmatpush1.msra.mxu0 %v7059
        %7405 = vmatprep.subr.mxu0 0.0
        %7406 = vmatpush1.msra.mxu0 0.0
        %7407 = vmatprep.subr.mxu0 0.0
        %7408 = vmatpush1.msra.mxu0 0.0
        %7409 = vmatprep.subr.mxu0 0.0
        %7410 = vmatpush1.msra.mxu0 0.0
        %7411 = vmatprep.subr.mxu0 0.0
        %7412 = vmatpush1.msra.mxu0 0.0
        %7413 = vmatprep.subr.mxu0 0.0
        %7414 = vmatpush1.msra.mxu0 0.0
        %7415 = vmatprep.subr.mxu0 0.0
        %7416 = vmatpush1.msra.mxu0 0.0
        %7417 = vmatprep.subr.mxu0 0.0
        %7418 = vmatpush1.msra.mxu0 0.0
        %7419 = vmatprep.subr.mxu0 0.0
        %7420 = vmatpush1.msra.mxu0 0.0
        %7421 = vmatprep.subr.mxu0 0.0
        %7422 = vmatpush1.msra.mxu0 0.0
        %7423 = vmatprep.subr.mxu0 0.0
        %7424 = vmatpush1.msra.mxu0 0.0
        %7425 = vmatprep.subr.mxu0 0.0
        %7426 = vmatpush1.msra.mxu0 0.0
        %7427 = vmatprep.subr.mxu0 0.0
        %7428 = vmatpush1.msra.mxu0 0.0
        %7429 = vmatprep.subr.mxu0 0.0
        %7430 = vmatpush1.msra.mxu0 0.0
        %7431 = vmatprep.subr.mxu0 0.0
        %7432 = vmatpush1.msra.mxu0 0.0
        %7433 = vmatprep.subr.mxu0 0.0
        %7434 = vmatpush1.msra.mxu0 0.0
        %7435 = vmatprep.subr.mxu0 0.0
        %7436 = vmatpush1.msra.mxu0 0.0
        %7437 = vmatprep.subr.mxu0 0.0
        %7438 = vmatpush1.msra.mxu0 0.0
        %7439 = vmatprep.subr.mxu0 0.0
        %7440 = vmatpush1.msra.mxu0 0.0
        %7441 = vmatprep.subr.mxu0 0.0
        %7442 = vmatpush1.msra.mxu0 0.0
        %7443 = vmatprep.subr.mxu0 0.0
        %7444 = vmatpush1.msra.mxu0 0.0
        %7445 = vmatprep.subr.mxu0 0.0
        %7446 = vmatpush1.msra.mxu0 0.0
        %7447 = vmatprep.subr.mxu0 0.0
        %7448 = vmatpush1.msra.mxu0 0.0
        %7449 = vmatprep.subr.mxu0 0.0
        %7450 = vmatpush1.msra.mxu0 0.0
        %7451 = vmatprep.mubr.f32.mxu0 0.0
        %7452 = vmatmul.mubr.f32.gmra.mrb[0].mxu0 %v7172
        %v7453 = vpop.f32.mrb[0].mxu0
        %v7454 = vadd.f32 %v7169, %v7453
        %v7455 = vpop.f32.mrb[0].mxu0
        %v7456 = vadd.f32 %v7169, %v7455
        %7457 = vdwg.mxu0
        %7459 = vset.pattern.permute.xlu0 0
        %7460 = vperm.xlu0 %7459, %v4306
        %v7461 = vpop.permute.xlu0 %7460
        %v7463 = vmul.f32 %v7461, %v7241
        %v7464 = vmul.f32 %v7461, %v7243
        %v7465 = vmul.f32 %v7461, %v7312
        %v7466 = vmul.f32 %v7461, %v7314
        %v7467 = vmul.f32 %v7461, %v7383
        %v7468 = vmul.f32 %v7461, %v7385
        %v7469 = vmul.f32 %v7461, %v7454
        %v7470 = vmul.f32 %v7461, %v7456
        %7472 = vset.pattern.permute.xlu0 0
        %7473 = vperm.xlu0 %7472, %v4311
        %v7474 = vpop.permute.xlu0 %7473
        %v7476 = vadd.f32 %v7463, %v7474
        %v7477 = vadd.f32 %v7464, %v7474
        %v7478 = vadd.f32 %v7465, %v7474
        %v7479 = vadd.f32 %v7466, %v7474
        %v7480 = vadd.f32 %v7467, %v7474
        %v7481 = vadd.f32 %v7468, %v7474
        %v7482 = vadd.f32 %v7469, %v7474
        %v7483 = vadd.f32 %v7470, %v7474
        %v7484 = vmul.f32 %v7476, 0.2
        %v7485 = vmul.f32 %v7477, 0.2
        %v7486 = vmul.f32 %v7478, 0.2
        %v7487 = vmul.f32 %v7479, 0.2
        %v7488 = vmul.f32 %v7480, 0.2
        %v7489 = vmul.f32 %v7481, 0.2
        %v7490 = vmul.f32 %v7482, 0.2
        %v7491 = vmul.f32 %v7483, 0.2
        %v7492 = vmax.f32 %v7476, %v7484
        %v7493 = vmax.f32 %v7477, %v7485
        %v7494 = vmax.f32 %v7478, %v7486
        %v7495 = vmax.f32 %v7479, %v7487
        %v7496 = vmax.f32 %v7480, %v7488
        %v7497 = vmax.f32 %v7481, %v7489
        %v7498 = vmax.f32 %v7482, %v7490
        %v7499 = vmax.f32 %v7483, %v7491
        %7501 = vset.pattern.permute.xlu0 0
        %7502 = vperm.xlu0 %7501, %v4316
        %v7503 = vpop.permute.xlu0 %7502
        %v7505 = vmul.f32 %v7503, %v7492
        %v7506 = vmul.f32 %v7503, %v7493
        %v7507 = vmul.f32 %v7503, %v7494
        %v7508 = vmul.f32 %v7503, %v7495
        %v7509 = vmul.f32 %v7503, %v7496
        %v7510 = vmul.f32 %v7503, %v7497
        %v7511 = vmul.f32 %v7503, %v7498
        %v7512 = vmul.f32 %v7503, %v7499
        %7514 = vset.pattern.permute.xlu0 0
        %7515 = vperm.xlu0 %7514, %v4321
        %v7516 = vpop.permute.xlu0 %7515
        %v7518 = vadd.f32 %v7505, %v7516
        %v7519 = vadd.f32 %v7506, %v7516
        %v7520 = vadd.f32 %v7507, %v7516
        %v7521 = vadd.f32 %v7508, %v7516
        %v7522 = vadd.f32 %v7509, %v7516
        %v7523 = vadd.f32 %v7510, %v7516
        %v7524 = vadd.f32 %v7511, %v7516
        %v7525 = vadd.f32 %v7512, %v7516
        %v7526 = vmul.f32 %v7518, 0.2
        %v7527 = vmul.f32 %v7519, 0.2
        %v7528 = vmul.f32 %v7520, 0.2
        %v7529 = vmul.f32 %v7521, 0.2
        %v7530 = vmul.f32 %v7522, 0.2
        %v7531 = vmul.f32 %v7523, 0.2
        %v7532 = vmul.f32 %v7524, 0.2
        %v7533 = vmul.f32 %v7525, 0.2
        %v7534 = vmax.f32 %v7518, %v7526
        %v7535 = vmax.f32 %v7519, %v7527
        %v7536 = vmax.f32 %v7520, %v7528
        %v7537 = vmax.f32 %v7521, %v7529
        %v7538 = vmax.f32 %v7522, %v7530
        %v7539 = vmax.f32 %v7523, %v7531
        %v7540 = vmax.f32 %v7524, %v7532
        %v7541 = vmax.f32 %v7525, %v7533
        %7550 = vrot.lane.b32.xlu0 %v7534, 33
        %v7551 = vpop.permute.xlu0 %7550
        %7552 = vrot.lane.b32.xlu0 %v7535, 33
        %v7553 = vpop.permute.xlu0 %7552
        %7554 = vrot.lane.b32.xlu0 %v7536, 33
        %v7555 = vpop.permute.xlu0 %7554
        %7556 = vrot.lane.b32.xlu0 %v7537, 33
        %v7557 = vpop.permute.xlu0 %7556
        %7558 = vrot.lane.b32.xlu0 %v7538, 33
        %v7559 = vpop.permute.xlu0 %7558
        %7560 = vrot.lane.b32.xlu0 %v7539, 33
        %v7561 = vpop.permute.xlu0 %7560
        %7562 = vrot.lane.b32.xlu0 %v7540, 33
        %v7563 = vpop.permute.xlu0 %7562
        %7564 = vrot.lane.b32.xlu0 %v7541, 33
        %v7565 = vpop.permute.xlu0 %7564
        %v7566 = vsel %vm6671, %v7551, %v7553
        %v7567 = vsel %vm6671, %v7553, %v7555
        %v7568 = vsel %vm6671, %v7555, %v7557
        %v7569 = vsel %vm6671, %v7557, %v7559
        %v7570 = vsel %vm6671, %v7559, %v7561
        %v7571 = vsel %vm6671, %v7561, %v7563
        %v7572 = vsel %vm6671, %v7563, %v7565
        %v7582 = vsel %vm6671, 0.0, %v7551
        %v7583 = vsel %vm6671, %v7565, 0.0
        %v7584 = vsel %vm6816, %v7582, 0.0
        %v7585 = vsel %vm6817, %v7566, 0.0
        %v7586 = vsel %vm6818, %v7567, 0.0
        %v7587 = vsel %vm6819, %v7568, 0.0
        %v7588 = vsel %vm6820, %v7569, 0.0
        %v7589 = vsel %vm6821, %v7570, 0.0
        %v7590 = vsel %vm6822, %v7571, 0.0
        %v7591 = vsel %vm6823, %v7572, 0.0
        %7594 = vrot.lane.b32.xlu0 %v7582, 126
        %v7595 = vpop.permute.xlu0 %7594
        %7596 = vrot.lane.b32.xlu0 %v7566, 126
        %v7597 = vpop.permute.xlu0 %7596
        %7598 = vrot.lane.b32.xlu0 %v7567, 126
        %v7599 = vpop.permute.xlu0 %7598
        %7600 = vrot.lane.b32.xlu0 %v7568, 126
        %v7601 = vpop.permute.xlu0 %7600
        %7602 = vrot.lane.b32.xlu0 %v7569, 126
        %v7603 = vpop.permute.xlu0 %7602
        %7604 = vrot.lane.b32.xlu0 %v7570, 126
        %v7605 = vpop.permute.xlu0 %7604
        %7606 = vrot.lane.b32.xlu0 %v7571, 126
        %v7607 = vpop.permute.xlu0 %7606
        %7608 = vrot.lane.b32.xlu0 %v7572, 126
        %v7609 = vpop.permute.xlu0 %7608
        %7610 = vrot.lane.b32.xlu0 %v7583, 126
        %v7611 = vpop.permute.xlu0 %7610
        %v7612 = vsel %vm5459, %v7595, %v7597
        %v7613 = vsel %vm5459, %v7597, %v7599
        %v7614 = vsel %vm5459, %v7599, %v7601
        %v7615 = vsel %vm5459, %v7601, %v7603
        %v7616 = vsel %vm5459, %v7603, %v7605
        %v7617 = vsel %vm5459, %v7605, %v7607
        %v7618 = vsel %vm5459, %v7607, %v7609
        %v7619 = vsel %vm5459, %v7609, %v7611
        %v7628 = vsel %vm6840, %v7612, 0.0
        %v7629 = vsel %vm6841, %v7613, 0.0
        %v7630 = vsel %vm6842, %v7614, 0.0
        %v7631 = vsel %vm6843, %v7615, 0.0
        %v7632 = vsel %vm6844, %v7616, 0.0
        %v7633 = vsel %vm6845, %v7617, 0.0
        %v7634 = vsel %vm6846, %v7618, 0.0
        %v7635 = vsel %vm6847, %v7619, 0.0
        %7636 = vrot.lane.b32.xlu0 %v7582, 96
        %v7637 = vpop.permute.xlu0 %7636
        %7638 = vrot.lane.b32.xlu0 %v7566, 96
        %v7639 = vpop.permute.xlu0 %7638
        %7640 = vrot.lane.b32.xlu0 %v7567, 96
        %v7641 = vpop.permute.xlu0 %7640
        %7642 = vrot.lane.b32.xlu0 %v7568, 96
        %v7643 = vpop.permute.xlu0 %7642
        %7644 = vrot.lane.b32.xlu0 %v7569, 96
        %v7645 = vpop.permute.xlu0 %7644
        %7646 = vrot.lane.b32.xlu0 %v7570, 96
        %v7647 = vpop.permute.xlu0 %7646
        %7648 = vrot.lane.b32.xlu0 %v7571, 96
        %v7649 = vpop.permute.xlu0 %7648
        %7650 = vrot.lane.b32.xlu0 %v7572, 96
        %v7651 = vpop.permute.xlu0 %7650
        %7652 = vrot.lane.b32.xlu0 %v7583, 96
        %v7653 = vpop.permute.xlu0 %7652
        %v7654 = vsel %vm3621, %v7637, %v7639
        %v7655 = vsel %vm3621, %v7639, %v7641
        %v7656 = vsel %vm3621, %v7641, %v7643
        %v7657 = vsel %vm3621, %v7643, %v7645
        %v7658 = vsel %vm3621, %v7645, %v7647
        %v7659 = vsel %vm3621, %v7647, %v7649
        %v7660 = vsel %vm3621, %v7649, %v7651
        %v7661 = vsel %vm3621, %v7651, %v7653
        %v7670 = vsel %vm6816, %v7654, 0.0
        %v7671 = vsel %vm6817, %v7655, 0.0
        %v7672 = vsel %vm6818, %v7656, 0.0
        %v7673 = vsel %vm6819, %v7657, 0.0
        %v7674 = vsel %vm6820, %v7658, 0.0
        %v7675 = vsel %vm6821, %v7659, 0.0
        %v7676 = vsel %vm6822, %v7660, 0.0
        %v7677 = vsel %vm6823, %v7661, 0.0
        %7678 = vrot.lane.b32.xlu0 %v7582, 94
        %v7679 = vpop.permute.xlu0 %7678
        %7680 = vrot.lane.b32.xlu0 %v7566, 94
        %v7681 = vpop.permute.xlu0 %7680
        %7682 = vrot.lane.b32.xlu0 %v7567, 94
        %v7683 = vpop.permute.xlu0 %7682
        %7684 = vrot.lane.b32.xlu0 %v7568, 94
        %v7685 = vpop.permute.xlu0 %7684
        %7686 = vrot.lane.b32.xlu0 %v7569, 94
        %v7687 = vpop.permute.xlu0 %7686
        %7688 = vrot.lane.b32.xlu0 %v7570, 94
        %v7689 = vpop.permute.xlu0 %7688
        %7690 = vrot.lane.b32.xlu0 %v7571, 94
        %v7691 = vpop.permute.xlu0 %7690
        %7692 = vrot.lane.b32.xlu0 %v7572, 94
        %v7693 = vpop.permute.xlu0 %7692
        %7694 = vrot.lane.b32.xlu0 %v7583, 94
        %v7695 = vpop.permute.xlu0 %7694
        %v7696 = vsel %vm5558, %v7679, %v7681
        %v7697 = vsel %vm5558, %v7681, %v7683
        %v7698 = vsel %vm5558, %v7683, %v7685
        %v7699 = vsel %vm5558, %v7685, %v7687
        %v7700 = vsel %vm5558, %v7687, %v7689
        %v7701 = vsel %vm5558, %v7689, %v7691
        %v7702 = vsel %vm5558, %v7691, %v7693
        %v7703 = vsel %vm5558, %v7693, %v7695
        %v7712 = vsel %vm6840, %v7696, 0.0
        %v7713 = vsel %vm6841, %v7697, 0.0
        %v7714 = vsel %vm6842, %v7698, 0.0
        %v7715 = vsel %vm6843, %v7699, 0.0
        %v7716 = vsel %vm6844, %v7700, 0.0
        %v7717 = vsel %vm6845, %v7701, 0.0
        %v7718 = vsel %vm6846, %v7702, 0.0
        %v7719 = vsel %vm6847, %v7703, 0.0
        %7720 = vrot.lane.b32.xlu0 %v7582, 64
        %v7721 = vpop.permute.xlu0 %7720
        %7722 = vrot.lane.b32.xlu0 %v7566, 64
        %v7723 = vpop.permute.xlu0 %7722
        %7724 = vrot.lane.b32.xlu0 %v7567, 64
        %v7725 = vpop.permute.xlu0 %7724
        %7726 = vrot.lane.b32.xlu0 %v7568, 64
        %v7727 = vpop.permute.xlu0 %7726
        %7728 = vrot.lane.b32.xlu0 %v7569, 64
        %v7729 = vpop.permute.xlu0 %7728
        %7730 = vrot.lane.b32.xlu0 %v7570, 64
        %v7731 = vpop.permute.xlu0 %7730
        %7732 = vrot.lane.b32.xlu0 %v7571, 64
        %v7733 = vpop.permute.xlu0 %7732
        %7734 = vrot.lane.b32.xlu0 %v7572, 64
        %v7735 = vpop.permute.xlu0 %7734
        %7736 = vrot.lane.b32.xlu0 %v7583, 64
        %v7737 = vpop.permute.xlu0 %7736
        %v7738 = vsel %vm5221, %v7721, %v7723
        %v7739 = vsel %vm5221, %v7723, %v7725
        %v7740 = vsel %vm5221, %v7725, %v7727
        %v7741 = vsel %vm5221, %v7727, %v7729
        %v7742 = vsel %vm5221, %v7729, %v7731
        %v7743 = vsel %vm5221, %v7731, %v7733
        %v7744 = vsel %vm5221, %v7733, %v7735
        %v7745 = vsel %vm5221, %v7735, %v7737
        %v7754 = vsel %vm6816, %v7738, 0.0
        %v7755 = vsel %vm6817, %v7739, 0.0
        %v7756 = vsel %vm6818, %v7740, 0.0
        %v7757 = vsel %vm6819, %v7741, 0.0
        %v7758 = vsel %vm6820, %v7742, 0.0
        %v7759 = vsel %vm6821, %v7743, 0.0
        %v7760 = vsel %vm6822, %v7744, 0.0
        %v7761 = vsel %vm6823, %v7745, 0.0
        %7762 = vrot.lane.b32.xlu0 %v7582, 62
        %v7763 = vpop.permute.xlu0 %7762
        %7764 = vrot.lane.b32.xlu0 %v7566, 62
        %v7765 = vpop.permute.xlu0 %7764
        %7766 = vrot.lane.b32.xlu0 %v7567, 62
        %v7767 = vpop.permute.xlu0 %7766
        %7768 = vrot.lane.b32.xlu0 %v7568, 62
        %v7769 = vpop.permute.xlu0 %7768
        %7770 = vrot.lane.b32.xlu0 %v7569, 62
        %v7771 = vpop.permute.xlu0 %7770
        %7772 = vrot.lane.b32.xlu0 %v7570, 62
        %v7773 = vpop.permute.xlu0 %7772
        %7774 = vrot.lane.b32.xlu0 %v7571, 62
        %v7775 = vpop.permute.xlu0 %7774
        %7776 = vrot.lane.b32.xlu0 %v7572, 62
        %v7777 = vpop.permute.xlu0 %7776
        %7778 = vrot.lane.b32.xlu0 %v7583, 62
        %v7779 = vpop.permute.xlu0 %7778
        %v7780 = vsel %vm7036, %v7763, %v7765
        %v7781 = vsel %vm7036, %v7765, %v7767
        %v7782 = vsel %vm7036, %v7767, %v7769
        %v7783 = vsel %vm7036, %v7769, %v7771
        %v7784 = vsel %vm7036, %v7771, %v7773
        %v7785 = vsel %vm7036, %v7773, %v7775
        %v7786 = vsel %vm7036, %v7775, %v7777
        %v7787 = vsel %vm7036, %v7777, %v7779
        %v7796 = vsel %vm6840, %v7780, 0.0
        %v7797 = vsel %vm6841, %v7781, 0.0
        %v7798 = vsel %vm6842, %v7782, 0.0
        %v7799 = vsel %vm6843, %v7783, 0.0
        %v7800 = vsel %vm6844, %v7784, 0.0
        %v7801 = vsel %vm6845, %v7785, 0.0
        %v7802 = vsel %vm6846, %v7786, 0.0
        %v7803 = vsel %vm6847, %v7787, 0.0
        %v7804 = vrot.slane %v7582, 4
        %v7805 = vrot.slane %v7566, 4
        %v7806 = vrot.slane %v7567, 4
        %v7807 = vrot.slane %v7568, 4
        %v7808 = vrot.slane %v7569, 4
        %v7809 = vrot.slane %v7570, 4
        %v7810 = vrot.slane %v7571, 4
        %v7811 = vrot.slane %v7572, 4
        %v7812 = vrot.slane %v7583, 4
        %7813 = vrot.lane.b32.xlu0 %v7804, 127
        %v7814 = vpop.permute.xlu0 %7813
        %7815 = vrot.lane.b32.xlu0 %v7805, 127
        %v7816 = vpop.permute.xlu0 %7815
        %7817 = vrot.lane.b32.xlu0 %v7806, 127
        %v7818 = vpop.permute.xlu0 %7817
        %7819 = vrot.lane.b32.xlu0 %v7807, 127
        %v7820 = vpop.permute.xlu0 %7819
        %7821 = vrot.lane.b32.xlu0 %v7808, 127
        %v7822 = vpop.permute.xlu0 %7821
        %7823 = vrot.lane.b32.xlu0 %v7809, 127
        %v7824 = vpop.permute.xlu0 %7823
        %7825 = vrot.lane.b32.xlu0 %v7810, 127
        %v7826 = vpop.permute.xlu0 %7825
        %7827 = vrot.lane.b32.xlu0 %v7811, 127
        %v7828 = vpop.permute.xlu0 %7827
        %7829 = vrot.lane.b32.xlu0 %v7812, 127
        %v7830 = vpop.permute.xlu0 %7829
        %v7831 = vsel %vm5583, %v7814, %v7816
        %v7832 = vsel %vm5583, %v7816, %v7818
        %v7833 = vsel %vm5583, %v7818, %v7820
        %v7834 = vsel %vm5583, %v7820, %v7822
        %v7835 = vsel %vm5583, %v7822, %v7824
        %v7836 = vsel %vm5583, %v7824, %v7826
        %v7837 = vsel %vm5583, %v7826, %v7828
        %v7838 = vsel %vm5583, %v7828, %v7830
        %v7855 = vrot.slane %v7670, 4
        %v7856 = vrot.slane %v7671, 4
        %v7857 = vrot.slane %v7672, 4
        %v7858 = vrot.slane %v7673, 4
        %v7859 = vrot.slane %v7674, 4
        %v7860 = vrot.slane %v7675, 4
        %v7861 = vrot.slane %v7676, 4
        %v7862 = vrot.slane %v7677, 4
        %7871 = vrot.lane.b32.xlu0 %v7582, 95
        %v7872 = vpop.permute.xlu0 %7871
        %7873 = vrot.lane.b32.xlu0 %v7566, 95
        %v7874 = vpop.permute.xlu0 %7873
        %7875 = vrot.lane.b32.xlu0 %v7567, 95
        %v7876 = vpop.permute.xlu0 %7875
        %7877 = vrot.lane.b32.xlu0 %v7568, 95
        %v7878 = vpop.permute.xlu0 %7877
        %7879 = vrot.lane.b32.xlu0 %v7569, 95
        %v7880 = vpop.permute.xlu0 %7879
        %7881 = vrot.lane.b32.xlu0 %v7570, 95
        %v7882 = vpop.permute.xlu0 %7881
        %7883 = vrot.lane.b32.xlu0 %v7571, 95
        %v7884 = vpop.permute.xlu0 %7883
        %7885 = vrot.lane.b32.xlu0 %v7572, 95
        %v7886 = vpop.permute.xlu0 %7885
        %7887 = vrot.lane.b32.xlu0 %v7583, 95
        %v7888 = vpop.permute.xlu0 %7887
        %v7889 = vsel %vm5625, %v7872, %v7874
        %v7890 = vsel %vm5625, %v7874, %v7876
        %v7891 = vsel %vm5625, %v7876, %v7878
        %v7892 = vsel %vm5625, %v7878, %v7880
        %v7893 = vsel %vm5625, %v7880, %v7882
        %v7894 = vsel %vm5625, %v7882, %v7884
        %v7895 = vsel %vm5625, %v7884, %v7886
        %v7896 = vsel %vm5625, %v7886, %v7888
        %v7913 = vrot.slane %v7712, 4
        %v7914 = vrot.slane %v7713, 4
        %v7915 = vrot.slane %v7714, 4
        %v7916 = vrot.slane %v7715, 4
        %v7917 = vrot.slane %v7716, 4
        %v7918 = vrot.slane %v7717, 4
        %v7919 = vrot.slane %v7718, 4
        %v7920 = vrot.slane %v7719, 4
        %7929 = vrot.lane.b32.xlu0 %v7804, 63
        %v7930 = vpop.permute.xlu0 %7929
        %7931 = vrot.lane.b32.xlu0 %v7805, 63
        %v7932 = vpop.permute.xlu0 %7931
        %7933 = vrot.lane.b32.xlu0 %v7806, 63
        %v7934 = vpop.permute.xlu0 %7933
        %7935 = vrot.lane.b32.xlu0 %v7807, 63
        %v7936 = vpop.permute.xlu0 %7935
        %7937 = vrot.lane.b32.xlu0 %v7808, 63
        %v7938 = vpop.permute.xlu0 %7937
        %7939 = vrot.lane.b32.xlu0 %v7809, 63
        %v7940 = vpop.permute.xlu0 %7939
        %7941 = vrot.lane.b32.xlu0 %v7810, 63
        %v7942 = vpop.permute.xlu0 %7941
        %7943 = vrot.lane.b32.xlu0 %v7811, 63
        %v7944 = vpop.permute.xlu0 %7943
        %7945 = vrot.lane.b32.xlu0 %v7812, 63
        %v7946 = vpop.permute.xlu0 %7945
        %v7947 = vsel %vm7147, %v7930, %v7932
        %v7948 = vsel %vm7147, %v7932, %v7934
        %v7949 = vsel %vm7147, %v7934, %v7936
        %v7950 = vsel %vm7147, %v7936, %v7938
        %v7951 = vsel %vm7147, %v7938, %v7940
        %v7952 = vsel %vm7147, %v7940, %v7942
        %v7953 = vsel %vm7147, %v7942, %v7944
        %v7954 = vsel %vm7147, %v7944, %v7946
        %vm7963 = vcmask 1043456
        %v7964 = vsel %vm7963, %v7584, %v7831
        %v7965 = vsel %vm7963, %v7585, %v7832
        %v7966 = vsel %vm7963, %v7586, %v7833
        %v7967 = vsel %vm7963, %v7587, %v7834
        %v7968 = vsel %vm7963, %v7588, %v7835
        %v7969 = vsel %vm7963, %v7589, %v7836
        %v7970 = vsel %vm7963, %v7590, %v7837
        %v7971 = vsel %vm7963, %v7591, %v7838
        %v7972 = vsel %vm7963, %v7628, %v7855
        %v7973 = vsel %vm7963, %v7629, %v7856
        %v7974 = vsel %vm7963, %v7630, %v7857
        %v7975 = vsel %vm7963, %v7631, %v7858
        %v7976 = vsel %vm7963, %v7632, %v7859
        %v7977 = vsel %vm7963, %v7633, %v7860
        %v7978 = vsel %vm7963, %v7634, %v7861
        %v7979 = vsel %vm7963, %v7635, %v7862
        %v7980 = vsel %vm7963, %v7889, %v7913
        %v7981 = vsel %vm7963, %v7890, %v7914
        %v7982 = vsel %vm7963, %v7891, %v7915
        %v7983 = vsel %vm7963, %v7892, %v7916
        %v7984 = vsel %vm7963, %v7893, %v7917
        %v7985 = vsel %vm7963, %v7894, %v7918
        %v7986 = vsel %vm7963, %v7895, %v7919
        %v7987 = vsel %vm7963, %v7896, %v7920
        %v7988 = vsel %vm7963, %v7754, %v7947
        %v7989 = vsel %vm7963, %v7755, %v7948
        %v7990 = vsel %vm7963, %v7756, %v7949
        %v7991 = vsel %vm7963, %v7757, %v7950
        %v7992 = vsel %vm7963, %v7758, %v7951
        %v7993 = vsel %vm7963, %v7759, %v7952
        %v7994 = vsel %vm7963, %v7760, %v7953
        %v7995 = vsel %vm7963, %v7761, %v7954
        %v7996 = vld [vmem:[#allocation19] sm:$0xf]
        %v7997 = vld [vmem:[%s53] sm:$0xf]
        %7999 = vset.pattern.permute.xlu0 0
        %8000 = vperm.xlu0 %7999, %v7997
        %v8001 = vpop.permute.xlu0 %8000
        %vm8003 = vcmask 293888
        %v8005 = vsel %vm8003, %v7996, 0
        %v8008 = vsel %vm7963, %v7796, 0
        %v8011 = vsel %vm7963, %v7797, 0
        %v8014 = vsel %vm7963, %v7798, 0
        %v8017 = vsel %vm7963, %v7799, 0
        %v8020 = vsel %vm7963, %v7800, 0
        %v8023 = vsel %vm7963, %v7801, 0
        %v8026 = vsel %vm7963, %v7802, 0
        %v8029 = vsel %vm7963, %v7803, 0
        %8031 = vmatprep.subr.mxu0 %v7965
        %8032 = vmatpush1.msra.mxu0 %v7964
        %8033 = vmatprep.subr.mxu0 %v7973
        %8034 = vmatpush1.msra.mxu0 %v7972
        %8035 = vmatprep.subr.mxu0 %v7981
        %8036 = vmatpush1.msra.mxu0 %v7980
        %8037 = vmatprep.subr.mxu0 %v7989
        %8038 = vmatpush1.msra.mxu0 %v7988
        %8039 = vmatprep.subr.mxu0 %v8011
        %8040 = vmatpush1.msra.mxu0 %v8008
        %8041 = vmatprep.subr.mxu0 0.0
        %8042 = vmatpush1.msra.mxu0 0.0
        %8043 = vmatprep.subr.mxu0 0.0
        %8044 = vmatpush1.msra.mxu0 0.0
        %8045 = vmatprep.subr.mxu0 0.0
        %8046 = vmatpush1.msra.mxu0 0.0
        %8047 = vmatprep.subr.mxu0 0.0
        %8048 = vmatpush1.msra.mxu0 0.0
        %8049 = vmatprep.subr.mxu0 0.0
        %8050 = vmatpush1.msra.mxu0 0.0
        %8051 = vmatprep.subr.mxu0 0.0
        %8052 = vmatpush1.msra.mxu0 0.0
        %8053 = vmatprep.subr.mxu0 0.0
        %8054 = vmatpush1.msra.mxu0 0.0
        %8055 = vmatprep.subr.mxu0 0.0
        %8056 = vmatpush1.msra.mxu0 0.0
        %8057 = vmatprep.subr.mxu0 0.0
        %8058 = vmatpush1.msra.mxu0 0.0
        %8059 = vmatprep.subr.mxu0 0.0
        %8060 = vmatpush1.msra.mxu0 0.0
        %8061 = vmatprep.subr.mxu0 0.0
        %8062 = vmatpush1.msra.mxu0 0.0
        %8063 = vmatprep.subr.mxu0 0.0
        %8064 = vmatpush1.msra.mxu0 0.0
        %8065 = vmatprep.subr.mxu0 0.0
        %8066 = vmatpush1.msra.mxu0 0.0
        %8067 = vmatprep.subr.mxu0 0.0
        %8068 = vmatpush1.msra.mxu0 0.0
        %8069 = vmatprep.subr.mxu0 0.0
        %8070 = vmatpush1.msra.mxu0 0.0
        %8071 = vmatprep.subr.mxu0 0.0
        %8072 = vmatpush1.msra.mxu0 0.0
        %8073 = vmatprep.subr.mxu0 0.0
        %8074 = vmatpush1.msra.mxu0 0.0
        %8075 = vmatprep.subr.mxu0 0.0
        %8076 = vmatpush1.msra.mxu0 0.0
        %8077 = vmatprep.subr.mxu0 0.0
        %8078 = vmatpush1.msra.mxu0 0.0
        %8079 = vmatprep.subr.mxu0 0.0
        %8080 = vmatpush1.msra.mxu0 0.0
        %8081 = vmatprep.subr.mxu0 0.0
        %8082 = vmatpush1.msra.mxu0 0.0
        %8083 = vmatprep.subr.mxu0 0.0
        %8084 = vmatpush1.msra.mxu0 0.0
        %8085 = vmatprep.subr.mxu0 0.0
        %8086 = vmatpush1.msra.mxu0 0.0
        %8087 = vmatprep.subr.mxu0 0.0
        %8088 = vmatpush1.msra.mxu0 0.0
        %8089 = vmatprep.subr.mxu0 0.0
        %8090 = vmatpush1.msra.mxu0 0.0
        %8091 = vmatprep.subr.mxu0 0.0
        %8092 = vmatpush1.msra.mxu0 0.0
        %8093 = vmatprep.subr.mxu0 0.0
        %8094 = vmatpush1.msra.mxu0 0.0
        %8095 = vmatprep.mubr.f32.mxu0 0.0
        %8096 = vmatmul.mubr.f32.gmra.mrb[0].mxu0 %v8005
        %v8097 = vpop.f32.mrb[0].mxu0
        %v8098 = vadd.f32 %v8001, %v8097
        %v8099 = vpop.f32.mrb[0].mxu0
        %v8100 = vadd.f32 %v8001, %v8099
        %8101 = vdwg.mxu0
        %8102 = vmatprep.subr.mxu0 %v7967
        %8103 = vmatpush1.msra.mxu0 %v7966
        %8104 = vmatprep.subr.mxu0 %v7975
        %8105 = vmatpush1.msra.mxu0 %v7974
        %8106 = vmatprep.subr.mxu0 %v7983
        %8107 = vmatpush1.msra.mxu0 %v7982
        %8108 = vmatprep.subr.mxu0 %v7991
        %8109 = vmatpush1.msra.mxu0 %v7990
        %8110 = vmatprep.subr.mxu0 %v8017
        %8111 = vmatpush1.msra.mxu0 %v8014
        %8112 = vmatprep.subr.mxu0 0.0
        %8113 = vmatpush1.msra.mxu0 0.0
        %8114 = vmatprep.subr.mxu0 0.0
        %8115 = vmatpush1.msra.mxu0 0.0
        %8116 = vmatprep.subr.mxu0 0.0
        %8117 = vmatpush1.msra.mxu0 0.0
        %8118 = vmatprep.subr.mxu0 0.0
        %8119 = vmatpush1.msra.mxu0 0.0
        %8120 = vmatprep.subr.mxu0 0.0
        %8121 = vmatpush1.msra.mxu0 0.0
        %8122 = vmatprep.subr.mxu0 0.0
        %8123 = vmatpush1.msra.mxu0 0.0
        %8124 = vmatprep.subr.mxu0 0.0
        %8125 = vmatpush1.msra.mxu0 0.0
        %8126 = vmatprep.subr.mxu0 0.0
        %8127 = vmatpush1.msra.mxu0 0.0
        %8128 = vmatprep.subr.mxu0 0.0
        %8129 = vmatpush1.msra.mxu0 0.0
        %8130 = vmatprep.subr.mxu0 0.0
        %8131 = vmatpush1.msra.mxu0 0.0
        %8132 = vmatprep.subr.mxu0 0.0
        %8133 = vmatpush1.msra.mxu0 0.0
        %8134 = vmatprep.subr.mxu0 0.0
        %8135 = vmatpush1.msra.mxu0 0.0
        %8136 = vmatprep.subr.mxu0 0.0
        %8137 = vmatpush1.msra.mxu0 0.0
        %8138 = vmatprep.subr.mxu0 0.0
        %8139 = vmatpush1.msra.mxu0 0.0
        %8140 = vmatprep.subr.mxu0 0.0
        %8141 = vmatpush1.msra.mxu0 0.0
        %8142 = vmatprep.subr.mxu0 0.0
        %8143 = vmatpush1.msra.mxu0 0.0
        %8144 = vmatprep.subr.mxu0 0.0
        %8145 = vmatpush1.msra.mxu0 0.0
        %8146 = vmatprep.subr.mxu0 0.0
        %8147 = vmatpush1.msra.mxu0 0.0
        %8148 = vmatprep.subr.mxu0 0.0
        %8149 = vmatpush1.msra.mxu0 0.0
        %8150 = vmatprep.subr.mxu0 0.0
        %8151 = vmatpush1.msra.mxu0 0.0
        %8152 = vmatprep.subr.mxu0 0.0
        %8153 = vmatpush1.msra.mxu0 0.0
        %8154 = vmatprep.subr.mxu0 0.0
        %8155 = vmatpush1.msra.mxu0 0.0
        %8156 = vmatprep.subr.mxu0 0.0
        %8157 = vmatpush1.msra.mxu0 0.0
        %8158 = vmatprep.subr.mxu0 0.0
        %8159 = vmatpush1.msra.mxu0 0.0
        %8160 = vmatprep.subr.mxu0 0.0
        %8161 = vmatpush1.msra.mxu0 0.0
        %8162 = vmatprep.subr.mxu0 0.0
        %8163 = vmatpush1.msra.mxu0 0.0
        %8164 = vmatprep.subr.mxu0 0.0
        %8165 = vmatpush1.msra.mxu0 0.0
        %8166 = vmatprep.mubr.f32.mxu0 0.0
        %8167 = vmatmul.mubr.f32.gmra.mrb[0].mxu0 %v8005
        %v8168 = vpop.f32.mrb[0].mxu0
        %v8169 = vadd.f32 %v8001, %v8168
        %v8170 = vpop.f32.mrb[0].mxu0
        %v8171 = vadd.f32 %v8001, %v8170
        %8172 = vdwg.mxu0
        %8173 = vmatprep.subr.mxu0 %v7969
        %8174 = vmatpush1.msra.mxu0 %v7968
        %8175 = vmatprep.subr.mxu0 %v7977
        %8176 = vmatpush1.msra.mxu0 %v7976
        %8177 = vmatprep.subr.mxu0 %v7985
        %8178 = vmatpush1.msra.mxu0 %v7984
        %8179 = vmatprep.subr.mxu0 %v7993
        %8180 = vmatpush1.msra.mxu0 %v7992
        %8181 = vmatprep.subr.mxu0 %v8023
        %8182 = vmatpush1.msra.mxu0 %v8020
        %8183 = vmatprep.subr.mxu0 0.0
        %8184 = vmatpush1.msra.mxu0 0.0
        %8185 = vmatprep.subr.mxu0 0.0
        %8186 = vmatpush1.msra.mxu0 0.0
        %8187 = vmatprep.subr.mxu0 0.0
        %8188 = vmatpush1.msra.mxu0 0.0
        %8189 = vmatprep.subr.mxu0 0.0
        %8190 = vmatpush1.msra.mxu0 0.0
        %8191 = vmatprep.subr.mxu0 0.0
        %8192 = vmatpush1.msra.mxu0 0.0
        %8193 = vmatprep.subr.mxu0 0.0
        %8194 = vmatpush1.msra.mxu0 0.0
        %8195 = vmatprep.subr.mxu0 0.0
        %8196 = vmatpush1.msra.mxu0 0.0
        %8197 = vmatprep.subr.mxu0 0.0
        %8198 = vmatpush1.msra.mxu0 0.0
        %8199 = vmatprep.subr.mxu0 0.0
        %8200 = vmatpush1.msra.mxu0 0.0
        %8201 = vmatprep.subr.mxu0 0.0
        %8202 = vmatpush1.msra.mxu0 0.0
        %8203 = vmatprep.subr.mxu0 0.0
        %8204 = vmatpush1.msra.mxu0 0.0
        %8205 = vmatprep.subr.mxu0 0.0
        %8206 = vmatpush1.msra.mxu0 0.0
        %8207 = vmatprep.subr.mxu0 0.0
        %8208 = vmatpush1.msra.mxu0 0.0
        %8209 = vmatprep.subr.mxu0 0.0
        %8210 = vmatpush1.msra.mxu0 0.0
        %8211 = vmatprep.subr.mxu0 0.0
        %8212 = vmatpush1.msra.mxu0 0.0
        %8213 = vmatprep.subr.mxu0 0.0
        %8214 = vmatpush1.msra.mxu0 0.0
        %8215 = vmatprep.subr.mxu0 0.0
        %8216 = vmatpush1.msra.mxu0 0.0
        %8217 = vmatprep.subr.mxu0 0.0
        %8218 = vmatpush1.msra.mxu0 0.0
        %8219 = vmatprep.subr.mxu0 0.0
        %8220 = vmatpush1.msra.mxu0 0.0
        %8221 = vmatprep.subr.mxu0 0.0
        %8222 = vmatpush1.msra.mxu0 0.0
        %8223 = vmatprep.subr.mxu0 0.0
        %8224 = vmatpush1.msra.mxu0 0.0
        %8225 = vmatprep.subr.mxu0 0.0
        %8226 = vmatpush1.msra.mxu0 0.0
        %8227 = vmatprep.subr.mxu0 0.0
        %8228 = vmatpush1.msra.mxu0 0.0
        %8229 = vmatprep.subr.mxu0 0.0
        %8230 = vmatpush1.msra.mxu0 0.0
        %8231 = vmatprep.subr.mxu0 0.0
        %8232 = vmatpush1.msra.mxu0 0.0
        %8233 = vmatprep.subr.mxu0 0.0
        %8234 = vmatpush1.msra.mxu0 0.0
        %8235 = vmatprep.subr.mxu0 0.0
        %8236 = vmatpush1.msra.mxu0 0.0
        %8237 = vmatprep.mubr.f32.mxu0 0.0
        %8238 = vmatmul.mubr.f32.gmra.mrb[0].mxu0 %v8005
        %v8239 = vpop.f32.mrb[0].mxu0
        %v8240 = vadd.f32 %v8001, %v8239
        %v8241 = vpop.f32.mrb[0].mxu0
        %v8242 = vadd.f32 %v8001, %v8241
        %8243 = vdwg.mxu0
        %8244 = vmatprep.subr.mxu0 %v7971
        %8245 = vmatpush1.msra.mxu0 %v7970
        %8246 = vmatprep.subr.mxu0 %v7979
        %8247 = vmatpush1.msra.mxu0 %v7978
        %8248 = vmatprep.subr.mxu0 %v7987
        %8249 = vmatpush1.msra.mxu0 %v7986
        %8250 = vmatprep.subr.mxu0 %v7995
        %8251 = vmatpush1.msra.mxu0 %v7994
        %8252 = vmatprep.subr.mxu0 %v8029
        %8253 = vmatpush1.msra.mxu0 %v8026
        %8254 = vmatprep.subr.mxu0 0.0
        %8255 = vmatpush1.msra.mxu0 0.0
        %8256 = vmatprep.subr.mxu0 0.0
        %8257 = vmatpush1.msra.mxu0 0.0
        %8258 = vmatprep.subr.mxu0 0.0
        %8259 = vmatpush1.msra.mxu0 0.0
        %8260 = vmatprep.subr.mxu0 0.0
        %8261 = vmatpush1.msra.mxu0 0.0
        %8262 = vmatprep.subr.mxu0 0.0
        %8263 = vmatpush1.msra.mxu0 0.0
        %8264 = vmatprep.subr.mxu0 0.0
        %8265 = vmatpush1.msra.mxu0 0.0
        %8266 = vmatprep.subr.mxu0 0.0
        %8267 = vmatpush1.msra.mxu0 0.0
        %8268 = vmatprep.subr.mxu0 0.0
        %8269 = vmatpush1.msra.mxu0 0.0
        %8270 = vmatprep.subr.mxu0 0.0
        %8271 = vmatpush1.msra.mxu0 0.0
        %8272 = vmatprep.subr.mxu0 0.0
        %8273 = vmatpush1.msra.mxu0 0.0
        %8274 = vmatprep.subr.mxu0 0.0
        %8275 = vmatpush1.msra.mxu0 0.0
        %8276 = vmatprep.subr.mxu0 0.0
        %8277 = vmatpush1.msra.mxu0 0.0
        %8278 = vmatprep.subr.mxu0 0.0
        %8279 = vmatpush1.msra.mxu0 0.0
        %8280 = vmatprep.subr.mxu0 0.0
        %8281 = vmatpush1.msra.mxu0 0.0
        %8282 = vmatprep.subr.mxu0 0.0
        %8283 = vmatpush1.msra.mxu0 0.0
        %8284 = vmatprep.subr.mxu0 0.0
        %8285 = vmatpush1.msra.mxu0 0.0
        %8286 = vmatprep.subr.mxu0 0.0
        %8287 = vmatpush1.msra.mxu0 0.0
        %8288 = vmatprep.subr.mxu0 0.0
        %8289 = vmatpush1.msra.mxu0 0.0
        %8290 = vmatprep.subr.mxu0 0.0
        %8291 = vmatpush1.msra.mxu0 0.0
        %8292 = vmatprep.subr.mxu0 0.0
        %8293 = vmatpush1.msra.mxu0 0.0
        %8294 = vmatprep.subr.mxu0 0.0
        %8295 = vmatpush1.msra.mxu0 0.0
        %8296 = vmatprep.subr.mxu0 0.0
        %8297 = vmatpush1.msra.mxu0 0.0
        %8298 = vmatprep.subr.mxu0 0.0
        %8299 = vmatpush1.msra.mxu0 0.0
        %8300 = vmatprep.subr.mxu0 0.0
        %8301 = vmatpush1.msra.mxu0 0.0
        %8302 = vmatprep.subr.mxu0 0.0
        %8303 = vmatpush1.msra.mxu0 0.0
        %8304 = vmatprep.subr.mxu0 0.0
        %8305 = vmatpush1.msra.mxu0 0.0
        %8306 = vmatprep.subr.mxu0 0.0
        %8307 = vmatpush1.msra.mxu0 0.0
        %8308 = vmatprep.mubr.f32.mxu0 0.0
        %8309 = vmatmul.mubr.f32.gmra.mrb[0].mxu0 %v8005
        %v8310 = vpop.f32.mrb[0].mxu0
        %v8311 = vadd.f32 %v8001, %v8310
        %v8312 = vpop.f32.mrb[0].mxu0
        %v8313 = vadd.f32 %v8001, %v8312
        %8314 = vdwg.mxu0
        %v8315 = vld [vmem:[#allocation20] sm:$0xf]
        %v8316 = vld [vmem:[%s57] sm:$0xf]
        %8318 = vset.pattern.permute.xlu0 0
        %8319 = vperm.xlu0 %8318, %v8316
        %v8320 = vpop.permute.xlu0 %8319
        %vm8322 = vcmask 64512
        %v8324 = vsel %vm8322, %v8315, 0
        %8326 = vmatprep.subr.mxu0 %v6348
        %8327 = vmatpush1.msra.mxu0 %v6346
        %8328 = vmatprep.subr.mxu0 0.0
        %8329 = vmatpush1.msra.mxu0 0.0
        %8330 = vmatprep.subr.mxu0 0.0
        %8331 = vmatpush1.msra.mxu0 0.0
        %8332 = vmatprep.subr.mxu0 0.0
        %8333 = vmatpush1.msra.mxu0 0.0
        %8334 = vmatprep.subr.mxu0 0.0
        %8335 = vmatpush1.msra.mxu0 0.0
        %8336 = vmatprep.subr.mxu0 0.0
        %8337 = vmatpush1.msra.mxu0 0.0
        %8338 = vmatprep.subr.mxu0 0.0
        %8339 = vmatpush1.msra.mxu0 0.0
        %8340 = vmatprep.subr.mxu0 0.0
        %8341 = vmatpush1.msra.mxu0 0.0
        %8342 = vmatprep.subr.mxu0 0.0
        %8343 = vmatpush1.msra.mxu0 0.0
        %8344 = vmatprep.subr.mxu0 0.0
        %8345 = vmatpush1.msra.mxu0 0.0
        %8346 = vmatprep.subr.mxu0 0.0
        %8347 = vmatpush1.msra.mxu0 0.0
        %8348 = vmatprep.subr.mxu0 0.0
        %8349 = vmatpush1.msra.mxu0 0.0
        %8350 = vmatprep.subr.mxu0 0.0
        %8351 = vmatpush1.msra.mxu0 0.0
        %8352 = vmatprep.subr.mxu0 0.0
        %8353 = vmatpush1.msra.mxu0 0.0
        %8354 = vmatprep.subr.mxu0 0.0
        %8355 = vmatpush1.msra.mxu0 0.0
        %8356 = vmatprep.subr.mxu0 0.0
        %8357 = vmatpush1.msra.mxu0 0.0
        %8358 = vmatprep.subr.mxu0 0.0
        %8359 = vmatpush1.msra.mxu0 0.0
        %8360 = vmatprep.subr.mxu0 0.0
        %8361 = vmatpush1.msra.mxu0 0.0
        %8362 = vmatprep.subr.mxu0 0.0
        %8363 = vmatpush1.msra.mxu0 0.0
        %8364 = vmatprep.subr.mxu0 0.0
        %8365 = vmatpush1.msra.mxu0 0.0
        %8366 = vmatprep.subr.mxu0 0.0
        %8367 = vmatpush1.msra.mxu0 0.0
        %8368 = vmatprep.subr.mxu0 0.0
        %8369 = vmatpush1.msra.mxu0 0.0
        %8370 = vmatprep.subr.mxu0 0.0
        %8371 = vmatpush1.msra.mxu0 0.0
        %8372 = vmatprep.subr.mxu0 0.0
        %8373 = vmatpush1.msra.mxu0 0.0
        %8374 = vmatprep.subr.mxu0 0.0
        %8375 = vmatpush1.msra.mxu0 0.0
        %8376 = vmatprep.subr.mxu0 0.0
        %8377 = vmatpush1.msra.mxu0 0.0
        %8378 = vmatprep.subr.mxu0 0.0
        %8379 = vmatpush1.msra.mxu0 0.0
        %8380 = vmatprep.subr.mxu0 0.0
        %8381 = vmatpush1.msra.mxu0 0.0
        %8382 = vmatprep.subr.mxu0 0.0
        %8383 = vmatpush1.msra.mxu0 0.0
        %8384 = vmatprep.subr.mxu0 0.0
        %8385 = vmatpush1.msra.mxu0 0.0
        %8386 = vmatprep.subr.mxu0 0.0
        %8387 = vmatpush1.msra.mxu0 0.0
        %8388 = vmatprep.subr.mxu0 0.0
        %8389 = vmatpush1.msra.mxu0 0.0
        %8390 = vmatprep.mubr.f32.mxu0 0.0
        %8391 = vmatmul.mubr.f32.gmra.mrb[0].mxu0 %v8324
        %v8392 = vpop.f32.mrb[0].mxu0
        %v8393 = vadd.f32 %v8320, %v8392
        %v8394 = vpop.f32.mrb[0].mxu0
        %v8395 = vadd.f32 %v8320, %v8394
        %8396 = vdwg.mxu0
        %8397 = vmatprep.subr.mxu0 %v6419
        %8398 = vmatpush1.msra.mxu0 %v6417
        %8399 = vmatprep.subr.mxu0 0.0
        %8400 = vmatpush1.msra.mxu0 0.0
        %8401 = vmatprep.subr.mxu0 0.0
        %8402 = vmatpush1.msra.mxu0 0.0
        %8403 = vmatprep.subr.mxu0 0.0
        %8404 = vmatpush1.msra.mxu0 0.0
        %8405 = vmatprep.subr.mxu0 0.0
        %8406 = vmatpush1.msra.mxu0 0.0
        %8407 = vmatprep.subr.mxu0 0.0
        %8408 = vmatpush1.msra.mxu0 0.0
        %8409 = vmatprep.subr.mxu0 0.0
        %8410 = vmatpush1.msra.mxu0 0.0
        %8411 = vmatprep.subr.mxu0 0.0
        %8412 = vmatpush1.msra.mxu0 0.0
        %8413 = vmatprep.subr.mxu0 0.0
        %8414 = vmatpush1.msra.mxu0 0.0
        %8415 = vmatprep.subr.mxu0 0.0
        %8416 = vmatpush1.msra.mxu0 0.0
        %8417 = vmatprep.subr.mxu0 0.0
        %8418 = vmatpush1.msra.mxu0 0.0
        %8419 = vmatprep.subr.mxu0 0.0
        %8420 = vmatpush1.msra.mxu0 0.0
        %8421 = vmatprep.subr.mxu0 0.0
        %8422 = vmatpush1.msra.mxu0 0.0
        %8423 = vmatprep.subr.mxu0 0.0
        %8424 = vmatpush1.msra.mxu0 0.0
        %8425 = vmatprep.subr.mxu0 0.0
        %8426 = vmatpush1.msra.mxu0 0.0
        %8427 = vmatprep.subr.mxu0 0.0
        %8428 = vmatpush1.msra.mxu0 0.0
        %8429 = vmatprep.subr.mxu0 0.0
        %8430 = vmatpush1.msra.mxu0 0.0
        %8431 = vmatprep.subr.mxu0 0.0
        %8432 = vmatpush1.msra.mxu0 0.0
        %8433 = vmatprep.subr.mxu0 0.0
        %8434 = vmatpush1.msra.mxu0 0.0
        %8435 = vmatprep.subr.mxu0 0.0
        %8436 = vmatpush1.msra.mxu0 0.0
        %8437 = vmatprep.subr.mxu0 0.0
        %8438 = vmatpush1.msra.mxu0 0.0
        %8439 = vmatprep.subr.mxu0 0.0
        %8440 = vmatpush1.msra.mxu0 0.0
        %8441 = vmatprep.subr.mxu0 0.0
        %8442 = vmatpush1.msra.mxu0 0.0
        %8443 = vmatprep.subr.mxu0 0.0
        %8444 = vmatpush1.msra.mxu0 0.0
        %8445 = vmatprep.subr.mxu0 0.0
        %8446 = vmatpush1.msra.mxu0 0.0
        %8447 = vmatprep.subr.mxu0 0.0
        %8448 = vmatpush1.msra.mxu0 0.0
        %8449 = vmatprep.subr.mxu0 0.0
        %8450 = vmatpush1.msra.mxu0 0.0
        %8451 = vmatprep.subr.mxu0 0.0
        %8452 = vmatpush1.msra.mxu0 0.0
        %8453 = vmatprep.subr.mxu0 0.0
        %8454 = vmatpush1.msra.mxu0 0.0
        %8455 = vmatprep.subr.mxu0 0.0
        %8456 = vmatpush1.msra.mxu0 0.0
        %8457 = vmatprep.subr.mxu0 0.0
        %8458 = vmatpush1.msra.mxu0 0.0
        %8459 = vmatprep.subr.mxu0 0.0
        %8460 = vmatpush1.msra.mxu0 0.0
        %8461 = vmatprep.mubr.f32.mxu0 0.0
        %8462 = vmatmul.mubr.f32.gmra.mrb[0].mxu0 %v8324
        %v8463 = vpop.f32.mrb[0].mxu0
        %v8464 = vadd.f32 %v8320, %v8463
        %v8465 = vpop.f32.mrb[0].mxu0
        %v8466 = vadd.f32 %v8320, %v8465
        %8467 = vdwg.mxu0
        %8468 = vmatprep.subr.mxu0 %v6490
        %8469 = vmatpush1.msra.mxu0 %v6488
        %8470 = vmatprep.subr.mxu0 0.0
        %8471 = vmatpush1.msra.mxu0 0.0
        %8472 = vmatprep.subr.mxu0 0.0
        %8473 = vmatpush1.msra.mxu0 0.0
        %8474 = vmatprep.subr.mxu0 0.0
        %8475 = vmatpush1.msra.mxu0 0.0
        %8476 = vmatprep.subr.mxu0 0.0
        %8477 = vmatpush1.msra.mxu0 0.0
        %8478 = vmatprep.subr.mxu0 0.0
        %8479 = vmatpush1.msra.mxu0 0.0
        %8480 = vmatprep.subr.mxu0 0.0
        %8481 = vmatpush1.msra.mxu0 0.0
        %8482 = vmatprep.subr.mxu0 0.0
        %8483 = vmatpush1.msra.mxu0 0.0
        %8484 = vmatprep.subr.mxu0 0.0
        %8485 = vmatpush1.msra.mxu0 0.0
        %8486 = vmatprep.subr.mxu0 0.0
        %8487 = vmatpush1.msra.mxu0 0.0
        %8488 = vmatprep.subr.mxu0 0.0
        %8489 = vmatpush1.msra.mxu0 0.0
        %8490 = vmatprep.subr.mxu0 0.0
        %8491 = vmatpush1.msra.mxu0 0.0
        %8492 = vmatprep.subr.mxu0 0.0
        %8493 = vmatpush1.msra.mxu0 0.0
        %8494 = vmatprep.subr.mxu0 0.0
        %8495 = vmatpush1.msra.mxu0 0.0
        %8496 = vmatprep.subr.mxu0 0.0
        %8497 = vmatpush1.msra.mxu0 0.0
        %8498 = vmatprep.subr.mxu0 0.0
        %8499 = vmatpush1.msra.mxu0 0.0
        %8500 = vmatprep.subr.mxu0 0.0
        %8501 = vmatpush1.msra.mxu0 0.0
        %8502 = vmatprep.subr.mxu0 0.0
        %8503 = vmatpush1.msra.mxu0 0.0
        %8504 = vmatprep.subr.mxu0 0.0
        %8505 = vmatpush1.msra.mxu0 0.0
        %8506 = vmatprep.subr.mxu0 0.0
        %8507 = vmatpush1.msra.mxu0 0.0
        %8508 = vmatprep.subr.mxu0 0.0
        %8509 = vmatpush1.msra.mxu0 0.0
        %8510 = vmatprep.subr.mxu0 0.0
        %8511 = vmatpush1.msra.mxu0 0.0
        %8512 = vmatprep.subr.mxu0 0.0
        %8513 = vmatpush1.msra.mxu0 0.0
        %8514 = vmatprep.subr.mxu0 0.0
        %8515 = vmatpush1.msra.mxu0 0.0
        %8516 = vmatprep.subr.mxu0 0.0
        %8517 = vmatpush1.msra.mxu0 0.0
        %8518 = vmatprep.subr.mxu0 0.0
        %8519 = vmatpush1.msra.mxu0 0.0
        %8520 = vmatprep.subr.mxu0 0.0
        %8521 = vmatpush1.msra.mxu0 0.0
        %8522 = vmatprep.subr.mxu0 0.0
        %8523 = vmatpush1.msra.mxu0 0.0
        %8524 = vmatprep.subr.mxu0 0.0
        %8525 = vmatpush1.msra.mxu0 0.0
        %8526 = vmatprep.subr.mxu0 0.0
        %8527 = vmatpush1.msra.mxu0 0.0
        %8528 = vmatprep.subr.mxu0 0.0
        %8529 = vmatpush1.msra.mxu0 0.0
        %8530 = vmatprep.subr.mxu0 0.0
        %8531 = vmatpush1.msra.mxu0 0.0
        %8532 = vmatprep.mubr.f32.mxu0 0.0
        %8533 = vmatmul.mubr.f32.gmra.mrb[0].mxu0 %v8324
        %v8534 = vpop.f32.mrb[0].mxu0
        %v8535 = vadd.f32 %v8320, %v8534
        %v8536 = vpop.f32.mrb[0].mxu0
        %v8537 = vadd.f32 %v8320, %v8536
        %8538 = vdwg.mxu0
        %8539 = vmatprep.subr.mxu0 %v6561
        %8540 = vmatpush1.msra.mxu0 %v6559
        %8541 = vmatprep.subr.mxu0 0.0
        %8542 = vmatpush1.msra.mxu0 0.0
        %8543 = vmatprep.subr.mxu0 0.0
        %8544 = vmatpush1.msra.mxu0 0.0
        %8545 = vmatprep.subr.mxu0 0.0
        %8546 = vmatpush1.msra.mxu0 0.0
        %8547 = vmatprep.subr.mxu0 0.0
        %8548 = vmatpush1.msra.mxu0 0.0
        %8549 = vmatprep.subr.mxu0 0.0
        %8550 = vmatpush1.msra.mxu0 0.0
        %8551 = vmatprep.subr.mxu0 0.0
        %8552 = vmatpush1.msra.mxu0 0.0
        %8553 = vmatprep.subr.mxu0 0.0
        %8554 = vmatpush1.msra.mxu0 0.0
        %8555 = vmatprep.subr.mxu0 0.0
        %8556 = vmatpush1.msra.mxu0 0.0
        %8557 = vmatprep.subr.mxu0 0.0
        %8558 = vmatpush1.msra.mxu0 0.0
        %8559 = vmatprep.subr.mxu0 0.0
        %8560 = vmatpush1.msra.mxu0 0.0
        %8561 = vmatprep.subr.mxu0 0.0
        %8562 = vmatpush1.msra.mxu0 0.0
        %8563 = vmatprep.subr.mxu0 0.0
        %8564 = vmatpush1.msra.mxu0 0.0
        %8565 = vmatprep.subr.mxu0 0.0
        %8566 = vmatpush1.msra.mxu0 0.0
        %8567 = vmatprep.subr.mxu0 0.0
        %8568 = vmatpush1.msra.mxu0 0.0
        %8569 = vmatprep.subr.mxu0 0.0
        %8570 = vmatpush1.msra.mxu0 0.0
        %8571 = vmatprep.subr.mxu0 0.0
        %8572 = vmatpush1.msra.mxu0 0.0
        %8573 = vmatprep.subr.mxu0 0.0
        %8574 = vmatpush1.msra.mxu0 0.0
        %8575 = vmatprep.subr.mxu0 0.0
        %8576 = vmatpush1.msra.mxu0 0.0
        %8577 = vmatprep.subr.mxu0 0.0
        %8578 = vmatpush1.msra.mxu0 0.0
        %8579 = vmatprep.subr.mxu0 0.0
        %8580 = vmatpush1.msra.mxu0 0.0
        %8581 = vmatprep.subr.mxu0 0.0
        %8582 = vmatpush1.msra.mxu0 0.0
        %8583 = vmatprep.subr.mxu0 0.0
        %8584 = vmatpush1.msra.mxu0 0.0
        %8585 = vmatprep.subr.mxu0 0.0
        %8586 = vmatpush1.msra.mxu0 0.0
        %8587 = vmatprep.subr.mxu0 0.0
        %8588 = vmatpush1.msra.mxu0 0.0
        %8589 = vmatprep.subr.mxu0 0.0
        %8590 = vmatpush1.msra.mxu0 0.0
        %8591 = vmatprep.subr.mxu0 0.0
        %8592 = vmatpush1.msra.mxu0 0.0
        %8593 = vmatprep.subr.mxu0 0.0
        %8594 = vmatpush1.msra.mxu0 0.0
        %8595 = vmatprep.subr.mxu0 0.0
        %8596 = vmatpush1.msra.mxu0 0.0
        %8597 = vmatprep.subr.mxu0 0.0
        %8598 = vmatpush1.msra.mxu0 0.0
        %8599 = vmatprep.subr.mxu0 0.0
        %8600 = vmatpush1.msra.mxu0 0.0
        %8601 = vmatprep.subr.mxu0 0.0
        %8602 = vmatpush1.msra.mxu0 0.0
        %8603 = vmatprep.mubr.f32.mxu0 0.0
        %8604 = vmatmul.mubr.f32.gmra.mrb[0].mxu0 %v8324
        %v8605 = vpop.f32.mrb[0].mxu0
        %v8606 = vadd.f32 %v8320, %v8605
        %v8607 = vpop.f32.mrb[0].mxu0
        %v8608 = vadd.f32 %v8320, %v8607
        %8609 = vdwg.mxu0
        %v8610 = vadd.f32 %v8393, %v8098
        %v8611 = vadd.f32 %v8395, %v8100
        %v8612 = vadd.f32 %v8464, %v8169
        %v8613 = vadd.f32 %v8466, %v8171
        %v8614 = vadd.f32 %v8535, %v8240
        %v8615 = vadd.f32 %v8537, %v8242
        %v8616 = vadd.f32 %v8606, %v8311
        %v8617 = vadd.f32 %v8608, %v8313
        %v8618 = vmul.f32 %v8610, 0.2
        %v8619 = vmul.f32 %v8611, 0.2
        %v8620 = vmul.f32 %v8612, 0.2
        %v8621 = vmul.f32 %v8613, 0.2
        %v8622 = vmul.f32 %v8614, 0.2
        %v8623 = vmul.f32 %v8615, 0.2
        %v8624 = vmul.f32 %v8616, 0.2
        %v8625 = vmul.f32 %v8617, 0.2
        %v8626 = vmax.f32 %v8610, %v8618
        %v8627 = vmax.f32 %v8611, %v8619
        %v8628 = vmax.f32 %v8612, %v8620
        %v8629 = vmax.f32 %v8613, %v8621
        %v8630 = vmax.f32 %v8614, %v8622
        %v8631 = vmax.f32 %v8615, %v8623
        %v8632 = vmax.f32 %v8616, %v8624
        %v8633 = vmax.f32 %v8617, %v8625
        %8642 = vrot.lane.b32.xlu0 %v8626, 33
        %v8643 = vpop.permute.xlu0 %8642
        %8644 = vrot.lane.b32.xlu0 %v8627, 33
        %v8645 = vpop.permute.xlu0 %8644
        %8646 = vrot.lane.b32.xlu0 %v8628, 33
        %v8647 = vpop.permute.xlu0 %8646
        %8648 = vrot.lane.b32.xlu0 %v8629, 33
        %v8649 = vpop.permute.xlu0 %8648
        %8650 = vrot.lane.b32.xlu0 %v8630, 33
        %v8651 = vpop.permute.xlu0 %8650
        %8652 = vrot.lane.b32.xlu0 %v8631, 33
        %v8653 = vpop.permute.xlu0 %8652
        %8654 = vrot.lane.b32.xlu0 %v8632, 33
        %v8655 = vpop.permute.xlu0 %8654
        %8656 = vrot.lane.b32.xlu0 %v8633, 33
        %v8657 = vpop.permute.xlu0 %8656
        %v8658 = vsel %vm6671, %v8643, %v8645
        %v8659 = vsel %vm6671, %v8645, %v8647
        %v8660 = vsel %vm6671, %v8647, %v8649
        %v8661 = vsel %vm6671, %v8649, %v8651
        %v8662 = vsel %vm6671, %v8651, %v8653
        %v8663 = vsel %vm6671, %v8653, %v8655
        %v8664 = vsel %vm6671, %v8655, %v8657
        %v8674 = vsel %vm6671, 0.0, %v8643
        %v8675 = vsel %vm6671, %v8657, 0.0
        %v8676 = vsel %vm6816, %v8674, 0.0
        %v8677 = vsel %vm6817, %v8658, 0.0
        %v8678 = vsel %vm6818, %v8659, 0.0
        %v8679 = vsel %vm6819, %v8660, 0.0
        %v8680 = vsel %vm6820, %v8661, 0.0
        %v8681 = vsel %vm6821, %v8662, 0.0
        %v8682 = vsel %vm6822, %v8663, 0.0
        %v8683 = vsel %vm6823, %v8664, 0.0
        %8686 = vrot.lane.b32.xlu0 %v8674, 126
        %v8687 = vpop.permute.xlu0 %8686
        %8688 = vrot.lane.b32.xlu0 %v8658, 126
        %v8689 = vpop.permute.xlu0 %8688
        %8690 = vrot.lane.b32.xlu0 %v8659, 126
        %v8691 = vpop.permute.xlu0 %8690
        %8692 = vrot.lane.b32.xlu0 %v8660, 126
        %v8693 = vpop.permute.xlu0 %8692
        %8694 = vrot.lane.b32.xlu0 %v8661, 126
        %v8695 = vpop.permute.xlu0 %8694
        %8696 = vrot.lane.b32.xlu0 %v8662, 126
        %v8697 = vpop.permute.xlu0 %8696
        %8698 = vrot.lane.b32.xlu0 %v8663, 126
        %v8699 = vpop.permute.xlu0 %8698
        %8700 = vrot.lane.b32.xlu0 %v8664, 126
        %v8701 = vpop.permute.xlu0 %8700
        %8702 = vrot.lane.b32.xlu0 %v8675, 126
        %v8703 = vpop.permute.xlu0 %8702
        %v8704 = vsel %vm5459, %v8687, %v8689
        %v8705 = vsel %vm5459, %v8689, %v8691
        %v8706 = vsel %vm5459, %v8691, %v8693
        %v8707 = vsel %vm5459, %v8693, %v8695
        %v8708 = vsel %vm5459, %v8695, %v8697
        %v8709 = vsel %vm5459, %v8697, %v8699
        %v8710 = vsel %vm5459, %v8699, %v8701
        %v8711 = vsel %vm5459, %v8701, %v8703
        %v8720 = vsel %vm6840, %v8704, 0.0
        %v8721 = vsel %vm6841, %v8705, 0.0
        %v8722 = vsel %vm6842, %v8706, 0.0
        %v8723 = vsel %vm6843, %v8707, 0.0
        %v8724 = vsel %vm6844, %v8708, 0.0
        %v8725 = vsel %vm6845, %v8709, 0.0
        %v8726 = vsel %vm6846, %v8710, 0.0
        %v8727 = vsel %vm6847, %v8711, 0.0
        %8728 = vrot.lane.b32.xlu0 %v8674, 96
        %v8729 = vpop.permute.xlu0 %8728
        %8730 = vrot.lane.b32.xlu0 %v8658, 96
        %v8731 = vpop.permute.xlu0 %8730
        %8732 = vrot.lane.b32.xlu0 %v8659, 96
        %v8733 = vpop.permute.xlu0 %8732
        %8734 = vrot.lane.b32.xlu0 %v8660, 96
        %v8735 = vpop.permute.xlu0 %8734
        %8736 = vrot.lane.b32.xlu0 %v8661, 96
        %v8737 = vpop.permute.xlu0 %8736
        %8738 = vrot.lane.b32.xlu0 %v8662, 96
        %v8739 = vpop.permute.xlu0 %8738
        %8740 = vrot.lane.b32.xlu0 %v8663, 96
        %v8741 = vpop.permute.xlu0 %8740
        %8742 = vrot.lane.b32.xlu0 %v8664, 96
        %v8743 = vpop.permute.xlu0 %8742
        %8744 = vrot.lane.b32.xlu0 %v8675, 96
        %v8745 = vpop.permute.xlu0 %8744
        %v8746 = vsel %vm3621, %v8729, %v8731
        %v8747 = vsel %vm3621, %v8731, %v8733
        %v8748 = vsel %vm3621, %v8733, %v8735
        %v8749 = vsel %vm3621, %v8735, %v8737
        %v8750 = vsel %vm3621, %v8737, %v8739
        %v8751 = vsel %vm3621, %v8739, %v8741
        %v8752 = vsel %vm3621, %v8741, %v8743
        %v8753 = vsel %vm3621, %v8743, %v8745
        %v8762 = vsel %vm6816, %v8746, 0.0
        %v8763 = vsel %vm6817, %v8747, 0.0
        %v8764 = vsel %vm6818, %v8748, 0.0
        %v8765 = vsel %vm6819, %v8749, 0.0
        %v8766 = vsel %vm6820, %v8750, 0.0
        %v8767 = vsel %vm6821, %v8751, 0.0
        %v8768 = vsel %vm6822, %v8752, 0.0
        %v8769 = vsel %vm6823, %v8753, 0.0
        %8770 = vrot.lane.b32.xlu0 %v8674, 94
        %v8771 = vpop.permute.xlu0 %8770
        %8772 = vrot.lane.b32.xlu0 %v8658, 94
        %v8773 = vpop.permute.xlu0 %8772
        %8774 = vrot.lane.b32.xlu0 %v8659, 94
        %v8775 = vpop.permute.xlu0 %8774
        %8776 = vrot.lane.b32.xlu0 %v8660, 94
        %v8777 = vpop.permute.xlu0 %8776
        %8778 = vrot.lane.b32.xlu0 %v8661, 94
        %v8779 = vpop.permute.xlu0 %8778
        %8780 = vrot.lane.b32.xlu0 %v8662, 94
        %v8781 = vpop.permute.xlu0 %8780
        %8782 = vrot.lane.b32.xlu0 %v8663, 94
        %v8783 = vpop.permute.xlu0 %8782
        %8784 = vrot.lane.b32.xlu0 %v8664, 94
        %v8785 = vpop.permute.xlu0 %8784
        %8786 = vrot.lane.b32.xlu0 %v8675, 94
        %v8787 = vpop.permute.xlu0 %8786
        %v8788 = vsel %vm5558, %v8771, %v8773
        %v8789 = vsel %vm5558, %v8773, %v8775
        %v8790 = vsel %vm5558, %v8775, %v8777
        %v8791 = vsel %vm5558, %v8777, %v8779
        %v8792 = vsel %vm5558, %v8779, %v8781
        %v8793 = vsel %vm5558, %v8781, %v8783
        %v8794 = vsel %vm5558, %v8783, %v8785
        %v8795 = vsel %vm5558, %v8785, %v8787
        %v8804 = vsel %vm6840, %v8788, 0.0
        %v8805 = vsel %vm6841, %v8789, 0.0
        %v8806 = vsel %vm6842, %v8790, 0.0
        %v8807 = vsel %vm6843, %v8791, 0.0
        %v8808 = vsel %vm6844, %v8792, 0.0
        %v8809 = vsel %vm6845, %v8793, 0.0
        %v8810 = vsel %vm6846, %v8794, 0.0
        %v8811 = vsel %vm6847, %v8795, 0.0
        %8812 = vrot.lane.b32.xlu0 %v8674, 64
        %v8813 = vpop.permute.xlu0 %8812
        %8814 = vrot.lane.b32.xlu0 %v8658, 64
        %v8815 = vpop.permute.xlu0 %8814
        %8816 = vrot.lane.b32.xlu0 %v8659, 64
        %v8817 = vpop.permute.xlu0 %8816
        %8818 = vrot.lane.b32.xlu0 %v8660, 64
        %v8819 = vpop.permute.xlu0 %8818
        %8820 = vrot.lane.b32.xlu0 %v8661, 64
        %v8821 = vpop.permute.xlu0 %8820
        %8822 = vrot.lane.b32.xlu0 %v8662, 64
        %v8823 = vpop.permute.xlu0 %8822
        %8824 = vrot.lane.b32.xlu0 %v8663, 64
        %v8825 = vpop.permute.xlu0 %8824
        %8826 = vrot.lane.b32.xlu0 %v8664, 64
        %v8827 = vpop.permute.xlu0 %8826
        %8828 = vrot.lane.b32.xlu0 %v8675, 64
        %v8829 = vpop.permute.xlu0 %8828
        %v8830 = vsel %vm5221, %v8813, %v8815
        %v8831 = vsel %vm5221, %v8815, %v8817
        %v8832 = vsel %vm5221, %v8817, %v8819
        %v8833 = vsel %vm5221, %v8819, %v8821
        %v8834 = vsel %vm5221, %v8821, %v8823
        %v8835 = vsel %vm5221, %v8823, %v8825
        %v8836 = vsel %vm5221, %v8825, %v8827
        %v8837 = vsel %vm5221, %v8827, %v8829
        %v8846 = vsel %vm6816, %v8830, 0.0
        %v8847 = vsel %vm6817, %v8831, 0.0
        %v8848 = vsel %vm6818, %v8832, 0.0
        %v8849 = vsel %vm6819, %v8833, 0.0
        %v8850 = vsel %vm6820, %v8834, 0.0
        %v8851 = vsel %vm6821, %v8835, 0.0
        %v8852 = vsel %vm6822, %v8836, 0.0
        %v8853 = vsel %vm6823, %v8837, 0.0
        %8854 = vrot.lane.b32.xlu0 %v8674, 62
        %v8855 = vpop.permute.xlu0 %8854
        %8856 = vrot.lane.b32.xlu0 %v8658, 62
        %v8857 = vpop.permute.xlu0 %8856
        %8858 = vrot.lane.b32.xlu0 %v8659, 62
        %v8859 = vpop.permute.xlu0 %8858
        %8860 = vrot.lane.b32.xlu0 %v8660, 62
        %v8861 = vpop.permute.xlu0 %8860
        %8862 = vrot.lane.b32.xlu0 %v8661, 62
        %v8863 = vpop.permute.xlu0 %8862
        %8864 = vrot.lane.b32.xlu0 %v8662, 62
        %v8865 = vpop.permute.xlu0 %8864
        %8866 = vrot.lane.b32.xlu0 %v8663, 62
        %v8867 = vpop.permute.xlu0 %8866
        %8868 = vrot.lane.b32.xlu0 %v8664, 62
        %v8869 = vpop.permute.xlu0 %8868
        %8870 = vrot.lane.b32.xlu0 %v8675, 62
        %v8871 = vpop.permute.xlu0 %8870
        %v8872 = vsel %vm7036, %v8855, %v8857
        %v8873 = vsel %vm7036, %v8857, %v8859
        %v8874 = vsel %vm7036, %v8859, %v8861
        %v8875 = vsel %vm7036, %v8861, %v8863
        %v8876 = vsel %vm7036, %v8863, %v8865
        %v8877 = vsel %vm7036, %v8865, %v8867
        %v8878 = vsel %vm7036, %v8867, %v8869
        %v8879 = vsel %vm7036, %v8869, %v8871
        %v8888 = vsel %vm6840, %v8872, 0.0
        %v8889 = vsel %vm6841, %v8873, 0.0
        %v8890 = vsel %vm6842, %v8874, 0.0
        %v8891 = vsel %vm6843, %v8875, 0.0
        %v8892 = vsel %vm6844, %v8876, 0.0
        %v8893 = vsel %vm6845, %v8877, 0.0
        %v8894 = vsel %vm6846, %v8878, 0.0
        %v8895 = vsel %vm6847, %v8879, 0.0
        %v8896 = vrot.slane %v8674, 4
        %v8897 = vrot.slane %v8658, 4
        %v8898 = vrot.slane %v8659, 4
        %v8899 = vrot.slane %v8660, 4
        %v8900 = vrot.slane %v8661, 4
        %v8901 = vrot.slane %v8662, 4
        %v8902 = vrot.slane %v8663, 4
        %v8903 = vrot.slane %v8664, 4
        %v8904 = vrot.slane %v8675, 4
        %8905 = vrot.lane.b32.xlu0 %v8896, 127
        %v8906 = vpop.permute.xlu0 %8905
        %8907 = vrot.lane.b32.xlu0 %v8897, 127
        %v8908 = vpop.permute.xlu0 %8907
        %8909 = vrot.lane.b32.xlu0 %v8898, 127
        %v8910 = vpop.permute.xlu0 %8909
        %8911 = vrot.lane.b32.xlu0 %v8899, 127
        %v8912 = vpop.permute.xlu0 %8911
        %8913 = vrot.lane.b32.xlu0 %v8900, 127
        %v8914 = vpop.permute.xlu0 %8913
        %8915 = vrot.lane.b32.xlu0 %v8901, 127
        %v8916 = vpop.permute.xlu0 %8915
        %8917 = vrot.lane.b32.xlu0 %v8902, 127
        %v8918 = vpop.permute.xlu0 %8917
        %8919 = vrot.lane.b32.xlu0 %v8903, 127
        %v8920 = vpop.permute.xlu0 %8919
        %8921 = vrot.lane.b32.xlu0 %v8904, 127
        %v8922 = vpop.permute.xlu0 %8921
        %v8923 = vsel %vm5583, %v8906, %v8908
        %v8924 = vsel %vm5583, %v8908, %v8910
        %v8925 = vsel %vm5583, %v8910, %v8912
        %v8926 = vsel %vm5583, %v8912, %v8914
        %v8927 = vsel %vm5583, %v8914, %v8916
        %v8928 = vsel %vm5583, %v8916, %v8918
        %v8929 = vsel %vm5583, %v8918, %v8920
        %v8930 = vsel %vm5583, %v8920, %v8922
        %v8947 = vrot.slane %v8762, 4
        %v8948 = vrot.slane %v8763, 4
        %v8949 = vrot.slane %v8764, 4
        %v8950 = vrot.slane %v8765, 4
        %v8951 = vrot.slane %v8766, 4
        %v8952 = vrot.slane %v8767, 4
        %v8953 = vrot.slane %v8768, 4
        %v8954 = vrot.slane %v8769, 4
        %8963 = vrot.lane.b32.xlu0 %v8674, 95
        %v8964 = vpop.permute.xlu0 %8963
        %8965 = vrot.lane.b32.xlu0 %v8658, 95
        %v8966 = vpop.permute.xlu0 %8965
        %8967 = vrot.lane.b32.xlu0 %v8659, 95
        %v8968 = vpop.permute.xlu0 %8967
        %8969 = vrot.lane.b32.xlu0 %v8660, 95
        %v8970 = vpop.permute.xlu0 %8969
        %8971 = vrot.lane.b32.xlu0 %v8661, 95
        %v8972 = vpop.permute.xlu0 %8971
        %8973 = vrot.lane.b32.xlu0 %v8662, 95
        %v8974 = vpop.permute.xlu0 %8973
        %8975 = vrot.lane.b32.xlu0 %v8663, 95
        %v8976 = vpop.permute.xlu0 %8975
        %8977 = vrot.lane.b32.xlu0 %v8664, 95
        %v8978 = vpop.permute.xlu0 %8977
        %8979 = vrot.lane.b32.xlu0 %v8675, 95
        %v8980 = vpop.permute.xlu0 %8979
        %v8981 = vsel %vm5625, %v8964, %v8966
        %v8982 = vsel %vm5625, %v8966, %v8968
        %v8983 = vsel %vm5625, %v8968, %v8970
        %v8984 = vsel %vm5625, %v8970, %v8972
        %v8985 = vsel %vm5625, %v8972, %v8974
        %v8986 = vsel %vm5625, %v8974, %v8976
        %v8987 = vsel %vm5625, %v8976, %v8978
        %v8988 = vsel %vm5625, %v8978, %v8980
        %v9005 = vrot.slane %v8804, 4
        %v9006 = vrot.slane %v8805, 4
        %v9007 = vrot.slane %v8806, 4
        %v9008 = vrot.slane %v8807, 4
        %v9009 = vrot.slane %v8808, 4
        %v9010 = vrot.slane %v8809, 4
        %v9011 = vrot.slane %v8810, 4
        %v9012 = vrot.slane %v8811, 4
        %9021 = vrot.lane.b32.xlu0 %v8896, 63
        %v9022 = vpop.permute.xlu0 %9021
        %9023 = vrot.lane.b32.xlu0 %v8897, 63
        %v9024 = vpop.permute.xlu0 %9023
        %9025 = vrot.lane.b32.xlu0 %v8898, 63
        %v9026 = vpop.permute.xlu0 %9025
        %9027 = vrot.lane.b32.xlu0 %v8899, 63
        %v9028 = vpop.permute.xlu0 %9027
        %9029 = vrot.lane.b32.xlu0 %v8900, 63
        %v9030 = vpop.permute.xlu0 %9029
        %9031 = vrot.lane.b32.xlu0 %v8901, 63
        %v9032 = vpop.permute.xlu0 %9031
        %9033 = vrot.lane.b32.xlu0 %v8902, 63
        %v9034 = vpop.permute.xlu0 %9033
        %9035 = vrot.lane.b32.xlu0 %v8903, 63
        %v9036 = vpop.permute.xlu0 %9035
        %9037 = vrot.lane.b32.xlu0 %v8904, 63
        %v9038 = vpop.permute.xlu0 %9037
        %v9039 = vsel %vm7147, %v9022, %v9024
        %v9040 = vsel %vm7147, %v9024, %v9026
        %v9041 = vsel %vm7147, %v9026, %v9028
        %v9042 = vsel %vm7147, %v9028, %v9030
        %v9043 = vsel %vm7147, %v9030, %v9032
        %v9044 = vsel %vm7147, %v9032, %v9034
        %v9045 = vsel %vm7147, %v9034, %v9036
        %v9046 = vsel %vm7147, %v9036, %v9038
        %v9055 = vsel %vm7963, %v8676, %v8923
        %v9056 = vsel %vm7963, %v8677, %v8924
        %v9057 = vsel %vm7963, %v8678, %v8925
        %v9058 = vsel %vm7963, %v8679, %v8926
        %v9059 = vsel %vm7963, %v8680, %v8927
        %v9060 = vsel %vm7963, %v8681, %v8928
        %v9061 = vsel %vm7963, %v8682, %v8929
        %v9062 = vsel %vm7963, %v8683, %v8930
        %v9063 = vsel %vm7963, %v8720, %v8947
        %v9064 = vsel %vm7963, %v8721, %v8948
        %v9065 = vsel %vm7963, %v8722, %v8949
        %v9066 = vsel %vm7963, %v8723, %v8950
        %v9067 = vsel %vm7963, %v8724, %v8951
        %v9068 = vsel %vm7963, %v8725, %v8952
        %v9069 = vsel %vm7963, %v8726, %v8953
        %v9070 = vsel %vm7963, %v8727, %v8954
        %v9071 = vsel %vm7963, %v8981, %v9005
        %v9072 = vsel %vm7963, %v8982, %v9006
        %v9073 = vsel %vm7963, %v8983, %v9007
        %v9074 = vsel %vm7963, %v8984, %v9008
        %v9075 = vsel %vm7963, %v8985, %v9009
        %v9076 = vsel %vm7963, %v8986, %v9010
        %v9077 = vsel %vm7963, %v8987, %v9011
        %v9078 = vsel %vm7963, %v8988, %v9012
        %v9079 = vsel %vm7963, %v8846, %v9039
        %v9080 = vsel %vm7963, %v8847, %v9040
        %v9081 = vsel %vm7963, %v8848, %v9041
        %v9082 = vsel %vm7963, %v8849, %v9042
        %v9083 = vsel %vm7963, %v8850, %v9043
        %v9084 = vsel %vm7963, %v8851, %v9044
        %v9085 = vsel %vm7963, %v8852, %v9045
        %v9086 = vsel %vm7963, %v8853, %v9046
        %v9087 = vld [vmem:[%s59] sm:$0x7]
        %v9088 = vld [vmem:[%s61] sm:$0x7]
        %9090 = vset.pattern.permute.xlu0 0
        %9091 = vperm.xlu0 %9090, %v9088
        %v9092 = vpop.permute.xlu0 %9091
        %v9095 = vsel %vm8003, %v9087, 0
        %v9098 = vsel %vm7963, %v8888, 0
        %v9101 = vsel %vm7963, %v8889, 0
        %v9104 = vsel %vm7963, %v8890, 0
        %v9107 = vsel %vm7963, %v8891, 0
        %v9110 = vsel %vm7963, %v8892, 0
        %v9113 = vsel %vm7963, %v8893, 0
        %v9116 = vsel %vm7963, %v8894, 0
        %v9119 = vsel %vm7963, %v8895, 0
        %9121 = vmatprep.subr.mxu0 %v9056
        %9122 = vmatpush1.msra.mxu0 %v9055
        %9123 = vmatprep.subr.mxu0 %v9064
        %9124 = vmatpush1.msra.mxu0 %v9063
        %9125 = vmatprep.subr.mxu0 %v9072
        %9126 = vmatpush1.msra.mxu0 %v9071
        %9127 = vmatprep.subr.mxu0 %v9080
        %9128 = vmatpush1.msra.mxu0 %v9079
        %9129 = vmatprep.subr.mxu0 %v9101
        %9130 = vmatpush1.msra.mxu0 %v9098
        %9131 = vmatprep.subr.mxu0 0.0
        %9132 = vmatpush1.msra.mxu0 0.0
        %9133 = vmatprep.subr.mxu0 0.0
        %9134 = vmatpush1.msra.mxu0 0.0
        %9135 = vmatprep.subr.mxu0 0.0
        %9136 = vmatpush1.msra.mxu0 0.0
        %9137 = vmatprep.subr.mxu0 0.0
        %9138 = vmatpush1.msra.mxu0 0.0
        %9139 = vmatprep.subr.mxu0 0.0
        %9140 = vmatpush1.msra.mxu0 0.0
        %9141 = vmatprep.subr.mxu0 0.0
        %9142 = vmatpush1.msra.mxu0 0.0
        %9143 = vmatprep.subr.mxu0 0.0
        %9144 = vmatpush1.msra.mxu0 0.0
        %9145 = vmatprep.subr.mxu0 0.0
        %9146 = vmatpush1.msra.mxu0 0.0
        %9147 = vmatprep.subr.mxu0 0.0
        %9148 = vmatpush1.msra.mxu0 0.0
        %9149 = vmatprep.subr.mxu0 0.0
        %9150 = vmatpush1.msra.mxu0 0.0
        %9151 = vmatprep.subr.mxu0 0.0
        %9152 = vmatpush1.msra.mxu0 0.0
        %9153 = vmatprep.subr.mxu0 0.0
        %9154 = vmatpush1.msra.mxu0 0.0
        %9155 = vmatprep.subr.mxu0 0.0
        %9156 = vmatpush1.msra.mxu0 0.0
        %9157 = vmatprep.subr.mxu0 0.0
        %9158 = vmatpush1.msra.mxu0 0.0
        %9159 = vmatprep.subr.mxu0 0.0
        %9160 = vmatpush1.msra.mxu0 0.0
        %9161 = vmatprep.subr.mxu0 0.0
        %9162 = vmatpush1.msra.mxu0 0.0
        %9163 = vmatprep.subr.mxu0 0.0
        %9164 = vmatpush1.msra.mxu0 0.0
        %9165 = vmatprep.subr.mxu0 0.0
        %9166 = vmatpush1.msra.mxu0 0.0
        %9167 = vmatprep.subr.mxu0 0.0
        %9168 = vmatpush1.msra.mxu0 0.0
        %9169 = vmatprep.subr.mxu0 0.0
        %9170 = vmatpush1.msra.mxu0 0.0
        %9171 = vmatprep.subr.mxu0 0.0
        %9172 = vmatpush1.msra.mxu0 0.0
        %9173 = vmatprep.subr.mxu0 0.0
        %9174 = vmatpush1.msra.mxu0 0.0
        %9175 = vmatprep.subr.mxu0 0.0
        %9176 = vmatpush1.msra.mxu0 0.0
        %9177 = vmatprep.subr.mxu0 0.0
        %9178 = vmatpush1.msra.mxu0 0.0
        %9179 = vmatprep.subr.mxu0 0.0
        %9180 = vmatpush1.msra.mxu0 0.0
        %9181 = vmatprep.subr.mxu0 0.0
        %9182 = vmatpush1.msra.mxu0 0.0
        %9183 = vmatprep.subr.mxu0 0.0
        %9184 = vmatpush1.msra.mxu0 0.0
        %9185 = vmatprep.mubr.f32.mxu0 0.0
        %9186 = vmatmul.mubr.f32.gmra.mrb[0].mxu0 %v9095
        %v9187 = vpop.f32.mrb[0].mxu0
        %v9188 = vadd.f32 %v9092, %v9187
        %v9189 = vpop.f32.mrb[0].mxu0
        %v9190 = vadd.f32 %v9092, %v9189
        %9191 = vdwg.mxu0
        %9192 = vmatprep.subr.mxu0 %v9058
        %9193 = vmatpush1.msra.mxu0 %v9057
        %9194 = vmatprep.subr.mxu0 %v9066
        %9195 = vmatpush1.msra.mxu0 %v9065
        %9196 = vmatprep.subr.mxu0 %v9074
        %9197 = vmatpush1.msra.mxu0 %v9073
        %9198 = vmatprep.subr.mxu0 %v9082
        %9199 = vmatpush1.msra.mxu0 %v9081
        %9200 = vmatprep.subr.mxu0 %v9107
        %9201 = vmatpush1.msra.mxu0 %v9104
        %9202 = vmatprep.subr.mxu0 0.0
        %9203 = vmatpush1.msra.mxu0 0.0
        %9204 = vmatprep.subr.mxu0 0.0
        %9205 = vmatpush1.msra.mxu0 0.0
        %9206 = vmatprep.subr.mxu0 0.0
        %9207 = vmatpush1.msra.mxu0 0.0
        %9208 = vmatprep.subr.mxu0 0.0
        %9209 = vmatpush1.msra.mxu0 0.0
        %9210 = vmatprep.subr.mxu0 0.0
        %9211 = vmatpush1.msra.mxu0 0.0
        %9212 = vmatprep.subr.mxu0 0.0
        %9213 = vmatpush1.msra.mxu0 0.0
        %9214 = vmatprep.subr.mxu0 0.0
        %9215 = vmatpush1.msra.mxu0 0.0
        %9216 = vmatprep.subr.mxu0 0.0
        %9217 = vmatpush1.msra.mxu0 0.0
        %9218 = vmatprep.subr.mxu0 0.0
        %9219 = vmatpush1.msra.mxu0 0.0
        %9220 = vmatprep.subr.mxu0 0.0
        %9221 = vmatpush1.msra.mxu0 0.0
        %9222 = vmatprep.subr.mxu0 0.0
        %9223 = vmatpush1.msra.mxu0 0.0
        %9224 = vmatprep.subr.mxu0 0.0
        %9225 = vmatpush1.msra.mxu0 0.0
        %9226 = vmatprep.subr.mxu0 0.0
        %9227 = vmatpush1.msra.mxu0 0.0
        %9228 = vmatprep.subr.mxu0 0.0
        %9229 = vmatpush1.msra.mxu0 0.0
        %9230 = vmatprep.subr.mxu0 0.0
        %9231 = vmatpush1.msra.mxu0 0.0
        %9232 = vmatprep.subr.mxu0 0.0
        %9233 = vmatpush1.msra.mxu0 0.0
        %9234 = vmatprep.subr.mxu0 0.0
        %9235 = vmatpush1.msra.mxu0 0.0
        %9236 = vmatprep.subr.mxu0 0.0
        %9237 = vmatpush1.msra.mxu0 0.0
        %9238 = vmatprep.subr.mxu0 0.0
        %9239 = vmatpush1.msra.mxu0 0.0
        %9240 = vmatprep.subr.mxu0 0.0
        %9241 = vmatpush1.msra.mxu0 0.0
        %9242 = vmatprep.subr.mxu0 0.0
        %9243 = vmatpush1.msra.mxu0 0.0
        %9244 = vmatprep.subr.mxu0 0.0
        %9245 = vmatpush1.msra.mxu0 0.0
        %9246 = vmatprep.subr.mxu0 0.0
        %9247 = vmatpush1.msra.mxu0 0.0
        %9248 = vmatprep.subr.mxu0 0.0
        %9249 = vmatpush1.msra.mxu0 0.0
        %9250 = vmatprep.subr.mxu0 0.0
        %9251 = vmatpush1.msra.mxu0 0.0
        %9252 = vmatprep.subr.mxu0 0.0
        %9253 = vmatpush1.msra.mxu0 0.0
        %9254 = vmatprep.subr.mxu0 0.0
        %9255 = vmatpush1.msra.mxu0 0.0
        %9256 = vmatprep.mubr.f32.mxu0 0.0
        %9257 = vmatmul.mubr.f32.gmra.mrb[0].mxu0 %v9095
        %v9258 = vpop.f32.mrb[0].mxu0
        %v9259 = vadd.f32 %v9092, %v9258
        %v9260 = vpop.f32.mrb[0].mxu0
        %v9261 = vadd.f32 %v9092, %v9260
        %9262 = vdwg.mxu0
        %9263 = vmatprep.subr.mxu0 %v9060
        %9264 = vmatpush1.msra.mxu0 %v9059
        %9265 = vmatprep.subr.mxu0 %v9068
        %9266 = vmatpush1.msra.mxu0 %v9067
        %9267 = vmatprep.subr.mxu0 %v9076
        %9268 = vmatpush1.msra.mxu0 %v9075
        %9269 = vmatprep.subr.mxu0 %v9084
        %9270 = vmatpush1.msra.mxu0 %v9083
        %9271 = vmatprep.subr.mxu0 %v9113
        %9272 = vmatpush1.msra.mxu0 %v9110
        %9273 = vmatprep.subr.mxu0 0.0
        %9274 = vmatpush1.msra.mxu0 0.0
        %9275 = vmatprep.subr.mxu0 0.0
        %9276 = vmatpush1.msra.mxu0 0.0
        %9277 = vmatprep.subr.mxu0 0.0
        %9278 = vmatpush1.msra.mxu0 0.0
        %9279 = vmatprep.subr.mxu0 0.0
        %9280 = vmatpush1.msra.mxu0 0.0
        %9281 = vmatprep.subr.mxu0 0.0
        %9282 = vmatpush1.msra.mxu0 0.0
        %9283 = vmatprep.subr.mxu0 0.0
        %9284 = vmatpush1.msra.mxu0 0.0
        %9285 = vmatprep.subr.mxu0 0.0
        %9286 = vmatpush1.msra.mxu0 0.0
        %9287 = vmatprep.subr.mxu0 0.0
        %9288 = vmatpush1.msra.mxu0 0.0
        %9289 = vmatprep.subr.mxu0 0.0
        %9290 = vmatpush1.msra.mxu0 0.0
        %9291 = vmatprep.subr.mxu0 0.0
        %9292 = vmatpush1.msra.mxu0 0.0
        %9293 = vmatprep.subr.mxu0 0.0
        %9294 = vmatpush1.msra.mxu0 0.0
        %9295 = vmatprep.subr.mxu0 0.0
        %9296 = vmatpush1.msra.mxu0 0.0
        %9297 = vmatprep.subr.mxu0 0.0
        %9298 = vmatpush1.msra.mxu0 0.0
        %9299 = vmatprep.subr.mxu0 0.0
        %9300 = vmatpush1.msra.mxu0 0.0
        %9301 = vmatprep.subr.mxu0 0.0
        %9302 = vmatpush1.msra.mxu0 0.0
        %9303 = vmatprep.subr.mxu0 0.0
        %9304 = vmatpush1.msra.mxu0 0.0
        %9305 = vmatprep.subr.mxu0 0.0
        %9306 = vmatpush1.msra.mxu0 0.0
        %9307 = vmatprep.subr.mxu0 0.0
        %9308 = vmatpush1.msra.mxu0 0.0
        %9309 = vmatprep.subr.mxu0 0.0
        %9310 = vmatpush1.msra.mxu0 0.0
        %9311 = vmatprep.subr.mxu0 0.0
        %9312 = vmatpush1.msra.mxu0 0.0
        %9313 = vmatprep.subr.mxu0 0.0
        %9314 = vmatpush1.msra.mxu0 0.0
        %9315 = vmatprep.subr.mxu0 0.0
        %9316 = vmatpush1.msra.mxu0 0.0
        %9317 = vmatprep.subr.mxu0 0.0
        %9318 = vmatpush1.msra.mxu0 0.0
        %9319 = vmatprep.subr.mxu0 0.0
        %9320 = vmatpush1.msra.mxu0 0.0
        %9321 = vmatprep.subr.mxu0 0.0
        %9322 = vmatpush1.msra.mxu0 0.0
        %9323 = vmatprep.subr.mxu0 0.0
        %9324 = vmatpush1.msra.mxu0 0.0
        %9325 = vmatprep.subr.mxu0 0.0
        %9326 = vmatpush1.msra.mxu0 0.0
        %9327 = vmatprep.mubr.f32.mxu0 0.0
        %9328 = vmatmul.mubr.f32.gmra.mrb[0].mxu0 %v9095
        %v9329 = vpop.f32.mrb[0].mxu0
        %v9330 = vadd.f32 %v9092, %v9329
        %v9331 = vpop.f32.mrb[0].mxu0
        %v9332 = vadd.f32 %v9092, %v9331
        %9333 = vdwg.mxu0
        %9334 = vmatprep.subr.mxu0 %v9062
        %9335 = vmatpush1.msra.mxu0 %v9061
        %9336 = vmatprep.subr.mxu0 %v9070
        %9337 = vmatpush1.msra.mxu0 %v9069
        %9338 = vmatprep.subr.mxu0 %v9078
        %9339 = vmatpush1.msra.mxu0 %v9077
        %9340 = vmatprep.subr.mxu0 %v9086
        %9341 = vmatpush1.msra.mxu0 %v9085
        %9342 = vmatprep.subr.mxu0 %v9119
        %9343 = vmatpush1.msra.mxu0 %v9116
        %9344 = vmatprep.subr.mxu0 0.0
        %9345 = vmatpush1.msra.mxu0 0.0
        %9346 = vmatprep.subr.mxu0 0.0
        %9347 = vmatpush1.msra.mxu0 0.0
        %9348 = vmatprep.subr.mxu0 0.0
        %9349 = vmatpush1.msra.mxu0 0.0
        %9350 = vmatprep.subr.mxu0 0.0
        %9351 = vmatpush1.msra.mxu0 0.0
        %9352 = vmatprep.subr.mxu0 0.0
        %9353 = vmatpush1.msra.mxu0 0.0
        %9354 = vmatprep.subr.mxu0 0.0
        %9355 = vmatpush1.msra.mxu0 0.0
        %9356 = vmatprep.subr.mxu0 0.0
        %9357 = vmatpush1.msra.mxu0 0.0
        %9358 = vmatprep.subr.mxu0 0.0
        %9359 = vmatpush1.msra.mxu0 0.0
        %9360 = vmatprep.subr.mxu0 0.0
        %9361 = vmatpush1.msra.mxu0 0.0
        %9362 = vmatprep.subr.mxu0 0.0
        %9363 = vmatpush1.msra.mxu0 0.0
        %9364 = vmatprep.subr.mxu0 0.0
        %9365 = vmatpush1.msra.mxu0 0.0
        %9366 = vmatprep.subr.mxu0 0.0
        %9367 = vmatpush1.msra.mxu0 0.0
        %9368 = vmatprep.subr.mxu0 0.0
        %9369 = vmatpush1.msra.mxu0 0.0
        %9370 = vmatprep.subr.mxu0 0.0
        %9371 = vmatpush1.msra.mxu0 0.0
        %9372 = vmatprep.subr.mxu0 0.0
        %9373 = vmatpush1.msra.mxu0 0.0
        %9374 = vmatprep.subr.mxu0 0.0
        %9375 = vmatpush1.msra.mxu0 0.0
        %9376 = vmatprep.subr.mxu0 0.0
        %9377 = vmatpush1.msra.mxu0 0.0
        %9378 = vmatprep.subr.mxu0 0.0
        %9379 = vmatpush1.msra.mxu0 0.0
        %9380 = vmatprep.subr.mxu0 0.0
        %9381 = vmatpush1.msra.mxu0 0.0
        %9382 = vmatprep.subr.mxu0 0.0
        %9383 = vmatpush1.msra.mxu0 0.0
        %9384 = vmatprep.subr.mxu0 0.0
        %9385 = vmatpush1.msra.mxu0 0.0
        %9386 = vmatprep.subr.mxu0 0.0
        %9387 = vmatpush1.msra.mxu0 0.0
        %9388 = vmatprep.subr.mxu0 0.0
        %9389 = vmatpush1.msra.mxu0 0.0
        %9390 = vmatprep.subr.mxu0 0.0
        %9391 = vmatpush1.msra.mxu0 0.0
        %9392 = vmatprep.subr.mxu0 0.0
        %9393 = vmatpush1.msra.mxu0 0.0
        %9394 = vmatprep.subr.mxu0 0.0
        %9395 = vmatpush1.msra.mxu0 0.0
        %9396 = vmatprep.subr.mxu0 0.0
        %9397 = vmatpush1.msra.mxu0 0.0
        %9398 = vmatprep.mubr.f32.mxu0 0.0
        %9399 = vmatmul.mubr.f32.gmra.mrb[0].mxu0 %v9095
        %v9400 = vpop.f32.mrb[0].mxu0
        %v9401 = vadd.f32 %v9092, %v9400
        %v9402 = vpop.f32.mrb[0].mxu0
        %v9403 = vadd.f32 %v9092, %v9402
        %9404 = vdwg.mxu0
        %v9405 = vtanh.pop %v9188
        %v9406 = vtanh.pop %v9190
        %v9407 = vtanh.pop %v9259
        %v9408 = vtanh.pop %v9261
        %v9409 = vtanh.pop %v9330
        %v9410 = vtanh.pop %v9332
        %v9411 = vtanh.pop %v9401
        %v9412 = vtanh.pop %v9403
        %v9421 = vcombine.low %v9405, %v9406
        %v9422 = vcombine.low %v9407, %v9408
        %v9423 = vcombine.low %v9409, %v9410
        %v9424 = vcombine.low %v9411, %v9412
        %9429 = vst [vmem:[%s1101] sm:$0x77] %v9421
        %9430 = vst [vmem:[%s1101 + $0x8] sm:$0x77] %v9422
        %9431 = vst [vmem:[%s1101 + $0x10] sm:$0x77] %v9423
        %9432 = vst [vmem:[%s1101 + $0x18] sm:$0x77] %v9424
        %p9433 = scmp.lt.s32.totalorder %s82, 1
        %s9434 = scalar_select %p9433, %s82, 1
        %s9435 = smul.addr %s9434, 8
        %s9436 = smul.addr %s9435, 4
        %s9437 = scalar_lea.vmem %s63, %s9436
        // Predicated region
        $region193: #{netg_forward.1} parent=143 // pred_check
          %p9438 = pneg %p751
        $region194: #{netg_forward.1} parent=143 // pred_check_branch
          %9440 = sbr.rel (%p9438) target = $region196
        $region195: #{netg_forward.1} parent=143 // pred_region
          _
        $region196: #{netg_forward.1} parent=143 // pred_fallthru
          _
      $region144: #{netg_forward.1} parent=5 // pred_fallthru
        _
      %p9441 = scmp.le.s32.totalorder 2, %s77
      // Predicated region
      $region197: #{netg_forward.1} parent=5 // pred_check
        %p9442 = pneg %p9441
      $region198: #{netg_forward.1} parent=5 // pred_check_branch
        %9444 = sbr.rel (%p9442) target = $region200
      $region199: #{netg_forward.1} parent=5 // pred_region
        %s9445 = ssub.s32 %s77, 2
        // Predicated region
        $region201: #{netg_forward.1} parent=199 // pred_check
          %p9446 = pneg %p757
        $region202: #{netg_forward.1} parent=199 // pred_check_branch
          %9448 = sbr.rel (%p9446) target = $region204
        $region203: #{netg_forward.1} parent=199 // pred_region
          %p9449 = scmp.lt.s32.totalorder %s83, 1
          %s9450 = scalar_select %p9449, %s83, 1
          %s9451 = smul.addr %s9450, 8
          %s9452 = smul.addr %s9451, 4
          %s9453 = scalar_lea.vmem %s63, %s9452
        $region204: #{netg_forward.1} parent=199 // pred_fallthru
          _
      $region200: #{netg_forward.1} parent=5 // pred_fallthru
        _
    $region6: #{netg_forward.1} parent=1 // loop_footer
      %s81 = sadd.s32 1, %s77
    $region7: #{netg_forward.1} parent=1 // loop_footer_branch
      %76 = sbr.rel target = $region3
    $region8: #{netg_forward.1} parent=1 // loop_exit
      _
    %9454 = vsyncpa [#allocation3], 1
    %s9455 = scalar_lea.sflag [#allocation3], 1
    %9456 = vsyncpa %s9455, 1
    %9457 = vsyncpa [#allocation9], 1
    %9458 = vsyncpa [#allocation12], 1
    %9459 = vsyncpa [#allocation15], 1
    %9460 = vsyncpa [#allocation18], 1
    %9461 = vsyncpa [#allocation21], 1
    %9462 = vsyncpa [#allocation4], 1
    %s9463 = scalar_lea.sflag [#allocation4], 1
    %9464 = vsyncpa %s9463, 1
    %9465 = vsyncpa [#allocation6], 1

</llo_original>
